<compile_context>
chip_gen: v7x
topology: tpu7x:2x2x1
jax: 0.10.0
libtpu: 0.0.40
codegen_flags: <defaults>
</compile_context>

<pallas_src>
import math
import functools

import jax
import jax.numpy as jnp
from jax.experimental import pallas as pl
from jax.experimental.pallas import tpu as pltpu

# ---------------- configuration (small shapes consistent with the module) ----
B = 2                 # batch
CIN = 4               # input channels fed to the feature model
Z, H, W = 4, 8, 4     # Z*H*W = 128
ZHW = Z * H * W
COUT = 128            # feature-model output channels
ATTN_DIM_LIST = [64, 64]
NUM_HEAD_LIST = [2, 2]
NUM_LAYERS = len(ATTN_DIM_LIST)
HEADS = NUM_HEAD_LIST[0]
DIM_HEAD = ATTN_DIM_LIST[0]
INNER_DIM = DIM_HEAD * HEADS                       # 128
SEQ = (Z * H * W * COUT) // INNER_DIM              # 128 (scaled-down "2048")
NUM_CLASS = 10
NUM_CLASS_PAD = 128                                # lane-dense padded head output
MAX_LEN = 5000

# 'b c z h w -> b (z h w) c' + reshape(b, SEQ, DIM) is identity only because
# ZHW == SEQ and COUT == INNER_DIM; the PE add needs SEQ == d_model.
assert SEQ == ZHW and INNER_DIM == COUT


# ------------------------------ fused kernel ---------------------------------
def _fused_forward_kernel(
    x_ref,            # (M, CIN)             f32   M = bb*SEQ
    pe_ref,           # (M, 1)               f32
    mean_ref,         # (bb, M)              bf16  block-diag ones/SEQ
    convw_ref,        # (CIN, COUT)          f32
    convb_ref,        # (1, COUT)            f32
    wqkv_ref,         # (L, D, 3D)           bf16  (scale folded into q cols)
    wo_ref,           # (L, D, D)            bf16
    bo_ref,           # (L, 1, D)            f32
    ln1w_ref,         # (L, 1, D)            f32
    ln1b_ref,         # (L, 1, D)            f32
    wff_ref,          # (L, D, D)            bf16  (w1 @ w2 collapsed)
    ln2w_ref,         # (L, 1, D)            f32
    ln2b_ref,         # (L, 1, D)            f32
    hw1_ref,          # (D, 512)             bf16
    hb1_ref,          # (1, 512)             f32
    hw2_ref,          # (512, 256)           bf16
    hb2_ref,          # (1, 256)             f32
    hw3_ref,          # (256, NUM_CLASS_PAD) bf16 (zero-padded)
    hb3_ref,          # (1, NUM_CLASS_PAD)   f32  (zero-padded)
    o_ref,            # (bb, 1, NUM_CLASS_PAD) f32
    *, bb, num_layers, heads, dim_head,
):
    d = heads * dim_head
    m_rows = x_ref.shape[0]
    seq = m_rows // bb

    # --- feature model: 1x1x1 Conv3d as CIN VPU broadcast-FMAs (channels-last)
    xb = x_ref[...]                                            # (M, CIN) f32
    feat = xb[:, 0:1] * convw_ref[0:1, :] + convb_ref[...]     # (M, COUT)
    for i in range(1, xb.shape[1]):
        feat = feat + xb[:, i:i + 1] * convw_ref[i:i + 1, :]
    # (M, COUT) == (bb*SEQ, D): identity reshape.

    # --- PositionalEncoding (dropout p=0): out[b*seq+s, :] = feat + pe[b, s]
    x = feat + pe_ref[...]                                     # (M, D) f32

    # --- TransformerEncoder stack (static unroll over layers / batch / heads)
    for l in range(num_layers):
        wo_l = wo_ref[l]                                       # (D, D) bf16
        # qkv produced once, cast to bf16 once (no per-head casts).
        qkv = jnp.dot(x.astype(jnp.bfloat16), wqkv_ref[l],
                      preferred_element_type=jnp.float32
                      ).astype(jnp.bfloat16)                   # (M, 3D) bf16

        attn_rows = []
        for b in range(bb):
            base = b * seq
            acc = None
            for hh in range(heads):
                lo = hh * dim_head
                q = qkv[base:base + seq, lo:lo + dim_head]
                k = qkv[base:base + seq, d + lo:d + lo + dim_head]
                v = qkv[base:base + seq, 2 * d + lo:2 * d + lo + dim_head]
                # scale already folded into the q columns of wqkv at init
                dots = jax.lax.dot_general(
                    q, k, (((1,), (1,)), ((), ())),
                    preferred_element_type=jnp.float32)        # (S, S) f32
                e = jnp.exp(dots - jnp.max(dots, axis=-1, keepdims=True))
                rsum = jnp.sum(e, axis=-1, keepdims=True)      # (S, 1)
                # unnormalized softmax: P@V first, normalize the (S,64) result
                o_h = jnp.dot(e.astype(jnp.bfloat16), v,
                              preferred_element_type=jnp.float32)
                o_h = o_h * pl.reciprocal(rsum, approx=True)   # (S, dh) f32
                # per-head output projection, accumulated (no scratch round trip)
                part = jnp.dot(o_h.astype(jnp.bfloat16),
                               wo_l[lo:lo + dim_head, :],
                               preferred_element_type=jnp.float32)  # (S, D)
                acc = part if acc is None else acc + part
            attn_rows.append(acc + bo_ref[l])
        attn = attn_rows[0] if bb == 1 else jnp.concatenate(attn_rows, axis=0)

        # residual + LayerNorm(eps=1e-6); var = E[r^2] - mu^2 (independent reductions)
        r = x + attn
        mu = jnp.mean(r, axis=-1, keepdims=True)
        ms = jnp.mean(r * r, axis=-1, keepdims=True)
        a = (r - mu) * jax.lax.rsqrt(ms - mu * mu + 1e-6) * ln1w_ref[l] + ln1b_ref[l]

        # feed-forward: collapsed w_ff = w1@w2 (no bias / no activation in reference)
        h2 = jnp.dot(a.astype(jnp.bfloat16), wff_ref[l],
                     preferred_element_type=jnp.float32)       # (M, D)
        y = a + h2
        mu2 = jnp.mean(y, axis=-1, keepdims=True)
        ms2 = jnp.mean(y * y, axis=-1, keepdims=True)
        x = (y - mu2) * jax.lax.rsqrt(ms2 - mu2 * mu2 + 1e-6) * ln2w_ref[l] + ln2b_ref[l]

    # --- head: per-batch sequence mean as a tiny MXU pass, then the MLP head
    m = jnp.dot(mean_ref[...], x.astype(jnp.bfloat16),
                preferred_element_type=jnp.float32)            # (bb, D) f32
    t = jnp.dot(m.astype(jnp.bfloat16), hw1_ref[...],
                preferred_element_type=jnp.float32) + hb1_ref[...]
    t = jnp.clip(t, 0.0, 6.0)                                  # ReLU6
    t = jnp.dot(t.astype(jnp.bfloat16), hw2_ref[...],
                preferred_element_type=jnp.float32) + hb2_ref[...]
    t = jnp.clip(t, 0.0, 6.0)                                  # ReLU6
    logits = jnp.dot(t.astype(jnp.bfloat16), hw3_ref[...],
                     preferred_element_type=jnp.float32) + hb3_ref[...]
    o_ref[:, 0, :] = jax.nn.sigmoid(logits)   # (bb, 128); cols >= NUM_CLASS sliced off


# ------------------------------ wrapper --------------------------------------
def _full_spec(shape):
    zeros = (0,) * len(shape)
    return pl.BlockSpec(shape, lambda i, _z=zeros: _z)


@functools.partial(jax.jit, static_argnames=("block_b",))
def _forward_impl(x, params, block_b):
    b = x.shape[0]
    assert b % block_b == 0
    n_steps = b // block_b
    m = block_b * SEQ

    # channels-last flatten of the NCDHW input for the pointwise conv
    x_cl = jnp.transpose(x, (0, 2, 3, 4, 1)).reshape(b * ZHW, CIN)
    # module's quirky x + pe[:B] (pe[:B] shape (B, d_model, 1)):
    #   out[b, s, d] = x[b, s, d] + pe[b, s]   -> pass pe flattened as (B*SEQ, 1)
    pe_flat = params["pe"][:b].reshape(b * SEQ, 1)
    # block-diagonal mean matrix: mean_mat[i, j] = 1/SEQ if j//SEQ == i else 0
    mean_mat = (jnp.repeat(jnp.eye(block_b, dtype=jnp.float32), SEQ, axis=1)
                * (1.0 / SEQ)).astype(jnp.bfloat16)            # (bb, bb*SEQ)

    kernel = functools.partial(
        _fused_forward_kernel, bb=block_b,
        num_layers=NUM_LAYERS, heads=HEADS, dim_head=DIM_HEAD)

    weight_keys = ("conv_w", "conv_b", "wqkv", "wo", "bo", "ln1w", "ln1b",
                   "wff", "ln2w", "ln2b",
                   "hw1", "hb1", "hw2", "hb2", "hw3", "hb3")
    operands = (x_cl, pe_flat, mean_mat, *[params[k] for k in weight_keys])
    in_specs = [
        pl.BlockSpec((m, CIN), lambda i: (i, 0)),      # x   (per grid step)
        pl.BlockSpec((m, 1), lambda i: (i, 0)),        # pe  (per grid step)
        _full_spec(mean_mat.shape),
    ] + [_full_spec(params[k].shape) for k in weight_keys]

    out = pl.pallas_call(
        kernel,
        out_shape=jax.ShapeDtypeStruct((b, 1, NUM_CLASS_PAD), jnp.float32),
        grid_spec=pltpu.PrefetchScalarGridSpec(
            num_scalar_prefetch=0,
            grid=(n_steps,),
            in_specs=in_specs,
            out_specs=pl.BlockSpec((block_b, 1, NUM_CLASS_PAD),
                                   lambda i: (i, 0, 0)),
        ),
        # v7x: one batch element per TensorCore via the parallel B-axis.
        # v5e/v6e: n_steps == 1, all weights + activations resident in VMEM.
        compiler_params=pltpu.CompilerParams(dimension_semantics=("parallel",)),
    )(*operands)
    return out[:, 0, :NUM_CLASS]


def cnn_feature_transformer_3d_forward(x, params):
    # v7x has 2 TensorCores/chip -> keep grid=(B,) so megacore shards the batch;
    # single-TC v5e/v6e merge the whole batch into one grid step (M = B*SEQ for
    # every non-attention matmul, no per-step grid overhead).
    kind = jax.devices()[0].device_kind.lower()
    is_v7 = any(tag in kind for tag in ("v7", "tpu7", "7x"))
    block_b = 1 if is_v7 else x.shape[0]
    return _forward_impl(x, params, block_b=block_b)


# --------------------------- parameter setup ---------------------------------
def make_positional_encoding(d_model, max_len=MAX_LEN):
    position = jnp.arange(max_len, dtype=jnp.float32)[:, None]
    div_term = jnp.exp(
        jnp.arange(0, d_model, 2, dtype=jnp.float32) * (-math.log(10000.0) / d_model))
    pe = jnp.zeros((max_len, d_model), jnp.float32)
    pe = pe.at[:, 0::2].set(jnp.sin(position * div_term))
    pe = pe.at[:, 1::2].set(jnp.cos(position * div_term))
    return pe


def init_params(key):
    keys = iter(jax.random.split(key, 64))
    w = lambda shape, s=0.02: jax.random.normal(next(keys), shape, jnp.float32) * s
    d = INNER_DIM
    L = NUM_LAYERS
    scale = DIM_HEAD ** (-0.5)

    def stack(make):
        return jnp.stack([make() for _ in range(L)])

    # fold 1/sqrt(dim_head) into the q columns of wqkv (init-time, zero runtime cost)
    wqkv = stack(lambda: w((d, 3 * d)))
    wqkv = wqkv.at[:, :, :d].multiply(scale)

    # collapse the bias-free, activation-free FFN: w_ff = w1 @ w2 in f32, then bf16
    w1 = stack(lambda: w((d, 4 * d)))
    w2 = stack(lambda: w((4 * d, d)))
    wff = jnp.einsum("lik,lkj->lij", w1, w2)

    params = {
        "conv_w": w((CIN, COUT)),
        "conv_b": w((1, COUT)),
        "pe": make_positional_encoding(INNER_DIM),
        "wqkv": wqkv.astype(jnp.bfloat16),
        "wo":   stack(lambda: w((d, d))).astype(jnp.bfloat16),
        "bo":   jnp.zeros((L, 1, d), jnp.float32),
        "ln1w": jnp.ones((L, 1, d), jnp.float32),
        "ln1b": jnp.zeros((L, 1, d), jnp.float32),
        "wff":  wff.astype(jnp.bfloat16),
        "ln2w": jnp.ones((L, 1, d), jnp.float32),
        "ln2b": jnp.zeros((L, 1, d), jnp.float32),
    }
    # head; final linear zero-padded to a lane-dense 128-column output
    hw3 = jnp.zeros((256, NUM_CLASS_PAD), jnp.float32)
    hw3 = hw3.at[:, :NUM_CLASS].set(w((256, NUM_CLASS)))
    params.update({
        "hw1": w((d, 512)).astype(jnp.bfloat16),
        "hb1": jnp.zeros((1, 512), jnp.float32),
        "hw2": w((512, 256)).astype(jnp.bfloat16),
        "hb2": jnp.zeros((1, 256), jnp.float32),
        "hw3": hw3.astype(jnp.bfloat16),
        "hb3": jnp.zeros((1, NUM_CLASS_PAD), jnp.float32),
    })
    return params


if __name__ == "__main__":
    key = jax.random.PRNGKey(0)
    pkey, xkey = jax.random.split(key)
    params = init_params(pkey)
    x = jax.random.normal(xkey, (B, CIN, Z, H, W), jnp.float32)

    out = cnn_feature_transformer_3d_forward(x, params)
    out = jax.block_until_ready(out)
    assert out.shape == (B, NUM_CLASS), out.shape
    assert bool(jnp.all(jnp.isfinite(out)))
    print("KERNEL_OK")
</pallas_src>

<mosaic_0001>
module attributes {stable_mosaic.version = 11 : i64} {
  func.func @_fused_forward_kernel(%arg0: i32, %arg1: memref<256x4xf32, #tpu.memory_space<vmem>>, %arg2: memref<256x1xf32, #tpu.memory_space<vmem>>, %arg3: memref<2x256xbf16, #tpu.memory_space<vmem>>, %arg4: memref<4x128xf32, #tpu.memory_space<vmem>>, %arg5: memref<1x128xf32, #tpu.memory_space<vmem>>, %arg6: memref<2x128x384xbf16, #tpu.memory_space<vmem>>, %arg7: memref<2x128x128xbf16, #tpu.memory_space<vmem>>, %arg8: memref<2x1x128xf32, #tpu.memory_space<vmem>>, %arg9: memref<2x1x128xf32, #tpu.memory_space<vmem>>, %arg10: memref<2x1x128xf32, #tpu.memory_space<vmem>>, %arg11: memref<2x128x128xbf16, #tpu.memory_space<vmem>>, %arg12: memref<2x1x128xf32, #tpu.memory_space<vmem>>, %arg13: memref<2x1x128xf32, #tpu.memory_space<vmem>>, %arg14: memref<128x512xbf16, #tpu.memory_space<vmem>>, %arg15: memref<1x512xf32, #tpu.memory_space<vmem>>, %arg16: memref<512x256xbf16, #tpu.memory_space<vmem>>, %arg17: memref<1x256xf32, #tpu.memory_space<vmem>>, %arg18: memref<256x128xbf16, #tpu.memory_space<vmem>>, %arg19: memref<1x128xf32, #tpu.memory_space<vmem>>, %arg20: memref<2x1x128xf32, #tpu.memory_space<vmem>>) attributes {dimension_semantics = [#tpu.dimension_semantics<parallel>], iteration_bounds = array<i64: 1>, scalar_prefetch = 0 : i64, scratch_operands = 0 : i64, tpu.core_type = #tpu.core_type<tc>, window_params = [{transform_indices = @transform_0, window_bounds = array<i64: 256, 4>}, {transform_indices = @transform_1, window_bounds = array<i64: 256, 1>}, {pipeline_mode = #tpu.pipeline_mode<synchronous>, transform_indices = @transform_2, window_bounds = array<i64: 2, 256>}, {pipeline_mode = #tpu.pipeline_mode<synchronous>, transform_indices = @transform_3, window_bounds = array<i64: 4, 128>}, {pipeline_mode = #tpu.pipeline_mode<synchronous>, transform_indices = @transform_4, window_bounds = array<i64: 1, 128>}, {pipeline_mode = #tpu.pipeline_mode<synchronous>, transform_indices = @transform_5, window_bounds = array<i64: 2, 128, 384>}, {pipeline_mode = #tpu.pipeline_mode<synchronous>, transform_indices = @transform_6, window_bounds = array<i64: 2, 128, 128>}, {pipeline_mode = #tpu.pipeline_mode<synchronous>, transform_indices = @transform_7, window_bounds = array<i64: 2, 1, 128>}, {pipeline_mode = #tpu.pipeline_mode<synchronous>, transform_indices = @transform_8, window_bounds = array<i64: 2, 1, 128>}, {pipeline_mode = #tpu.pipeline_mode<synchronous>, transform_indices = @transform_9, window_bounds = array<i64: 2, 1, 128>}, {pipeline_mode = #tpu.pipeline_mode<synchronous>, transform_indices = @transform_10, window_bounds = array<i64: 2, 128, 128>}, {pipeline_mode = #tpu.pipeline_mode<synchronous>, transform_indices = @transform_11, window_bounds = array<i64: 2, 1, 128>}, {pipeline_mode = #tpu.pipeline_mode<synchronous>, transform_indices = @transform_12, window_bounds = array<i64: 2, 1, 128>}, {pipeline_mode = #tpu.pipeline_mode<synchronous>, transform_indices = @transform_13, window_bounds = array<i64: 128, 512>}, {pipeline_mode = #tpu.pipeline_mode<synchronous>, transform_indices = @transform_14, window_bounds = array<i64: 1, 512>}, {pipeline_mode = #tpu.pipeline_mode<synchronous>, transform_indices = @transform_15, window_bounds = array<i64: 512, 256>}, {pipeline_mode = #tpu.pipeline_mode<synchronous>, transform_indices = @transform_16, window_bounds = array<i64: 1, 256>}, {pipeline_mode = #tpu.pipeline_mode<synchronous>, transform_indices = @transform_17, window_bounds = array<i64: 256, 128>}, {pipeline_mode = #tpu.pipeline_mode<synchronous>, transform_indices = @transform_18, window_bounds = array<i64: 1, 128>}, {transform_indices = @transform_19, window_bounds = array<i64: 2, 1, 128>}]} {
    %c0 = arith.constant 0 : index
    %c0_0 = arith.constant 0 : index
    %0 = vector.load %arg1[%c0, %c0_0] : memref<256x4xf32, #tpu.memory_space<vmem>>, vector<256x4xf32>
    %1 = vector.extract_strided_slice %0 {offsets = [0, 0], sizes = [256, 1], strides = [1, 1]} : vector<256x4xf32> to vector<256x1xf32>
    %c0_1 = arith.constant 0 : index
    %c0_2 = arith.constant 0 : index
    %2 = vector.load %arg4[%c0_1, %c0_2] : memref<4x128xf32, #tpu.memory_space<vmem>>, vector<1x128xf32>
    %3 = vector.broadcast %1 : vector<256x1xf32> to vector<256x128xf32>
    %4 = vector.broadcast %2 : vector<1x128xf32> to vector<256x128xf32>
    %5 = arith.mulf %3, %4 : vector<256x128xf32>
    %c0_3 = arith.constant 0 : index
    %c0_4 = arith.constant 0 : index
    %6 = vector.load %arg5[%c0_3, %c0_4] : memref<1x128xf32, #tpu.memory_space<vmem>>, vector<1x128xf32>
    %7 = vector.broadcast %6 : vector<1x128xf32> to vector<256x128xf32>
    %8 = arith.addf %5, %7 : vector<256x128xf32>
    %9 = vector.extract_strided_slice %0 {offsets = [0, 1], sizes = [256, 1], strides = [1, 1]} : vector<256x4xf32> to vector<256x1xf32>
    %c1 = arith.constant 1 : index
    %c0_5 = arith.constant 0 : index
    %10 = vector.load %arg4[%c1, %c0_5] : memref<4x128xf32, #tpu.memory_space<vmem>>, vector<1x128xf32>
    %11 = vector.broadcast %9 : vector<256x1xf32> to vector<256x128xf32>
    %12 = vector.broadcast %10 : vector<1x128xf32> to vector<256x128xf32>
    %13 = arith.mulf %11, %12 : vector<256x128xf32>
    %14 = arith.addf %8, %13 : vector<256x128xf32>
    %15 = vector.extract_strided_slice %0 {offsets = [0, 2], sizes = [256, 1], strides = [1, 1]} : vector<256x4xf32> to vector<256x1xf32>
    %c2 = arith.constant 2 : index
    %c0_6 = arith.constant 0 : index
    %16 = vector.load %arg4[%c2, %c0_6] : memref<4x128xf32, #tpu.memory_space<vmem>>, vector<1x128xf32>
    %17 = vector.broadcast %15 : vector<256x1xf32> to vector<256x128xf32>
    %18 = vector.broadcast %16 : vector<1x128xf32> to vector<256x128xf32>
    %19 = arith.mulf %17, %18 : vector<256x128xf32>
    %20 = arith.addf %14, %19 : vector<256x128xf32>
    %21 = vector.extract_strided_slice %0 {offsets = [0, 3], sizes = [256, 1], strides = [1, 1]} : vector<256x4xf32> to vector<256x1xf32>
    %c3 = arith.constant 3 : index
    %c0_7 = arith.constant 0 : index
    %22 = vector.load %arg4[%c3, %c0_7] : memref<4x128xf32, #tpu.memory_space<vmem>>, vector<1x128xf32>
    %23 = vector.broadcast %21 : vector<256x1xf32> to vector<256x128xf32>
    %24 = vector.broadcast %22 : vector<1x128xf32> to vector<256x128xf32>
    %25 = arith.mulf %23, %24 : vector<256x128xf32>
    %26 = arith.addf %20, %25 : vector<256x128xf32>
    %c0_8 = arith.constant 0 : index
    %c0_9 = arith.constant 0 : index
    %27 = vector.load %arg2[%c0_8, %c0_9] : memref<256x1xf32, #tpu.memory_space<vmem>>, vector<256x1xf32>
    %28 = vector.broadcast %27 : vector<256x1xf32> to vector<256x128xf32>
    %29 = arith.addf %26, %28 : vector<256x128xf32>
    %c0_10 = arith.constant 0 : index
    %c0_11 = arith.constant 0 : index
    %c0_12 = arith.constant 0 : index
    %30 = vector.load %arg7[%c0_10, %c0_11, %c0_12] : memref<2x128x128xbf16, #tpu.memory_space<vmem>>, vector<1x128x128xbf16>
    %31 = vector.shape_cast %30 : vector<1x128x128xbf16> to vector<128x128xbf16>
    %32 = arith.truncf %29 : vector<256x128xf32> to vector<256x128xbf16>
    %c0_13 = arith.constant 0 : index
    %c0_14 = arith.constant 0 : index
    %c0_15 = arith.constant 0 : index
    %33 = vector.load %arg6[%c0_13, %c0_14, %c0_15] : memref<2x128x384xbf16, #tpu.memory_space<vmem>>, vector<1x128x384xbf16>
    %34 = vector.shape_cast %33 : vector<1x128x384xbf16> to vector<128x384xbf16>
    %cst = arith.constant dense<0.000000e+00> : vector<256x384xf32>
    %35 = tpu.matmul %32, %34, %cst {dimension_numbers = #tpu.dot_dimension_numbers<[1], [0], [0], [1], [0, 0, 1, 1], [], []>} : vector<256x128xbf16>, vector<128x384xbf16>, vector<256x384xf32> -> vector<256x384xf32>
    %36 = arith.truncf %35 : vector<256x384xf32> to vector<256x384xbf16>
    %37 = vector.extract_strided_slice %36 {offsets = [0, 0], sizes = [128, 64], strides = [1, 1]} : vector<256x384xbf16> to vector<128x64xbf16>
    %38 = vector.extract_strided_slice %36 {offsets = [0, 128], sizes = [128, 64], strides = [1, 1]} : vector<256x384xbf16> to vector<128x64xbf16>
    %39 = vector.extract_strided_slice %36 {offsets = [0, 256], sizes = [128, 64], strides = [1, 1]} : vector<256x384xbf16> to vector<128x64xbf16>
    %cst_16 = arith.constant dense<0.000000e+00> : vector<128x128xf32>
    %40 = tpu.matmul %37, %38, %cst_16 {dimension_numbers = #tpu.dot_dimension_numbers<[1], [1], [0], [0], [0, 0, 1, 0], [], []>} : vector<128x64xbf16>, vector<128x64xbf16>, vector<128x128xf32> -> vector<128x128xf32>
    %cst_17 = arith.constant dense<0xFF800000> : vector<128xf32>
    %41 = vector.multi_reduction <maximumf>, %40, %cst_17 [1] : vector<128x128xf32> to vector<128xf32>
    %42 = vector.shape_cast %41 : vector<128xf32> to vector<128x1xf32>
    %43 = vector.broadcast %42 : vector<128x1xf32> to vector<128x128xf32>
    %44 = arith.subf %40, %43 : vector<128x128xf32>
    %45 = math.exp %44 : vector<128x128xf32>
    %cst_18 = arith.constant dense<0.000000e+00> : vector<128xf32>
    %46 = vector.multi_reduction <add>, %45, %cst_18 [1] : vector<128x128xf32> to vector<128xf32>
    %47 = vector.shape_cast %46 : vector<128xf32> to vector<128x1xf32>
    %48 = arith.truncf %45 : vector<128x128xf32> to vector<128x128xbf16>
    %cst_19 = arith.constant dense<0.000000e+00> : vector<128x64xf32>
    %49 = tpu.matmul %48, %39, %cst_19 {dimension_numbers = #tpu.dot_dimension_numbers<[1], [0], [0], [1], [0, 0, 1, 1], [], []>} : vector<128x128xbf16>, vector<128x64xbf16>, vector<128x64xf32> -> vector<128x64xf32>
    %50 = tpu.reciprocal %47 {approx = true} : vector<128x1xf32> -> vector<128x1xf32>
    %51 = vector.broadcast %50 : vector<128x1xf32> to vector<128x64xf32>
    %52 = arith.mulf %49, %51 : vector<128x64xf32>
    %53 = arith.truncf %52 : vector<128x64xf32> to vector<128x64xbf16>
    %54 = vector.extract_strided_slice %31 {offsets = [0, 0], sizes = [64, 128], strides = [1, 1]} : vector<128x128xbf16> to vector<64x128xbf16>
    %cst_20 = arith.constant dense<0.000000e+00> : vector<128x128xf32>
    %55 = tpu.matmul %53, %54, %cst_20 {dimension_numbers = #tpu.dot_dimension_numbers<[1], [0], [0], [1], [0, 0, 1, 1], [], []>} : vector<128x64xbf16>, vector<64x128xbf16>, vector<128x128xf32> -> vector<128x128xf32>
    %56 = vector.extract_strided_slice %36 {offsets = [0, 64], sizes = [128, 64], strides = [1, 1]} : vector<256x384xbf16> to vector<128x64xbf16>
    %57 = vector.extract_strided_slice %36 {offsets = [0, 192], sizes = [128, 64], strides = [1, 1]} : vector<256x384xbf16> to vector<128x64xbf16>
    %58 = vector.extract_strided_slice %36 {offsets = [0, 320], sizes = [128, 64], strides = [1, 1]} : vector<256x384xbf16> to vector<128x64xbf16>
    %cst_21 = arith.constant dense<0.000000e+00> : vector<128x128xf32>
    %59 = tpu.matmul %56, %57, %cst_21 {dimension_numbers = #tpu.dot_dimension_numbers<[1], [1], [0], [0], [0, 0, 1, 0], [], []>} : vector<128x64xbf16>, vector<128x64xbf16>, vector<128x128xf32> -> vector<128x128xf32>
    %cst_22 = arith.constant dense<0xFF800000> : vector<128xf32>
    %60 = vector.multi_reduction <maximumf>, %59, %cst_22 [1] : vector<128x128xf32> to vector<128xf32>
    %61 = vector.shape_cast %60 : vector<128xf32> to vector<128x1xf32>
    %62 = vector.broadcast %61 : vector<128x1xf32> to vector<128x128xf32>
    %63 = arith.subf %59, %62 : vector<128x128xf32>
    %64 = math.exp %63 : vector<128x128xf32>
    %cst_23 = arith.constant dense<0.000000e+00> : vector<128xf32>
    %65 = vector.multi_reduction <add>, %64, %cst_23 [1] : vector<128x128xf32> to vector<128xf32>
    %66 = vector.shape_cast %65 : vector<128xf32> to vector<128x1xf32>
    %67 = arith.truncf %64 : vector<128x128xf32> to vector<128x128xbf16>
    %cst_24 = arith.constant dense<0.000000e+00> : vector<128x64xf32>
    %68 = tpu.matmul %67, %58, %cst_24 {dimension_numbers = #tpu.dot_dimension_numbers<[1], [0], [0], [1], [0, 0, 1, 1], [], []>} : vector<128x128xbf16>, vector<128x64xbf16>, vector<128x64xf32> -> vector<128x64xf32>
    %69 = tpu.reciprocal %66 {approx = true} : vector<128x1xf32> -> vector<128x1xf32>
    %70 = vector.broadcast %69 : vector<128x1xf32> to vector<128x64xf32>
    %71 = arith.mulf %68, %70 : vector<128x64xf32>
    %72 = arith.truncf %71 : vector<128x64xf32> to vector<128x64xbf16>
    %73 = vector.extract_strided_slice %31 {offsets = [64, 0], sizes = [64, 128], strides = [1, 1]} : vector<128x128xbf16> to vector<64x128xbf16>
    %cst_25 = arith.constant dense<0.000000e+00> : vector<128x128xf32>
    %74 = tpu.matmul %72, %73, %cst_25 {dimension_numbers = #tpu.dot_dimension_numbers<[1], [0], [0], [1], [0, 0, 1, 1], [], []>} : vector<128x64xbf16>, vector<64x128xbf16>, vector<128x128xf32> -> vector<128x128xf32>
    %75 = arith.addf %55, %74 : vector<128x128xf32>
    %c0_26 = arith.constant 0 : index
    %c0_27 = arith.constant 0 : index
    %c0_28 = arith.constant 0 : index
    %76 = vector.load %arg8[%c0_26, %c0_27, %c0_28] : memref<2x1x128xf32, #tpu.memory_space<vmem>>, vector<1x1x128xf32>
    %77 = vector.shape_cast %76 : vector<1x1x128xf32> to vector<1x128xf32>
    %78 = vector.broadcast %77 : vector<1x128xf32> to vector<128x128xf32>
    %79 = arith.addf %75, %78 : vector<128x128xf32>
    %80 = vector.extract_strided_slice %36 {offsets = [128, 0], sizes = [128, 64], strides = [1, 1]} : vector<256x384xbf16> to vector<128x64xbf16>
    %81 = vector.extract_strided_slice %36 {offsets = [128, 128], sizes = [128, 64], strides = [1, 1]} : vector<256x384xbf16> to vector<128x64xbf16>
    %82 = vector.extract_strided_slice %36 {offsets = [128, 256], sizes = [128, 64], strides = [1, 1]} : vector<256x384xbf16> to vector<128x64xbf16>
    %cst_29 = arith.constant dense<0.000000e+00> : vector<128x128xf32>
    %83 = tpu.matmul %80, %81, %cst_29 {dimension_numbers = #tpu.dot_dimension_numbers<[1], [1], [0], [0], [0, 0, 1, 0], [], []>} : vector<128x64xbf16>, vector<128x64xbf16>, vector<128x128xf32> -> vector<128x128xf32>
    %cst_30 = arith.constant dense<0xFF800000> : vector<128xf32>
    %84 = vector.multi_reduction <maximumf>, %83, %cst_30 [1] : vector<128x128xf32> to vector<128xf32>
    %85 = vector.shape_cast %84 : vector<128xf32> to vector<128x1xf32>
    %86 = vector.broadcast %85 : vector<128x1xf32> to vector<128x128xf32>
    %87 = arith.subf %83, %86 : vector<128x128xf32>
    %88 = math.exp %87 : vector<128x128xf32>
    %cst_31 = arith.constant dense<0.000000e+00> : vector<128xf32>
    %89 = vector.multi_reduction <add>, %88, %cst_31 [1] : vector<128x128xf32> to vector<128xf32>
    %90 = vector.shape_cast %89 : vector<128xf32> to vector<128x1xf32>
    %91 = arith.truncf %88 : vector<128x128xf32> to vector<128x128xbf16>
    %cst_32 = arith.constant dense<0.000000e+00> : vector<128x64xf32>
    %92 = tpu.matmul %91, %82, %cst_32 {dimension_numbers = #tpu.dot_dimension_numbers<[1], [0], [0], [1], [0, 0, 1, 1], [], []>} : vector<128x128xbf16>, vector<128x64xbf16>, vector<128x64xf32> -> vector<128x64xf32>
    %93 = tpu.reciprocal %90 {approx = true} : vector<128x1xf32> -> vector<128x1xf32>
    %94 = vector.broadcast %93 : vector<128x1xf32> to vector<128x64xf32>
    %95 = arith.mulf %92, %94 : vector<128x64xf32>
    %96 = arith.truncf %95 : vector<128x64xf32> to vector<128x64xbf16>
    %97 = vector.extract_strided_slice %31 {offsets = [0, 0], sizes = [64, 128], strides = [1, 1]} : vector<128x128xbf16> to vector<64x128xbf16>
    %cst_33 = arith.constant dense<0.000000e+00> : vector<128x128xf32>
    %98 = tpu.matmul %96, %97, %cst_33 {dimension_numbers = #tpu.dot_dimension_numbers<[1], [0], [0], [1], [0, 0, 1, 1], [], []>} : vector<128x64xbf16>, vector<64x128xbf16>, vector<128x128xf32> -> vector<128x128xf32>
    %99 = vector.extract_strided_slice %36 {offsets = [128, 64], sizes = [128, 64], strides = [1, 1]} : vector<256x384xbf16> to vector<128x64xbf16>
    %100 = vector.extract_strided_slice %36 {offsets = [128, 192], sizes = [128, 64], strides = [1, 1]} : vector<256x384xbf16> to vector<128x64xbf16>
    %101 = vector.extract_strided_slice %36 {offsets = [128, 320], sizes = [128, 64], strides = [1, 1]} : vector<256x384xbf16> to vector<128x64xbf16>
    %cst_34 = arith.constant dense<0.000000e+00> : vector<128x128xf32>
    %102 = tpu.matmul %99, %100, %cst_34 {dimension_numbers = #tpu.dot_dimension_numbers<[1], [1], [0], [0], [0, 0, 1, 0], [], []>} : vector<128x64xbf16>, vector<128x64xbf16>, vector<128x128xf32> -> vector<128x128xf32>
    %cst_35 = arith.constant dense<0xFF800000> : vector<128xf32>
    %103 = vector.multi_reduction <maximumf>, %102, %cst_35 [1] : vector<128x128xf32> to vector<128xf32>
    %104 = vector.shape_cast %103 : vector<128xf32> to vector<128x1xf32>
    %105 = vector.broadcast %104 : vector<128x1xf32> to vector<128x128xf32>
    %106 = arith.subf %102, %105 : vector<128x128xf32>
    %107 = math.exp %106 : vector<128x128xf32>
    %cst_36 = arith.constant dense<0.000000e+00> : vector<128xf32>
    %108 = vector.multi_reduction <add>, %107, %cst_36 [1] : vector<128x128xf32> to vector<128xf32>
    %109 = vector.shape_cast %108 : vector<128xf32> to vector<128x1xf32>
    %110 = arith.truncf %107 : vector<128x128xf32> to vector<128x128xbf16>
    %cst_37 = arith.constant dense<0.000000e+00> : vector<128x64xf32>
    %111 = tpu.matmul %110, %101, %cst_37 {dimension_numbers = #tpu.dot_dimension_numbers<[1], [0], [0], [1], [0, 0, 1, 1], [], []>} : vector<128x128xbf16>, vector<128x64xbf16>, vector<128x64xf32> -> vector<128x64xf32>
    %112 = tpu.reciprocal %109 {approx = true} : vector<128x1xf32> -> vector<128x1xf32>
    %113 = vector.broadcast %112 : vector<128x1xf32> to vector<128x64xf32>
    %114 = arith.mulf %111, %113 : vector<128x64xf32>
    %115 = arith.truncf %114 : vector<128x64xf32> to vector<128x64xbf16>
    %116 = vector.extract_strided_slice %31 {offsets = [64, 0], sizes = [64, 128], strides = [1, 1]} : vector<128x128xbf16> to vector<64x128xbf16>
    %cst_38 = arith.constant dense<0.000000e+00> : vector<128x128xf32>
    %117 = tpu.matmul %115, %116, %cst_38 {dimension_numbers = #tpu.dot_dimension_numbers<[1], [0], [0], [1], [0, 0, 1, 1], [], []>} : vector<128x64xbf16>, vector<64x128xbf16>, vector<128x128xf32> -> vector<128x128xf32>
    %118 = arith.addf %98, %117 : vector<128x128xf32>
    %c0_39 = arith.constant 0 : index
    %c0_40 = arith.constant 0 : index
    %c0_41 = arith.constant 0 : index
    %119 = vector.load %arg8[%c0_39, %c0_40, %c0_41] : memref<2x1x128xf32, #tpu.memory_space<vmem>>, vector<1x1x128xf32>
    %120 = vector.shape_cast %119 : vector<1x1x128xf32> to vector<1x128xf32>
    %121 = vector.broadcast %120 : vector<1x128xf32> to vector<128x128xf32>
    %122 = arith.addf %118, %121 : vector<128x128xf32>
    %123 = tpu.concatenate %79, %122 in 0 : vector<128x128xf32>, vector<128x128xf32> -> vector<256x128xf32>
    %124 = arith.addf %29, %123 : vector<256x128xf32>
    %cst_42 = arith.constant dense<0.000000e+00> : vector<256xf32>
    %125 = vector.multi_reduction <add>, %124, %cst_42 [1] : vector<256x128xf32> to vector<256xf32>
    %126 = vector.shape_cast %125 : vector<256xf32> to vector<256x1xf32>
    %cst_43 = arith.constant 1.280000e+02 : f32
    %127 = vector.broadcast %cst_43 : f32 to vector<256x1xf32>
    %128 = arith.divf %126, %127 : vector<256x1xf32>
    %129 = arith.mulf %124, %124 : vector<256x128xf32>
    %cst_44 = arith.constant dense<0.000000e+00> : vector<256xf32>
    %130 = vector.multi_reduction <add>, %129, %cst_44 [1] : vector<256x128xf32> to vector<256xf32>
    %131 = vector.shape_cast %130 : vector<256xf32> to vector<256x1xf32>
    %cst_45 = arith.constant 1.280000e+02 : f32
    %132 = vector.broadcast %cst_45 : f32 to vector<256x1xf32>
    %133 = arith.divf %131, %132 : vector<256x1xf32>
    %134 = vector.broadcast %128 : vector<256x1xf32> to vector<256x128xf32>
    %135 = arith.subf %124, %134 : vector<256x128xf32>
    %136 = arith.mulf %128, %128 : vector<256x1xf32>
    %137 = arith.subf %133, %136 : vector<256x1xf32>
    %cst_46 = arith.constant 9.99999997E-7 : f32
    %138 = vector.broadcast %cst_46 : f32 to vector<256x1xf32>
    %139 = arith.addf %137, %138 : vector<256x1xf32>
    %140 = math.rsqrt %139 : vector<256x1xf32>
    %141 = vector.broadcast %140 : vector<256x1xf32> to vector<256x128xf32>
    %142 = arith.mulf %135, %141 : vector<256x128xf32>
    %c0_47 = arith.constant 0 : index
    %c0_48 = arith.constant 0 : index
    %c0_49 = arith.constant 0 : index
    %143 = vector.load %arg9[%c0_47, %c0_48, %c0_49] : memref<2x1x128xf32, #tpu.memory_space<vmem>>, vector<1x1x128xf32>
    %144 = vector.shape_cast %143 : vector<1x1x128xf32> to vector<1x128xf32>
    %145 = vector.broadcast %144 : vector<1x128xf32> to vector<256x128xf32>
    %146 = arith.mulf %142, %145 : vector<256x128xf32>
    %c0_50 = arith.constant 0 : index
    %c0_51 = arith.constant 0 : index
    %c0_52 = arith.constant 0 : index
    %147 = vector.load %arg10[%c0_50, %c0_51, %c0_52] : memref<2x1x128xf32, #tpu.memory_space<vmem>>, vector<1x1x128xf32>
    %148 = vector.shape_cast %147 : vector<1x1x128xf32> to vector<1x128xf32>
    %149 = vector.broadcast %148 : vector<1x128xf32> to vector<256x128xf32>
    %150 = arith.addf %146, %149 : vector<256x128xf32>
    %151 = arith.truncf %150 : vector<256x128xf32> to vector<256x128xbf16>
    %c0_53 = arith.constant 0 : index
    %c0_54 = arith.constant 0 : index
    %c0_55 = arith.constant 0 : index
    %152 = vector.load %arg11[%c0_53, %c0_54, %c0_55] : memref<2x128x128xbf16, #tpu.memory_space<vmem>>, vector<1x128x128xbf16>
    %153 = vector.shape_cast %152 : vector<1x128x128xbf16> to vector<128x128xbf16>
    %cst_56 = arith.constant dense<0.000000e+00> : vector<256x128xf32>
    %154 = tpu.matmul %151, %153, %cst_56 {dimension_numbers = #tpu.dot_dimension_numbers<[1], [0], [0], [1], [0, 0, 1, 1], [], []>} : vector<256x128xbf16>, vector<128x128xbf16>, vector<256x128xf32> -> vector<256x128xf32>
    %155 = arith.addf %150, %154 : vector<256x128xf32>
    %cst_57 = arith.constant dense<0.000000e+00> : vector<256xf32>
    %156 = vector.multi_reduction <add>, %155, %cst_57 [1] : vector<256x128xf32> to vector<256xf32>
    %157 = vector.shape_cast %156 : vector<256xf32> to vector<256x1xf32>
    %cst_58 = arith.constant 1.280000e+02 : f32
    %158 = vector.broadcast %cst_58 : f32 to vector<256x1xf32>
    %159 = arith.divf %157, %158 : vector<256x1xf32>
    %160 = arith.mulf %155, %155 : vector<256x128xf32>
    %cst_59 = arith.constant dense<0.000000e+00> : vector<256xf32>
    %161 = vector.multi_reduction <add>, %160, %cst_59 [1] : vector<256x128xf32> to vector<256xf32>
    %162 = vector.shape_cast %161 : vector<256xf32> to vector<256x1xf32>
    %cst_60 = arith.constant 1.280000e+02 : f32
    %163 = vector.broadcast %cst_60 : f32 to vector<256x1xf32>
    %164 = arith.divf %162, %163 : vector<256x1xf32>
    %165 = vector.broadcast %159 : vector<256x1xf32> to vector<256x128xf32>
    %166 = arith.subf %155, %165 : vector<256x128xf32>
    %167 = arith.mulf %159, %159 : vector<256x1xf32>
    %168 = arith.subf %164, %167 : vector<256x1xf32>
    %cst_61 = arith.constant 9.99999997E-7 : f32
    %169 = vector.broadcast %cst_61 : f32 to vector<256x1xf32>
    %170 = arith.addf %168, %169 : vector<256x1xf32>
    %171 = math.rsqrt %170 : vector<256x1xf32>
    %172 = vector.broadcast %171 : vector<256x1xf32> to vector<256x128xf32>
    %173 = arith.mulf %166, %172 : vector<256x128xf32>
    %c0_62 = arith.constant 0 : index
    %c0_63 = arith.constant 0 : index
    %c0_64 = arith.constant 0 : index
    %174 = vector.load %arg12[%c0_62, %c0_63, %c0_64] : memref<2x1x128xf32, #tpu.memory_space<vmem>>, vector<1x1x128xf32>
    %175 = vector.shape_cast %174 : vector<1x1x128xf32> to vector<1x128xf32>
    %176 = vector.broadcast %175 : vector<1x128xf32> to vector<256x128xf32>
    %177 = arith.mulf %173, %176 : vector<256x128xf32>
    %c0_65 = arith.constant 0 : index
    %c0_66 = arith.constant 0 : index
    %c0_67 = arith.constant 0 : index
    %178 = vector.load %arg13[%c0_65, %c0_66, %c0_67] : memref<2x1x128xf32, #tpu.memory_space<vmem>>, vector<1x1x128xf32>
    %179 = vector.shape_cast %178 : vector<1x1x128xf32> to vector<1x128xf32>
    %180 = vector.broadcast %179 : vector<1x128xf32> to vector<256x128xf32>
    %181 = arith.addf %177, %180 : vector<256x128xf32>
    %c1_68 = arith.constant 1 : index
    %c0_69 = arith.constant 0 : index
    %c0_70 = arith.constant 0 : index
    %182 = vector.load %arg7[%c1_68, %c0_69, %c0_70] : memref<2x128x128xbf16, #tpu.memory_space<vmem>>, vector<1x128x128xbf16>
    %183 = vector.shape_cast %182 : vector<1x128x128xbf16> to vector<128x128xbf16>
    %184 = arith.truncf %181 : vector<256x128xf32> to vector<256x128xbf16>
    %c1_71 = arith.constant 1 : index
    %c0_72 = arith.constant 0 : index
    %c0_73 = arith.constant 0 : index
    %185 = vector.load %arg6[%c1_71, %c0_72, %c0_73] : memref<2x128x384xbf16, #tpu.memory_space<vmem>>, vector<1x128x384xbf16>
    %186 = vector.shape_cast %185 : vector<1x128x384xbf16> to vector<128x384xbf16>
    %cst_74 = arith.constant dense<0.000000e+00> : vector<256x384xf32>
    %187 = tpu.matmul %184, %186, %cst_74 {dimension_numbers = #tpu.dot_dimension_numbers<[1], [0], [0], [1], [0, 0, 1, 1], [], []>} : vector<256x128xbf16>, vector<128x384xbf16>, vector<256x384xf32> -> vector<256x384xf32>
    %188 = arith.truncf %187 : vector<256x384xf32> to vector<256x384xbf16>
    %189 = vector.extract_strided_slice %188 {offsets = [0, 0], sizes = [128, 64], strides = [1, 1]} : vector<256x384xbf16> to vector<128x64xbf16>
    %190 = vector.extract_strided_slice %188 {offsets = [0, 128], sizes = [128, 64], strides = [1, 1]} : vector<256x384xbf16> to vector<128x64xbf16>
    %191 = vector.extract_strided_slice %188 {offsets = [0, 256], sizes = [128, 64], strides = [1, 1]} : vector<256x384xbf16> to vector<128x64xbf16>
    %cst_75 = arith.constant dense<0.000000e+00> : vector<128x128xf32>
    %192 = tpu.matmul %189, %190, %cst_75 {dimension_numbers = #tpu.dot_dimension_numbers<[1], [1], [0], [0], [0, 0, 1, 0], [], []>} : vector<128x64xbf16>, vector<128x64xbf16>, vector<128x128xf32> -> vector<128x128xf32>
    %cst_76 = arith.constant dense<0xFF800000> : vector<128xf32>
    %193 = vector.multi_reduction <maximumf>, %192, %cst_76 [1] : vector<128x128xf32> to vector<128xf32>
    %194 = vector.shape_cast %193 : vector<128xf32> to vector<128x1xf32>
    %195 = vector.broadcast %194 : vector<128x1xf32> to vector<128x128xf32>
    %196 = arith.subf %192, %195 : vector<128x128xf32>
    %197 = math.exp %196 : vector<128x128xf32>
    %cst_77 = arith.constant dense<0.000000e+00> : vector<128xf32>
    %198 = vector.multi_reduction <add>, %197, %cst_77 [1] : vector<128x128xf32> to vector<128xf32>
    %199 = vector.shape_cast %198 : vector<128xf32> to vector<128x1xf32>
    %200 = arith.truncf %197 : vector<128x128xf32> to vector<128x128xbf16>
    %cst_78 = arith.constant dense<0.000000e+00> : vector<128x64xf32>
    %201 = tpu.matmul %200, %191, %cst_78 {dimension_numbers = #tpu.dot_dimension_numbers<[1], [0], [0], [1], [0, 0, 1, 1], [], []>} : vector<128x128xbf16>, vector<128x64xbf16>, vector<128x64xf32> -> vector<128x64xf32>
    %202 = tpu.reciprocal %199 {approx = true} : vector<128x1xf32> -> vector<128x1xf32>
    %203 = vector.broadcast %202 : vector<128x1xf32> to vector<128x64xf32>
    %204 = arith.mulf %201, %203 : vector<128x64xf32>
    %205 = arith.truncf %204 : vector<128x64xf32> to vector<128x64xbf16>
    %206 = vector.extract_strided_slice %183 {offsets = [0, 0], sizes = [64, 128], strides = [1, 1]} : vector<128x128xbf16> to vector<64x128xbf16>
    %cst_79 = arith.constant dense<0.000000e+00> : vector<128x128xf32>
    %207 = tpu.matmul %205, %206, %cst_79 {dimension_numbers = #tpu.dot_dimension_numbers<[1], [0], [0], [1], [0, 0, 1, 1], [], []>} : vector<128x64xbf16>, vector<64x128xbf16>, vector<128x128xf32> -> vector<128x128xf32>
    %208 = vector.extract_strided_slice %188 {offsets = [0, 64], sizes = [128, 64], strides = [1, 1]} : vector<256x384xbf16> to vector<128x64xbf16>
    %209 = vector.extract_strided_slice %188 {offsets = [0, 192], sizes = [128, 64], strides = [1, 1]} : vector<256x384xbf16> to vector<128x64xbf16>
    %210 = vector.extract_strided_slice %188 {offsets = [0, 320], sizes = [128, 64], strides = [1, 1]} : vector<256x384xbf16> to vector<128x64xbf16>
    %cst_80 = arith.constant dense<0.000000e+00> : vector<128x128xf32>
    %211 = tpu.matmul %208, %209, %cst_80 {dimension_numbers = #tpu.dot_dimension_numbers<[1], [1], [0], [0], [0, 0, 1, 0], [], []>} : vector<128x64xbf16>, vector<128x64xbf16>, vector<128x128xf32> -> vector<128x128xf32>
    %cst_81 = arith.constant dense<0xFF800000> : vector<128xf32>
    %212 = vector.multi_reduction <maximumf>, %211, %cst_81 [1] : vector<128x128xf32> to vector<128xf32>
    %213 = vector.shape_cast %212 : vector<128xf32> to vector<128x1xf32>
    %214 = vector.broadcast %213 : vector<128x1xf32> to vector<128x128xf32>
    %215 = arith.subf %211, %214 : vector<128x128xf32>
    %216 = math.exp %215 : vector<128x128xf32>
    %cst_82 = arith.constant dense<0.000000e+00> : vector<128xf32>
    %217 = vector.multi_reduction <add>, %216, %cst_82 [1] : vector<128x128xf32> to vector<128xf32>
    %218 = vector.shape_cast %217 : vector<128xf32> to vector<128x1xf32>
    %219 = arith.truncf %216 : vector<128x128xf32> to vector<128x128xbf16>
    %cst_83 = arith.constant dense<0.000000e+00> : vector<128x64xf32>
    %220 = tpu.matmul %219, %210, %cst_83 {dimension_numbers = #tpu.dot_dimension_numbers<[1], [0], [0], [1], [0, 0, 1, 1], [], []>} : vector<128x128xbf16>, vector<128x64xbf16>, vector<128x64xf32> -> vector<128x64xf32>
    %221 = tpu.reciprocal %218 {approx = true} : vector<128x1xf32> -> vector<128x1xf32>
    %222 = vector.broadcast %221 : vector<128x1xf32> to vector<128x64xf32>
    %223 = arith.mulf %220, %222 : vector<128x64xf32>
    %224 = arith.truncf %223 : vector<128x64xf32> to vector<128x64xbf16>
    %225 = vector.extract_strided_slice %183 {offsets = [64, 0], sizes = [64, 128], strides = [1, 1]} : vector<128x128xbf16> to vector<64x128xbf16>
    %cst_84 = arith.constant dense<0.000000e+00> : vector<128x128xf32>
    %226 = tpu.matmul %224, %225, %cst_84 {dimension_numbers = #tpu.dot_dimension_numbers<[1], [0], [0], [1], [0, 0, 1, 1], [], []>} : vector<128x64xbf16>, vector<64x128xbf16>, vector<128x128xf32> -> vector<128x128xf32>
    %227 = arith.addf %207, %226 : vector<128x128xf32>
    %c1_85 = arith.constant 1 : index
    %c0_86 = arith.constant 0 : index
    %c0_87 = arith.constant 0 : index
    %228 = vector.load %arg8[%c1_85, %c0_86, %c0_87] : memref<2x1x128xf32, #tpu.memory_space<vmem>>, vector<1x1x128xf32>
    %229 = vector.shape_cast %228 : vector<1x1x128xf32> to vector<1x128xf32>
    %230 = vector.broadcast %229 : vector<1x128xf32> to vector<128x128xf32>
    %231 = arith.addf %227, %230 : vector<128x128xf32>
    %232 = vector.extract_strided_slice %188 {offsets = [128, 0], sizes = [128, 64], strides = [1, 1]} : vector<256x384xbf16> to vector<128x64xbf16>
    %233 = vector.extract_strided_slice %188 {offsets = [128, 128], sizes = [128, 64], strides = [1, 1]} : vector<256x384xbf16> to vector<128x64xbf16>
    %234 = vector.extract_strided_slice %188 {offsets = [128, 256], sizes = [128, 64], strides = [1, 1]} : vector<256x384xbf16> to vector<128x64xbf16>
    %cst_88 = arith.constant dense<0.000000e+00> : vector<128x128xf32>
    %235 = tpu.matmul %232, %233, %cst_88 {dimension_numbers = #tpu.dot_dimension_numbers<[1], [1], [0], [0], [0, 0, 1, 0], [], []>} : vector<128x64xbf16>, vector<128x64xbf16>, vector<128x128xf32> -> vector<128x128xf32>
    %cst_89 = arith.constant dense<0xFF800000> : vector<128xf32>
    %236 = vector.multi_reduction <maximumf>, %235, %cst_89 [1] : vector<128x128xf32> to vector<128xf32>
    %237 = vector.shape_cast %236 : vector<128xf32> to vector<128x1xf32>
    %238 = vector.broadcast %237 : vector<128x1xf32> to vector<128x128xf32>
    %239 = arith.subf %235, %238 : vector<128x128xf32>
    %240 = math.exp %239 : vector<128x128xf32>
    %cst_90 = arith.constant dense<0.000000e+00> : vector<128xf32>
    %241 = vector.multi_reduction <add>, %240, %cst_90 [1] : vector<128x128xf32> to vector<128xf32>
    %242 = vector.shape_cast %241 : vector<128xf32> to vector<128x1xf32>
    %243 = arith.truncf %240 : vector<128x128xf32> to vector<128x128xbf16>
    %cst_91 = arith.constant dense<0.000000e+00> : vector<128x64xf32>
    %244 = tpu.matmul %243, %234, %cst_91 {dimension_numbers = #tpu.dot_dimension_numbers<[1], [0], [0], [1], [0, 0, 1, 1], [], []>} : vector<128x128xbf16>, vector<128x64xbf16>, vector<128x64xf32> -> vector<128x64xf32>
    %245 = tpu.reciprocal %242 {approx = true} : vector<128x1xf32> -> vector<128x1xf32>
    %246 = vector.broadcast %245 : vector<128x1xf32> to vector<128x64xf32>
    %247 = arith.mulf %244, %246 : vector<128x64xf32>
    %248 = arith.truncf %247 : vector<128x64xf32> to vector<128x64xbf16>
    %249 = vector.extract_strided_slice %183 {offsets = [0, 0], sizes = [64, 128], strides = [1, 1]} : vector<128x128xbf16> to vector<64x128xbf16>
    %cst_92 = arith.constant dense<0.000000e+00> : vector<128x128xf32>
    %250 = tpu.matmul %248, %249, %cst_92 {dimension_numbers = #tpu.dot_dimension_numbers<[1], [0], [0], [1], [0, 0, 1, 1], [], []>} : vector<128x64xbf16>, vector<64x128xbf16>, vector<128x128xf32> -> vector<128x128xf32>
    %251 = vector.extract_strided_slice %188 {offsets = [128, 64], sizes = [128, 64], strides = [1, 1]} : vector<256x384xbf16> to vector<128x64xbf16>
    %252 = vector.extract_strided_slice %188 {offsets = [128, 192], sizes = [128, 64], strides = [1, 1]} : vector<256x384xbf16> to vector<128x64xbf16>
    %253 = vector.extract_strided_slice %188 {offsets = [128, 320], sizes = [128, 64], strides = [1, 1]} : vector<256x384xbf16> to vector<128x64xbf16>
    %cst_93 = arith.constant dense<0.000000e+00> : vector<128x128xf32>
    %254 = tpu.matmul %251, %252, %cst_93 {dimension_numbers = #tpu.dot_dimension_numbers<[1], [1], [0], [0], [0, 0, 1, 0], [], []>} : vector<128x64xbf16>, vector<128x64xbf16>, vector<128x128xf32> -> vector<128x128xf32>
    %cst_94 = arith.constant dense<0xFF800000> : vector<128xf32>
    %255 = vector.multi_reduction <maximumf>, %254, %cst_94 [1] : vector<128x128xf32> to vector<128xf32>
    %256 = vector.shape_cast %255 : vector<128xf32> to vector<128x1xf32>
    %257 = vector.broadcast %256 : vector<128x1xf32> to vector<128x128xf32>
    %258 = arith.subf %254, %257 : vector<128x128xf32>
    %259 = math.exp %258 : vector<128x128xf32>
    %cst_95 = arith.constant dense<0.000000e+00> : vector<128xf32>
    %260 = vector.multi_reduction <add>, %259, %cst_95 [1] : vector<128x128xf32> to vector<128xf32>
    %261 = vector.shape_cast %260 : vector<128xf32> to vector<128x1xf32>
    %262 = arith.truncf %259 : vector<128x128xf32> to vector<128x128xbf16>
    %cst_96 = arith.constant dense<0.000000e+00> : vector<128x64xf32>
    %263 = tpu.matmul %262, %253, %cst_96 {dimension_numbers = #tpu.dot_dimension_numbers<[1], [0], [0], [1], [0, 0, 1, 1], [], []>} : vector<128x128xbf16>, vector<128x64xbf16>, vector<128x64xf32> -> vector<128x64xf32>
    %264 = tpu.reciprocal %261 {approx = true} : vector<128x1xf32> -> vector<128x1xf32>
    %265 = vector.broadcast %264 : vector<128x1xf32> to vector<128x64xf32>
    %266 = arith.mulf %263, %265 : vector<128x64xf32>
    %267 = arith.truncf %266 : vector<128x64xf32> to vector<128x64xbf16>
    %268 = vector.extract_strided_slice %183 {offsets = [64, 0], sizes = [64, 128], strides = [1, 1]} : vector<128x128xbf16> to vector<64x128xbf16>
    %cst_97 = arith.constant dense<0.000000e+00> : vector<128x128xf32>
    %269 = tpu.matmul %267, %268, %cst_97 {dimension_numbers = #tpu.dot_dimension_numbers<[1], [0], [0], [1], [0, 0, 1, 1], [], []>} : vector<128x64xbf16>, vector<64x128xbf16>, vector<128x128xf32> -> vector<128x128xf32>
    %270 = arith.addf %250, %269 : vector<128x128xf32>
    %c1_98 = arith.constant 1 : index
    %c0_99 = arith.constant 0 : index
    %c0_100 = arith.constant 0 : index
    %271 = vector.load %arg8[%c1_98, %c0_99, %c0_100] : memref<2x1x128xf32, #tpu.memory_space<vmem>>, vector<1x1x128xf32>
    %272 = vector.shape_cast %271 : vector<1x1x128xf32> to vector<1x128xf32>
    %273 = vector.broadcast %272 : vector<1x128xf32> to vector<128x128xf32>
    %274 = arith.addf %270, %273 : vector<128x128xf32>
    %275 = tpu.concatenate %231, %274 in 0 : vector<128x128xf32>, vector<128x128xf32> -> vector<256x128xf32>
    %276 = arith.addf %181, %275 : vector<256x128xf32>
    %cst_101 = arith.constant dense<0.000000e+00> : vector<256xf32>
    %277 = vector.multi_reduction <add>, %276, %cst_101 [1] : vector<256x128xf32> to vector<256xf32>
    %278 = vector.shape_cast %277 : vector<256xf32> to vector<256x1xf32>
    %cst_102 = arith.constant 1.280000e+02 : f32
    %279 = vector.broadcast %cst_102 : f32 to vector<256x1xf32>
    %280 = arith.divf %278, %279 : vector<256x1xf32>
    %281 = arith.mulf %276, %276 : vector<256x128xf32>
    %cst_103 = arith.constant dense<0.000000e+00> : vector<256xf32>
    %282 = vector.multi_reduction <add>, %281, %cst_103 [1] : vector<256x128xf32> to vector<256xf32>
    %283 = vector.shape_cast %282 : vector<256xf32> to vector<256x1xf32>
    %cst_104 = arith.constant 1.280000e+02 : f32
    %284 = vector.broadcast %cst_104 : f32 to vector<256x1xf32>
    %285 = arith.divf %283, %284 : vector<256x1xf32>
    %286 = vector.broadcast %280 : vector<256x1xf32> to vector<256x128xf32>
    %287 = arith.subf %276, %286 : vector<256x128xf32>
    %288 = arith.mulf %280, %280 : vector<256x1xf32>
    %289 = arith.subf %285, %288 : vector<256x1xf32>
    %cst_105 = arith.constant 9.99999997E-7 : f32
    %290 = vector.broadcast %cst_105 : f32 to vector<256x1xf32>
    %291 = arith.addf %289, %290 : vector<256x1xf32>
    %292 = math.rsqrt %291 : vector<256x1xf32>
    %293 = vector.broadcast %292 : vector<256x1xf32> to vector<256x128xf32>
    %294 = arith.mulf %287, %293 : vector<256x128xf32>
    %c1_106 = arith.constant 1 : index
    %c0_107 = arith.constant 0 : index
    %c0_108 = arith.constant 0 : index
    %295 = vector.load %arg9[%c1_106, %c0_107, %c0_108] : memref<2x1x128xf32, #tpu.memory_space<vmem>>, vector<1x1x128xf32>
    %296 = vector.shape_cast %295 : vector<1x1x128xf32> to vector<1x128xf32>
    %297 = vector.broadcast %296 : vector<1x128xf32> to vector<256x128xf32>
    %298 = arith.mulf %294, %297 : vector<256x128xf32>
    %c1_109 = arith.constant 1 : index
    %c0_110 = arith.constant 0 : index
    %c0_111 = arith.constant 0 : index
    %299 = vector.load %arg10[%c1_109, %c0_110, %c0_111] : memref<2x1x128xf32, #tpu.memory_space<vmem>>, vector<1x1x128xf32>
    %300 = vector.shape_cast %299 : vector<1x1x128xf32> to vector<1x128xf32>
    %301 = vector.broadcast %300 : vector<1x128xf32> to vector<256x128xf32>
    %302 = arith.addf %298, %301 : vector<256x128xf32>
    %303 = arith.truncf %302 : vector<256x128xf32> to vector<256x128xbf16>
    %c1_112 = arith.constant 1 : index
    %c0_113 = arith.constant 0 : index
    %c0_114 = arith.constant 0 : index
    %304 = vector.load %arg11[%c1_112, %c0_113, %c0_114] : memref<2x128x128xbf16, #tpu.memory_space<vmem>>, vector<1x128x128xbf16>
    %305 = vector.shape_cast %304 : vector<1x128x128xbf16> to vector<128x128xbf16>
    %cst_115 = arith.constant dense<0.000000e+00> : vector<256x128xf32>
    %306 = tpu.matmul %303, %305, %cst_115 {dimension_numbers = #tpu.dot_dimension_numbers<[1], [0], [0], [1], [0, 0, 1, 1], [], []>} : vector<256x128xbf16>, vector<128x128xbf16>, vector<256x128xf32> -> vector<256x128xf32>
    %307 = arith.addf %302, %306 : vector<256x128xf32>
    %cst_116 = arith.constant dense<0.000000e+00> : vector<256xf32>
    %308 = vector.multi_reduction <add>, %307, %cst_116 [1] : vector<256x128xf32> to vector<256xf32>
    %309 = vector.shape_cast %308 : vector<256xf32> to vector<256x1xf32>
    %cst_117 = arith.constant 1.280000e+02 : f32
    %310 = vector.broadcast %cst_117 : f32 to vector<256x1xf32>
    %311 = arith.divf %309, %310 : vector<256x1xf32>
    %312 = arith.mulf %307, %307 : vector<256x128xf32>
    %cst_118 = arith.constant dense<0.000000e+00> : vector<256xf32>
    %313 = vector.multi_reduction <add>, %312, %cst_118 [1] : vector<256x128xf32> to vector<256xf32>
    %314 = vector.shape_cast %313 : vector<256xf32> to vector<256x1xf32>
    %cst_119 = arith.constant 1.280000e+02 : f32
    %315 = vector.broadcast %cst_119 : f32 to vector<256x1xf32>
    %316 = arith.divf %314, %315 : vector<256x1xf32>
    %317 = vector.broadcast %311 : vector<256x1xf32> to vector<256x128xf32>
    %318 = arith.subf %307, %317 : vector<256x128xf32>
    %319 = arith.mulf %311, %311 : vector<256x1xf32>
    %320 = arith.subf %316, %319 : vector<256x1xf32>
    %cst_120 = arith.constant 9.99999997E-7 : f32
    %321 = vector.broadcast %cst_120 : f32 to vector<256x1xf32>
    %322 = arith.addf %320, %321 : vector<256x1xf32>
    %323 = math.rsqrt %322 : vector<256x1xf32>
    %324 = vector.broadcast %323 : vector<256x1xf32> to vector<256x128xf32>
    %325 = arith.mulf %318, %324 : vector<256x128xf32>
    %c1_121 = arith.constant 1 : index
    %c0_122 = arith.constant 0 : index
    %c0_123 = arith.constant 0 : index
    %326 = vector.load %arg12[%c1_121, %c0_122, %c0_123] : memref<2x1x128xf32, #tpu.memory_space<vmem>>, vector<1x1x128xf32>
    %327 = vector.shape_cast %326 : vector<1x1x128xf32> to vector<1x128xf32>
    %328 = vector.broadcast %327 : vector<1x128xf32> to vector<256x128xf32>
    %329 = arith.mulf %325, %328 : vector<256x128xf32>
    %c1_124 = arith.constant 1 : index
    %c0_125 = arith.constant 0 : index
    %c0_126 = arith.constant 0 : index
    %330 = vector.load %arg13[%c1_124, %c0_125, %c0_126] : memref<2x1x128xf32, #tpu.memory_space<vmem>>, vector<1x1x128xf32>
    %331 = vector.shape_cast %330 : vector<1x1x128xf32> to vector<1x128xf32>
    %332 = vector.broadcast %331 : vector<1x128xf32> to vector<256x128xf32>
    %333 = arith.addf %329, %332 : vector<256x128xf32>
    %c0_127 = arith.constant 0 : index
    %c0_128 = arith.constant 0 : index
    %334 = vector.load %arg3[%c0_127, %c0_128] : memref<2x256xbf16, #tpu.memory_space<vmem>>, vector<2x256xbf16>
    %335 = arith.truncf %333 : vector<256x128xf32> to vector<256x128xbf16>
    %cst_129 = arith.constant dense<0.000000e+00> : vector<2x128xf32>
    %336 = tpu.matmul %334, %335, %cst_129 {dimension_numbers = #tpu.dot_dimension_numbers<[1], [0], [0], [1], [0, 0, 1, 1], [], []>} : vector<2x256xbf16>, vector<256x128xbf16>, vector<2x128xf32> -> vector<2x128xf32>
    %337 = arith.truncf %336 : vector<2x128xf32> to vector<2x128xbf16>
    %c0_130 = arith.constant 0 : index
    %c0_131 = arith.constant 0 : index
    %338 = vector.load %arg14[%c0_130, %c0_131] : memref<128x512xbf16, #tpu.memory_space<vmem>>, vector<128x512xbf16>
    %cst_132 = arith.constant dense<0.000000e+00> : vector<2x512xf32>
    %339 = tpu.matmul %337, %338, %cst_132 {dimension_numbers = #tpu.dot_dimension_numbers<[1], [0], [0], [1], [0, 0, 1, 1], [], []>} : vector<2x128xbf16>, vector<128x512xbf16>, vector<2x512xf32> -> vector<2x512xf32>
    %c0_133 = arith.constant 0 : index
    %c0_134 = arith.constant 0 : index
    %340 = vector.load %arg15[%c0_133, %c0_134] : memref<1x512xf32, #tpu.memory_space<vmem>>, vector<1x512xf32>
    %341 = vector.broadcast %340 : vector<1x512xf32> to vector<2x512xf32>
    %342 = arith.addf %339, %341 : vector<2x512xf32>
    %cst_135 = arith.constant 0.000000e+00 : f32
    %cst_136 = arith.constant 6.000000e+00 : f32
    %343 = vector.broadcast %cst_135 : f32 to vector<2x512xf32>
    %344 = arith.maximumf %343, %342 : vector<2x512xf32>
    %345 = vector.broadcast %cst_136 : f32 to vector<2x512xf32>
    %346 = arith.minimumf %345, %344 : vector<2x512xf32>
    %347 = arith.truncf %346 : vector<2x512xf32> to vector<2x512xbf16>
    %c0_137 = arith.constant 0 : index
    %c0_138 = arith.constant 0 : index
    %348 = vector.load %arg16[%c0_137, %c0_138] : memref<512x256xbf16, #tpu.memory_space<vmem>>, vector<512x256xbf16>
    %cst_139 = arith.constant dense<0.000000e+00> : vector<2x256xf32>
    %349 = tpu.matmul %347, %348, %cst_139 {dimension_numbers = #tpu.dot_dimension_numbers<[1], [0], [0], [1], [0, 0, 1, 1], [], []>} : vector<2x512xbf16>, vector<512x256xbf16>, vector<2x256xf32> -> vector<2x256xf32>
    %c0_140 = arith.constant 0 : index
    %c0_141 = arith.constant 0 : index
    %350 = vector.load %arg17[%c0_140, %c0_141] : memref<1x256xf32, #tpu.memory_space<vmem>>, vector<1x256xf32>
    %351 = vector.broadcast %350 : vector<1x256xf32> to vector<2x256xf32>
    %352 = arith.addf %349, %351 : vector<2x256xf32>
    %cst_142 = arith.constant 0.000000e+00 : f32
    %cst_143 = arith.constant 6.000000e+00 : f32
    %353 = vector.broadcast %cst_142 : f32 to vector<2x256xf32>
    %354 = arith.maximumf %353, %352 : vector<2x256xf32>
    %355 = vector.broadcast %cst_143 : f32 to vector<2x256xf32>
    %356 = arith.minimumf %355, %354 : vector<2x256xf32>
    %357 = arith.truncf %356 : vector<2x256xf32> to vector<2x256xbf16>
    %c0_144 = arith.constant 0 : index
    %c0_145 = arith.constant 0 : index
    %358 = vector.load %arg18[%c0_144, %c0_145] : memref<256x128xbf16, #tpu.memory_space<vmem>>, vector<256x128xbf16>
    %cst_146 = arith.constant dense<0.000000e+00> : vector<2x128xf32>
    %359 = tpu.matmul %357, %358, %cst_146 {dimension_numbers = #tpu.dot_dimension_numbers<[1], [0], [0], [1], [0, 0, 1, 1], [], []>} : vector<2x256xbf16>, vector<256x128xbf16>, vector<2x128xf32> -> vector<2x128xf32>
    %c0_147 = arith.constant 0 : index
    %c0_148 = arith.constant 0 : index
    %360 = vector.load %arg19[%c0_147, %c0_148] : memref<1x128xf32, #tpu.memory_space<vmem>>, vector<1x128xf32>
    %361 = vector.broadcast %360 : vector<1x128xf32> to vector<2x128xf32>
    %362 = arith.addf %359, %361 : vector<2x128xf32>
    %363 = arith.negf %362 : vector<2x128xf32>
    %364 = math.exp %363 : vector<2x128xf32>
    %cst_149 = arith.constant 1.000000e+00 : f32
    %365 = vector.broadcast %cst_149 : f32 to vector<2x128xf32>
    %366 = arith.addf %365, %364 : vector<2x128xf32>
    %367 = arith.divf %365, %366 : vector<2x128xf32>
    %c0_150 = arith.constant 0 : index
    %c0_151 = arith.constant 0 : index
    %c0_152 = arith.constant 0 : index
    %368 = vector.load %arg20[%c0_150, %c0_151, %c0_152] : memref<2x1x128xf32, #tpu.memory_space<vmem>>, vector<2x1x128xf32>
    %369 = vector.shape_cast %368 : vector<2x1x128xf32> to vector<2x128xf32>
    %370 = vector.shape_cast %367 : vector<2x128xf32> to vector<2x1x128xf32>
    tpu.vector_store %arg20[%c0_150, %c0_151, %c0_152], %370 {strides = array<i32>} : memref<2x1x128xf32, #tpu.memory_space<vmem>>, vector<2x1x128xf32>,
    return
  }
  func.func @transform_0(%arg0: i32) -> (i32, i32) {
    %c0_i32 = arith.constant 0 : i32
    %c0_i32_0 = arith.constant 0 : i32
    return %arg0, %c0_i32 : i32, i32
  }
  func.func @transform_1(%arg0: i32) -> (i32, i32) {
    %c0_i32 = arith.constant 0 : i32
    %c0_i32_0 = arith.constant 0 : i32
    return %arg0, %c0_i32 : i32, i32
  }
  func.func @transform_2(%arg0: i32) -> (i32, i32) {
    %c0_i32 = arith.constant 0 : i32
    %c0_i32_0 = arith.constant 0 : i32
    %c0_i32_1 = arith.constant 0 : i32
    return %c0_i32, %c0_i32_0 : i32, i32
  }
  func.func @transform_3(%arg0: i32) -> (i32, i32) {
    %c0_i32 = arith.constant 0 : i32
    %c0_i32_0 = arith.constant 0 : i32
    %c0_i32_1 = arith.constant 0 : i32
    return %c0_i32, %c0_i32_0 : i32, i32
  }
  func.func @transform_4(%arg0: i32) -> (i32, i32) {
    %c0_i32 = arith.constant 0 : i32
    %c0_i32_0 = arith.constant 0 : i32
    %c0_i32_1 = arith.constant 0 : i32
    return %c0_i32, %c0_i32_0 : i32, i32
  }
  func.func @transform_5(%arg0: i32) -> (i32, i32, i32) {
    %c0_i32 = arith.constant 0 : i32
    %c0_i32_0 = arith.constant 0 : i32
    %c0_i32_1 = arith.constant 0 : i32
    %c0_i32_2 = arith.constant 0 : i32
    return %c0_i32, %c0_i32_0, %c0_i32_1 : i32, i32, i32
  }
  func.func @transform_6(%arg0: i32) -> (i32, i32, i32) {
    %c0_i32 = arith.constant 0 : i32
    %c0_i32_0 = arith.constant 0 : i32
    %c0_i32_1 = arith.constant 0 : i32
    %c0_i32_2 = arith.constant 0 : i32
    return %c0_i32, %c0_i32_0, %c0_i32_1 : i32, i32, i32
  }
  func.func @transform_7(%arg0: i32) -> (i32, i32, i32) {
    %c0_i32 = arith.constant 0 : i32
    %c0_i32_0 = arith.constant 0 : i32
    %c0_i32_1 = arith.constant 0 : i32
    %c0_i32_2 = arith.constant 0 : i32
    return %c0_i32, %c0_i32_0, %c0_i32_1 : i32, i32, i32
  }
  func.func @transform_8(%arg0: i32) -> (i32, i32, i32) {
    %c0_i32 = arith.constant 0 : i32
    %c0_i32_0 = arith.constant 0 : i32
    %c0_i32_1 = arith.constant 0 : i32
    %c0_i32_2 = arith.constant 0 : i32
    return %c0_i32, %c0_i32_0, %c0_i32_1 : i32, i32, i32
  }
  func.func @transform_9(%arg0: i32) -> (i32, i32, i32) {
    %c0_i32 = arith.constant 0 : i32
    %c0_i32_0 = arith.constant 0 : i32
    %c0_i32_1 = arith.constant 0 : i32
    %c0_i32_2 = arith.constant 0 : i32
    return %c0_i32, %c0_i32_0, %c0_i32_1 : i32, i32, i32
  }
  func.func @transform_10(%arg0: i32) -> (i32, i32, i32) {
    %c0_i32 = arith.constant 0 : i32
    %c0_i32_0 = arith.constant 0 : i32
    %c0_i32_1 = arith.constant 0 : i32
    %c0_i32_2 = arith.constant 0 : i32
    return %c0_i32, %c0_i32_0, %c0_i32_1 : i32, i32, i32
  }
  func.func @transform_11(%arg0: i32) -> (i32, i32, i32) {
    %c0_i32 = arith.constant 0 : i32
    %c0_i32_0 = arith.constant 0 : i32
    %c0_i32_1 = arith.constant 0 : i32
    %c0_i32_2 = arith.constant 0 : i32
    return %c0_i32, %c0_i32_0, %c0_i32_1 : i32, i32, i32
  }
  func.func @transform_12(%arg0: i32) -> (i32, i32, i32) {
    %c0_i32 = arith.constant 0 : i32
    %c0_i32_0 = arith.constant 0 : i32
    %c0_i32_1 = arith.constant 0 : i32
    %c0_i32_2 = arith.constant 0 : i32
    return %c0_i32, %c0_i32_0, %c0_i32_1 : i32, i32, i32
  }
  func.func @transform_13(%arg0: i32) -> (i32, i32) {
    %c0_i32 = arith.constant 0 : i32
    %c0_i32_0 = arith.constant 0 : i32
    %c0_i32_1 = arith.constant 0 : i32
    return %c0_i32, %c0_i32_0 : i32, i32
  }
  func.func @transform_14(%arg0: i32) -> (i32, i32) {
    %c0_i32 = arith.constant 0 : i32
    %c0_i32_0 = arith.constant 0 : i32
    %c0_i32_1 = arith.constant 0 : i32
    return %c0_i32, %c0_i32_0 : i32, i32
  }
  func.func @transform_15(%arg0: i32) -> (i32, i32) {
    %c0_i32 = arith.constant 0 : i32
    %c0_i32_0 = arith.constant 0 : i32
    %c0_i32_1 = arith.constant 0 : i32
    return %c0_i32, %c0_i32_0 : i32, i32
  }
  func.func @transform_16(%arg0: i32) -> (i32, i32) {
    %c0_i32 = arith.constant 0 : i32
    %c0_i32_0 = arith.constant 0 : i32
    %c0_i32_1 = arith.constant 0 : i32
    return %c0_i32, %c0_i32_0 : i32, i32
  }
  func.func @transform_17(%arg0: i32) -> (i32, i32) {
    %c0_i32 = arith.constant 0 : i32
    %c0_i32_0 = arith.constant 0 : i32
    %c0_i32_1 = arith.constant 0 : i32
    return %c0_i32, %c0_i32_0 : i32, i32
  }
  func.func @transform_18(%arg0: i32) -> (i32, i32) {
    %c0_i32 = arith.constant 0 : i32
    %c0_i32_0 = arith.constant 0 : i32
    %c0_i32_1 = arith.constant 0 : i32
    return %c0_i32, %c0_i32_0 : i32, i32
  }
  func.func @transform_19(%arg0: i32) -> (i32, i32, i32) {
    %c0_i32 = arith.constant 0 : i32
    %c0_i32_0 = arith.constant 0 : i32
    %c0_i32_1 = arith.constant 0 : i32
    return %arg0, %c0_i32, %c0_i32_0 : i32, i32, i32
  }
}

</mosaic_0001>

<llo_original>
// kernel: _forward_impl.1
$region0: #{_forward_impl.1}
  #allocation0 [shape = 'u32[]', space=smem, size = 0x4, offset = 0x4, fixed_abs, tag = 'smem constant byte address 0x4 - core index']
  #allocation1 [shape = 'u32[144,128]{1,0:T(1,128)}', space=vmem, size = 0x12000, scoped, tag = 'internal scratch']
  %s0 = inlined_call_operand.vmem [shape: f32[256,4], index: 0, kind: input, shape index: {}]
  %s1 = inlined_call_operand.vmem [shape: f32[256,1], index: 1, kind: input, shape index: {}]
  %s2 = inlined_call_operand.vmem [shape: bf16[2,256], index: 2, kind: input, shape index: {}]
  %s3 = inlined_call_operand.hbm [shape: f32[4,128], index: 3, kind: input, shape index: {}]
  %s4 = inlined_call_operand.hbm [shape: f32[1,128], index: 4, kind: input, shape index: {}]
  %s5 = inlined_call_operand.hbm [shape: bf16[2,128,384], index: 5, kind: input, shape index: {}]
  %s6 = inlined_call_operand.hbm [shape: bf16[2,128,128], index: 6, kind: input, shape index: {}]
  %s7 = inlined_call_operand.hbm [shape: f32[2,1,128], index: 7, kind: input, shape index: {}]
  %s8 = inlined_call_operand.hbm [shape: f32[2,1,128], index: 8, kind: input, shape index: {}]
  %s9 = inlined_call_operand.hbm [shape: f32[2,1,128], index: 9, kind: input, shape index: {}]
  %s10 = inlined_call_operand.hbm [shape: bf16[2,128,128], index: 10, kind: input, shape index: {}]
  %s11 = inlined_call_operand.hbm [shape: f32[2,1,128], index: 11, kind: input, shape index: {}]
  %s12 = inlined_call_operand.hbm [shape: f32[2,1,128], index: 12, kind: input, shape index: {}]
  %s13 = inlined_call_operand.hbm [shape: bf16[128,512], index: 13, kind: input, shape index: {}]
  %s14 = inlined_call_operand.hbm [shape: f32[1,512], index: 14, kind: input, shape index: {}]
  %s15 = inlined_call_operand.hbm [shape: bf16[512,256], index: 15, kind: input, shape index: {}]
  %s16 = inlined_call_operand.hbm [shape: f32[1,256], index: 16, kind: input, shape index: {}]
  %s17 = inlined_call_operand.hbm [shape: bf16[256,128], index: 17, kind: input, shape index: {}]
  %s18 = inlined_call_operand.hbm [shape: f32[1,128], index: 18, kind: input, shape index: {}]
  %s19 = inlined_call_operand.hbm [shape: f32[2,1,128], index: 19, kind: output, shape index: {}]
  %s20 = sld [smem:[#allocation0]]
  $region150: #{_forward_impl.1} parent=0
    _
  %s22 = ssub.s32 1, %s20
  %s23 = scalar_select 0, %s22, %s20
  $region1: #{_forward_impl.1} parent=0
    #allocation2 [shape = 'u8[2048]{0}', space=vmem, size = 0x800, scoped, tag = 'input window, operand 3, single buffered']
    #allocation3 [shape = 's32[1]{0}', space=sflag, size = 0x4, scoped, tag = 'scoped memory for _forward_impl.1']
    #allocation4 [shape = 's32[1]{0}', space=sflag, size = 0x4, scoped, tag = 'scoped memory for _forward_impl.1']
    #allocation5 [shape = 'u8[512]{0}', space=vmem, size = 0x400, scoped, tag = 'input window, operand 4, single buffered']
    #allocation6 [shape = 's32[1]{0}', space=sflag, size = 0x4, scoped, tag = 'scoped memory for _forward_impl.1']
    #allocation7 [shape = 'u8[196608]{0}', space=vmem, size = 0x30000, scoped, tag = 'input window, operand 5, single buffered']
    #allocation8 [shape = 'u8[65536]{0}', space=vmem, size = 0x10000, scoped, tag = 'input window, operand 6, single buffered']
    #allocation9 [shape = 's32[1]{0}', space=sflag, size = 0x4, scoped, tag = 'scoped memory for _forward_impl.1']
    #allocation10 [shape = 'u8[1024]{0}', space=vmem, size = 0x400, scoped, tag = 'input window, operand 7, single buffered']
    #allocation11 [shape = 'u8[1024]{0}', space=vmem, size = 0x400, scoped, tag = 'input window, operand 8, single buffered']
    #allocation12 [shape = 's32[1]{0}', space=sflag, size = 0x4, scoped, tag = 'scoped memory for _forward_impl.1']
    #allocation13 [shape = 'u8[1024]{0}', space=vmem, size = 0x400, scoped, tag = 'input window, operand 9, single buffered']
    #allocation14 [shape = 'u8[65536]{0}', space=vmem, size = 0x10000, scoped, tag = 'input window, operand 10, single buffered']
    #allocation15 [shape = 's32[1]{0}', space=sflag, size = 0x4, scoped, tag = 'scoped memory for _forward_impl.1']
    #allocation16 [shape = 'u8[1024]{0}', space=vmem, size = 0x400, scoped, tag = 'input window, operand 11, single buffered']
    #allocation17 [shape = 'u8[1024]{0}', space=vmem, size = 0x400, scoped, tag = 'input window, operand 12, single buffered']
    #allocation18 [shape = 's32[1]{0}', space=sflag, size = 0x4, scoped, tag = 'scoped memory for _forward_impl.1']
    #allocation19 [shape = 'u8[131072]{0}', space=vmem, size = 0x20000, scoped, tag = 'input window, operand 13, single buffered']
    #allocation20 [shape = 'u8[2048]{0}', space=vmem, size = 0x800, scoped, tag = 'input window, operand 14, single buffered']
    #allocation21 [shape = 's32[1]{0}', space=sflag, size = 0x4, scoped, tag = 'scoped memory for _forward_impl.1']
    #allocation22 [shape = 'u8[262144]{0}', space=vmem, size = 0x40000, scoped, tag = 'input window, operand 15, single buffered']
    #allocation23 [shape = 'u8[1024]{0}', space=vmem, size = 0x400, scoped, tag = 'input window, operand 16, single buffered']
    #allocation24 [shape = 's32[1]{0}', space=sflag, size = 0x4, scoped, tag = 'scoped memory for _forward_impl.1']
    #allocation25 [shape = 'u8[65536]{0}', space=vmem, size = 0x10000, scoped, tag = 'input window, operand 17, single buffered']
    #allocation26 [shape = 'u8[512]{0}', space=vmem, size = 0x400, scoped, tag = 'input window, operand 18, single buffered']
    #allocation27 [shape = 's32[1]{0}', space=sflag, size = 0x4, scoped, tag = 'scoped memory for _forward_impl.1']
    #allocation28 [shape = 'u8[1024]{0}', space=vmem, size = 0x400, scoped, tag = 'output window, operand 0, single buffered']
    %24 = vsyncpa [#allocation3], 0
    %25 = vsyncpa [#allocation6], 0
    %26 = vsyncpa [#allocation9], 0
    %27 = vsyncpa [#allocation12], 0
    %28 = vsyncpa [#allocation15], 0
    %29 = vsyncpa [#allocation18], 0
    %30 = vsyncpa [#allocation21], 0
    %31 = vsyncpa [#allocation24], 0
    %32 = vsyncpa [#allocation27], 0
    %33 = vsyncpa [#allocation4], 0
    // Predicated region
    $region2: #{_forward_impl.1} parent=1 // pred_check
      _
    $region3: #{_forward_impl.1} parent=1 // pred_check_branch
      %35 = sbr.rel (0) target = $region5
    $region4: #{_forward_impl.1} parent=1 // pred_region
      _
    $region5: #{_forward_impl.1} parent=1 // pred_fallthru
      _
    // Predicated region
    $region6: #{_forward_impl.1} parent=1 // pred_check
      _
    $region7: #{_forward_impl.1} parent=1 // pred_check_branch
      %37 = sbr.rel (0) target = $region9
    $region8: #{_forward_impl.1} parent=1 // pred_region
      _
    $region9: #{_forward_impl.1} parent=1 // pred_fallthru
      _
    // Predicated region
    $region10: #{_forward_impl.1} parent=1 // pred_check
      _
    $region11: #{_forward_impl.1} parent=1 // pred_check_branch
      %39 = sbr.rel (0) target = $region13
    $region12: #{_forward_impl.1} parent=1 // pred_region
      _
    $region13: #{_forward_impl.1} parent=1 // pred_fallthru
      _
    // Predicated region
    $region14: #{_forward_impl.1} parent=1 // pred_check
      _
    $region15: #{_forward_impl.1} parent=1 // pred_check_branch
      %41 = sbr.rel (0) target = $region17
    $region16: #{_forward_impl.1} parent=1 // pred_region
      %s43 = ssub.s32 64, 64
      %44 = vsyncadd [#allocation3], %s43
      %s46 = sshll.u32 [#allocation2], 4
      %s47 = int_to_ptr.vmem [resolvable:$true] %s46
      %49 = dma.hbm_to_vmem [thread:$0]  %s3, 64, %s47, [#allocation3]
    $region17: #{_forward_impl.1} parent=1 // pred_fallthru
      _
    // Predicated region
    $region18: #{_forward_impl.1} parent=1 // pred_check
      _
    $region19: #{_forward_impl.1} parent=1 // pred_check_branch
      %51 = sbr.rel (0) target = $region21
    $region20: #{_forward_impl.1} parent=1 // pred_region
      %s53 = ssub.s32 16, 16
      %54 = vsyncadd [#allocation6], %s53
      %s56 = sshll.u32 [#allocation5], 4
      %s57 = int_to_ptr.vmem [resolvable:$true] %s56
      %59 = dma.hbm_to_vmem [thread:$0]  %s4, 16, %s57, [#allocation6]
    $region21: #{_forward_impl.1} parent=1 // pred_fallthru
      _
    // Predicated region
    $region22: #{_forward_impl.1} parent=1 // pred_check
      _
    $region23: #{_forward_impl.1} parent=1 // pred_check_branch
      %61 = sbr.rel (0) target = $region25
    $region24: #{_forward_impl.1} parent=1 // pred_region
      %s63 = ssub.s32 6144, 6144
      %64 = vsyncadd [#allocation6], %s63
      %s65 = sshll.u32 [#allocation7], 4
      %s66 = int_to_ptr.vmem [resolvable:$true] %s65
      %71 = dma.hbm_to_vmem [thread:$0]  %s5, 6144, %s66, [#allocation6], 192, 192, 12
    $region25: #{_forward_impl.1} parent=1 // pred_fallthru
      _
    // Predicated region
    $region26: #{_forward_impl.1} parent=1 // pred_check
      _
    $region27: #{_forward_impl.1} parent=1 // pred_check_branch
      %73 = sbr.rel (0) target = $region29
    $region28: #{_forward_impl.1} parent=1 // pred_region
      %s75 = ssub.s32 2048, 2048
      %76 = vsyncadd [#allocation9], %s75
      %s77 = sshll.u32 [#allocation8], 4
      %s78 = int_to_ptr.vmem [resolvable:$true] %s77
      %83 = dma.hbm_to_vmem [thread:$0]  %s6, 2048, %s78, [#allocation9], 64, 64, 4
    $region29: #{_forward_impl.1} parent=1 // pred_fallthru
      _
    // Predicated region
    $region30: #{_forward_impl.1} parent=1 // pred_check
      _
    $region31: #{_forward_impl.1} parent=1 // pred_check_branch
      %85 = sbr.rel (0) target = $region33
    $region32: #{_forward_impl.1} parent=1 // pred_region
      %s87 = ssub.s32 32, 32
      %88 = vsyncadd [#allocation9], %s87
      %s89 = sshll.u32 [#allocation10], 4
      %s90 = int_to_ptr.vmem [resolvable:$true] %s89
      %95 = dma.hbm_to_vmem [thread:$0]  %s7, 32, %s90, [#allocation9], 16, 16, 1
    $region33: #{_forward_impl.1} parent=1 // pred_fallthru
      _
    // Predicated region
    $region34: #{_forward_impl.1} parent=1 // pred_check
      _
    $region35: #{_forward_impl.1} parent=1 // pred_check_branch
      %97 = sbr.rel (0) target = $region37
    $region36: #{_forward_impl.1} parent=1 // pred_region
      %s99 = ssub.s32 32, 32
      %100 = vsyncadd [#allocation12], %s99
      %s101 = sshll.u32 [#allocation11], 4
      %s102 = int_to_ptr.vmem [resolvable:$true] %s101
      %107 = dma.hbm_to_vmem [thread:$0]  %s8, 32, %s102, [#allocation12], 16, 16, 1
    $region37: #{_forward_impl.1} parent=1 // pred_fallthru
      _
    // Predicated region
    $region38: #{_forward_impl.1} parent=1 // pred_check
      _
    $region39: #{_forward_impl.1} parent=1 // pred_check_branch
      %109 = sbr.rel (0) target = $region41
    $region40: #{_forward_impl.1} parent=1 // pred_region
      %s111 = ssub.s32 32, 32
      %112 = vsyncadd [#allocation12], %s111
      %s113 = sshll.u32 [#allocation13], 4
      %s114 = int_to_ptr.vmem [resolvable:$true] %s113
      %119 = dma.hbm_to_vmem [thread:$0]  %s9, 32, %s114, [#allocation12], 16, 16, 1
    $region41: #{_forward_impl.1} parent=1 // pred_fallthru
      _
    // Predicated region
    $region42: #{_forward_impl.1} parent=1 // pred_check
      _
    $region43: #{_forward_impl.1} parent=1 // pred_check_branch
      %121 = sbr.rel (0) target = $region45
    $region44: #{_forward_impl.1} parent=1 // pred_region
      %s123 = ssub.s32 2048, 2048
      %124 = vsyncadd [#allocation15], %s123
      %s125 = sshll.u32 [#allocation14], 4
      %s126 = int_to_ptr.vmem [resolvable:$true] %s125
      %131 = dma.hbm_to_vmem [thread:$0]  %s10, 2048, %s126, [#allocation15], 64, 64, 4
    $region45: #{_forward_impl.1} parent=1 // pred_fallthru
      _
    // Predicated region
    $region46: #{_forward_impl.1} parent=1 // pred_check
      _
    $region47: #{_forward_impl.1} parent=1 // pred_check_branch
      %133 = sbr.rel (0) target = $region49
    $region48: #{_forward_impl.1} parent=1 // pred_region
      %s135 = ssub.s32 32, 32
      %136 = vsyncadd [#allocation15], %s135
      %s137 = sshll.u32 [#allocation16], 4
      %s138 = int_to_ptr.vmem [resolvable:$true] %s137
      %143 = dma.hbm_to_vmem [thread:$0]  %s11, 32, %s138, [#allocation15], 16, 16, 1
    $region49: #{_forward_impl.1} parent=1 // pred_fallthru
      _
    // Predicated region
    $region50: #{_forward_impl.1} parent=1 // pred_check
      _
    $region51: #{_forward_impl.1} parent=1 // pred_check_branch
      %145 = sbr.rel (0) target = $region53
    $region52: #{_forward_impl.1} parent=1 // pred_region
      %s147 = ssub.s32 32, 32
      %148 = vsyncadd [#allocation18], %s147
      %s149 = sshll.u32 [#allocation17], 4
      %s150 = int_to_ptr.vmem [resolvable:$true] %s149
      %155 = dma.hbm_to_vmem [thread:$0]  %s12, 32, %s150, [#allocation18], 16, 16, 1
    $region53: #{_forward_impl.1} parent=1 // pred_fallthru
      _
    // Predicated region
    $region54: #{_forward_impl.1} parent=1 // pred_check
      _
    $region55: #{_forward_impl.1} parent=1 // pred_check_branch
      %157 = sbr.rel (0) target = $region57
    $region56: #{_forward_impl.1} parent=1 // pred_region
      %s159 = ssub.s32 4096, 4096
      %160 = vsyncadd [#allocation18], %s159
      %s161 = sshll.u32 [#allocation19], 4
      %s162 = int_to_ptr.vmem [resolvable:$true] %s161
      %167 = dma.hbm_to_vmem [thread:$0]  %s13, 4096, %s162, [#allocation18], 256, 256, 16
    $region57: #{_forward_impl.1} parent=1 // pred_fallthru
      _
    // Predicated region
    $region58: #{_forward_impl.1} parent=1 // pred_check
      _
    $region59: #{_forward_impl.1} parent=1 // pred_check_branch
      %169 = sbr.rel (0) target = $region61
    $region60: #{_forward_impl.1} parent=1 // pred_region
      %s171 = ssub.s32 64, 64
      %172 = vsyncadd [#allocation21], %s171
      %s174 = sshll.u32 [#allocation20], 4
      %s175 = int_to_ptr.vmem [resolvable:$true] %s174
      %177 = dma.hbm_to_vmem [thread:$0]  %s14, 64, %s175, [#allocation21]
    $region61: #{_forward_impl.1} parent=1 // pred_fallthru
      _
    // Predicated region
    $region62: #{_forward_impl.1} parent=1 // pred_check
      _
    $region63: #{_forward_impl.1} parent=1 // pred_check_branch
      %179 = sbr.rel (0) target = $region65
    $region64: #{_forward_impl.1} parent=1 // pred_region
      %s181 = ssub.s32 8192, 8192
      %182 = vsyncadd [#allocation21], %s181
      %s183 = sshll.u32 [#allocation22], 4
      %s184 = int_to_ptr.vmem [resolvable:$true] %s183
      %189 = dma.hbm_to_vmem [thread:$0]  %s15, 8192, %s184, [#allocation21], 128, 128, 8
    $region65: #{_forward_impl.1} parent=1 // pred_fallthru
      _
    // Predicated region
    $region66: #{_forward_impl.1} parent=1 // pred_check
      _
    $region67: #{_forward_impl.1} parent=1 // pred_check_branch
      %191 = sbr.rel (0) target = $region69
    $region68: #{_forward_impl.1} parent=1 // pred_region
      %s193 = ssub.s32 32, 32
      %194 = vsyncadd [#allocation24], %s193
      %s196 = sshll.u32 [#allocation23], 4
      %s197 = int_to_ptr.vmem [resolvable:$true] %s196
      %199 = dma.hbm_to_vmem [thread:$0]  %s16, 32, %s197, [#allocation24]
    $region69: #{_forward_impl.1} parent=1 // pred_fallthru
      _
    // Predicated region
    $region70: #{_forward_impl.1} parent=1 // pred_check
      _
    $region71: #{_forward_impl.1} parent=1 // pred_check_branch
      %201 = sbr.rel (0) target = $region73
    $region72: #{_forward_impl.1} parent=1 // pred_region
      %s203 = ssub.s32 2048, 2048
      %204 = vsyncadd [#allocation24], %s203
      %s205 = sshll.u32 [#allocation25], 4
      %s206 = int_to_ptr.vmem [resolvable:$true] %s205
      %211 = dma.hbm_to_vmem [thread:$0]  %s17, 2048, %s206, [#allocation24], 64, 64, 4
    $region73: #{_forward_impl.1} parent=1 // pred_fallthru
      _
    // Predicated region
    $region74: #{_forward_impl.1} parent=1 // pred_check
      _
    $region75: #{_forward_impl.1} parent=1 // pred_check_branch
      %213 = sbr.rel (0) target = $region77
    $region76: #{_forward_impl.1} parent=1 // pred_region
      %s215 = ssub.s32 16, 16
      %216 = vsyncadd [#allocation27], %s215
      %s218 = sshll.u32 [#allocation26], 4
      %s219 = int_to_ptr.vmem [resolvable:$true] %s218
      %221 = dma.hbm_to_vmem [thread:$0]  %s18, 16, %s219, [#allocation27]
    $region77: #{_forward_impl.1} parent=1 // pred_fallthru
      _
    // Predicated region
    $region78: #{_forward_impl.1} parent=1 // pred_check
      _
    $region79: #{_forward_impl.1} parent=1 // pred_check_branch
      %223 = sbr.rel (0) target = $region81
    $region80: #{_forward_impl.1} parent=1 // pred_region
      %224 = dma.done [#allocation3], 64
    $region81: #{_forward_impl.1} parent=1 // pred_fallthru
      _
    // Predicated region
    $region82: #{_forward_impl.1} parent=1 // pred_check
      _
    $region83: #{_forward_impl.1} parent=1 // pred_check_branch
      %226 = sbr.rel (0) target = $region85
    $region84: #{_forward_impl.1} parent=1 // pred_region
      %227 = dma.done [#allocation6], 16
    $region85: #{_forward_impl.1} parent=1 // pred_fallthru
      _
    // Predicated region
    $region86: #{_forward_impl.1} parent=1 // pred_check
      _
    $region87: #{_forward_impl.1} parent=1 // pred_check_branch
      %229 = sbr.rel (0) target = $region89
    $region88: #{_forward_impl.1} parent=1 // pred_region
      %230 = dma.done [#allocation6], 6144
    $region89: #{_forward_impl.1} parent=1 // pred_fallthru
      _
    // Predicated region
    $region90: #{_forward_impl.1} parent=1 // pred_check
      _
    $region91: #{_forward_impl.1} parent=1 // pred_check_branch
      %232 = sbr.rel (0) target = $region93
    $region92: #{_forward_impl.1} parent=1 // pred_region
      %233 = dma.done [#allocation9], 2048
    $region93: #{_forward_impl.1} parent=1 // pred_fallthru
      _
    // Predicated region
    $region94: #{_forward_impl.1} parent=1 // pred_check
      _
    $region95: #{_forward_impl.1} parent=1 // pred_check_branch
      %235 = sbr.rel (0) target = $region97
    $region96: #{_forward_impl.1} parent=1 // pred_region
      %236 = dma.done [#allocation9], 32
    $region97: #{_forward_impl.1} parent=1 // pred_fallthru
      _
    // Predicated region
    $region98: #{_forward_impl.1} parent=1 // pred_check
      _
    $region99: #{_forward_impl.1} parent=1 // pred_check_branch
      %238 = sbr.rel (0) target = $region101
    $region100: #{_forward_impl.1} parent=1 // pred_region
      %239 = dma.done [#allocation12], 32
    $region101: #{_forward_impl.1} parent=1 // pred_fallthru
      _
    // Predicated region
    $region102: #{_forward_impl.1} parent=1 // pred_check
      _
    $region103: #{_forward_impl.1} parent=1 // pred_check_branch
      %241 = sbr.rel (0) target = $region105
    $region104: #{_forward_impl.1} parent=1 // pred_region
      %242 = dma.done [#allocation12], 32
    $region105: #{_forward_impl.1} parent=1 // pred_fallthru
      _
    // Predicated region
    $region106: #{_forward_impl.1} parent=1 // pred_check
      _
    $region107: #{_forward_impl.1} parent=1 // pred_check_branch
      %244 = sbr.rel (0) target = $region109
    $region108: #{_forward_impl.1} parent=1 // pred_region
      %245 = dma.done [#allocation15], 2048
    $region109: #{_forward_impl.1} parent=1 // pred_fallthru
      _
    // Predicated region
    $region110: #{_forward_impl.1} parent=1 // pred_check
      _
    $region111: #{_forward_impl.1} parent=1 // pred_check_branch
      %247 = sbr.rel (0) target = $region113
    $region112: #{_forward_impl.1} parent=1 // pred_region
      %248 = dma.done [#allocation15], 32
    $region113: #{_forward_impl.1} parent=1 // pred_fallthru
      _
    // Predicated region
    $region114: #{_forward_impl.1} parent=1 // pred_check
      _
    $region115: #{_forward_impl.1} parent=1 // pred_check_branch
      %250 = sbr.rel (0) target = $region117
    $region116: #{_forward_impl.1} parent=1 // pred_region
      %251 = dma.done [#allocation18], 32
    $region117: #{_forward_impl.1} parent=1 // pred_fallthru
      _
    // Predicated region
    $region118: #{_forward_impl.1} parent=1 // pred_check
      _
    $region119: #{_forward_impl.1} parent=1 // pred_check_branch
      %253 = sbr.rel (0) target = $region121
    $region120: #{_forward_impl.1} parent=1 // pred_region
      %254 = dma.done [#allocation18], 4096
    $region121: #{_forward_impl.1} parent=1 // pred_fallthru
      _
    // Predicated region
    $region122: #{_forward_impl.1} parent=1 // pred_check
      _
    $region123: #{_forward_impl.1} parent=1 // pred_check_branch
      %256 = sbr.rel (0) target = $region125
    $region124: #{_forward_impl.1} parent=1 // pred_region
      %257 = dma.done [#allocation21], 64
    $region125: #{_forward_impl.1} parent=1 // pred_fallthru
      _
    // Predicated region
    $region126: #{_forward_impl.1} parent=1 // pred_check
      _
    $region127: #{_forward_impl.1} parent=1 // pred_check_branch
      %259 = sbr.rel (0) target = $region129
    $region128: #{_forward_impl.1} parent=1 // pred_region
      %260 = dma.done [#allocation21], 8192
    $region129: #{_forward_impl.1} parent=1 // pred_fallthru
      _
    // Predicated region
    $region130: #{_forward_impl.1} parent=1 // pred_check
      _
    $region131: #{_forward_impl.1} parent=1 // pred_check_branch
      %262 = sbr.rel (0) target = $region133
    $region132: #{_forward_impl.1} parent=1 // pred_region
      %263 = dma.done [#allocation24], 32
    $region133: #{_forward_impl.1} parent=1 // pred_fallthru
      _
    // Predicated region
    $region134: #{_forward_impl.1} parent=1 // pred_check
      _
    $region135: #{_forward_impl.1} parent=1 // pred_check_branch
      %265 = sbr.rel (0) target = $region137
    $region136: #{_forward_impl.1} parent=1 // pred_region
      %266 = dma.done [#allocation24], 2048
    $region137: #{_forward_impl.1} parent=1 // pred_fallthru
      _
    // Predicated region
    $region138: #{_forward_impl.1} parent=1 // pred_check
      _
    $region139: #{_forward_impl.1} parent=1 // pred_check_branch
      %268 = sbr.rel (0) target = $region141
    $region140: #{_forward_impl.1} parent=1 // pred_region
      %269 = dma.done [#allocation27], 16
    $region141: #{_forward_impl.1} parent=1 // pred_fallthru
      _
    %v271 = vld [vmem:[%s0] sm:$0xff]
    %v272 = vld [vmem:[%s0 + $0x8] sm:$0xff]
    %v273 = vld [vmem:[%s0 + $0x10] sm:$0xff]
    %v274 = vld [vmem:[%s0 + $0x18] sm:$0xff]
    %v275 = vld [vmem:[%s0 + $0x20] sm:$0xff]
    %v276 = vld [vmem:[%s0 + $0x28] sm:$0xff]
    %v277 = vld [vmem:[%s0 + $0x30] sm:$0xff]
    %v278 = vld [vmem:[%s0 + $0x38] sm:$0xff]
    %v279 = vld [vmem:[%s0 + $0x40] sm:$0xff]
    %v280 = vld [vmem:[%s0 + $0x48] sm:$0xff]
    %v281 = vld [vmem:[%s0 + $0x50] sm:$0xff]
    %v282 = vld [vmem:[%s0 + $0x58] sm:$0xff]
    %v283 = vld [vmem:[%s0 + $0x60] sm:$0xff]
    %v284 = vld [vmem:[%s0 + $0x68] sm:$0xff]
    %v285 = vld [vmem:[%s0 + $0x70] sm:$0xff]
    %v286 = vld [vmem:[%s0 + $0x78] sm:$0xff]
    %v287 = vld [vmem:[%s0 + $0x80] sm:$0xff]
    %v288 = vld [vmem:[%s0 + $0x88] sm:$0xff]
    %v289 = vld [vmem:[%s0 + $0x90] sm:$0xff]
    %v290 = vld [vmem:[%s0 + $0x98] sm:$0xff]
    %v291 = vld [vmem:[%s0 + $0xa0] sm:$0xff]
    %v292 = vld [vmem:[%s0 + $0xa8] sm:$0xff]
    %v293 = vld [vmem:[%s0 + $0xb0] sm:$0xff]
    %v294 = vld [vmem:[%s0 + $0xb8] sm:$0xff]
    %v295 = vld [vmem:[%s0 + $0xc0] sm:$0xff]
    %v296 = vld [vmem:[%s0 + $0xc8] sm:$0xff]
    %v297 = vld [vmem:[%s0 + $0xd0] sm:$0xff]
    %v298 = vld [vmem:[%s0 + $0xd8] sm:$0xff]
    %v299 = vld [vmem:[%s0 + $0xe0] sm:$0xff]
    %v300 = vld [vmem:[%s0 + $0xe8] sm:$0xff]
    %v301 = vld [vmem:[%s0 + $0xf0] sm:$0xff]
    %v302 = vld [vmem:[%s0 + $0xf8] sm:$0xff]
    %v303 = vld [vmem:[#allocation2] sm:$0x1]
    %305 = vset.pattern.permute.xlu0 0
    %306 = vperm.xlu0 %305, %v271
    %v307 = vpop.permute.xlu0 %306
    %310 = vset.pattern.permute.xlu0 0
    %311 = vperm.xlu0 %310, %v272
    %v312 = vpop.permute.xlu0 %311
    %315 = vset.pattern.permute.xlu0 0
    %316 = vperm.xlu0 %315, %v273
    %v317 = vpop.permute.xlu0 %316
    %320 = vset.pattern.permute.xlu0 0
    %321 = vperm.xlu0 %320, %v274
    %v322 = vpop.permute.xlu0 %321
    %325 = vset.pattern.permute.xlu0 0
    %326 = vperm.xlu0 %325, %v275
    %v327 = vpop.permute.xlu0 %326
    %330 = vset.pattern.permute.xlu0 0
    %331 = vperm.xlu0 %330, %v276
    %v332 = vpop.permute.xlu0 %331
    %335 = vset.pattern.permute.xlu0 0
    %336 = vperm.xlu0 %335, %v277
    %v337 = vpop.permute.xlu0 %336
    %340 = vset.pattern.permute.xlu0 0
    %341 = vperm.xlu0 %340, %v278
    %v342 = vpop.permute.xlu0 %341
    %345 = vset.pattern.permute.xlu0 0
    %346 = vperm.xlu0 %345, %v279
    %v347 = vpop.permute.xlu0 %346
    %350 = vset.pattern.permute.xlu0 0
    %351 = vperm.xlu0 %350, %v280
    %v352 = vpop.permute.xlu0 %351
    %355 = vset.pattern.permute.xlu0 0
    %356 = vperm.xlu0 %355, %v281
    %v357 = vpop.permute.xlu0 %356
    %360 = vset.pattern.permute.xlu0 0
    %361 = vperm.xlu0 %360, %v282
    %v362 = vpop.permute.xlu0 %361
    %365 = vset.pattern.permute.xlu0 0
    %366 = vperm.xlu0 %365, %v283
    %v367 = vpop.permute.xlu0 %366
    %370 = vset.pattern.permute.xlu0 0
    %371 = vperm.xlu0 %370, %v284
    %v372 = vpop.permute.xlu0 %371
    %375 = vset.pattern.permute.xlu0 0
    %376 = vperm.xlu0 %375, %v285
    %v377 = vpop.permute.xlu0 %376
    %380 = vset.pattern.permute.xlu0 0
    %381 = vperm.xlu0 %380, %v286
    %v382 = vpop.permute.xlu0 %381
    %385 = vset.pattern.permute.xlu0 0
    %386 = vperm.xlu0 %385, %v287
    %v387 = vpop.permute.xlu0 %386
    %390 = vset.pattern.permute.xlu0 0
    %391 = vperm.xlu0 %390, %v288
    %v392 = vpop.permute.xlu0 %391
    %395 = vset.pattern.permute.xlu0 0
    %396 = vperm.xlu0 %395, %v289
    %v397 = vpop.permute.xlu0 %396
    %400 = vset.pattern.permute.xlu0 0
    %401 = vperm.xlu0 %400, %v290
    %v402 = vpop.permute.xlu0 %401
    %405 = vset.pattern.permute.xlu0 0
    %406 = vperm.xlu0 %405, %v291
    %v407 = vpop.permute.xlu0 %406
    %410 = vset.pattern.permute.xlu0 0
    %411 = vperm.xlu0 %410, %v292
    %v412 = vpop.permute.xlu0 %411
    %415 = vset.pattern.permute.xlu0 0
    %416 = vperm.xlu0 %415, %v293
    %v417 = vpop.permute.xlu0 %416
    %420 = vset.pattern.permute.xlu0 0
    %421 = vperm.xlu0 %420, %v294
    %v422 = vpop.permute.xlu0 %421
    %425 = vset.pattern.permute.xlu0 0
    %426 = vperm.xlu0 %425, %v295
    %v427 = vpop.permute.xlu0 %426
    %430 = vset.pattern.permute.xlu0 0
    %431 = vperm.xlu0 %430, %v296
    %v432 = vpop.permute.xlu0 %431
    %435 = vset.pattern.permute.xlu0 0
    %436 = vperm.xlu0 %435, %v297
    %v437 = vpop.permute.xlu0 %436
    %440 = vset.pattern.permute.xlu0 0
    %441 = vperm.xlu0 %440, %v298
    %v442 = vpop.permute.xlu0 %441
    %445 = vset.pattern.permute.xlu0 0
    %446 = vperm.xlu0 %445, %v299
    %v447 = vpop.permute.xlu0 %446
    %450 = vset.pattern.permute.xlu0 0
    %451 = vperm.xlu0 %450, %v300
    %v452 = vpop.permute.xlu0 %451
    %455 = vset.pattern.permute.xlu0 0
    %456 = vperm.xlu0 %455, %v301
    %v457 = vpop.permute.xlu0 %456
    %460 = vset.pattern.permute.xlu0 0
    %461 = vperm.xlu0 %460, %v302
    %v462 = vpop.permute.xlu0 %461
    %v464 = vlaneseq
    %v465 = vshrl.u32 %v464, 7
    %v466 = vsub.s32 0, %v465
    %v467 = vrot.slane %v303, %v466
    %v468 = vmul.f32 %v307, %v467
    %v469 = vmul.f32 %v312, %v467
    %v470 = vmul.f32 %v317, %v467
    %v471 = vmul.f32 %v322, %v467
    %v472 = vmul.f32 %v327, %v467
    %v473 = vmul.f32 %v332, %v467
    %v474 = vmul.f32 %v337, %v467
    %v475 = vmul.f32 %v342, %v467
    %v476 = vmul.f32 %v347, %v467
    %v477 = vmul.f32 %v352, %v467
    %v478 = vmul.f32 %v357, %v467
    %v479 = vmul.f32 %v362, %v467
    %v480 = vmul.f32 %v367, %v467
    %v481 = vmul.f32 %v372, %v467
    %v482 = vmul.f32 %v377, %v467
    %v483 = vmul.f32 %v382, %v467
    %v484 = vmul.f32 %v387, %v467
    %v485 = vmul.f32 %v392, %v467
    %v486 = vmul.f32 %v397, %v467
    %v487 = vmul.f32 %v402, %v467
    %v488 = vmul.f32 %v407, %v467
    %v489 = vmul.f32 %v412, %v467
    %v490 = vmul.f32 %v417, %v467
    %v491 = vmul.f32 %v422, %v467
    %v492 = vmul.f32 %v427, %v467
    %v493 = vmul.f32 %v432, %v467
    %v494 = vmul.f32 %v437, %v467
    %v495 = vmul.f32 %v442, %v467
    %v496 = vmul.f32 %v447, %v467
    %v497 = vmul.f32 %v452, %v467
    %v498 = vmul.f32 %v457, %v467
    %v499 = vmul.f32 %v462, %v467
    %v500 = vld [vmem:[#allocation5] sm:$0x1]
    %v502 = vlaneseq
    %v503 = vshrl.u32 %v502, 7
    %v504 = vsub.s32 0, %v503
    %v505 = vrot.slane %v500, %v504
    %v507 = vadd.f32 %v468, %v505
    %v508 = vadd.f32 %v469, %v505
    %v509 = vadd.f32 %v470, %v505
    %v510 = vadd.f32 %v471, %v505
    %v511 = vadd.f32 %v472, %v505
    %v512 = vadd.f32 %v473, %v505
    %v513 = vadd.f32 %v474, %v505
    %v514 = vadd.f32 %v475, %v505
    %v515 = vadd.f32 %v476, %v505
    %v516 = vadd.f32 %v477, %v505
    %v517 = vadd.f32 %v478, %v505
    %v518 = vadd.f32 %v479, %v505
    %v519 = vadd.f32 %v480, %v505
    %v520 = vadd.f32 %v481, %v505
    %v521 = vadd.f32 %v482, %v505
    %v522 = vadd.f32 %v483, %v505
    %v523 = vadd.f32 %v484, %v505
    %v524 = vadd.f32 %v485, %v505
    %v525 = vadd.f32 %v486, %v505
    %v526 = vadd.f32 %v487, %v505
    %v527 = vadd.f32 %v488, %v505
    %v528 = vadd.f32 %v489, %v505
    %v529 = vadd.f32 %v490, %v505
    %v530 = vadd.f32 %v491, %v505
    %v531 = vadd.f32 %v492, %v505
    %v532 = vadd.f32 %v493, %v505
    %v533 = vadd.f32 %v494, %v505
    %v534 = vadd.f32 %v495, %v505
    %v535 = vadd.f32 %v496, %v505
    %v536 = vadd.f32 %v497, %v505
    %v537 = vadd.f32 %v498, %v505
    %v538 = vadd.f32 %v499, %v505
    %v539 = vld [vmem:[#allocation2 + $0x1] sm:$0x1]
    %540 = vset.pattern.permute.xlu0 1
    %541 = vperm.xlu0 %540, %v271
    %v542 = vpop.permute.xlu0 %541
    %544 = vset.pattern.permute.xlu0 1
    %545 = vperm.xlu0 %544, %v272
    %v546 = vpop.permute.xlu0 %545
    %548 = vset.pattern.permute.xlu0 1
    %549 = vperm.xlu0 %548, %v273
    %v550 = vpop.permute.xlu0 %549
    %552 = vset.pattern.permute.xlu0 1
    %553 = vperm.xlu0 %552, %v274
    %v554 = vpop.permute.xlu0 %553
    %556 = vset.pattern.permute.xlu0 1
    %557 = vperm.xlu0 %556, %v275
    %v558 = vpop.permute.xlu0 %557
    %560 = vset.pattern.permute.xlu0 1
    %561 = vperm.xlu0 %560, %v276
    %v562 = vpop.permute.xlu0 %561
    %564 = vset.pattern.permute.xlu0 1
    %565 = vperm.xlu0 %564, %v277
    %v566 = vpop.permute.xlu0 %565
    %568 = vset.pattern.permute.xlu0 1
    %569 = vperm.xlu0 %568, %v278
    %v570 = vpop.permute.xlu0 %569
    %572 = vset.pattern.permute.xlu0 1
    %573 = vperm.xlu0 %572, %v279
    %v574 = vpop.permute.xlu0 %573
    %576 = vset.pattern.permute.xlu0 1
    %577 = vperm.xlu0 %576, %v280
    %v578 = vpop.permute.xlu0 %577
    %580 = vset.pattern.permute.xlu0 1
    %581 = vperm.xlu0 %580, %v281
    %v582 = vpop.permute.xlu0 %581
    %584 = vset.pattern.permute.xlu0 1
    %585 = vperm.xlu0 %584, %v282
    %v586 = vpop.permute.xlu0 %585
    %588 = vset.pattern.permute.xlu0 1
    %589 = vperm.xlu0 %588, %v283
    %v590 = vpop.permute.xlu0 %589
    %592 = vset.pattern.permute.xlu0 1
    %593 = vperm.xlu0 %592, %v284
    %v594 = vpop.permute.xlu0 %593
    %596 = vset.pattern.permute.xlu0 1
    %597 = vperm.xlu0 %596, %v285
    %v598 = vpop.permute.xlu0 %597
    %600 = vset.pattern.permute.xlu0 1
    %601 = vperm.xlu0 %600, %v286
    %v602 = vpop.permute.xlu0 %601
    %604 = vset.pattern.permute.xlu0 1
    %605 = vperm.xlu0 %604, %v287
    %v606 = vpop.permute.xlu0 %605
    %608 = vset.pattern.permute.xlu0 1
    %609 = vperm.xlu0 %608, %v288
    %v610 = vpop.permute.xlu0 %609
    %612 = vset.pattern.permute.xlu0 1
    %613 = vperm.xlu0 %612, %v289
    %v614 = vpop.permute.xlu0 %613
    %616 = vset.pattern.permute.xlu0 1
    %617 = vperm.xlu0 %616, %v290
    %v618 = vpop.permute.xlu0 %617
    %620 = vset.pattern.permute.xlu0 1
    %621 = vperm.xlu0 %620, %v291
    %v622 = vpop.permute.xlu0 %621
    %624 = vset.pattern.permute.xlu0 1
    %625 = vperm.xlu0 %624, %v292
    %v626 = vpop.permute.xlu0 %625
    %628 = vset.pattern.permute.xlu0 1
    %629 = vperm.xlu0 %628, %v293
    %v630 = vpop.permute.xlu0 %629
    %632 = vset.pattern.permute.xlu0 1
    %633 = vperm.xlu0 %632, %v294
    %v634 = vpop.permute.xlu0 %633
    %636 = vset.pattern.permute.xlu0 1
    %637 = vperm.xlu0 %636, %v295
    %v638 = vpop.permute.xlu0 %637
    %640 = vset.pattern.permute.xlu0 1
    %641 = vperm.xlu0 %640, %v296
    %v642 = vpop.permute.xlu0 %641
    %644 = vset.pattern.permute.xlu0 1
    %645 = vperm.xlu0 %644, %v297
    %v646 = vpop.permute.xlu0 %645
    %648 = vset.pattern.permute.xlu0 1
    %649 = vperm.xlu0 %648, %v298
    %v650 = vpop.permute.xlu0 %649
    %652 = vset.pattern.permute.xlu0 1
    %653 = vperm.xlu0 %652, %v299
    %v654 = vpop.permute.xlu0 %653
    %656 = vset.pattern.permute.xlu0 1
    %657 = vperm.xlu0 %656, %v300
    %v658 = vpop.permute.xlu0 %657
    %660 = vset.pattern.permute.xlu0 1
    %661 = vperm.xlu0 %660, %v301
    %v662 = vpop.permute.xlu0 %661
    %664 = vset.pattern.permute.xlu0 1
    %665 = vperm.xlu0 %664, %v302
    %v666 = vpop.permute.xlu0 %665
    %v668 = vlaneseq
    %v669 = vshrl.u32 %v668, 7
    %v670 = vsub.s32 0, %v669
    %v671 = vrot.slane %v539, %v670
    %v672 = vmul.f32 %v542, %v671
    %v673 = vmul.f32 %v546, %v671
    %v674 = vmul.f32 %v550, %v671
    %v675 = vmul.f32 %v554, %v671
    %v676 = vmul.f32 %v558, %v671
    %v677 = vmul.f32 %v562, %v671
    %v678 = vmul.f32 %v566, %v671
    %v679 = vmul.f32 %v570, %v671
    %v680 = vmul.f32 %v574, %v671
    %v681 = vmul.f32 %v578, %v671
    %v682 = vmul.f32 %v582, %v671
    %v683 = vmul.f32 %v586, %v671
    %v684 = vmul.f32 %v590, %v671
    %v685 = vmul.f32 %v594, %v671
    %v686 = vmul.f32 %v598, %v671
    %v687 = vmul.f32 %v602, %v671
    %v688 = vmul.f32 %v606, %v671
    %v689 = vmul.f32 %v610, %v671
    %v690 = vmul.f32 %v614, %v671
    %v691 = vmul.f32 %v618, %v671
    %v692 = vmul.f32 %v622, %v671
    %v693 = vmul.f32 %v626, %v671
    %v694 = vmul.f32 %v630, %v671
    %v695 = vmul.f32 %v634, %v671
    %v696 = vmul.f32 %v638, %v671
    %v697 = vmul.f32 %v642, %v671
    %v698 = vmul.f32 %v646, %v671
    %v699 = vmul.f32 %v650, %v671
    %v700 = vmul.f32 %v654, %v671
    %v701 = vmul.f32 %v658, %v671
    %v702 = vmul.f32 %v662, %v671
    %v703 = vmul.f32 %v666, %v671
    %v704 = vadd.f32 %v507, %v672
    %v705 = vadd.f32 %v508, %v673
    %v706 = vadd.f32 %v509, %v674
    %v707 = vadd.f32 %v510, %v675
    %v708 = vadd.f32 %v511, %v676
    %v709 = vadd.f32 %v512, %v677
    %v710 = vadd.f32 %v513, %v678
    %v711 = vadd.f32 %v514, %v679
    %v712 = vadd.f32 %v515, %v680
    %v713 = vadd.f32 %v516, %v681
    %v714 = vadd.f32 %v517, %v682
    %v715 = vadd.f32 %v518, %v683
    %v716 = vadd.f32 %v519, %v684
    %v717 = vadd.f32 %v520, %v685
    %v718 = vadd.f32 %v521, %v686
    %v719 = vadd.f32 %v522, %v687
    %v720 = vadd.f32 %v523, %v688
    %v721 = vadd.f32 %v524, %v689
    %v722 = vadd.f32 %v525, %v690
    %v723 = vadd.f32 %v526, %v691
    %v724 = vadd.f32 %v527, %v692
    %v725 = vadd.f32 %v528, %v693
    %v726 = vadd.f32 %v529, %v694
    %v727 = vadd.f32 %v530, %v695
    %v728 = vadd.f32 %v531, %v696
    %v729 = vadd.f32 %v532, %v697
    %v730 = vadd.f32 %v533, %v698
    %v731 = vadd.f32 %v534, %v699
    %v732 = vadd.f32 %v535, %v700
    %v733 = vadd.f32 %v536, %v701
    %v734 = vadd.f32 %v537, %v702
    %v735 = vadd.f32 %v538, %v703
    %v736 = vld [vmem:[#allocation2 + $0x2] sm:$0x1]
    %737 = vset.pattern.permute.xlu0 2
    %738 = vperm.xlu0 %737, %v271
    %v739 = vpop.permute.xlu0 %738
    %741 = vset.pattern.permute.xlu0 2
    %742 = vperm.xlu0 %741, %v272
    %v743 = vpop.permute.xlu0 %742
    %745 = vset.pattern.permute.xlu0 2
    %746 = vperm.xlu0 %745, %v273
    %v747 = vpop.permute.xlu0 %746
    %749 = vset.pattern.permute.xlu0 2
    %750 = vperm.xlu0 %749, %v274
    %v751 = vpop.permute.xlu0 %750
    %753 = vset.pattern.permute.xlu0 2
    %754 = vperm.xlu0 %753, %v275
    %v755 = vpop.permute.xlu0 %754
    %757 = vset.pattern.permute.xlu0 2
    %758 = vperm.xlu0 %757, %v276
    %v759 = vpop.permute.xlu0 %758
    %761 = vset.pattern.permute.xlu0 2
    %762 = vperm.xlu0 %761, %v277
    %v763 = vpop.permute.xlu0 %762
    %765 = vset.pattern.permute.xlu0 2
    %766 = vperm.xlu0 %765, %v278
    %v767 = vpop.permute.xlu0 %766
    %769 = vset.pattern.permute.xlu0 2
    %770 = vperm.xlu0 %769, %v279
    %v771 = vpop.permute.xlu0 %770
    %773 = vset.pattern.permute.xlu0 2
    %774 = vperm.xlu0 %773, %v280
    %v775 = vpop.permute.xlu0 %774
    %777 = vset.pattern.permute.xlu0 2
    %778 = vperm.xlu0 %777, %v281
    %v779 = vpop.permute.xlu0 %778
    %781 = vset.pattern.permute.xlu0 2
    %782 = vperm.xlu0 %781, %v282
    %v783 = vpop.permute.xlu0 %782
    %785 = vset.pattern.permute.xlu0 2
    %786 = vperm.xlu0 %785, %v283
    %v787 = vpop.permute.xlu0 %786
    %789 = vset.pattern.permute.xlu0 2
    %790 = vperm.xlu0 %789, %v284
    %v791 = vpop.permute.xlu0 %790
    %793 = vset.pattern.permute.xlu0 2
    %794 = vperm.xlu0 %793, %v285
    %v795 = vpop.permute.xlu0 %794
    %797 = vset.pattern.permute.xlu0 2
    %798 = vperm.xlu0 %797, %v286
    %v799 = vpop.permute.xlu0 %798
    %801 = vset.pattern.permute.xlu0 2
    %802 = vperm.xlu0 %801, %v287
    %v803 = vpop.permute.xlu0 %802
    %805 = vset.pattern.permute.xlu0 2
    %806 = vperm.xlu0 %805, %v288
    %v807 = vpop.permute.xlu0 %806
    %809 = vset.pattern.permute.xlu0 2
    %810 = vperm.xlu0 %809, %v289
    %v811 = vpop.permute.xlu0 %810
    %813 = vset.pattern.permute.xlu0 2
    %814 = vperm.xlu0 %813, %v290
    %v815 = vpop.permute.xlu0 %814
    %817 = vset.pattern.permute.xlu0 2
    %818 = vperm.xlu0 %817, %v291
    %v819 = vpop.permute.xlu0 %818
    %821 = vset.pattern.permute.xlu0 2
    %822 = vperm.xlu0 %821, %v292
    %v823 = vpop.permute.xlu0 %822
    %825 = vset.pattern.permute.xlu0 2
    %826 = vperm.xlu0 %825, %v293
    %v827 = vpop.permute.xlu0 %826
    %829 = vset.pattern.permute.xlu0 2
    %830 = vperm.xlu0 %829, %v294
    %v831 = vpop.permute.xlu0 %830
    %833 = vset.pattern.permute.xlu0 2
    %834 = vperm.xlu0 %833, %v295
    %v835 = vpop.permute.xlu0 %834
    %837 = vset.pattern.permute.xlu0 2
    %838 = vperm.xlu0 %837, %v296
    %v839 = vpop.permute.xlu0 %838
    %841 = vset.pattern.permute.xlu0 2
    %842 = vperm.xlu0 %841, %v297
    %v843 = vpop.permute.xlu0 %842
    %845 = vset.pattern.permute.xlu0 2
    %846 = vperm.xlu0 %845, %v298
    %v847 = vpop.permute.xlu0 %846
    %849 = vset.pattern.permute.xlu0 2
    %850 = vperm.xlu0 %849, %v299
    %v851 = vpop.permute.xlu0 %850
    %853 = vset.pattern.permute.xlu0 2
    %854 = vperm.xlu0 %853, %v300
    %v855 = vpop.permute.xlu0 %854
    %857 = vset.pattern.permute.xlu0 2
    %858 = vperm.xlu0 %857, %v301
    %v859 = vpop.permute.xlu0 %858
    %861 = vset.pattern.permute.xlu0 2
    %862 = vperm.xlu0 %861, %v302
    %v863 = vpop.permute.xlu0 %862
    %v865 = vlaneseq
    %v866 = vshrl.u32 %v865, 7
    %v867 = vsub.s32 0, %v866
    %v868 = vrot.slane %v736, %v867
    %v869 = vmul.f32 %v739, %v868
    %v870 = vmul.f32 %v743, %v868
    %v871 = vmul.f32 %v747, %v868
    %v872 = vmul.f32 %v751, %v868
    %v873 = vmul.f32 %v755, %v868
    %v874 = vmul.f32 %v759, %v868
    %v875 = vmul.f32 %v763, %v868
    %v876 = vmul.f32 %v767, %v868
    %v877 = vmul.f32 %v771, %v868
    %v878 = vmul.f32 %v775, %v868
    %v879 = vmul.f32 %v779, %v868
    %v880 = vmul.f32 %v783, %v868
    %v881 = vmul.f32 %v787, %v868
    %v882 = vmul.f32 %v791, %v868
    %v883 = vmul.f32 %v795, %v868
    %v884 = vmul.f32 %v799, %v868
    %v885 = vmul.f32 %v803, %v868
    %v886 = vmul.f32 %v807, %v868
    %v887 = vmul.f32 %v811, %v868
    %v888 = vmul.f32 %v815, %v868
    %v889 = vmul.f32 %v819, %v868
    %v890 = vmul.f32 %v823, %v868
    %v891 = vmul.f32 %v827, %v868
    %v892 = vmul.f32 %v831, %v868
    %v893 = vmul.f32 %v835, %v868
    %v894 = vmul.f32 %v839, %v868
    %v895 = vmul.f32 %v843, %v868
    %v896 = vmul.f32 %v847, %v868
    %v897 = vmul.f32 %v851, %v868
    %v898 = vmul.f32 %v855, %v868
    %v899 = vmul.f32 %v859, %v868
    %v900 = vmul.f32 %v863, %v868
    %v901 = vadd.f32 %v704, %v869
    %v902 = vadd.f32 %v705, %v870
    %v903 = vadd.f32 %v706, %v871
    %v904 = vadd.f32 %v707, %v872
    %v905 = vadd.f32 %v708, %v873
    %v906 = vadd.f32 %v709, %v874
    %v907 = vadd.f32 %v710, %v875
    %v908 = vadd.f32 %v711, %v876
    %v909 = vadd.f32 %v712, %v877
    %v910 = vadd.f32 %v713, %v878
    %v911 = vadd.f32 %v714, %v879
    %v912 = vadd.f32 %v715, %v880
    %v913 = vadd.f32 %v716, %v881
    %v914 = vadd.f32 %v717, %v882
    %v915 = vadd.f32 %v718, %v883
    %v916 = vadd.f32 %v719, %v884
    %v917 = vadd.f32 %v720, %v885
    %v918 = vadd.f32 %v721, %v886
    %v919 = vadd.f32 %v722, %v887
    %v920 = vadd.f32 %v723, %v888
    %v921 = vadd.f32 %v724, %v889
    %v922 = vadd.f32 %v725, %v890
    %v923 = vadd.f32 %v726, %v891
    %v924 = vadd.f32 %v727, %v892
    %v925 = vadd.f32 %v728, %v893
    %v926 = vadd.f32 %v729, %v894
    %v927 = vadd.f32 %v730, %v895
    %v928 = vadd.f32 %v731, %v896
    %v929 = vadd.f32 %v732, %v897
    %v930 = vadd.f32 %v733, %v898
    %v931 = vadd.f32 %v734, %v899
    %v932 = vadd.f32 %v735, %v900
    %v933 = vld [vmem:[#allocation2 + $0x3] sm:$0x1]
    %934 = vset.pattern.permute.xlu0 3
    %935 = vperm.xlu0 %934, %v271
    %v936 = vpop.permute.xlu0 %935
    %938 = vset.pattern.permute.xlu0 3
    %939 = vperm.xlu0 %938, %v272
    %v940 = vpop.permute.xlu0 %939
    %942 = vset.pattern.permute.xlu0 3
    %943 = vperm.xlu0 %942, %v273
    %v944 = vpop.permute.xlu0 %943
    %946 = vset.pattern.permute.xlu0 3
    %947 = vperm.xlu0 %946, %v274
    %v948 = vpop.permute.xlu0 %947
    %950 = vset.pattern.permute.xlu0 3
    %951 = vperm.xlu0 %950, %v275
    %v952 = vpop.permute.xlu0 %951
    %954 = vset.pattern.permute.xlu0 3
    %955 = vperm.xlu0 %954, %v276
    %v956 = vpop.permute.xlu0 %955
    %958 = vset.pattern.permute.xlu0 3
    %959 = vperm.xlu0 %958, %v277
    %v960 = vpop.permute.xlu0 %959
    %962 = vset.pattern.permute.xlu0 3
    %963 = vperm.xlu0 %962, %v278
    %v964 = vpop.permute.xlu0 %963
    %966 = vset.pattern.permute.xlu0 3
    %967 = vperm.xlu0 %966, %v279
    %v968 = vpop.permute.xlu0 %967
    %970 = vset.pattern.permute.xlu0 3
    %971 = vperm.xlu0 %970, %v280
    %v972 = vpop.permute.xlu0 %971
    %974 = vset.pattern.permute.xlu0 3
    %975 = vperm.xlu0 %974, %v281
    %v976 = vpop.permute.xlu0 %975
    %978 = vset.pattern.permute.xlu0 3
    %979 = vperm.xlu0 %978, %v282
    %v980 = vpop.permute.xlu0 %979
    %982 = vset.pattern.permute.xlu0 3
    %983 = vperm.xlu0 %982, %v283
    %v984 = vpop.permute.xlu0 %983
    %986 = vset.pattern.permute.xlu0 3
    %987 = vperm.xlu0 %986, %v284
    %v988 = vpop.permute.xlu0 %987
    %990 = vset.pattern.permute.xlu0 3
    %991 = vperm.xlu0 %990, %v285
    %v992 = vpop.permute.xlu0 %991
    %994 = vset.pattern.permute.xlu0 3
    %995 = vperm.xlu0 %994, %v286
    %v996 = vpop.permute.xlu0 %995
    %998 = vset.pattern.permute.xlu0 3
    %999 = vperm.xlu0 %998, %v287
    %v1000 = vpop.permute.xlu0 %999
    %1002 = vset.pattern.permute.xlu0 3
    %1003 = vperm.xlu0 %1002, %v288
    %v1004 = vpop.permute.xlu0 %1003
    %1006 = vset.pattern.permute.xlu0 3
    %1007 = vperm.xlu0 %1006, %v289
    %v1008 = vpop.permute.xlu0 %1007
    %1010 = vset.pattern.permute.xlu0 3
    %1011 = vperm.xlu0 %1010, %v290
    %v1012 = vpop.permute.xlu0 %1011
    %1014 = vset.pattern.permute.xlu0 3
    %1015 = vperm.xlu0 %1014, %v291
    %v1016 = vpop.permute.xlu0 %1015
    %1018 = vset.pattern.permute.xlu0 3
    %1019 = vperm.xlu0 %1018, %v292
    %v1020 = vpop.permute.xlu0 %1019
    %1022 = vset.pattern.permute.xlu0 3
    %1023 = vperm.xlu0 %1022, %v293
    %v1024 = vpop.permute.xlu0 %1023
    %1026 = vset.pattern.permute.xlu0 3
    %1027 = vperm.xlu0 %1026, %v294
    %v1028 = vpop.permute.xlu0 %1027
    %1030 = vset.pattern.permute.xlu0 3
    %1031 = vperm.xlu0 %1030, %v295
    %v1032 = vpop.permute.xlu0 %1031
    %1034 = vset.pattern.permute.xlu0 3
    %1035 = vperm.xlu0 %1034, %v296
    %v1036 = vpop.permute.xlu0 %1035
    %1038 = vset.pattern.permute.xlu0 3
    %1039 = vperm.xlu0 %1038, %v297
    %v1040 = vpop.permute.xlu0 %1039
    %1042 = vset.pattern.permute.xlu0 3
    %1043 = vperm.xlu0 %1042, %v298
    %v1044 = vpop.permute.xlu0 %1043
    %1046 = vset.pattern.permute.xlu0 3
    %1047 = vperm.xlu0 %1046, %v299
    %v1048 = vpop.permute.xlu0 %1047
    %1050 = vset.pattern.permute.xlu0 3
    %1051 = vperm.xlu0 %1050, %v300
    %v1052 = vpop.permute.xlu0 %1051
    %1054 = vset.pattern.permute.xlu0 3
    %1055 = vperm.xlu0 %1054, %v301
    %v1056 = vpop.permute.xlu0 %1055
    %1058 = vset.pattern.permute.xlu0 3
    %1059 = vperm.xlu0 %1058, %v302
    %v1060 = vpop.permute.xlu0 %1059
    %v1062 = vlaneseq
    %v1063 = vshrl.u32 %v1062, 7
    %v1064 = vsub.s32 0, %v1063
    %v1065 = vrot.slane %v933, %v1064
    %v1066 = vmul.f32 %v936, %v1065
    %v1067 = vmul.f32 %v940, %v1065
    %v1068 = vmul.f32 %v944, %v1065
    %v1069 = vmul.f32 %v948, %v1065
    %v1070 = vmul.f32 %v952, %v1065
    %v1071 = vmul.f32 %v956, %v1065
    %v1072 = vmul.f32 %v960, %v1065
    %v1073 = vmul.f32 %v964, %v1065
    %v1074 = vmul.f32 %v968, %v1065
    %v1075 = vmul.f32 %v972, %v1065
    %v1076 = vmul.f32 %v976, %v1065
    %v1077 = vmul.f32 %v980, %v1065
    %v1078 = vmul.f32 %v984, %v1065
    %v1079 = vmul.f32 %v988, %v1065
    %v1080 = vmul.f32 %v992, %v1065
    %v1081 = vmul.f32 %v996, %v1065
    %v1082 = vmul.f32 %v1000, %v1065
    %v1083 = vmul.f32 %v1004, %v1065
    %v1084 = vmul.f32 %v1008, %v1065
    %v1085 = vmul.f32 %v1012, %v1065
    %v1086 = vmul.f32 %v1016, %v1065
    %v1087 = vmul.f32 %v1020, %v1065
    %v1088 = vmul.f32 %v1024, %v1065
    %v1089 = vmul.f32 %v1028, %v1065
    %v1090 = vmul.f32 %v1032, %v1065
    %v1091 = vmul.f32 %v1036, %v1065
    %v1092 = vmul.f32 %v1040, %v1065
    %v1093 = vmul.f32 %v1044, %v1065
    %v1094 = vmul.f32 %v1048, %v1065
    %v1095 = vmul.f32 %v1052, %v1065
    %v1096 = vmul.f32 %v1056, %v1065
    %v1097 = vmul.f32 %v1060, %v1065
    %v1098 = vadd.f32 %v901, %v1066
    %v1099 = vadd.f32 %v902, %v1067
    %v1100 = vadd.f32 %v903, %v1068
    %v1101 = vadd.f32 %v904, %v1069
    %v1102 = vadd.f32 %v905, %v1070
    %v1103 = vadd.f32 %v906, %v1071
    %v1104 = vadd.f32 %v907, %v1072
    %v1105 = vadd.f32 %v908, %v1073
    %v1106 = vadd.f32 %v909, %v1074
    %v1107 = vadd.f32 %v910, %v1075
    %v1108 = vadd.f32 %v911, %v1076
    %v1109 = vadd.f32 %v912, %v1077
    %v1110 = vadd.f32 %v913, %v1078
    %v1111 = vadd.f32 %v914, %v1079
    %v1112 = vadd.f32 %v915, %v1080
    %v1113 = vadd.f32 %v916, %v1081
    %v1114 = vadd.f32 %v917, %v1082
    %v1115 = vadd.f32 %v918, %v1083
    %v1116 = vadd.f32 %v919, %v1084
    %v1117 = vadd.f32 %v920, %v1085
    %v1118 = vadd.f32 %v921, %v1086
    %v1119 = vadd.f32 %v922, %v1087
    %v1120 = vadd.f32 %v923, %v1088
    %v1121 = vadd.f32 %v924, %v1089
    %v1122 = vadd.f32 %v925, %v1090
    %v1123 = vadd.f32 %v926, %v1091
    %v1124 = vadd.f32 %v927, %v1092
    %v1125 = vadd.f32 %v928, %v1093
    %v1126 = vadd.f32 %v929, %v1094
    %v1127 = vadd.f32 %v930, %v1095
    %v1128 = vadd.f32 %v931, %v1096
    %v1129 = vadd.f32 %v932, %v1097
    %v1130 = vld [vmem:[%s1] sm:$0xff]
    %v1131 = vld [vmem:[%s1 + $0x8] sm:$0xff]
    %v1132 = vld [vmem:[%s1 + $0x10] sm:$0xff]
    %v1133 = vld [vmem:[%s1 + $0x18] sm:$0xff]
    %v1134 = vld [vmem:[%s1 + $0x20] sm:$0xff]
    %v1135 = vld [vmem:[%s1 + $0x28] sm:$0xff]
    %v1136 = vld [vmem:[%s1 + $0x30] sm:$0xff]
    %v1137 = vld [vmem:[%s1 + $0x38] sm:$0xff]
    %v1138 = vld [vmem:[%s1 + $0x40] sm:$0xff]
    %v1139 = vld [vmem:[%s1 + $0x48] sm:$0xff]
    %v1140 = vld [vmem:[%s1 + $0x50] sm:$0xff]
    %v1141 = vld [vmem:[%s1 + $0x58] sm:$0xff]
    %v1142 = vld [vmem:[%s1 + $0x60] sm:$0xff]
    %v1143 = vld [vmem:[%s1 + $0x68] sm:$0xff]
    %v1144 = vld [vmem:[%s1 + $0x70] sm:$0xff]
    %v1145 = vld [vmem:[%s1 + $0x78] sm:$0xff]
    %v1146 = vld [vmem:[%s1 + $0x80] sm:$0xff]
    %v1147 = vld [vmem:[%s1 + $0x88] sm:$0xff]
    %v1148 = vld [vmem:[%s1 + $0x90] sm:$0xff]
    %v1149 = vld [vmem:[%s1 + $0x98] sm:$0xff]
    %v1150 = vld [vmem:[%s1 + $0xa0] sm:$0xff]
    %v1151 = vld [vmem:[%s1 + $0xa8] sm:$0xff]
    %v1152 = vld [vmem:[%s1 + $0xb0] sm:$0xff]
    %v1153 = vld [vmem:[%s1 + $0xb8] sm:$0xff]
    %v1154 = vld [vmem:[%s1 + $0xc0] sm:$0xff]
    %v1155 = vld [vmem:[%s1 + $0xc8] sm:$0xff]
    %v1156 = vld [vmem:[%s1 + $0xd0] sm:$0xff]
    %v1157 = vld [vmem:[%s1 + $0xd8] sm:$0xff]
    %v1158 = vld [vmem:[%s1 + $0xe0] sm:$0xff]
    %v1159 = vld [vmem:[%s1 + $0xe8] sm:$0xff]
    %v1160 = vld [vmem:[%s1 + $0xf0] sm:$0xff]
    %v1161 = vld [vmem:[%s1 + $0xf8] sm:$0xff]
    %1163 = vset.pattern.permute.xlu0 0
    %1164 = vperm.xlu0 %1163, %v1130
    %v1165 = vpop.permute.xlu0 %1164
    %1168 = vset.pattern.permute.xlu0 0
    %1169 = vperm.xlu0 %1168, %v1131
    %v1170 = vpop.permute.xlu0 %1169
    %1173 = vset.pattern.permute.xlu0 0
    %1174 = vperm.xlu0 %1173, %v1132
    %v1175 = vpop.permute.xlu0 %1174
    %1178 = vset.pattern.permute.xlu0 0
    %1179 = vperm.xlu0 %1178, %v1133
    %v1180 = vpop.permute.xlu0 %1179
    %1183 = vset.pattern.permute.xlu0 0
    %1184 = vperm.xlu0 %1183, %v1134
    %v1185 = vpop.permute.xlu0 %1184
    %1188 = vset.pattern.permute.xlu0 0
    %1189 = vperm.xlu0 %1188, %v1135
    %v1190 = vpop.permute.xlu0 %1189
    %1193 = vset.pattern.permute.xlu0 0
    %1194 = vperm.xlu0 %1193, %v1136
    %v1195 = vpop.permute.xlu0 %1194
    %1198 = vset.pattern.permute.xlu0 0
    %1199 = vperm.xlu0 %1198, %v1137
    %v1200 = vpop.permute.xlu0 %1199
    %1203 = vset.pattern.permute.xlu0 0
    %1204 = vperm.xlu0 %1203, %v1138
    %v1205 = vpop.permute.xlu0 %1204
    %1208 = vset.pattern.permute.xlu0 0
    %1209 = vperm.xlu0 %1208, %v1139
    %v1210 = vpop.permute.xlu0 %1209
    %1213 = vset.pattern.permute.xlu0 0
    %1214 = vperm.xlu0 %1213, %v1140
    %v1215 = vpop.permute.xlu0 %1214
    %1218 = vset.pattern.permute.xlu0 0
    %1219 = vperm.xlu0 %1218, %v1141
    %v1220 = vpop.permute.xlu0 %1219
    %1223 = vset.pattern.permute.xlu0 0
    %1224 = vperm.xlu0 %1223, %v1142
    %v1225 = vpop.permute.xlu0 %1224
    %1228 = vset.pattern.permute.xlu0 0
    %1229 = vperm.xlu0 %1228, %v1143
    %v1230 = vpop.permute.xlu0 %1229
    %1233 = vset.pattern.permute.xlu0 0
    %1234 = vperm.xlu0 %1233, %v1144
    %v1235 = vpop.permute.xlu0 %1234
    %1238 = vset.pattern.permute.xlu0 0
    %1239 = vperm.xlu0 %1238, %v1145
    %v1240 = vpop.permute.xlu0 %1239
    %1243 = vset.pattern.permute.xlu0 0
    %1244 = vperm.xlu0 %1243, %v1146
    %v1245 = vpop.permute.xlu0 %1244
    %1248 = vset.pattern.permute.xlu0 0
    %1249 = vperm.xlu0 %1248, %v1147
    %v1250 = vpop.permute.xlu0 %1249
    %1253 = vset.pattern.permute.xlu0 0
    %1254 = vperm.xlu0 %1253, %v1148
    %v1255 = vpop.permute.xlu0 %1254
    %1258 = vset.pattern.permute.xlu0 0
    %1259 = vperm.xlu0 %1258, %v1149
    %v1260 = vpop.permute.xlu0 %1259
    %1263 = vset.pattern.permute.xlu0 0
    %1264 = vperm.xlu0 %1263, %v1150
    %v1265 = vpop.permute.xlu0 %1264
    %1268 = vset.pattern.permute.xlu0 0
    %1269 = vperm.xlu0 %1268, %v1151
    %v1270 = vpop.permute.xlu0 %1269
    %1273 = vset.pattern.permute.xlu0 0
    %1274 = vperm.xlu0 %1273, %v1152
    %v1275 = vpop.permute.xlu0 %1274
    %1278 = vset.pattern.permute.xlu0 0
    %1279 = vperm.xlu0 %1278, %v1153
    %v1280 = vpop.permute.xlu0 %1279
    %1283 = vset.pattern.permute.xlu0 0
    %1284 = vperm.xlu0 %1283, %v1154
    %v1285 = vpop.permute.xlu0 %1284
    %1288 = vset.pattern.permute.xlu0 0
    %1289 = vperm.xlu0 %1288, %v1155
    %v1290 = vpop.permute.xlu0 %1289
    %1293 = vset.pattern.permute.xlu0 0
    %1294 = vperm.xlu0 %1293, %v1156
    %v1295 = vpop.permute.xlu0 %1294
    %1298 = vset.pattern.permute.xlu0 0
    %1299 = vperm.xlu0 %1298, %v1157
    %v1300 = vpop.permute.xlu0 %1299
    %1303 = vset.pattern.permute.xlu0 0
    %1304 = vperm.xlu0 %1303, %v1158
    %v1305 = vpop.permute.xlu0 %1304
    %1308 = vset.pattern.permute.xlu0 0
    %1309 = vperm.xlu0 %1308, %v1159
    %v1310 = vpop.permute.xlu0 %1309
    %1313 = vset.pattern.permute.xlu0 0
    %1314 = vperm.xlu0 %1313, %v1160
    %v1315 = vpop.permute.xlu0 %1314
    %1318 = vset.pattern.permute.xlu0 0
    %1319 = vperm.xlu0 %1318, %v1161
    %v1320 = vpop.permute.xlu0 %1319
    %v1322 = vadd.f32 %v1098, %v1165
    %v1323 = vadd.f32 %v1099, %v1170
    %v1324 = vadd.f32 %v1100, %v1175
    %v1325 = vadd.f32 %v1101, %v1180
    %v1326 = vadd.f32 %v1102, %v1185
    %v1327 = vadd.f32 %v1103, %v1190
    %v1328 = vadd.f32 %v1104, %v1195
    %v1329 = vadd.f32 %v1105, %v1200
    %v1330 = vadd.f32 %v1106, %v1205
    %v1331 = vadd.f32 %v1107, %v1210
    %v1332 = vadd.f32 %v1108, %v1215
    %v1333 = vadd.f32 %v1109, %v1220
    %v1334 = vadd.f32 %v1110, %v1225
    %v1335 = vadd.f32 %v1111, %v1230
    %v1336 = vadd.f32 %v1112, %v1235
    %v1337 = vadd.f32 %v1113, %v1240
    %v1338 = vadd.f32 %v1114, %v1245
    %v1339 = vadd.f32 %v1115, %v1250
    %v1340 = vadd.f32 %v1116, %v1255
    %v1341 = vadd.f32 %v1117, %v1260
    %v1342 = vadd.f32 %v1118, %v1265
    %v1343 = vadd.f32 %v1119, %v1270
    %v1344 = vadd.f32 %v1120, %v1275
    %v1345 = vadd.f32 %v1121, %v1280
    %v1346 = vadd.f32 %v1122, %v1285
    %v1347 = vadd.f32 %v1123, %v1290
    %v1348 = vadd.f32 %v1124, %v1295
    %v1349 = vadd.f32 %v1125, %v1300
    %v1350 = vadd.f32 %v1126, %v1305
    %v1351 = vadd.f32 %v1127, %v1310
    %v1352 = vadd.f32 %v1128, %v1315
    %v1353 = vadd.f32 %v1129, %v1320
    %v1354 = vld [vmem:[#allocation8] sm:$0xf]
    %v1355 = vld [vmem:[#allocation8 + $0x4] sm:$0xf]
    %v1356 = vld [vmem:[#allocation8 + $0x8] sm:$0xf]
    %v1357 = vld [vmem:[#allocation8 + $0xc] sm:$0xf]
    %v1358 = vld [vmem:[#allocation8 + $0x10] sm:$0xf]
    %v1359 = vld [vmem:[#allocation8 + $0x14] sm:$0xf]
    %v1360 = vld [vmem:[#allocation8 + $0x18] sm:$0xf]
    %v1361 = vld [vmem:[#allocation8 + $0x1c] sm:$0xf]
    %v1362 = vld [vmem:[#allocation8 + $0x20] sm:$0xf]
    %v1363 = vld [vmem:[#allocation8 + $0x24] sm:$0xf]
    %v1364 = vld [vmem:[#allocation8 + $0x28] sm:$0xf]
    %v1365 = vld [vmem:[#allocation8 + $0x2c] sm:$0xf]
    %v1366 = vld [vmem:[#allocation8 + $0x30] sm:$0xf]
    %v1367 = vld [vmem:[#allocation8 + $0x34] sm:$0xf]
    %v1368 = vld [vmem:[#allocation8 + $0x38] sm:$0xf]
    %v1369 = vld [vmem:[#allocation8 + $0x3c] sm:$0xf]
    %v1370 = vpack.c.bf16 %v1323, %v1322
    %v1371 = vpack.c.bf16 %v1325, %v1324
    %v1372 = vpack.c.bf16 %v1327, %v1326
    %v1373 = vpack.c.bf16 %v1329, %v1328
    %v1374 = vpack.c.bf16 %v1331, %v1330
    %v1375 = vpack.c.bf16 %v1333, %v1332
    %v1376 = vpack.c.bf16 %v1335, %v1334
    %v1377 = vpack.c.bf16 %v1337, %v1336
    %v1378 = vpack.c.bf16 %v1339, %v1338
    %v1379 = vpack.c.bf16 %v1341, %v1340
    %v1380 = vpack.c.bf16 %v1343, %v1342
    %v1381 = vpack.c.bf16 %v1345, %v1344
    %v1382 = vpack.c.bf16 %v1347, %v1346
    %v1383 = vpack.c.bf16 %v1349, %v1348
    %v1384 = vpack.c.bf16 %v1351, %v1350
    %v1385 = vpack.c.bf16 %v1353, %v1352
    %v1386 = vld [vmem:[#allocation7] sm:$0xff]
    %v1387 = vld [vmem:[#allocation7 + $0x8] sm:$0xf]
    %v1388 = vld [vmem:[#allocation7 + $0xc] sm:$0xff]
    %v1389 = vld [vmem:[#allocation7 + $0x14] sm:$0xf]
    %v1390 = vld [vmem:[#allocation7 + $0x18] sm:$0xff]
    %v1391 = vld [vmem:[#allocation7 + $0x20] sm:$0xf]
    %v1392 = vld [vmem:[#allocation7 + $0x24] sm:$0xff]
    %v1393 = vld [vmem:[#allocation7 + $0x2c] sm:$0xf]
    %v1394 = vld [vmem:[#allocation7 + $0x30] sm:$0xff]
    %v1395 = vld [vmem:[#allocation7 + $0x38] sm:$0xf]
    %v1396 = vld [vmem:[#allocation7 + $0x3c] sm:$0xff]
    %v1397 = vld [vmem:[#allocation7 + $0x44] sm:$0xf]
    %v1398 = vld [vmem:[#allocation7 + $0x48] sm:$0xff]
    %v1399 = vld [vmem:[#allocation7 + $0x50] sm:$0xf]
    %v1400 = vld [vmem:[#allocation7 + $0x54] sm:$0xff]
    %v1401 = vld [vmem:[#allocation7 + $0x5c] sm:$0xf]
    %v1402 = vld [vmem:[#allocation7 + $0x60] sm:$0xff]
    %v1403 = vld [vmem:[#allocation7 + $0x68] sm:$0xf]
    %v1404 = vld [vmem:[#allocation7 + $0x6c] sm:$0xff]
    %v1405 = vld [vmem:[#allocation7 + $0x74] sm:$0xf]
    %v1406 = vld [vmem:[#allocation7 + $0x78] sm:$0xff]
    %v1407 = vld [vmem:[#allocation7 + $0x80] sm:$0xf]
    %v1408 = vld [vmem:[#allocation7 + $0x84] sm:$0xff]
    %v1409 = vld [vmem:[#allocation7 + $0x8c] sm:$0xf]
    %v1410 = vld [vmem:[#allocation7 + $0x90] sm:$0xff]
    %v1411 = vld [vmem:[#allocation7 + $0x98] sm:$0xf]
    %v1412 = vld [vmem:[#allocation7 + $0x9c] sm:$0xff]
    %v1413 = vld [vmem:[#allocation7 + $0xa4] sm:$0xf]
    %v1414 = vld [vmem:[#allocation7 + $0xa8] sm:$0xff]
    %v1415 = vld [vmem:[#allocation7 + $0xb0] sm:$0xf]
    %v1416 = vld [vmem:[#allocation7 + $0xb4] sm:$0xff]
    %v1417 = vld [vmem:[#allocation7 + $0xbc] sm:$0xf]
    %v1450 = vunpack.c.l.b16 %v1386
    %v1451 = vunpack.c.h.b16 %v1386
    %v1452 = vunpack.c.l.b16 %v1387
    %v1453 = vunpack.c.l.b16 %v1388
    %v1454 = vunpack.c.h.b16 %v1388
    %v1455 = vunpack.c.l.b16 %v1389
    %v1456 = vunpack.c.l.b16 %v1390
    %v1457 = vunpack.c.h.b16 %v1390
    %v1458 = vunpack.c.l.b16 %v1391
    %v1459 = vunpack.c.l.b16 %v1392
    %v1460 = vunpack.c.h.b16 %v1392
    %v1461 = vunpack.c.l.b16 %v1393
    %v1462 = vunpack.c.l.b16 %v1394
    %v1463 = vunpack.c.h.b16 %v1394
    %v1464 = vunpack.c.l.b16 %v1395
    %v1465 = vunpack.c.l.b16 %v1396
    %v1466 = vunpack.c.h.b16 %v1396
    %v1467 = vunpack.c.l.b16 %v1397
    %v1468 = vunpack.c.l.b16 %v1398
    %v1469 = vunpack.c.h.b16 %v1398
    %v1470 = vunpack.c.l.b16 %v1399
    %v1471 = vunpack.c.l.b16 %v1400
    %v1472 = vunpack.c.h.b16 %v1400
    %v1473 = vunpack.c.l.b16 %v1401
    %v1474 = vunpack.c.l.b16 %v1402
    %v1475 = vunpack.c.h.b16 %v1402
    %v1476 = vunpack.c.l.b16 %v1403
    %v1477 = vunpack.c.l.b16 %v1404
    %v1478 = vunpack.c.h.b16 %v1404
    %v1479 = vunpack.c.l.b16 %v1405
    %v1480 = vunpack.c.l.b16 %v1406
    %v1481 = vunpack.c.h.b16 %v1406
    %v1482 = vunpack.c.l.b16 %v1407
    %v1483 = vunpack.c.l.b16 %v1408
    %v1484 = vunpack.c.h.b16 %v1408
    %v1485 = vunpack.c.l.b16 %v1409
    %v1486 = vunpack.c.l.b16 %v1410
    %v1487 = vunpack.c.h.b16 %v1410
    %v1488 = vunpack.c.l.b16 %v1411
    %v1489 = vunpack.c.l.b16 %v1412
    %v1490 = vunpack.c.h.b16 %v1412
    %v1491 = vunpack.c.l.b16 %v1413
    %v1492 = vunpack.c.l.b16 %v1414
    %v1493 = vunpack.c.h.b16 %v1414
    %v1494 = vunpack.c.l.b16 %v1415
    %v1495 = vunpack.c.l.b16 %v1416
    %v1496 = vunpack.c.h.b16 %v1416
    %v1497 = vunpack.c.l.b16 %v1417
    %v1498 = vpack.c.b16 %v1453, %v1450
    %v1499 = vpack.c.b16 %v1454, %v1451
    %v1500 = vpack.c.b16 %v1455, %v1452
    %v1501 = vpack.c.b16 %v1459, %v1456
    %v1502 = vpack.c.b16 %v1460, %v1457
    %v1503 = vpack.c.b16 %v1461, %v1458
    %v1504 = vpack.c.b16 %v1465, %v1462
    %v1505 = vpack.c.b16 %v1466, %v1463
    %v1506 = vpack.c.b16 %v1467, %v1464
    %v1507 = vpack.c.b16 %v1471, %v1468
    %v1508 = vpack.c.b16 %v1472, %v1469
    %v1509 = vpack.c.b16 %v1473, %v1470
    %v1510 = vpack.c.b16 %v1477, %v1474
    %v1511 = vpack.c.b16 %v1478, %v1475
    %v1512 = vpack.c.b16 %v1479, %v1476
    %v1513 = vpack.c.b16 %v1483, %v1480
    %v1514 = vpack.c.b16 %v1484, %v1481
    %v1515 = vpack.c.b16 %v1485, %v1482
    %v1516 = vpack.c.b16 %v1489, %v1486
    %v1517 = vpack.c.b16 %v1490, %v1487
    %v1518 = vpack.c.b16 %v1491, %v1488
    %v1519 = vpack.c.b16 %v1495, %v1492
    %v1520 = vpack.c.b16 %v1496, %v1493
    %v1521 = vpack.c.b16 %v1497, %v1494
    %1546 = vmatprep.subr.bf16.mxu0 %v1499
    %1547 = vmatpush1.bf16.msra.mxu0 %v1498
    %1548 = vmatprep.subr.bf16.mxu0 %v1502
    %1549 = vmatpush1.bf16.msra.mxu0 %v1501
    %1550 = vmatprep.subr.bf16.mxu0 %v1505
    %1551 = vmatpush1.bf16.msra.mxu0 %v1504
    %1552 = vmatprep.subr.bf16.mxu0 %v1508
    %1553 = vmatpush1.bf16.msra.mxu0 %v1507
    %1554 = vmatprep.subr.bf16.mxu0 %v1511
    %1555 = vmatpush1.bf16.msra.mxu0 %v1510
    %1556 = vmatprep.subr.bf16.mxu0 %v1514
    %1557 = vmatpush1.bf16.msra.mxu0 %v1513
    %1558 = vmatprep.subr.bf16.mxu0 %v1517
    %1559 = vmatpush1.bf16.msra.mxu0 %v1516
    %1560 = vmatprep.subr.bf16.mxu0 %v1520
    %1561 = vmatpush1.bf16.msra.mxu0 %v1519
    %1562 = vmatprep.subr.bf16.mxu0 0
    %1563 = vmatpush1.bf16.msra.mxu0 0
    %1564 = vmatprep.subr.bf16.mxu0 0
    %1565 = vmatpush1.bf16.msra.mxu0 0
    %1566 = vmatprep.subr.bf16.mxu0 0
    %1567 = vmatpush1.bf16.msra.mxu0 0
    %1568 = vmatprep.subr.bf16.mxu0 0
    %1569 = vmatpush1.bf16.msra.mxu0 0
    %1570 = vmatprep.subr.bf16.mxu0 0
    %1571 = vmatpush1.bf16.msra.mxu0 0
    %1572 = vmatprep.subr.bf16.mxu0 0
    %1573 = vmatpush1.bf16.msra.mxu0 0
    %1574 = vmatprep.subr.bf16.mxu0 0
    %1575 = vmatpush1.bf16.msra.mxu0 0
    %1576 = vmatprep.subr.bf16.mxu0 0
    %1577 = vmatpush1.bf16.msra.mxu0 0
    %1578 = vmatprep.mubr.bf16.mxu0 0
    %1579 = vmatmul.mubr.bf16.gmra.mrb[0].mxu0 %v1370
    %v1580 = vpop.f32.mrb[0].mxu0
    %v1581 = vadd.f32 0.0, %v1580
    %v1582 = vpop.f32.mrb[0].mxu0
    %v1583 = vadd.f32 0.0, %v1582
    %v1584 = vpop.f32.mrb[0].mxu0
    %v1585 = vadd.f32 0.0, %v1584
    %v1586 = vpop.f32.mrb[0].mxu0
    %v1587 = vadd.f32 0.0, %v1586
    %1588 = vmatprep.mubr.bf16.mxu0 0
    %1589 = vmatmul.mubr.bf16.gmra.mrb[0].mxu0 %v1371
    %v1590 = vpop.f32.mrb[0].mxu0
    %v1591 = vadd.f32 0.0, %v1590
    %v1592 = vpop.f32.mrb[0].mxu0
    %v1593 = vadd.f32 0.0, %v1592
    %v1594 = vpop.f32.mrb[0].mxu0
    %v1595 = vadd.f32 0.0, %v1594
    %v1596 = vpop.f32.mrb[0].mxu0
    %v1597 = vadd.f32 0.0, %v1596
    %1598 = vmatprep.mubr.bf16.mxu0 0
    %1599 = vmatmul.mubr.bf16.gmra.mrb[0].mxu0 %v1372
    %v1600 = vpop.f32.mrb[0].mxu0
    %v1601 = vadd.f32 0.0, %v1600
    %v1602 = vpop.f32.mrb[0].mxu0
    %v1603 = vadd.f32 0.0, %v1602
    %v1604 = vpop.f32.mrb[0].mxu0
    %v1605 = vadd.f32 0.0, %v1604
    %v1606 = vpop.f32.mrb[0].mxu0
    %v1607 = vadd.f32 0.0, %v1606
    %1608 = vmatprep.mubr.bf16.mxu0 0
    %1609 = vmatmul.mubr.bf16.gmra.mrb[0].mxu0 %v1373
    %v1610 = vpop.f32.mrb[0].mxu0
    %v1611 = vadd.f32 0.0, %v1610
    %v1612 = vpop.f32.mrb[0].mxu0
    %v1613 = vadd.f32 0.0, %v1612
    %v1614 = vpop.f32.mrb[0].mxu0
    %v1615 = vadd.f32 0.0, %v1614
    %v1616 = vpop.f32.mrb[0].mxu0
    %v1617 = vadd.f32 0.0, %v1616
    %1618 = vmatprep.mubr.bf16.mxu0 0
    %1619 = vmatmul.mubr.bf16.gmra.mrb[0].mxu0 %v1374
    %v1620 = vpop.f32.mrb[0].mxu0
    %v1621 = vadd.f32 0.0, %v1620
    %v1622 = vpop.f32.mrb[0].mxu0
    %v1623 = vadd.f32 0.0, %v1622
    %v1624 = vpop.f32.mrb[0].mxu0
    %v1625 = vadd.f32 0.0, %v1624
    %v1626 = vpop.f32.mrb[0].mxu0
    %v1627 = vadd.f32 0.0, %v1626
    %1628 = vmatprep.mubr.bf16.mxu0 0
    %1629 = vmatmul.mubr.bf16.gmra.mrb[0].mxu0 %v1375
    %v1630 = vpop.f32.mrb[0].mxu0
    %v1631 = vadd.f32 0.0, %v1630
    %v1632 = vpop.f32.mrb[0].mxu0
    %v1633 = vadd.f32 0.0, %v1632
    %v1634 = vpop.f32.mrb[0].mxu0
    %v1635 = vadd.f32 0.0, %v1634
    %v1636 = vpop.f32.mrb[0].mxu0
    %v1637 = vadd.f32 0.0, %v1636
    %1638 = vmatprep.mubr.bf16.mxu0 0
    %1639 = vmatmul.mubr.bf16.gmra.mrb[0].mxu0 %v1376
    %v1640 = vpop.f32.mrb[0].mxu0
    %v1641 = vadd.f32 0.0, %v1640
    %v1642 = vpop.f32.mrb[0].mxu0
    %v1643 = vadd.f32 0.0, %v1642
    %v1644 = vpop.f32.mrb[0].mxu0
    %v1645 = vadd.f32 0.0, %v1644
    %v1646 = vpop.f32.mrb[0].mxu0
    %v1647 = vadd.f32 0.0, %v1646
    %1648 = vmatprep.mubr.bf16.mxu0 0
    %1649 = vmatmul.mubr.bf16.gmra.mrb[0].mxu0 %v1377
    %v1650 = vpop.f32.mrb[0].mxu0
    %v1651 = vadd.f32 0.0, %v1650
    %v1652 = vpop.f32.mrb[0].mxu0
    %v1653 = vadd.f32 0.0, %v1652
    %v1654 = vpop.f32.mrb[0].mxu0
    %v1655 = vadd.f32 0.0, %v1654
    %v1656 = vpop.f32.mrb[0].mxu0
    %v1657 = vadd.f32 0.0, %v1656
    %1658 = vmatprep.mubr.bf16.mxu0 0
    %1659 = vmatmul.mubr.bf16.gmra.mrb[0].mxu0 %v1378
    %v1660 = vpop.f32.mrb[0].mxu0
    %v1661 = vadd.f32 0.0, %v1660
    %v1662 = vpop.f32.mrb[0].mxu0
    %v1663 = vadd.f32 0.0, %v1662
    %v1664 = vpop.f32.mrb[0].mxu0
    %v1665 = vadd.f32 0.0, %v1664
    %v1666 = vpop.f32.mrb[0].mxu0
    %v1667 = vadd.f32 0.0, %v1666
    %1668 = vmatprep.mubr.bf16.mxu0 0
    %1669 = vmatmul.mubr.bf16.gmra.mrb[0].mxu0 %v1379
    %v1670 = vpop.f32.mrb[0].mxu0
    %v1671 = vadd.f32 0.0, %v1670
    %v1672 = vpop.f32.mrb[0].mxu0
    %v1673 = vadd.f32 0.0, %v1672
    %v1674 = vpop.f32.mrb[0].mxu0
    %v1675 = vadd.f32 0.0, %v1674
    %v1676 = vpop.f32.mrb[0].mxu0
    %v1677 = vadd.f32 0.0, %v1676
    %1678 = vmatprep.mubr.bf16.mxu0 0
    %1679 = vmatmul.mubr.bf16.gmra.mrb[0].mxu0 %v1380
    %v1680 = vpop.f32.mrb[0].mxu0
    %v1681 = vadd.f32 0.0, %v1680
    %v1682 = vpop.f32.mrb[0].mxu0
    %v1683 = vadd.f32 0.0, %v1682
    %v1684 = vpop.f32.mrb[0].mxu0
    %v1685 = vadd.f32 0.0, %v1684
    %v1686 = vpop.f32.mrb[0].mxu0
    %v1687 = vadd.f32 0.0, %v1686
    %1688 = vmatprep.mubr.bf16.mxu0 0
    %1689 = vmatmul.mubr.bf16.gmra.mrb[0].mxu0 %v1381
    %v1690 = vpop.f32.mrb[0].mxu0
    %v1691 = vadd.f32 0.0, %v1690
    %v1692 = vpop.f32.mrb[0].mxu0
    %v1693 = vadd.f32 0.0, %v1692
    %v1694 = vpop.f32.mrb[0].mxu0
    %v1695 = vadd.f32 0.0, %v1694
    %v1696 = vpop.f32.mrb[0].mxu0
    %v1697 = vadd.f32 0.0, %v1696
    %1698 = vmatprep.mubr.bf16.mxu0 0
    %1699 = vmatmul.mubr.bf16.gmra.mrb[0].mxu0 %v1382
    %v1700 = vpop.f32.mrb[0].mxu0
    %v1701 = vadd.f32 0.0, %v1700
    %v1702 = vpop.f32.mrb[0].mxu0
    %v1703 = vadd.f32 0.0, %v1702
    %v1704 = vpop.f32.mrb[0].mxu0
    %v1705 = vadd.f32 0.0, %v1704
    %v1706 = vpop.f32.mrb[0].mxu0
    %v1707 = vadd.f32 0.0, %v1706
    %1708 = vmatprep.mubr.bf16.mxu0 0
    %1709 = vmatmul.mubr.bf16.gmra.mrb[0].mxu0 %v1383
    %v1710 = vpop.f32.mrb[0].mxu0
    %v1711 = vadd.f32 0.0, %v1710
    %v1712 = vpop.f32.mrb[0].mxu0
    %v1713 = vadd.f32 0.0, %v1712
    %v1714 = vpop.f32.mrb[0].mxu0
    %v1715 = vadd.f32 0.0, %v1714
    %v1716 = vpop.f32.mrb[0].mxu0
    %v1717 = vadd.f32 0.0, %v1716
    %1718 = vmatprep.mubr.bf16.mxu0 0
    %1719 = vmatmul.mubr.bf16.gmra.mrb[0].mxu0 %v1384
    %v1720 = vpop.f32.mrb[0].mxu0
    %v1721 = vadd.f32 0.0, %v1720
    %v1722 = vpop.f32.mrb[0].mxu0
    %v1723 = vadd.f32 0.0, %v1722
    %v1724 = vpop.f32.mrb[0].mxu0
    %v1725 = vadd.f32 0.0, %v1724
    %v1726 = vpop.f32.mrb[0].mxu0
    %v1727 = vadd.f32 0.0, %v1726
    %1728 = vmatprep.mubr.bf16.mxu0 0
    %1729 = vmatmul.mubr.bf16.gmra.mrb[0].mxu0 %v1385
    %v1730 = vpop.f32.mrb[0].mxu0
    %v1731 = vadd.f32 0.0, %v1730
    %v1732 = vpop.f32.mrb[0].mxu0
    %v1733 = vadd.f32 0.0, %v1732
    %v1734 = vpop.f32.mrb[0].mxu0
    %v1735 = vadd.f32 0.0, %v1734
    %v1736 = vpop.f32.mrb[0].mxu0
    %v1737 = vadd.f32 0.0, %v1736
    %1738 = vdwg.mxu0
    %1739 = vmatprep.subr.bf16.mxu0 0
    %1740 = vmatpush1.bf16.msra.mxu0 %v1500
    %1741 = vmatprep.subr.bf16.mxu0 0
    %1742 = vmatpush1.bf16.msra.mxu0 %v1503
    %1743 = vmatprep.subr.bf16.mxu0 0
    %1744 = vmatpush1.bf16.msra.mxu0 %v1506
    %1745 = vmatprep.subr.bf16.mxu0 0
    %1746 = vmatpush1.bf16.msra.mxu0 %v1509
    %1747 = vmatprep.subr.bf16.mxu0 0
    %1748 = vmatpush1.bf16.msra.mxu0 %v1512
    %1749 = vmatprep.subr.bf16.mxu0 0
    %1750 = vmatpush1.bf16.msra.mxu0 %v1515
    %1751 = vmatprep.subr.bf16.mxu0 0
    %1752 = vmatpush1.bf16.msra.mxu0 %v1518
    %1753 = vmatprep.subr.bf16.mxu0 0
    %1754 = vmatpush1.bf16.msra.mxu0 %v1521
    %1755 = vmatprep.subr.bf16.mxu0 0
    %1756 = vmatpush1.bf16.msra.mxu0 0
    %1757 = vmatprep.subr.bf16.mxu0 0
    %1758 = vmatpush1.bf16.msra.mxu0 0
    %1759 = vmatprep.subr.bf16.mxu0 0
    %1760 = vmatpush1.bf16.msra.mxu0 0
    %1761 = vmatprep.subr.bf16.mxu0 0
    %1762 = vmatpush1.bf16.msra.mxu0 0
    %1763 = vmatprep.subr.bf16.mxu0 0
    %1764 = vmatpush1.bf16.msra.mxu0 0
    %1765 = vmatprep.subr.bf16.mxu0 0
    %1766 = vmatpush1.bf16.msra.mxu0 0
    %1767 = vmatprep.subr.bf16.mxu0 0
    %1768 = vmatpush1.bf16.msra.mxu0 0
    %1769 = vmatprep.subr.bf16.mxu0 0
    %1770 = vmatpush1.bf16.msra.mxu0 0
    %1771 = vmatprep.mubr.bf16.mxu0 0
    %1772 = vmatmul.mubr.bf16.gmra.mrb[0].mxu0 %v1370
    %v1773 = vpop.f32.mrb[0].mxu0
    %v1774 = vadd.f32 0.0, %v1773
    %v1775 = vpop.f32.mrb[0].mxu0
    %v1776 = vpop.f32.mrb[0].mxu0
    %v1777 = vadd.f32 0.0, %v1776
    %v1778 = vpop.f32.mrb[0].mxu0
    %1779 = vmatprep.mubr.bf16.mxu0 0
    %1780 = vmatmul.mubr.bf16.gmra.mrb[0].mxu0 %v1371
    %v1781 = vpop.f32.mrb[0].mxu0
    %v1782 = vadd.f32 0.0, %v1781
    %v1783 = vpop.f32.mrb[0].mxu0
    %v1784 = vpop.f32.mrb[0].mxu0
    %v1785 = vadd.f32 0.0, %v1784
    %v1786 = vpop.f32.mrb[0].mxu0
    %1787 = vmatprep.mubr.bf16.mxu0 0
    %1788 = vmatmul.mubr.bf16.gmra.mrb[0].mxu0 %v1372
    %v1789 = vpop.f32.mrb[0].mxu0
    %v1790 = vadd.f32 0.0, %v1789
    %v1791 = vpop.f32.mrb[0].mxu0
    %v1792 = vpop.f32.mrb[0].mxu0
    %v1793 = vadd.f32 0.0, %v1792
    %v1794 = vpop.f32.mrb[0].mxu0
    %1795 = vmatprep.mubr.bf16.mxu0 0
    %1796 = vmatmul.mubr.bf16.gmra.mrb[0].mxu0 %v1373
    %v1797 = vpop.f32.mrb[0].mxu0
    %v1798 = vadd.f32 0.0, %v1797
    %v1799 = vpop.f32.mrb[0].mxu0
    %v1800 = vpop.f32.mrb[0].mxu0
    %v1801 = vadd.f32 0.0, %v1800
    %v1802 = vpop.f32.mrb[0].mxu0
    %1803 = vmatprep.mubr.bf16.mxu0 0
    %1804 = vmatmul.mubr.bf16.gmra.mrb[0].mxu0 %v1374
    %v1805 = vpop.f32.mrb[0].mxu0
    %v1806 = vadd.f32 0.0, %v1805
    %v1807 = vpop.f32.mrb[0].mxu0
    %v1808 = vpop.f32.mrb[0].mxu0
    %v1809 = vadd.f32 0.0, %v1808
    %v1810 = vpop.f32.mrb[0].mxu0
    %1811 = vmatprep.mubr.bf16.mxu0 0
    %1812 = vmatmul.mubr.bf16.gmra.mrb[0].mxu0 %v1375
    %v1813 = vpop.f32.mrb[0].mxu0
    %v1814 = vadd.f32 0.0, %v1813
    %v1815 = vpop.f32.mrb[0].mxu0
    %v1816 = vpop.f32.mrb[0].mxu0
    %v1817 = vadd.f32 0.0, %v1816
    %v1818 = vpop.f32.mrb[0].mxu0
    %1819 = vmatprep.mubr.bf16.mxu0 0
    %1820 = vmatmul.mubr.bf16.gmra.mrb[0].mxu0 %v1376
    %v1821 = vpop.f32.mrb[0].mxu0
    %v1822 = vadd.f32 0.0, %v1821
    %v1823 = vpop.f32.mrb[0].mxu0
    %v1824 = vpop.f32.mrb[0].mxu0
    %v1825 = vadd.f32 0.0, %v1824
    %v1826 = vpop.f32.mrb[0].mxu0
    %1827 = vmatprep.mubr.bf16.mxu0 0
    %1828 = vmatmul.mubr.bf16.gmra.mrb[0].mxu0 %v1377
    %v1829 = vpop.f32.mrb[0].mxu0
    %v1830 = vadd.f32 0.0, %v1829
    %v1831 = vpop.f32.mrb[0].mxu0
    %v1832 = vpop.f32.mrb[0].mxu0
    %v1833 = vadd.f32 0.0, %v1832
    %v1834 = vpop.f32.mrb[0].mxu0
    %1835 = vmatprep.mubr.bf16.mxu0 0
    %1836 = vmatmul.mubr.bf16.gmra.mrb[0].mxu0 %v1378
    %v1837 = vpop.f32.mrb[0].mxu0
    %v1838 = vadd.f32 0.0, %v1837
    %v1839 = vpop.f32.mrb[0].mxu0
    %v1840 = vpop.f32.mrb[0].mxu0
    %v1841 = vadd.f32 0.0, %v1840
    %v1842 = vpop.f32.mrb[0].mxu0
    %1843 = vmatprep.mubr.bf16.mxu0 0
    %1844 = vmatmul.mubr.bf16.gmra.mrb[0].mxu0 %v1379
    %v1845 = vpop.f32.mrb[0].mxu0
    %v1846 = vadd.f32 0.0, %v1845
    %v1847 = vpop.f32.mrb[0].mxu0
    %v1848 = vpop.f32.mrb[0].mxu0
    %v1849 = vadd.f32 0.0, %v1848
    %v1850 = vpop.f32.mrb[0].mxu0
    %1851 = vmatprep.mubr.bf16.mxu0 0
    %1852 = vmatmul.mubr.bf16.gmra.mrb[0].mxu0 %v1380
    %v1853 = vpop.f32.mrb[0].mxu0
    %v1854 = vadd.f32 0.0, %v1853
    %v1855 = vpop.f32.mrb[0].mxu0
    %v1856 = vpop.f32.mrb[0].mxu0
    %v1857 = vadd.f32 0.0, %v1856
    %v1858 = vpop.f32.mrb[0].mxu0
    %1859 = vmatprep.mubr.bf16.mxu0 0
    %1860 = vmatmul.mubr.bf16.gmra.mrb[0].mxu0 %v1381
    %v1861 = vpop.f32.mrb[0].mxu0
    %v1862 = vadd.f32 0.0, %v1861
    %v1863 = vpop.f32.mrb[0].mxu0
    %v1864 = vpop.f32.mrb[0].mxu0
    %v1865 = vadd.f32 0.0, %v1864
    %v1866 = vpop.f32.mrb[0].mxu0
    %1867 = vmatprep.mubr.bf16.mxu0 0
    %1868 = vmatmul.mubr.bf16.gmra.mrb[0].mxu0 %v1382
    %v1869 = vpop.f32.mrb[0].mxu0
    %v1870 = vadd.f32 0.0, %v1869
    %v1871 = vpop.f32.mrb[0].mxu0
    %v1872 = vpop.f32.mrb[0].mxu0
    %v1873 = vadd.f32 0.0, %v1872
    %v1874 = vpop.f32.mrb[0].mxu0
    %1875 = vmatprep.mubr.bf16.mxu0 0
    %1876 = vmatmul.mubr.bf16.gmra.mrb[0].mxu0 %v1383
    %v1877 = vpop.f32.mrb[0].mxu0
    %v1878 = vadd.f32 0.0, %v1877
    %v1879 = vpop.f32.mrb[0].mxu0
    %v1880 = vpop.f32.mrb[0].mxu0
    %v1881 = vadd.f32 0.0, %v1880
    %v1882 = vpop.f32.mrb[0].mxu0
    %1883 = vmatprep.mubr.bf16.mxu0 0
    %1884 = vmatmul.mubr.bf16.gmra.mrb[0].mxu0 %v1384
    %v1885 = vpop.f32.mrb[0].mxu0
    %v1886 = vadd.f32 0.0, %v1885
    %v1887 = vpop.f32.mrb[0].mxu0
    %v1888 = vpop.f32.mrb[0].mxu0
    %v1889 = vadd.f32 0.0, %v1888
    %v1890 = vpop.f32.mrb[0].mxu0
    %1891 = vmatprep.mubr.bf16.mxu0 0
    %1892 = vmatmul.mubr.bf16.gmra.mrb[0].mxu0 %v1385
    %v1893 = vpop.f32.mrb[0].mxu0
    %v1894 = vadd.f32 0.0, %v1893
    %v1895 = vpop.f32.mrb[0].mxu0
    %v1896 = vpop.f32.mrb[0].mxu0
    %v1897 = vadd.f32 0.0, %v1896
    %v1898 = vpop.f32.mrb[0].mxu0
    %1899 = vdwg.mxu0
    %v1900 = vpack.c.bf16 %v1585, %v1581
    %v1901 = vpack.c.bf16 %v1587, %v1583
    %v1902 = vpack.c.bf16 %v1777, %v1774
    %v1903 = vpack.c.bf16 %v1595, %v1591
    %v1904 = vpack.c.bf16 %v1597, %v1593
    %v1905 = vpack.c.bf16 %v1785, %v1782
    %v1906 = vpack.c.bf16 %v1605, %v1601
    %v1907 = vpack.c.bf16 %v1607, %v1603
    %v1908 = vpack.c.bf16 %v1793, %v1790
    %v1909 = vpack.c.bf16 %v1615, %v1611
    %v1910 = vpack.c.bf16 %v1617, %v1613
    %v1911 = vpack.c.bf16 %v1801, %v1798
    %v1912 = vpack.c.bf16 %v1625, %v1621
    %v1913 = vpack.c.bf16 %v1627, %v1623
    %v1914 = vpack.c.bf16 %v1809, %v1806
    %v1915 = vpack.c.bf16 %v1635, %v1631
    %v1916 = vpack.c.bf16 %v1637, %v1633
    %v1917 = vpack.c.bf16 %v1817, %v1814
    %v1918 = vpack.c.bf16 %v1645, %v1641
    %v1919 = vpack.c.bf16 %v1647, %v1643
    %v1920 = vpack.c.bf16 %v1825, %v1822
    %v1921 = vpack.c.bf16 %v1655, %v1651
    %v1922 = vpack.c.bf16 %v1657, %v1653
    %v1923 = vpack.c.bf16 %v1833, %v1830
    %v1924 = vpack.c.bf16 %v1665, %v1661
    %v1925 = vpack.c.bf16 %v1667, %v1663
    %v1926 = vpack.c.bf16 %v1841, %v1838
    %v1927 = vpack.c.bf16 %v1675, %v1671
    %v1928 = vpack.c.bf16 %v1677, %v1673
    %v1929 = vpack.c.bf16 %v1849, %v1846
    %v1930 = vpack.c.bf16 %v1685, %v1681
    %v1931 = vpack.c.bf16 %v1687, %v1683
    %v1932 = vpack.c.bf16 %v1857, %v1854
    %v1933 = vpack.c.bf16 %v1695, %v1691
    %v1934 = vpack.c.bf16 %v1697, %v1693
    %v1935 = vpack.c.bf16 %v1865, %v1862
    %v1936 = vpack.c.bf16 %v1705, %v1701
    %v1937 = vpack.c.bf16 %v1707, %v1703
    %v1938 = vpack.c.bf16 %v1873, %v1870
    %v1939 = vpack.c.bf16 %v1715, %v1711
    %v1940 = vpack.c.bf16 %v1717, %v1713
    %v1941 = vpack.c.bf16 %v1881, %v1878
    %v1942 = vpack.c.bf16 %v1725, %v1721
    %v1943 = vpack.c.bf16 %v1727, %v1723
    %v1944 = vpack.c.bf16 %v1889, %v1886
    %v1945 = vpack.c.bf16 %v1735, %v1731
    %v1946 = vpack.c.bf16 %v1737, %v1733
    %v1947 = vpack.c.bf16 %v1897, %v1894
    %vm1948 = vcmask 523264
    %v1950 = vsel %vm1948, %v1900, 0
    %v1953 = vsel %vm1948, %v1903, 0
    %v1956 = vsel %vm1948, %v1906, 0
    %v1959 = vsel %vm1948, %v1909, 0
    %v1962 = vsel %vm1948, %v1912, 0
    %v1965 = vsel %vm1948, %v1915, 0
    %v1968 = vsel %vm1948, %v1918, 0
    %v1971 = vsel %vm1948, %v1921, 0
    %v1974 = vsel %vm1948, %v1901, 0
    %v1977 = vsel %vm1948, %v1904, 0
    %v1980 = vsel %vm1948, %v1907, 0
    %v1983 = vsel %vm1948, %v1910, 0
    %v1986 = vsel %vm1948, %v1913, 0
    %v1989 = vsel %vm1948, %v1916, 0
    %v1992 = vsel %vm1948, %v1919, 0
    %v1995 = vsel %vm1948, %v1922, 0
    %1997 = vmatprep.subr.bf16.mxu0 0
    %1998 = vmatpush1.bf16.xpose.msra.mxu0 %v1974
    %1999 = vmatprep.subr.bf16.mxu0 0
    %2000 = vmatpush1.bf16.xpose.msra.mxu0 %v1977
    %2001 = vmatprep.subr.bf16.mxu0 0
    %2002 = vmatpush1.bf16.xpose.msra.mxu0 %v1980
    %2003 = vmatprep.subr.bf16.mxu0 0
    %2004 = vmatpush1.bf16.xpose.msra.mxu0 %v1983
    %2005 = vmatprep.subr.bf16.mxu0 0
    %2006 = vmatpush1.bf16.xpose.msra.mxu0 %v1986
    %2007 = vmatprep.subr.bf16.mxu0 0
    %2008 = vmatpush1.bf16.xpose.msra.mxu0 %v1989
    %2009 = vmatprep.subr.bf16.mxu0 0
    %2010 = vmatpush1.bf16.xpose.msra.mxu0 %v1992
    %2011 = vmatprep.subr.bf16.mxu0 0
    %2012 = vmatpush1.bf16.xpose.msra.mxu0 %v1995
    %2013 = vmatprep.subr.bf16.mxu0 0
    %2014 = vmatpush1.bf16.xpose.msra.mxu0 0
    %2015 = vmatprep.subr.bf16.mxu0 0
    %2016 = vmatpush1.bf16.xpose.msra.mxu0 0
    %2017 = vmatprep.subr.bf16.mxu0 0
    %2018 = vmatpush1.bf16.xpose.msra.mxu0 0
    %2019 = vmatprep.subr.bf16.mxu0 0
    %2020 = vmatpush1.bf16.xpose.msra.mxu0 0
    %2021 = vmatprep.subr.bf16.mxu0 0
    %2022 = vmatpush1.bf16.xpose.msra.mxu0 0
    %2023 = vmatprep.subr.bf16.mxu0 0
    %2024 = vmatpush1.bf16.xpose.msra.mxu0 0
    %2025 = vmatprep.subr.bf16.mxu0 0
    %2026 = vmatpush1.bf16.xpose.msra.mxu0 0
    %2027 = vmatprep.subr.bf16.mxu0 0
    %2028 = vmatpush1.bf16.xpose.msra.mxu0 0
    %2029 = vmatprep.mubr.bf16.mxu0 0
    %2030 = vmatmul.mubr.bf16.gmra.mrb[0].mxu0 %v1950
    %v2031 = vpop.f32.mrb[0].mxu0
    %v2032 = vadd.f32 0.0, %v2031
    %v2033 = vpop.f32.mrb[0].mxu0
    %v2034 = vpop.f32.mrb[0].mxu0
    %v2035 = vadd.f32 0.0, %v2034
    %v2036 = vpop.f32.mrb[0].mxu0
    %2037 = vmatprep.mubr.bf16.mxu0 0
    %2038 = vmatmul.mubr.bf16.gmra.mrb[0].mxu0 %v1953
    %v2039 = vpop.f32.mrb[0].mxu0
    %v2040 = vadd.f32 0.0, %v2039
    %v2041 = vpop.f32.mrb[0].mxu0
    %v2042 = vpop.f32.mrb[0].mxu0
    %v2043 = vadd.f32 0.0, %v2042
    %v2044 = vpop.f32.mrb[0].mxu0
    %2045 = vmatprep.mubr.bf16.mxu0 0
    %2046 = vmatmul.mubr.bf16.gmra.mrb[0].mxu0 %v1956
    %v2047 = vpop.f32.mrb[0].mxu0
    %v2048 = vadd.f32 0.0, %v2047
    %v2049 = vpop.f32.mrb[0].mxu0
    %v2050 = vpop.f32.mrb[0].mxu0
    %v2051 = vadd.f32 0.0, %v2050
    %v2052 = vpop.f32.mrb[0].mxu0
    %2053 = vmatprep.mubr.bf16.mxu0 0
    %2054 = vmatmul.mubr.bf16.gmra.mrb[0].mxu0 %v1959
    %v2055 = vpop.f32.mrb[0].mxu0
    %v2056 = vadd.f32 0.0, %v2055
    %v2057 = vpop.f32.mrb[0].mxu0
    %v2058 = vpop.f32.mrb[0].mxu0
    %v2059 = vadd.f32 0.0, %v2058
    %v2060 = vpop.f32.mrb[0].mxu0
    %2061 = vmatprep.mubr.bf16.mxu0 0
    %2062 = vmatmul.mubr.bf16.gmra.mrb[0].mxu0 %v1962
    %v2063 = vpop.f32.mrb[0].mxu0
    %v2064 = vadd.f32 0.0, %v2063
    %v2065 = vpop.f32.mrb[0].mxu0
    %v2066 = vpop.f32.mrb[0].mxu0
    %v2067 = vadd.f32 0.0, %v2066
    %v2068 = vpop.f32.mrb[0].mxu0
    %2069 = vmatprep.mubr.bf16.mxu0 0
    %2070 = vmatmul.mubr.bf16.gmra.mrb[0].mxu0 %v1965
    %v2071 = vpop.f32.mrb[0].mxu0
    %v2072 = vadd.f32 0.0, %v2071
    %v2073 = vpop.f32.mrb[0].mxu0
    %v2074 = vpop.f32.mrb[0].mxu0
    %v2075 = vadd.f32 0.0, %v2074
    %v2076 = vpop.f32.mrb[0].mxu0
    %2077 = vmatprep.mubr.bf16.mxu0 0
    %2078 = vmatmul.mubr.bf16.gmra.mrb[0].mxu0 %v1968
    %v2079 = vpop.f32.mrb[0].mxu0
    %v2080 = vadd.f32 0.0, %v2079
    %v2081 = vpop.f32.mrb[0].mxu0
    %v2082 = vpop.f32.mrb[0].mxu0
    %v2083 = vadd.f32 0.0, %v2082
    %v2084 = vpop.f32.mrb[0].mxu0
    %2085 = vmatprep.mubr.bf16.mxu0 0
    %2086 = vmatmul.mubr.bf16.gmra.mrb[0].mxu0 %v1971
    %v2087 = vpop.f32.mrb[0].mxu0
    %v2088 = vadd.f32 0.0, %v2087
    %v2089 = vpop.f32.mrb[0].mxu0
    %v2090 = vpop.f32.mrb[0].mxu0
    %v2091 = vadd.f32 0.0, %v2090
    %v2092 = vpop.f32.mrb[0].mxu0
    %2093 = vdwg.mxu0
    %2094 = vmax.xlane.f32.xlu0 %v2032
    %v2095 = vpop.xlane.xlu0 %2094
    %2096 = vmax.xlane.f32.xlu0 %v2035
    %v2097 = vpop.xlane.xlu0 %2096
    %2098 = vmax.xlane.f32.xlu0 %v2040
    %v2099 = vpop.xlane.xlu0 %2098
    %2100 = vmax.xlane.f32.xlu0 %v2043
    %v2101 = vpop.xlane.xlu0 %2100
    %2102 = vmax.xlane.f32.xlu0 %v2048
    %v2103 = vpop.xlane.xlu0 %2102
    %2104 = vmax.xlane.f32.xlu0 %v2051
    %v2105 = vpop.xlane.xlu0 %2104
    %2106 = vmax.xlane.f32.xlu0 %v2056
    %v2107 = vpop.xlane.xlu0 %2106
    %2108 = vmax.xlane.f32.xlu0 %v2059
    %v2109 = vpop.xlane.xlu0 %2108
    %2110 = vmax.xlane.f32.xlu0 %v2064
    %v2111 = vpop.xlane.xlu0 %2110
    %2112 = vmax.xlane.f32.xlu0 %v2067
    %v2113 = vpop.xlane.xlu0 %2112
    %2114 = vmax.xlane.f32.xlu0 %v2072
    %v2115 = vpop.xlane.xlu0 %2114
    %2116 = vmax.xlane.f32.xlu0 %v2075
    %v2117 = vpop.xlane.xlu0 %2116
    %2118 = vmax.xlane.f32.xlu0 %v2080
    %v2119 = vpop.xlane.xlu0 %2118
    %2120 = vmax.xlane.f32.xlu0 %v2083
    %v2121 = vpop.xlane.xlu0 %2120
    %2122 = vmax.xlane.f32.xlu0 %v2088
    %v2123 = vpop.xlane.xlu0 %2122
    %2124 = vmax.xlane.f32.xlu0 %v2091
    %v2125 = vpop.xlane.xlu0 %2124
    %v2126 = vsub.f32 %v2032, %v2095
    %v2127 = vsub.f32 %v2035, %v2097
    %v2128 = vsub.f32 %v2040, %v2099
    %v2129 = vsub.f32 %v2043, %v2101
    %v2130 = vsub.f32 %v2048, %v2103
    %v2131 = vsub.f32 %v2051, %v2105
    %v2132 = vsub.f32 %v2056, %v2107
    %v2133 = vsub.f32 %v2059, %v2109
    %v2134 = vsub.f32 %v2064, %v2111
    %v2135 = vsub.f32 %v2067, %v2113
    %v2136 = vsub.f32 %v2072, %v2115
    %v2137 = vsub.f32 %v2075, %v2117
    %v2138 = vsub.f32 %v2080, %v2119
    %v2139 = vsub.f32 %v2083, %v2121
    %v2140 = vsub.f32 %v2088, %v2123
    %v2141 = vsub.f32 %v2091, %v2125
    %v2142 = vmul.f32 %v2126, 1.442695
    %v2143 = vpow.pop %v2142
    %v2144 = vmul.f32 %v2127, 1.442695
    %v2145 = vpow.pop %v2144
    %v2146 = vmul.f32 %v2128, 1.442695
    %v2147 = vpow.pop %v2146
    %v2148 = vmul.f32 %v2129, 1.442695
    %v2149 = vpow.pop %v2148
    %v2150 = vmul.f32 %v2130, 1.442695
    %v2151 = vpow.pop %v2150
    %v2152 = vmul.f32 %v2131, 1.442695
    %v2153 = vpow.pop %v2152
    %v2154 = vmul.f32 %v2132, 1.442695
    %v2155 = vpow.pop %v2154
    %v2156 = vmul.f32 %v2133, 1.442695
    %v2157 = vpow.pop %v2156
    %v2158 = vmul.f32 %v2134, 1.442695
    %v2159 = vpow.pop %v2158
    %v2160 = vmul.f32 %v2135, 1.442695
    %v2161 = vpow.pop %v2160
    %v2162 = vmul.f32 %v2136, 1.442695
    %v2163 = vpow.pop %v2162
    %v2164 = vmul.f32 %v2137, 1.442695
    %v2165 = vpow.pop %v2164
    %v2166 = vmul.f32 %v2138, 1.442695
    %v2167 = vpow.pop %v2166
    %v2168 = vmul.f32 %v2139, 1.442695
    %v2169 = vpow.pop %v2168
    %v2170 = vmul.f32 %v2140, 1.442695
    %v2171 = vpow.pop %v2170
    %v2172 = vmul.f32 %v2141, 1.442695
    %v2173 = vpow.pop %v2172
    %2174 = vadd.xlane.f32.xlu0 %v2143
    %v2175 = vpop.xlane.xlu0 %2174
    %2176 = vadd.xlane.f32.xlu0 %v2145
    %v2177 = vpop.xlane.xlu0 %2176
    %2178 = vadd.xlane.f32.xlu0 %v2147
    %v2179 = vpop.xlane.xlu0 %2178
    %2180 = vadd.xlane.f32.xlu0 %v2149
    %v2181 = vpop.xlane.xlu0 %2180
    %2182 = vadd.xlane.f32.xlu0 %v2151
    %v2183 = vpop.xlane.xlu0 %2182
    %2184 = vadd.xlane.f32.xlu0 %v2153
    %v2185 = vpop.xlane.xlu0 %2184
    %2186 = vadd.xlane.f32.xlu0 %v2155
    %v2187 = vpop.xlane.xlu0 %2186
    %2188 = vadd.xlane.f32.xlu0 %v2157
    %v2189 = vpop.xlane.xlu0 %2188
    %2190 = vadd.xlane.f32.xlu0 %v2159
    %v2191 = vpop.xlane.xlu0 %2190
    %2192 = vadd.xlane.f32.xlu0 %v2161
    %v2193 = vpop.xlane.xlu0 %2192
    %2194 = vadd.xlane.f32.xlu0 %v2163
    %v2195 = vpop.xlane.xlu0 %2194
    %2196 = vadd.xlane.f32.xlu0 %v2165
    %v2197 = vpop.xlane.xlu0 %2196
    %2198 = vadd.xlane.f32.xlu0 %v2167
    %v2199 = vpop.xlane.xlu0 %2198
    %2200 = vadd.xlane.f32.xlu0 %v2169
    %v2201 = vpop.xlane.xlu0 %2200
    %2202 = vadd.xlane.f32.xlu0 %v2171
    %v2203 = vpop.xlane.xlu0 %2202
    %2204 = vadd.xlane.f32.xlu0 %v2173
    %v2205 = vpop.xlane.xlu0 %2204
    %v2206 = vpack.c.bf16 %v2145, %v2143
    %v2207 = vpack.c.bf16 %v2149, %v2147
    %v2208 = vpack.c.bf16 %v2153, %v2151
    %v2209 = vpack.c.bf16 %v2157, %v2155
    %v2210 = vpack.c.bf16 %v2161, %v2159
    %v2211 = vpack.c.bf16 %v2165, %v2163
    %v2212 = vpack.c.bf16 %v2169, %v2167
    %v2213 = vpack.c.bf16 %v2173, %v2171
    %2214 = vmatprep.subr.bf16.mxu0 0
    %2215 = vmatpush1.bf16.msra.mxu0 %v1902
    %2216 = vmatprep.subr.bf16.mxu0 0
    %2217 = vmatpush1.bf16.msra.mxu0 %v1905
    %2218 = vmatprep.subr.bf16.mxu0 0
    %2219 = vmatpush1.bf16.msra.mxu0 %v1908
    %2220 = vmatprep.subr.bf16.mxu0 0
    %2221 = vmatpush1.bf16.msra.mxu0 %v1911
    %2222 = vmatprep.subr.bf16.mxu0 0
    %2223 = vmatpush1.bf16.msra.mxu0 %v1914
    %2224 = vmatprep.subr.bf16.mxu0 0
    %2225 = vmatpush1.bf16.msra.mxu0 %v1917
    %2226 = vmatprep.subr.bf16.mxu0 0
    %2227 = vmatpush1.bf16.msra.mxu0 %v1920
    %2228 = vmatprep.subr.bf16.mxu0 0
    %2229 = vmatpush1.bf16.msra.mxu0 %v1923
    %2230 = vmatprep.subr.bf16.mxu0 0
    %2231 = vmatpush1.bf16.msra.mxu0 0
    %2232 = vmatprep.subr.bf16.mxu0 0
    %2233 = vmatpush1.bf16.msra.mxu0 0
    %2234 = vmatprep.subr.bf16.mxu0 0
    %2235 = vmatpush1.bf16.msra.mxu0 0
    %2236 = vmatprep.subr.bf16.mxu0 0
    %2237 = vmatpush1.bf16.msra.mxu0 0
    %2238 = vmatprep.subr.bf16.mxu0 0
    %2239 = vmatpush1.bf16.msra.mxu0 0
    %2240 = vmatprep.subr.bf16.mxu0 0
    %2241 = vmatpush1.bf16.msra.mxu0 0
    %2242 = vmatprep.subr.bf16.mxu0 0
    %2243 = vmatpush1.bf16.msra.mxu0 0
    %2244 = vmatprep.subr.bf16.mxu0 0
    %2245 = vmatpush1.bf16.msra.mxu0 0
    %2246 = vmatprep.mubr.bf16.mxu0 0
    %2247 = vmatmul.mubr.bf16.gmra.mrb[0].mxu0 %v2206
    %v2248 = vpop.f32.mrb[0].mxu0
    %v2249 = vadd.f32 0.0, %v2248
    %v2250 = vpop.f32.mrb[0].mxu0
    %v2251 = vpop.f32.mrb[0].mxu0
    %v2252 = vadd.f32 0.0, %v2251
    %v2253 = vpop.f32.mrb[0].mxu0
    %2254 = vmatprep.mubr.bf16.mxu0 0
    %2255 = vmatmul.mubr.bf16.gmra.mrb[0].mxu0 %v2207
    %v2256 = vpop.f32.mrb[0].mxu0
    %v2257 = vadd.f32 0.0, %v2256
    %v2258 = vpop.f32.mrb[0].mxu0
    %v2259 = vpop.f32.mrb[0].mxu0
    %v2260 = vadd.f32 0.0, %v2259
    %v2261 = vpop.f32.mrb[0].mxu0
    %2262 = vmatprep.mubr.bf16.mxu0 0
    %2263 = vmatmul.mubr.bf16.gmra.mrb[0].mxu0 %v2208
    %v2264 = vpop.f32.mrb[0].mxu0
    %v2265 = vadd.f32 0.0, %v2264
    %v2266 = vpop.f32.mrb[0].mxu0
    %v2267 = vpop.f32.mrb[0].mxu0
    %v2268 = vadd.f32 0.0, %v2267
    %v2269 = vpop.f32.mrb[0].mxu0
    %2270 = vmatprep.mubr.bf16.mxu0 0
    %2271 = vmatmul.mubr.bf16.gmra.mrb[0].mxu0 %v2209
    %v2272 = vpop.f32.mrb[0].mxu0
    %v2273 = vadd.f32 0.0, %v2272
    %v2274 = vpop.f32.mrb[0].mxu0
    %v2275 = vpop.f32.mrb[0].mxu0
    %v2276 = vadd.f32 0.0, %v2275
    %v2277 = vpop.f32.mrb[0].mxu0
    %2278 = vmatprep.mubr.bf16.mxu0 0
    %2279 = vmatmul.mubr.bf16.gmra.mrb[0].mxu0 %v2210
    %v2280 = vpop.f32.mrb[0].mxu0
    %v2281 = vadd.f32 0.0, %v2280
    %v2282 = vpop.f32.mrb[0].mxu0
    %v2283 = vpop.f32.mrb[0].mxu0
    %v2284 = vadd.f32 0.0, %v2283
    %v2285 = vpop.f32.mrb[0].mxu0
    %2286 = vmatprep.mubr.bf16.mxu0 0
    %2287 = vmatmul.mubr.bf16.gmra.mrb[0].mxu0 %v2211
    %v2288 = vpop.f32.mrb[0].mxu0
    %v2289 = vadd.f32 0.0, %v2288
    %v2290 = vpop.f32.mrb[0].mxu0
    %v2291 = vpop.f32.mrb[0].mxu0
    %v2292 = vadd.f32 0.0, %v2291
    %v2293 = vpop.f32.mrb[0].mxu0
    %2294 = vmatprep.mubr.bf16.mxu0 0
    %2295 = vmatmul.mubr.bf16.gmra.mrb[0].mxu0 %v2212
    %v2296 = vpop.f32.mrb[0].mxu0
    %v2297 = vadd.f32 0.0, %v2296
    %v2298 = vpop.f32.mrb[0].mxu0
    %v2299 = vpop.f32.mrb[0].mxu0
    %v2300 = vadd.f32 0.0, %v2299
    %v2301 = vpop.f32.mrb[0].mxu0
    %2302 = vmatprep.mubr.bf16.mxu0 0
    %2303 = vmatmul.mubr.bf16.gmra.mrb[0].mxu0 %v2213
    %v2304 = vpop.f32.mrb[0].mxu0
    %v2305 = vadd.f32 0.0, %v2304
    %v2306 = vpop.f32.mrb[0].mxu0
    %v2307 = vpop.f32.mrb[0].mxu0
    %v2308 = vadd.f32 0.0, %v2307
    %v2309 = vpop.f32.mrb[0].mxu0
    %2310 = vdwg.mxu0
    %v2311 = vrcp.pop %v2175
    %v2312 = vrcp.pop %v2177
    %v2313 = vrcp.pop %v2179
    %v2314 = vrcp.pop %v2181
    %v2315 = vrcp.pop %v2183
    %v2316 = vrcp.pop %v2185
    %v2317 = vrcp.pop %v2187
    %v2318 = vrcp.pop %v2189
    %v2319 = vrcp.pop %v2191
    %v2320 = vrcp.pop %v2193
    %v2321 = vrcp.pop %v2195
    %v2322 = vrcp.pop %v2197
    %v2323 = vrcp.pop %v2199
    %v2324 = vrcp.pop %v2201
    %v2325 = vrcp.pop %v2203
    %v2326 = vrcp.pop %v2205
    %v2327 = vmul.f32 %v2249, %v2311
    %v2328 = vmul.f32 %v2252, %v2312
    %v2329 = vmul.f32 %v2257, %v2313
    %v2330 = vmul.f32 %v2260, %v2314
    %v2331 = vmul.f32 %v2265, %v2315
    %v2332 = vmul.f32 %v2268, %v2316
    %v2333 = vmul.f32 %v2273, %v2317
    %v2334 = vmul.f32 %v2276, %v2318
    %v2335 = vmul.f32 %v2281, %v2319
    %v2336 = vmul.f32 %v2284, %v2320
    %v2337 = vmul.f32 %v2289, %v2321
    %v2338 = vmul.f32 %v2292, %v2322
    %v2339 = vmul.f32 %v2297, %v2323
    %v2340 = vmul.f32 %v2300, %v2324
    %v2341 = vmul.f32 %v2305, %v2325
    %v2342 = vmul.f32 %v2308, %v2326
    %v2343 = vpack.c.bf16 %v2328, %v2327
    %v2344 = vpack.c.bf16 %v2330, %v2329
    %v2345 = vpack.c.bf16 %v2332, %v2331
    %v2346 = vpack.c.bf16 %v2334, %v2333
    %v2347 = vpack.c.bf16 %v2336, %v2335
    %v2348 = vpack.c.bf16 %v2338, %v2337
    %v2349 = vpack.c.bf16 %v2340, %v2339
    %v2350 = vpack.c.bf16 %v2342, %v2341
    %2359 = vrot.lane.b32.xlu0 %v1900, 64
    %v2360 = vpop.permute.xlu0 %2359
    %2361 = vrot.lane.b32.xlu0 %v1903, 64
    %v2362 = vpop.permute.xlu0 %2361
    %2363 = vrot.lane.b32.xlu0 %v1906, 64
    %v2364 = vpop.permute.xlu0 %2363
    %2365 = vrot.lane.b32.xlu0 %v1909, 64
    %v2366 = vpop.permute.xlu0 %2365
    %2367 = vrot.lane.b32.xlu0 %v1912, 64
    %v2368 = vpop.permute.xlu0 %2367
    %2369 = vrot.lane.b32.xlu0 %v1915, 64
    %v2370 = vpop.permute.xlu0 %2369
    %2371 = vrot.lane.b32.xlu0 %v1918, 64
    %v2372 = vpop.permute.xlu0 %2371
    %2373 = vrot.lane.b32.xlu0 %v1921, 64
    %v2374 = vpop.permute.xlu0 %2373
    %2383 = vrot.lane.b32.xlu0 %v1901, 64
    %v2384 = vpop.permute.xlu0 %2383
    %2385 = vrot.lane.b32.xlu0 %v1904, 64
    %v2386 = vpop.permute.xlu0 %2385
    %2387 = vrot.lane.b32.xlu0 %v1907, 64
    %v2388 = vpop.permute.xlu0 %2387
    %2389 = vrot.lane.b32.xlu0 %v1910, 64
    %v2390 = vpop.permute.xlu0 %2389
    %2391 = vrot.lane.b32.xlu0 %v1913, 64
    %v2392 = vpop.permute.xlu0 %2391
    %2393 = vrot.lane.b32.xlu0 %v1916, 64
    %v2394 = vpop.permute.xlu0 %2393
    %2395 = vrot.lane.b32.xlu0 %v1919, 64
    %v2396 = vpop.permute.xlu0 %2395
    %2397 = vrot.lane.b32.xlu0 %v1922, 64
    %v2398 = vpop.permute.xlu0 %2397
    %v2400 = vsel %vm1948, %v2360, 0
    %v2403 = vsel %vm1948, %v2362, 0
    %v2406 = vsel %vm1948, %v2364, 0
    %v2409 = vsel %vm1948, %v2366, 0
    %v2412 = vsel %vm1948, %v2368, 0
    %v2415 = vsel %vm1948, %v2370, 0
    %v2418 = vsel %vm1948, %v2372, 0
    %v2421 = vsel %vm1948, %v2374, 0
    %v2424 = vsel %vm1948, %v2384, 0
    %v2427 = vsel %vm1948, %v2386, 0
    %v2430 = vsel %vm1948, %v2388, 0
    %v2433 = vsel %vm1948, %v2390, 0
    %v2436 = vsel %vm1948, %v2392, 0
    %v2439 = vsel %vm1948, %v2394, 0
    %v2442 = vsel %vm1948, %v2396, 0
    %v2445 = vsel %vm1948, %v2398, 0
    %2447 = vmatprep.subr.bf16.mxu0 0
    %2448 = vmatpush1.bf16.xpose.msra.mxu0 %v2424
    %2449 = vmatprep.subr.bf16.mxu0 0
    %2450 = vmatpush1.bf16.xpose.msra.mxu0 %v2427
    %2451 = vmatprep.subr.bf16.mxu0 0
    %2452 = vmatpush1.bf16.xpose.msra.mxu0 %v2430
    %2453 = vmatprep.subr.bf16.mxu0 0
    %2454 = vmatpush1.bf16.xpose.msra.mxu0 %v2433
    %2455 = vmatprep.subr.bf16.mxu0 0
    %2456 = vmatpush1.bf16.xpose.msra.mxu0 %v2436
    %2457 = vmatprep.subr.bf16.mxu0 0
    %2458 = vmatpush1.bf16.xpose.msra.mxu0 %v2439
    %2459 = vmatprep.subr.bf16.mxu0 0
    %2460 = vmatpush1.bf16.xpose.msra.mxu0 %v2442
    %2461 = vmatprep.subr.bf16.mxu0 0
    %2462 = vmatpush1.bf16.xpose.msra.mxu0 %v2445
    %2463 = vmatprep.subr.bf16.mxu0 0
    %2464 = vmatpush1.bf16.xpose.msra.mxu0 0
    %2465 = vmatprep.subr.bf16.mxu0 0
    %2466 = vmatpush1.bf16.xpose.msra.mxu0 0
    %2467 = vmatprep.subr.bf16.mxu0 0
    %2468 = vmatpush1.bf16.xpose.msra.mxu0 0
    %2469 = vmatprep.subr.bf16.mxu0 0
    %2470 = vmatpush1.bf16.xpose.msra.mxu0 0
    %2471 = vmatprep.subr.bf16.mxu0 0
    %2472 = vmatpush1.bf16.xpose.msra.mxu0 0
    %2473 = vmatprep.subr.bf16.mxu0 0
    %2474 = vmatpush1.bf16.xpose.msra.mxu0 0
    %2475 = vmatprep.subr.bf16.mxu0 0
    %2476 = vmatpush1.bf16.xpose.msra.mxu0 0
    %2477 = vmatprep.subr.bf16.mxu0 0
    %2478 = vmatpush1.bf16.xpose.msra.mxu0 0
    %2479 = vmatprep.mubr.bf16.mxu0 0
    %2480 = vmatmul.mubr.bf16.gmra.mrb[0].mxu0 %v2400
    %v2481 = vpop.f32.mrb[0].mxu0
    %v2482 = vadd.f32 0.0, %v2481
    %v2483 = vpop.f32.mrb[0].mxu0
    %v2484 = vpop.f32.mrb[0].mxu0
    %v2485 = vadd.f32 0.0, %v2484
    %v2486 = vpop.f32.mrb[0].mxu0
    %2487 = vmatprep.mubr.bf16.mxu0 0
    %2488 = vmatmul.mubr.bf16.gmra.mrb[0].mxu0 %v2403
    %v2489 = vpop.f32.mrb[0].mxu0
    %v2490 = vadd.f32 0.0, %v2489
    %v2491 = vpop.f32.mrb[0].mxu0
    %v2492 = vpop.f32.mrb[0].mxu0
    %v2493 = vadd.f32 0.0, %v2492
    %v2494 = vpop.f32.mrb[0].mxu0
    %2495 = vmatprep.mubr.bf16.mxu0 0
    %2496 = vmatmul.mubr.bf16.gmra.mrb[0].mxu0 %v2406
    %v2497 = vpop.f32.mrb[0].mxu0
    %v2498 = vadd.f32 0.0, %v2497
    %v2499 = vpop.f32.mrb[0].mxu0
    %v2500 = vpop.f32.mrb[0].mxu0
    %v2501 = vadd.f32 0.0, %v2500
    %v2502 = vpop.f32.mrb[0].mxu0
    %2503 = vmatprep.mubr.bf16.mxu0 0
    %2504 = vmatmul.mubr.bf16.gmra.mrb[0].mxu0 %v2409
    %v2505 = vpop.f32.mrb[0].mxu0
    %v2506 = vadd.f32 0.0, %v2505
    %v2507 = vpop.f32.mrb[0].mxu0
    %v2508 = vpop.f32.mrb[0].mxu0
    %v2509 = vadd.f32 0.0, %v2508
    %v2510 = vpop.f32.mrb[0].mxu0
    %2511 = vmatprep.mubr.bf16.mxu0 0
    %2512 = vmatmul.mubr.bf16.gmra.mrb[0].mxu0 %v2412
    %v2513 = vpop.f32.mrb[0].mxu0
    %v2514 = vadd.f32 0.0, %v2513
    %v2515 = vpop.f32.mrb[0].mxu0
    %v2516 = vpop.f32.mrb[0].mxu0
    %v2517 = vadd.f32 0.0, %v2516
    %v2518 = vpop.f32.mrb[0].mxu0
    %2519 = vmatprep.mubr.bf16.mxu0 0
    %2520 = vmatmul.mubr.bf16.gmra.mrb[0].mxu0 %v2415
    %v2521 = vpop.f32.mrb[0].mxu0
    %v2522 = vadd.f32 0.0, %v2521
    %v2523 = vpop.f32.mrb[0].mxu0
    %v2524 = vpop.f32.mrb[0].mxu0
    %v2525 = vadd.f32 0.0, %v2524
    %v2526 = vpop.f32.mrb[0].mxu0
    %2527 = vmatprep.mubr.bf16.mxu0 0
    %2528 = vmatmul.mubr.bf16.gmra.mrb[0].mxu0 %v2418
    %v2529 = vpop.f32.mrb[0].mxu0
    %v2530 = vadd.f32 0.0, %v2529
    %v2531 = vpop.f32.mrb[0].mxu0
    %v2532 = vpop.f32.mrb[0].mxu0
    %v2533 = vadd.f32 0.0, %v2532
    %v2534 = vpop.f32.mrb[0].mxu0
    %2535 = vmatprep.mubr.bf16.mxu0 0
    %2536 = vmatmul.mubr.bf16.gmra.mrb[0].mxu0 %v2421
    %v2537 = vpop.f32.mrb[0].mxu0
    %v2538 = vadd.f32 0.0, %v2537
    %v2539 = vpop.f32.mrb[0].mxu0
    %v2540 = vpop.f32.mrb[0].mxu0
    %v2541 = vadd.f32 0.0, %v2540
    %v2542 = vpop.f32.mrb[0].mxu0
    %2543 = vdwg.mxu0
    %2544 = vmax.xlane.f32.xlu0 %v2482
    %v2545 = vpop.xlane.xlu0 %2544
    %2546 = vmax.xlane.f32.xlu0 %v2485
    %v2547 = vpop.xlane.xlu0 %2546
    %2548 = vmax.xlane.f32.xlu0 %v2490
    %v2549 = vpop.xlane.xlu0 %2548
    %2550 = vmax.xlane.f32.xlu0 %v2493
    %v2551 = vpop.xlane.xlu0 %2550
    %2552 = vmax.xlane.f32.xlu0 %v2498
    %v2553 = vpop.xlane.xlu0 %2552
    %2554 = vmax.xlane.f32.xlu0 %v2501
    %v2555 = vpop.xlane.xlu0 %2554
    %2556 = vmax.xlane.f32.xlu0 %v2506
    %v2557 = vpop.xlane.xlu0 %2556
    %2558 = vmax.xlane.f32.xlu0 %v2509
    %v2559 = vpop.xlane.xlu0 %2558
    %2560 = vmax.xlane.f32.xlu0 %v2514
    %v2561 = vpop.xlane.xlu0 %2560
    %2562 = vmax.xlane.f32.xlu0 %v2517
    %v2563 = vpop.xlane.xlu0 %2562
    %2564 = vmax.xlane.f32.xlu0 %v2522
    %v2565 = vpop.xlane.xlu0 %2564
    %2566 = vmax.xlane.f32.xlu0 %v2525
    %v2567 = vpop.xlane.xlu0 %2566
    %2568 = vmax.xlane.f32.xlu0 %v2530
    %v2569 = vpop.xlane.xlu0 %2568
    %2570 = vmax.xlane.f32.xlu0 %v2533
    %v2571 = vpop.xlane.xlu0 %2570
    %2572 = vmax.xlane.f32.xlu0 %v2538
    %v2573 = vpop.xlane.xlu0 %2572
    %2574 = vmax.xlane.f32.xlu0 %v2541
    %v2575 = vpop.xlane.xlu0 %2574
    %v2576 = vsub.f32 %v2482, %v2545
    %v2577 = vsub.f32 %v2485, %v2547
    %v2578 = vsub.f32 %v2490, %v2549
    %v2579 = vsub.f32 %v2493, %v2551
    %v2580 = vsub.f32 %v2498, %v2553
    %v2581 = vsub.f32 %v2501, %v2555
    %v2582 = vsub.f32 %v2506, %v2557
    %v2583 = vsub.f32 %v2509, %v2559
    %v2584 = vsub.f32 %v2514, %v2561
    %v2585 = vsub.f32 %v2517, %v2563
    %v2586 = vsub.f32 %v2522, %v2565
    %v2587 = vsub.f32 %v2525, %v2567
    %v2588 = vsub.f32 %v2530, %v2569
    %v2589 = vsub.f32 %v2533, %v2571
    %v2590 = vsub.f32 %v2538, %v2573
    %v2591 = vsub.f32 %v2541, %v2575
    %v2592 = vmul.f32 %v2576, 1.442695
    %v2593 = vpow.pop %v2592
    %v2594 = vmul.f32 %v2577, 1.442695
    %v2595 = vpow.pop %v2594
    %v2596 = vmul.f32 %v2578, 1.442695
    %v2597 = vpow.pop %v2596
    %v2598 = vmul.f32 %v2579, 1.442695
    %v2599 = vpow.pop %v2598
    %v2600 = vmul.f32 %v2580, 1.442695
    %v2601 = vpow.pop %v2600
    %v2602 = vmul.f32 %v2581, 1.442695
    %v2603 = vpow.pop %v2602
    %v2604 = vmul.f32 %v2582, 1.442695
    %v2605 = vpow.pop %v2604
    %v2606 = vmul.f32 %v2583, 1.442695
    %v2607 = vpow.pop %v2606
    %v2608 = vmul.f32 %v2584, 1.442695
    %v2609 = vpow.pop %v2608
    %v2610 = vmul.f32 %v2585, 1.442695
    %v2611 = vpow.pop %v2610
    %v2612 = vmul.f32 %v2586, 1.442695
    %v2613 = vpow.pop %v2612
    %v2614 = vmul.f32 %v2587, 1.442695
    %v2615 = vpow.pop %v2614
    %v2616 = vmul.f32 %v2588, 1.442695
    %v2617 = vpow.pop %v2616
    %v2618 = vmul.f32 %v2589, 1.442695
    %v2619 = vpow.pop %v2618
    %v2620 = vmul.f32 %v2590, 1.442695
    %v2621 = vpow.pop %v2620
    %v2622 = vmul.f32 %v2591, 1.442695
    %v2623 = vpow.pop %v2622
    %2624 = vadd.xlane.f32.xlu0 %v2593
    %v2625 = vpop.xlane.xlu0 %2624
    %2626 = vadd.xlane.f32.xlu0 %v2595
    %v2627 = vpop.xlane.xlu0 %2626
    %2628 = vadd.xlane.f32.xlu0 %v2597
    %v2629 = vpop.xlane.xlu0 %2628
    %2630 = vadd.xlane.f32.xlu0 %v2599
    %v2631 = vpop.xlane.xlu0 %2630
    %2632 = vadd.xlane.f32.xlu0 %v2601
    %v2633 = vpop.xlane.xlu0 %2632
    %2634 = vadd.xlane.f32.xlu0 %v2603
    %v2635 = vpop.xlane.xlu0 %2634
    %2636 = vadd.xlane.f32.xlu0 %v2605
    %v2637 = vpop.xlane.xlu0 %2636
    %2638 = vadd.xlane.f32.xlu0 %v2607
    %v2639 = vpop.xlane.xlu0 %2638
    %2640 = vadd.xlane.f32.xlu0 %v2609
    %v2641 = vpop.xlane.xlu0 %2640
    %2642 = vadd.xlane.f32.xlu0 %v2611
    %v2643 = vpop.xlane.xlu0 %2642
    %2644 = vadd.xlane.f32.xlu0 %v2613
    %v2645 = vpop.xlane.xlu0 %2644
    %2646 = vadd.xlane.f32.xlu0 %v2615
    %v2647 = vpop.xlane.xlu0 %2646
    %2648 = vadd.xlane.f32.xlu0 %v2617
    %v2649 = vpop.xlane.xlu0 %2648
    %2650 = vadd.xlane.f32.xlu0 %v2619
    %v2651 = vpop.xlane.xlu0 %2650
    %2652 = vadd.xlane.f32.xlu0 %v2621
    %v2653 = vpop.xlane.xlu0 %2652
    %2654 = vadd.xlane.f32.xlu0 %v2623
    %v2655 = vpop.xlane.xlu0 %2654
    %v2656 = vpack.c.bf16 %v2595, %v2593
    %v2657 = vpack.c.bf16 %v2599, %v2597
    %v2658 = vpack.c.bf16 %v2603, %v2601
    %v2659 = vpack.c.bf16 %v2607, %v2605
    %v2660 = vpack.c.bf16 %v2611, %v2609
    %v2661 = vpack.c.bf16 %v2615, %v2613
    %v2662 = vpack.c.bf16 %v2619, %v2617
    %v2663 = vpack.c.bf16 %v2623, %v2621
    %2672 = vrot.lane.b32.xlu0 %v1902, 64
    %v2673 = vpop.permute.xlu0 %2672
    %2674 = vrot.lane.b32.xlu0 %v1905, 64
    %v2675 = vpop.permute.xlu0 %2674
    %2676 = vrot.lane.b32.xlu0 %v1908, 64
    %v2677 = vpop.permute.xlu0 %2676
    %2678 = vrot.lane.b32.xlu0 %v1911, 64
    %v2679 = vpop.permute.xlu0 %2678
    %2680 = vrot.lane.b32.xlu0 %v1914, 64
    %v2681 = vpop.permute.xlu0 %2680
    %2682 = vrot.lane.b32.xlu0 %v1917, 64
    %v2683 = vpop.permute.xlu0 %2682
    %2684 = vrot.lane.b32.xlu0 %v1920, 64
    %v2685 = vpop.permute.xlu0 %2684
    %2686 = vrot.lane.b32.xlu0 %v1923, 64
    %v2687 = vpop.permute.xlu0 %2686
    %2696 = vmatprep.subr.bf16.mxu0 0
    %2697 = vmatpush1.bf16.msra.mxu0 %v2673
    %2698 = vmatprep.subr.bf16.mxu0 0
    %2699 = vmatpush1.bf16.msra.mxu0 %v2675
    %2700 = vmatprep.subr.bf16.mxu0 0
    %2701 = vmatpush1.bf16.msra.mxu0 %v2677
    %2702 = vmatprep.subr.bf16.mxu0 0
    %2703 = vmatpush1.bf16.msra.mxu0 %v2679
    %2704 = vmatprep.subr.bf16.mxu0 0
    %2705 = vmatpush1.bf16.msra.mxu0 %v2681
    %2706 = vmatprep.subr.bf16.mxu0 0
    %2707 = vmatpush1.bf16.msra.mxu0 %v2683
    %2708 = vmatprep.subr.bf16.mxu0 0
    %2709 = vmatpush1.bf16.msra.mxu0 %v2685
    %2710 = vmatprep.subr.bf16.mxu0 0
    %2711 = vmatpush1.bf16.msra.mxu0 %v2687
    %2712 = vmatprep.subr.bf16.mxu0 0
    %2713 = vmatpush1.bf16.msra.mxu0 0
    %2714 = vmatprep.subr.bf16.mxu0 0
    %2715 = vmatpush1.bf16.msra.mxu0 0
    %2716 = vmatprep.subr.bf16.mxu0 0
    %2717 = vmatpush1.bf16.msra.mxu0 0
    %2718 = vmatprep.subr.bf16.mxu0 0
    %2719 = vmatpush1.bf16.msra.mxu0 0
    %2720 = vmatprep.subr.bf16.mxu0 0
    %2721 = vmatpush1.bf16.msra.mxu0 0
    %2722 = vmatprep.subr.bf16.mxu0 0
    %2723 = vmatpush1.bf16.msra.mxu0 0
    %2724 = vmatprep.subr.bf16.mxu0 0
    %2725 = vmatpush1.bf16.msra.mxu0 0
    %2726 = vmatprep.subr.bf16.mxu0 0
    %2727 = vmatpush1.bf16.msra.mxu0 0
    %2728 = vmatprep.mubr.bf16.mxu0 0
    %2729 = vmatmul.mubr.bf16.gmra.mrb[0].mxu0 %v2656
    %v2730 = vpop.f32.mrb[0].mxu0
    %v2731 = vadd.f32 0.0, %v2730
    %v2732 = vpop.f32.mrb[0].mxu0
    %v2733 = vpop.f32.mrb[0].mxu0
    %v2734 = vadd.f32 0.0, %v2733
    %v2735 = vpop.f32.mrb[0].mxu0
    %2736 = vmatprep.mubr.bf16.mxu0 0
    %2737 = vmatmul.mubr.bf16.gmra.mrb[0].mxu0 %v2657
    %v2738 = vpop.f32.mrb[0].mxu0
    %v2739 = vadd.f32 0.0, %v2738
    %v2740 = vpop.f32.mrb[0].mxu0
    %v2741 = vpop.f32.mrb[0].mxu0
    %v2742 = vadd.f32 0.0, %v2741
    %v2743 = vpop.f32.mrb[0].mxu0
    %2744 = vmatprep.mubr.bf16.mxu0 0
    %2745 = vmatmul.mubr.bf16.gmra.mrb[0].mxu0 %v2658
    %v2746 = vpop.f32.mrb[0].mxu0
    %v2747 = vadd.f32 0.0, %v2746
    %v2748 = vpop.f32.mrb[0].mxu0
    %v2749 = vpop.f32.mrb[0].mxu0
    %v2750 = vadd.f32 0.0, %v2749
    %v2751 = vpop.f32.mrb[0].mxu0
    %2752 = vmatprep.mubr.bf16.mxu0 0
    %2753 = vmatmul.mubr.bf16.gmra.mrb[0].mxu0 %v2659
    %v2754 = vpop.f32.mrb[0].mxu0
    %v2755 = vadd.f32 0.0, %v2754
    %v2756 = vpop.f32.mrb[0].mxu0
    %v2757 = vpop.f32.mrb[0].mxu0
    %v2758 = vadd.f32 0.0, %v2757
    %v2759 = vpop.f32.mrb[0].mxu0
    %2760 = vmatprep.mubr.bf16.mxu0 0
    %2761 = vmatmul.mubr.bf16.gmra.mrb[0].mxu0 %v2660
    %v2762 = vpop.f32.mrb[0].mxu0
    %v2763 = vadd.f32 0.0, %v2762
    %v2764 = vpop.f32.mrb[0].mxu0
    %v2765 = vpop.f32.mrb[0].mxu0
    %v2766 = vadd.f32 0.0, %v2765
    %v2767 = vpop.f32.mrb[0].mxu0
    %2768 = vmatprep.mubr.bf16.mxu0 0
    %2769 = vmatmul.mubr.bf16.gmra.mrb[0].mxu0 %v2661
    %v2770 = vpop.f32.mrb[0].mxu0
    %v2771 = vadd.f32 0.0, %v2770
    %v2772 = vpop.f32.mrb[0].mxu0
    %v2773 = vpop.f32.mrb[0].mxu0
    %v2774 = vadd.f32 0.0, %v2773
    %v2775 = vpop.f32.mrb[0].mxu0
    %2776 = vmatprep.mubr.bf16.mxu0 0
    %2777 = vmatmul.mubr.bf16.gmra.mrb[0].mxu0 %v2662
    %v2778 = vpop.f32.mrb[0].mxu0
    %v2779 = vadd.f32 0.0, %v2778
    %v2780 = vpop.f32.mrb[0].mxu0
    %v2781 = vpop.f32.mrb[0].mxu0
    %v2782 = vadd.f32 0.0, %v2781
    %v2783 = vpop.f32.mrb[0].mxu0
    %2784 = vmatprep.mubr.bf16.mxu0 0
    %2785 = vmatmul.mubr.bf16.gmra.mrb[0].mxu0 %v2663
    %v2786 = vpop.f32.mrb[0].mxu0
    %v2787 = vadd.f32 0.0, %v2786
    %v2788 = vpop.f32.mrb[0].mxu0
    %v2789 = vpop.f32.mrb[0].mxu0
    %v2790 = vadd.f32 0.0, %v2789
    %v2791 = vpop.f32.mrb[0].mxu0
    %2792 = vdwg.mxu0
    %v2793 = vrcp.pop %v2625
    %v2794 = vrcp.pop %v2627
    %v2795 = vrcp.pop %v2629
    %v2796 = vrcp.pop %v2631
    %v2797 = vrcp.pop %v2633
    %v2798 = vrcp.pop %v2635
    %v2799 = vrcp.pop %v2637
    %v2800 = vrcp.pop %v2639
    %v2801 = vrcp.pop %v2641
    %v2802 = vrcp.pop %v2643
    %v2803 = vrcp.pop %v2645
    %v2804 = vrcp.pop %v2647
    %v2805 = vrcp.pop %v2649
    %v2806 = vrcp.pop %v2651
    %v2807 = vrcp.pop %v2653
    %v2808 = vrcp.pop %v2655
    %v2809 = vmul.f32 %v2731, %v2793
    %v2810 = vmul.f32 %v2734, %v2794
    %v2811 = vmul.f32 %v2739, %v2795
    %v2812 = vmul.f32 %v2742, %v2796
    %v2813 = vmul.f32 %v2747, %v2797
    %v2814 = vmul.f32 %v2750, %v2798
    %v2815 = vmul.f32 %v2755, %v2799
    %v2816 = vmul.f32 %v2758, %v2800
    %v2817 = vmul.f32 %v2763, %v2801
    %v2818 = vmul.f32 %v2766, %v2802
    %v2819 = vmul.f32 %v2771, %v2803
    %v2820 = vmul.f32 %v2774, %v2804
    %v2821 = vmul.f32 %v2779, %v2805
    %v2822 = vmul.f32 %v2782, %v2806
    %v2823 = vmul.f32 %v2787, %v2807
    %v2824 = vmul.f32 %v2790, %v2808
    %v2825 = vpack.c.bf16 %v2810, %v2809
    %v2826 = vpack.c.bf16 %v2812, %v2811
    %v2827 = vpack.c.bf16 %v2814, %v2813
    %v2828 = vpack.c.bf16 %v2816, %v2815
    %v2829 = vpack.c.bf16 %v2818, %v2817
    %v2830 = vpack.c.bf16 %v2820, %v2819
    %v2831 = vpack.c.bf16 %v2822, %v2821
    %v2832 = vpack.c.bf16 %v2824, %v2823
    %v2841 = vunpack.c.l.b16 %v1362
    %v2842 = vunpack.c.l.b16 %v1363
    %v2843 = vunpack.c.l.b16 %v1364
    %v2844 = vunpack.c.l.b16 %v1365
    %v2845 = vunpack.c.l.b16 %v1366
    %v2846 = vunpack.c.l.b16 %v1367
    %v2847 = vunpack.c.l.b16 %v1368
    %v2848 = vunpack.c.l.b16 %v1369
    %v2849 = vpack.c.b16 %v2842, %v2841
    %v2850 = vpack.c.b16 %v2844, %v2843
    %v2851 = vpack.c.b16 %v2846, %v2845
    %v2852 = vpack.c.b16 %v2848, %v2847
    %v2858 = vsel %vm1948, %v2825, 0
    %v2861 = vsel %vm1948, %v2826, 0
    %v2864 = vsel %vm1948, %v2827, 0
    %v2867 = vsel %vm1948, %v2828, 0
    %v2870 = vsel %vm1948, %v2829, 0
    %v2873 = vsel %vm1948, %v2830, 0
    %v2876 = vsel %vm1948, %v2831, 0
    %v2879 = vsel %vm1948, %v2832, 0
    %2881 = vmatprep.subr.bf16.mxu0 0
    %2882 = vmatpush1.bf16.msra.mxu0 %v2849
    %2883 = vmatprep.subr.bf16.mxu0 0
    %2884 = vmatpush1.bf16.msra.mxu0 %v2850
    %2885 = vmatprep.subr.bf16.mxu0 0
    %2886 = vmatpush1.bf16.msra.mxu0 %v2851
    %2887 = vmatprep.subr.bf16.mxu0 0
    %2888 = vmatpush1.bf16.msra.mxu0 %v2852
    %2889 = vmatprep.subr.bf16.mxu0 0
    %2890 = vmatpush1.bf16.msra.mxu0 0
    %2891 = vmatprep.subr.bf16.mxu0 0
    %2892 = vmatpush1.bf16.msra.mxu0 0
    %2893 = vmatprep.subr.bf16.mxu0 0
    %2894 = vmatpush1.bf16.msra.mxu0 0
    %2895 = vmatprep.subr.bf16.mxu0 0
    %2896 = vmatpush1.bf16.msra.mxu0 0
    %2897 = vmatprep.subr.bf16.mxu0 0
    %2898 = vmatpush1.bf16.msra.mxu0 0
    %2899 = vmatprep.subr.bf16.mxu0 0
    %2900 = vmatpush1.bf16.msra.mxu0 0
    %2901 = vmatprep.subr.bf16.mxu0 0
    %2902 = vmatpush1.bf16.msra.mxu0 0
    %2903 = vmatprep.subr.bf16.mxu0 0
    %2904 = vmatpush1.bf16.msra.mxu0 0
    %2905 = vmatprep.subr.bf16.mxu0 0
    %2906 = vmatpush1.bf16.msra.mxu0 0
    %2907 = vmatprep.subr.bf16.mxu0 0
    %2908 = vmatpush1.bf16.msra.mxu0 0
    %2909 = vmatprep.subr.bf16.mxu0 0
    %2910 = vmatpush1.bf16.msra.mxu0 0
    %2911 = vmatprep.subr.bf16.mxu0 0
    %2912 = vmatpush1.bf16.msra.mxu0 0
    %2913 = vmatprep.mubr.bf16.mxu0 0
    %2914 = vmatmul.mubr.bf16.gmra.mrb[0].mxu0 %v2858
    %v2915 = vpop.f32.mrb[0].mxu0
    %v2916 = vadd.f32 0.0, %v2915
    %v2917 = vpop.f32.mrb[0].mxu0
    %v2918 = vpop.f32.mrb[0].mxu0
    %v2919 = vadd.f32 0.0, %v2918
    %v2920 = vpop.f32.mrb[0].mxu0
    %2921 = vmatprep.mubr.bf16.mxu0 0
    %2922 = vmatmul.mubr.bf16.gmra.mrb[0].mxu0 %v2861
    %v2923 = vpop.f32.mrb[0].mxu0
    %v2924 = vadd.f32 0.0, %v2923
    %v2925 = vpop.f32.mrb[0].mxu0
    %v2926 = vpop.f32.mrb[0].mxu0
    %v2927 = vadd.f32 0.0, %v2926
    %v2928 = vpop.f32.mrb[0].mxu0
    %2929 = vmatprep.mubr.bf16.mxu0 0
    %2930 = vmatmul.mubr.bf16.gmra.mrb[0].mxu0 %v2864
    %v2931 = vpop.f32.mrb[0].mxu0
    %v2932 = vadd.f32 0.0, %v2931
    %v2933 = vpop.f32.mrb[0].mxu0
    %v2934 = vpop.f32.mrb[0].mxu0
    %v2935 = vadd.f32 0.0, %v2934
    %v2936 = vpop.f32.mrb[0].mxu0
    %2937 = vmatprep.mubr.bf16.mxu0 0
    %2938 = vmatmul.mubr.bf16.gmra.mrb[0].mxu0 %v2867
    %v2939 = vpop.f32.mrb[0].mxu0
    %v2940 = vadd.f32 0.0, %v2939
    %v2941 = vpop.f32.mrb[0].mxu0
    %v2942 = vpop.f32.mrb[0].mxu0
    %v2943 = vadd.f32 0.0, %v2942
    %v2944 = vpop.f32.mrb[0].mxu0
    %2945 = vmatprep.mubr.bf16.mxu0 0
    %2946 = vmatmul.mubr.bf16.gmra.mrb[0].mxu0 %v2870
    %v2947 = vpop.f32.mrb[0].mxu0
    %v2948 = vadd.f32 0.0, %v2947
    %v2949 = vpop.f32.mrb[0].mxu0
    %v2950 = vpop.f32.mrb[0].mxu0
    %v2951 = vadd.f32 0.0, %v2950
    %v2952 = vpop.f32.mrb[0].mxu0
    %2953 = vmatprep.mubr.bf16.mxu0 0
    %2954 = vmatmul.mubr.bf16.gmra.mrb[0].mxu0 %v2873
    %v2955 = vpop.f32.mrb[0].mxu0
    %v2956 = vadd.f32 0.0, %v2955
    %v2957 = vpop.f32.mrb[0].mxu0
    %v2958 = vpop.f32.mrb[0].mxu0
    %v2959 = vadd.f32 0.0, %v2958
    %v2960 = vpop.f32.mrb[0].mxu0
    %2961 = vmatprep.mubr.bf16.mxu0 0
    %2962 = vmatmul.mubr.bf16.gmra.mrb[0].mxu0 %v2876
    %v2963 = vpop.f32.mrb[0].mxu0
    %v2964 = vadd.f32 0.0, %v2963
    %v2965 = vpop.f32.mrb[0].mxu0
    %v2966 = vpop.f32.mrb[0].mxu0
    %v2967 = vadd.f32 0.0, %v2966
    %v2968 = vpop.f32.mrb[0].mxu0
    %2969 = vmatprep.mubr.bf16.mxu0 0
    %2970 = vmatmul.mubr.bf16.gmra.mrb[0].mxu0 %v2879
    %v2971 = vpop.f32.mrb[0].mxu0
    %v2972 = vadd.f32 0.0, %v2971
    %v2973 = vpop.f32.mrb[0].mxu0
    %v2974 = vpop.f32.mrb[0].mxu0
    %v2975 = vadd.f32 0.0, %v2974
    %v2976 = vpop.f32.mrb[0].mxu0
    %2977 = vdwg.mxu0
    %v2986 = vunpack.c.l.b16 %v1354
    %v2987 = vunpack.c.l.b16 %v1355
    %v2988 = vunpack.c.l.b16 %v1356
    %v2989 = vunpack.c.l.b16 %v1357
    %v2990 = vunpack.c.l.b16 %v1358
    %v2991 = vunpack.c.l.b16 %v1359
    %v2992 = vunpack.c.l.b16 %v1360
    %v2993 = vunpack.c.l.b16 %v1361
    %v2994 = vpack.c.b16 %v2987, %v2986
    %v2995 = vpack.c.b16 %v2989, %v2988
    %v2996 = vpack.c.b16 %v2991, %v2990
    %v2997 = vpack.c.b16 %v2993, %v2992
    %v3003 = vsel %vm1948, %v2343, 0
    %v3006 = vsel %vm1948, %v2344, 0
    %v3009 = vsel %vm1948, %v2345, 0
    %v3012 = vsel %vm1948, %v2346, 0
    %v3015 = vsel %vm1948, %v2347, 0
    %v3018 = vsel %vm1948, %v2348, 0
    %v3021 = vsel %vm1948, %v2349, 0
    %v3024 = vsel %vm1948, %v2350, 0
    %3026 = vmatprep.subr.bf16.mxu0 0
    %3027 = vmatpush1.bf16.msra.mxu0 %v2994
    %3028 = vmatprep.subr.bf16.mxu0 0
    %3029 = vmatpush1.bf16.msra.mxu0 %v2995
    %3030 = vmatprep.subr.bf16.mxu0 0
    %3031 = vmatpush1.bf16.msra.mxu0 %v2996
    %3032 = vmatprep.subr.bf16.mxu0 0
    %3033 = vmatpush1.bf16.msra.mxu0 %v2997
    %3034 = vmatprep.subr.bf16.mxu0 0
    %3035 = vmatpush1.bf16.msra.mxu0 0
    %3036 = vmatprep.subr.bf16.mxu0 0
    %3037 = vmatpush1.bf16.msra.mxu0 0
    %3038 = vmatprep.subr.bf16.mxu0 0
    %3039 = vmatpush1.bf16.msra.mxu0 0
    %3040 = vmatprep.subr.bf16.mxu0 0
    %3041 = vmatpush1.bf16.msra.mxu0 0
    %3042 = vmatprep.subr.bf16.mxu0 0
    %3043 = vmatpush1.bf16.msra.mxu0 0
    %3044 = vmatprep.subr.bf16.mxu0 0
    %3045 = vmatpush1.bf16.msra.mxu0 0
    %3046 = vmatprep.subr.bf16.mxu0 0
    %3047 = vmatpush1.bf16.msra.mxu0 0
    %3048 = vmatprep.subr.bf16.mxu0 0
    %3049 = vmatpush1.bf16.msra.mxu0 0
    %3050 = vmatprep.subr.bf16.mxu0 0
    %3051 = vmatpush1.bf16.msra.mxu0 0
    %3052 = vmatprep.subr.bf16.mxu0 0
    %3053 = vmatpush1.bf16.msra.mxu0 0
    %3054 = vmatprep.subr.bf16.mxu0 0
    %3055 = vmatpush1.bf16.msra.mxu0 0
    %3056 = vmatprep.subr.bf16.mxu0 0
    %3057 = vmatpush1.bf16.msra.mxu0 0
    %3058 = vmatprep.mubr.bf16.mxu0 0
    %3059 = vmatmul.mubr.bf16.gmra.mrb[0].mxu0 %v3003
    %v3060 = vpop.f32.mrb[0].mxu0
    %v3061 = vadd.f32 %v2916, %v3060
    %v3062 = vpop.f32.mrb[0].mxu0
    %v3063 = vpop.f32.mrb[0].mxu0
    %v3064 = vadd.f32 %v2919, %v3063
    %v3065 = vpop.f32.mrb[0].mxu0
    %3066 = vmatprep.mubr.bf16.mxu0 0
    %3067 = vmatmul.mubr.bf16.gmra.mrb[0].mxu0 %v3006
    %v3068 = vpop.f32.mrb[0].mxu0
    %v3069 = vadd.f32 %v2924, %v3068
    %v3070 = vpop.f32.mrb[0].mxu0
    %v3071 = vpop.f32.mrb[0].mxu0
    %v3072 = vadd.f32 %v2927, %v3071
    %v3073 = vpop.f32.mrb[0].mxu0
    %3074 = vmatprep.mubr.bf16.mxu0 0
    %3075 = vmatmul.mubr.bf16.gmra.mrb[0].mxu0 %v3009
    %v3076 = vpop.f32.mrb[0].mxu0
    %v3077 = vadd.f32 %v2932, %v3076
    %v3078 = vpop.f32.mrb[0].mxu0
    %v3079 = vpop.f32.mrb[0].mxu0
    %v3080 = vadd.f32 %v2935, %v3079
    %v3081 = vpop.f32.mrb[0].mxu0
    %3082 = vmatprep.mubr.bf16.mxu0 0
    %3083 = vmatmul.mubr.bf16.gmra.mrb[0].mxu0 %v3012
    %v3084 = vpop.f32.mrb[0].mxu0
    %v3085 = vadd.f32 %v2940, %v3084
    %v3086 = vpop.f32.mrb[0].mxu0
    %v3087 = vpop.f32.mrb[0].mxu0
    %v3088 = vadd.f32 %v2943, %v3087
    %v3089 = vpop.f32.mrb[0].mxu0
    %3090 = vmatprep.mubr.bf16.mxu0 0
    %3091 = vmatmul.mubr.bf16.gmra.mrb[0].mxu0 %v3015
    %v3092 = vpop.f32.mrb[0].mxu0
    %v3093 = vadd.f32 %v2948, %v3092
    %v3094 = vpop.f32.mrb[0].mxu0
    %v3095 = vpop.f32.mrb[0].mxu0
    %v3096 = vadd.f32 %v2951, %v3095
    %v3097 = vpop.f32.mrb[0].mxu0
    %3098 = vmatprep.mubr.bf16.mxu0 0
    %3099 = vmatmul.mubr.bf16.gmra.mrb[0].mxu0 %v3018
    %v3100 = vpop.f32.mrb[0].mxu0
    %v3101 = vadd.f32 %v2956, %v3100
    %v3102 = vpop.f32.mrb[0].mxu0
    %v3103 = vpop.f32.mrb[0].mxu0
    %v3104 = vadd.f32 %v2959, %v3103
    %v3105 = vpop.f32.mrb[0].mxu0
    %3106 = vmatprep.mubr.bf16.mxu0 0
    %3107 = vmatmul.mubr.bf16.gmra.mrb[0].mxu0 %v3021
    %v3108 = vpop.f32.mrb[0].mxu0
    %v3109 = vadd.f32 %v2964, %v3108
    %v3110 = vpop.f32.mrb[0].mxu0
    %v3111 = vpop.f32.mrb[0].mxu0
    %v3112 = vadd.f32 %v2967, %v3111
    %v3113 = vpop.f32.mrb[0].mxu0
    %3114 = vmatprep.mubr.bf16.mxu0 0
    %3115 = vmatmul.mubr.bf16.gmra.mrb[0].mxu0 %v3024
    %v3116 = vpop.f32.mrb[0].mxu0
    %v3117 = vadd.f32 %v2972, %v3116
    %v3118 = vpop.f32.mrb[0].mxu0
    %v3119 = vpop.f32.mrb[0].mxu0
    %v3120 = vadd.f32 %v2975, %v3119
    %v3121 = vpop.f32.mrb[0].mxu0
    %3122 = vdwg.mxu0
    %v3123 = vld [vmem:[#allocation10] sm:$0x1]
    %v3125 = vlaneseq
    %v3126 = vshrl.u32 %v3125, 7
    %v3127 = vsub.s32 0, %v3126
    %v3128 = vrot.slane %v3123, %v3127
    %v3130 = vadd.f32 %v3061, %v3128
    %v3131 = vadd.f32 %v3064, %v3128
    %v3132 = vadd.f32 %v3069, %v3128
    %v3133 = vadd.f32 %v3072, %v3128
    %v3134 = vadd.f32 %v3077, %v3128
    %v3135 = vadd.f32 %v3080, %v3128
    %v3136 = vadd.f32 %v3085, %v3128
    %v3137 = vadd.f32 %v3088, %v3128
    %v3138 = vadd.f32 %v3093, %v3128
    %v3139 = vadd.f32 %v3096, %v3128
    %v3140 = vadd.f32 %v3101, %v3128
    %v3141 = vadd.f32 %v3104, %v3128
    %v3142 = vadd.f32 %v3109, %v3128
    %v3143 = vadd.f32 %v3112, %v3128
    %v3144 = vadd.f32 %v3117, %v3128
    %v3145 = vadd.f32 %v3120, %v3128
    %v3147 = vsel %vm1948, %v1924, 0
    %v3150 = vsel %vm1948, %v1927, 0
    %v3153 = vsel %vm1948, %v1930, 0
    %v3156 = vsel %vm1948, %v1933, 0
    %v3159 = vsel %vm1948, %v1936, 0
    %v3162 = vsel %vm1948, %v1939, 0
    %v3165 = vsel %vm1948, %v1942, 0
    %v3168 = vsel %vm1948, %v1945, 0
    %v3171 = vsel %vm1948, %v1925, 0
    %v3174 = vsel %vm1948, %v1928, 0
    %v3177 = vsel %vm1948, %v1931, 0
    %v3180 = vsel %vm1948, %v1934, 0
    %v3183 = vsel %vm1948, %v1937, 0
    %v3186 = vsel %vm1948, %v1940, 0
    %v3189 = vsel %vm1948, %v1943, 0
    %v3192 = vsel %vm1948, %v1946, 0
    %3194 = vmatprep.subr.bf16.mxu0 0
    %3195 = vmatpush1.bf16.xpose.msra.mxu0 %v3171
    %3196 = vmatprep.subr.bf16.mxu0 0
    %3197 = vmatpush1.bf16.xpose.msra.mxu0 %v3174
    %3198 = vmatprep.subr.bf16.mxu0 0
    %3199 = vmatpush1.bf16.xpose.msra.mxu0 %v3177
    %3200 = vmatprep.subr.bf16.mxu0 0
    %3201 = vmatpush1.bf16.xpose.msra.mxu0 %v3180
    %3202 = vmatprep.subr.bf16.mxu0 0
    %3203 = vmatpush1.bf16.xpose.msra.mxu0 %v3183
    %3204 = vmatprep.subr.bf16.mxu0 0
    %3205 = vmatpush1.bf16.xpose.msra.mxu0 %v3186
    %3206 = vmatprep.subr.bf16.mxu0 0
    %3207 = vmatpush1.bf16.xpose.msra.mxu0 %v3189
    %3208 = vmatprep.subr.bf16.mxu0 0
    %3209 = vmatpush1.bf16.xpose.msra.mxu0 %v3192
    %3210 = vmatprep.subr.bf16.mxu0 0
    %3211 = vmatpush1.bf16.xpose.msra.mxu0 0
    %3212 = vmatprep.subr.bf16.mxu0 0
    %3213 = vmatpush1.bf16.xpose.msra.mxu0 0
    %3214 = vmatprep.subr.bf16.mxu0 0
    %3215 = vmatpush1.bf16.xpose.msra.mxu0 0
    %3216 = vmatprep.subr.bf16.mxu0 0
    %3217 = vmatpush1.bf16.xpose.msra.mxu0 0
    %3218 = vmatprep.subr.bf16.mxu0 0
    %3219 = vmatpush1.bf16.xpose.msra.mxu0 0
    %3220 = vmatprep.subr.bf16.mxu0 0
    %3221 = vmatpush1.bf16.xpose.msra.mxu0 0
    %3222 = vmatprep.subr.bf16.mxu0 0
    %3223 = vmatpush1.bf16.xpose.msra.mxu0 0
    %3224 = vmatprep.subr.bf16.mxu0 0
    %3225 = vmatpush1.bf16.xpose.msra.mxu0 0
    %3226 = vmatprep.mubr.bf16.mxu0 0
    %3227 = vmatmul.mubr.bf16.gmra.mrb[0].mxu0 %v3147
    %v3228 = vpop.f32.mrb[0].mxu0
    %v3229 = vadd.f32 0.0, %v3228
    %v3230 = vpop.f32.mrb[0].mxu0
    %v3231 = vpop.f32.mrb[0].mxu0
    %v3232 = vadd.f32 0.0, %v3231
    %v3233 = vpop.f32.mrb[0].mxu0
    %3234 = vmatprep.mubr.bf16.mxu0 0
    %3235 = vmatmul.mubr.bf16.gmra.mrb[0].mxu0 %v3150
    %v3236 = vpop.f32.mrb[0].mxu0
    %v3237 = vadd.f32 0.0, %v3236
    %v3238 = vpop.f32.mrb[0].mxu0
    %v3239 = vpop.f32.mrb[0].mxu0
    %v3240 = vadd.f32 0.0, %v3239
    %v3241 = vpop.f32.mrb[0].mxu0
    %3242 = vmatprep.mubr.bf16.mxu0 0
    %3243 = vmatmul.mubr.bf16.gmra.mrb[0].mxu0 %v3153
    %v3244 = vpop.f32.mrb[0].mxu0
    %v3245 = vadd.f32 0.0, %v3244
    %v3246 = vpop.f32.mrb[0].mxu0
    %v3247 = vpop.f32.mrb[0].mxu0
    %v3248 = vadd.f32 0.0, %v3247
    %v3249 = vpop.f32.mrb[0].mxu0
    %3250 = vmatprep.mubr.bf16.mxu0 0
    %3251 = vmatmul.mubr.bf16.gmra.mrb[0].mxu0 %v3156
    %v3252 = vpop.f32.mrb[0].mxu0
    %v3253 = vadd.f32 0.0, %v3252
    %v3254 = vpop.f32.mrb[0].mxu0
    %v3255 = vpop.f32.mrb[0].mxu0
    %v3256 = vadd.f32 0.0, %v3255
    %v3257 = vpop.f32.mrb[0].mxu0
    %3258 = vmatprep.mubr.bf16.mxu0 0
    %3259 = vmatmul.mubr.bf16.gmra.mrb[0].mxu0 %v3159
    %v3260 = vpop.f32.mrb[0].mxu0
    %v3261 = vadd.f32 0.0, %v3260
    %v3262 = vpop.f32.mrb[0].mxu0
    %v3263 = vpop.f32.mrb[0].mxu0
    %v3264 = vadd.f32 0.0, %v3263
    %v3265 = vpop.f32.mrb[0].mxu0
    %3266 = vmatprep.mubr.bf16.mxu0 0
    %3267 = vmatmul.mubr.bf16.gmra.mrb[0].mxu0 %v3162
    %v3268 = vpop.f32.mrb[0].mxu0
    %v3269 = vadd.f32 0.0, %v3268
    %v3270 = vpop.f32.mrb[0].mxu0
    %v3271 = vpop.f32.mrb[0].mxu0
    %v3272 = vadd.f32 0.0, %v3271
    %v3273 = vpop.f32.mrb[0].mxu0
    %3274 = vmatprep.mubr.bf16.mxu0 0
    %3275 = vmatmul.mubr.bf16.gmra.mrb[0].mxu0 %v3165
    %v3276 = vpop.f32.mrb[0].mxu0
    %v3277 = vadd.f32 0.0, %v3276
    %v3278 = vpop.f32.mrb[0].mxu0
    %v3279 = vpop.f32.mrb[0].mxu0
    %v3280 = vadd.f32 0.0, %v3279
    %v3281 = vpop.f32.mrb[0].mxu0
    %3282 = vmatprep.mubr.bf16.mxu0 0
    %3283 = vmatmul.mubr.bf16.gmra.mrb[0].mxu0 %v3168
    %v3284 = vpop.f32.mrb[0].mxu0
    %v3285 = vadd.f32 0.0, %v3284
    %v3286 = vpop.f32.mrb[0].mxu0
    %v3287 = vpop.f32.mrb[0].mxu0
    %v3288 = vadd.f32 0.0, %v3287
    %v3289 = vpop.f32.mrb[0].mxu0
    %3290 = vdwg.mxu0
    %3291 = vmax.xlane.f32.xlu0 %v3229
    %v3292 = vpop.xlane.xlu0 %3291
    %3293 = vmax.xlane.f32.xlu0 %v3232
    %v3294 = vpop.xlane.xlu0 %3293
    %3295 = vmax.xlane.f32.xlu0 %v3237
    %v3296 = vpop.xlane.xlu0 %3295
    %3297 = vmax.xlane.f32.xlu0 %v3240
    %v3298 = vpop.xlane.xlu0 %3297
    %3299 = vmax.xlane.f32.xlu0 %v3245
    %v3300 = vpop.xlane.xlu0 %3299
    %3301 = vmax.xlane.f32.xlu0 %v3248
    %v3302 = vpop.xlane.xlu0 %3301
    %3303 = vmax.xlane.f32.xlu0 %v3253
    %v3304 = vpop.xlane.xlu0 %3303
    %3305 = vmax.xlane.f32.xlu0 %v3256
    %v3306 = vpop.xlane.xlu0 %3305
    %3307 = vmax.xlane.f32.xlu0 %v3261
    %v3308 = vpop.xlane.xlu0 %3307
    %3309 = vmax.xlane.f32.xlu0 %v3264
    %v3310 = vpop.xlane.xlu0 %3309
    %3311 = vmax.xlane.f32.xlu0 %v3269
    %v3312 = vpop.xlane.xlu0 %3311
    %3313 = vmax.xlane.f32.xlu0 %v3272
    %v3314 = vpop.xlane.xlu0 %3313
    %3315 = vmax.xlane.f32.xlu0 %v3277
    %v3316 = vpop.xlane.xlu0 %3315
    %3317 = vmax.xlane.f32.xlu0 %v3280
    %v3318 = vpop.xlane.xlu0 %3317
    %3319 = vmax.xlane.f32.xlu0 %v3285
    %v3320 = vpop.xlane.xlu0 %3319
    %3321 = vmax.xlane.f32.xlu0 %v3288
    %v3322 = vpop.xlane.xlu0 %3321
    %v3323 = vsub.f32 %v3229, %v3292
    %v3324 = vsub.f32 %v3232, %v3294
    %v3325 = vsub.f32 %v3237, %v3296
    %v3326 = vsub.f32 %v3240, %v3298
    %v3327 = vsub.f32 %v3245, %v3300
    %v3328 = vsub.f32 %v3248, %v3302
    %v3329 = vsub.f32 %v3253, %v3304
    %v3330 = vsub.f32 %v3256, %v3306
    %v3331 = vsub.f32 %v3261, %v3308
    %v3332 = vsub.f32 %v3264, %v3310
    %v3333 = vsub.f32 %v3269, %v3312
    %v3334 = vsub.f32 %v3272, %v3314
    %v3335 = vsub.f32 %v3277, %v3316
    %v3336 = vsub.f32 %v3280, %v3318
    %v3337 = vsub.f32 %v3285, %v3320
    %v3338 = vsub.f32 %v3288, %v3322
    %v3339 = vmul.f32 %v3323, 1.442695
    %v3340 = vpow.pop %v3339
    %v3341 = vmul.f32 %v3324, 1.442695
    %v3342 = vpow.pop %v3341
    %v3343 = vmul.f32 %v3325, 1.442695
    %v3344 = vpow.pop %v3343
    %v3345 = vmul.f32 %v3326, 1.442695
    %v3346 = vpow.pop %v3345
    %v3347 = vmul.f32 %v3327, 1.442695
    %v3348 = vpow.pop %v3347
    %v3349 = vmul.f32 %v3328, 1.442695
    %v3350 = vpow.pop %v3349
    %v3351 = vmul.f32 %v3329, 1.442695
    %v3352 = vpow.pop %v3351
    %v3353 = vmul.f32 %v3330, 1.442695
    %v3354 = vpow.pop %v3353
    %v3355 = vmul.f32 %v3331, 1.442695
    %v3356 = vpow.pop %v3355
    %v3357 = vmul.f32 %v3332, 1.442695
    %v3358 = vpow.pop %v3357
    %v3359 = vmul.f32 %v3333, 1.442695
    %v3360 = vpow.pop %v3359
    %v3361 = vmul.f32 %v3334, 1.442695
    %v3362 = vpow.pop %v3361
    %v3363 = vmul.f32 %v3335, 1.442695
    %v3364 = vpow.pop %v3363
    %v3365 = vmul.f32 %v3336, 1.442695
    %v3366 = vpow.pop %v3365
    %v3367 = vmul.f32 %v3337, 1.442695
    %v3368 = vpow.pop %v3367
    %v3369 = vmul.f32 %v3338, 1.442695
    %v3370 = vpow.pop %v3369
    %3371 = vadd.xlane.f32.xlu0 %v3340
    %v3372 = vpop.xlane.xlu0 %3371
    %3373 = vadd.xlane.f32.xlu0 %v3342
    %v3374 = vpop.xlane.xlu0 %3373
    %3375 = vadd.xlane.f32.xlu0 %v3344
    %v3376 = vpop.xlane.xlu0 %3375
    %3377 = vadd.xlane.f32.xlu0 %v3346
    %v3378 = vpop.xlane.xlu0 %3377
    %3379 = vadd.xlane.f32.xlu0 %v3348
    %v3380 = vpop.xlane.xlu0 %3379
    %3381 = vadd.xlane.f32.xlu0 %v3350
    %v3382 = vpop.xlane.xlu0 %3381
    %3383 = vadd.xlane.f32.xlu0 %v3352
    %v3384 = vpop.xlane.xlu0 %3383
    %3385 = vadd.xlane.f32.xlu0 %v3354
    %v3386 = vpop.xlane.xlu0 %3385
    %3387 = vadd.xlane.f32.xlu0 %v3356
    %v3388 = vpop.xlane.xlu0 %3387
    %3389 = vadd.xlane.f32.xlu0 %v3358
    %v3390 = vpop.xlane.xlu0 %3389
    %3391 = vadd.xlane.f32.xlu0 %v3360
    %v3392 = vpop.xlane.xlu0 %3391
    %3393 = vadd.xlane.f32.xlu0 %v3362
    %v3394 = vpop.xlane.xlu0 %3393
    %3395 = vadd.xlane.f32.xlu0 %v3364
    %v3396 = vpop.xlane.xlu0 %3395
    %3397 = vadd.xlane.f32.xlu0 %v3366
    %v3398 = vpop.xlane.xlu0 %3397
    %3399 = vadd.xlane.f32.xlu0 %v3368
    %v3400 = vpop.xlane.xlu0 %3399
    %3401 = vadd.xlane.f32.xlu0 %v3370
    %v3402 = vpop.xlane.xlu0 %3401
    %v3403 = vpack.c.bf16 %v3342, %v3340
    %v3404 = vpack.c.bf16 %v3346, %v3344
    %v3405 = vpack.c.bf16 %v3350, %v3348
    %v3406 = vpack.c.bf16 %v3354, %v3352
    %v3407 = vpack.c.bf16 %v3358, %v3356
    %v3408 = vpack.c.bf16 %v3362, %v3360
    %v3409 = vpack.c.bf16 %v3366, %v3364
    %v3410 = vpack.c.bf16 %v3370, %v3368
    %3411 = vmatprep.subr.bf16.mxu0 0
    %3412 = vmatpush1.bf16.msra.mxu0 %v1926
    %3413 = vmatprep.subr.bf16.mxu0 0
    %3414 = vmatpush1.bf16.msra.mxu0 %v1929
    %3415 = vmatprep.subr.bf16.mxu0 0
    %3416 = vmatpush1.bf16.msra.mxu0 %v1932
    %3417 = vmatprep.subr.bf16.mxu0 0
    %3418 = vmatpush1.bf16.msra.mxu0 %v1935
    %3419 = vmatprep.subr.bf16.mxu0 0
    %3420 = vmatpush1.bf16.msra.mxu0 %v1938
    %3421 = vmatprep.subr.bf16.mxu0 0
    %3422 = vmatpush1.bf16.msra.mxu0 %v1941
    %3423 = vmatprep.subr.bf16.mxu0 0
    %3424 = vmatpush1.bf16.msra.mxu0 %v1944
    %3425 = vmatprep.subr.bf16.mxu0 0
    %3426 = vmatpush1.bf16.msra.mxu0 %v1947
    %3427 = vmatprep.subr.bf16.mxu0 0
    %3428 = vmatpush1.bf16.msra.mxu0 0
    %3429 = vmatprep.subr.bf16.mxu0 0
    %3430 = vmatpush1.bf16.msra.mxu0 0
    %3431 = vmatprep.subr.bf16.mxu0 0
    %3432 = vmatpush1.bf16.msra.mxu0 0
    %3433 = vmatprep.subr.bf16.mxu0 0
    %3434 = vmatpush1.bf16.msra.mxu0 0
    %3435 = vmatprep.subr.bf16.mxu0 0
    %3436 = vmatpush1.bf16.msra.mxu0 0
    %3437 = vmatprep.subr.bf16.mxu0 0
    %3438 = vmatpush1.bf16.msra.mxu0 0
    %3439 = vmatprep.subr.bf16.mxu0 0
    %3440 = vmatpush1.bf16.msra.mxu0 0
    %3441 = vmatprep.subr.bf16.mxu0 0
    %3442 = vmatpush1.bf16.msra.mxu0 0
    %3443 = vmatprep.mubr.bf16.mxu0 0
    %3444 = vmatmul.mubr.bf16.gmra.mrb[0].mxu0 %v3403
    %v3445 = vpop.f32.mrb[0].mxu0
    %v3446 = vadd.f32 0.0, %v3445
    %v3447 = vpop.f32.mrb[0].mxu0
    %v3448 = vpop.f32.mrb[0].mxu0
    %v3449 = vadd.f32 0.0, %v3448
    %v3450 = vpop.f32.mrb[0].mxu0
    %3451 = vmatprep.mubr.bf16.mxu0 0
    %3452 = vmatmul.mubr.bf16.gmra.mrb[0].mxu0 %v3404
    %v3453 = vpop.f32.mrb[0].mxu0
    %v3454 = vadd.f32 0.0, %v3453
    %v3455 = vpop.f32.mrb[0].mxu0
    %v3456 = vpop.f32.mrb[0].mxu0
    %v3457 = vadd.f32 0.0, %v3456
    %v3458 = vpop.f32.mrb[0].mxu0
    %3459 = vmatprep.mubr.bf16.mxu0 0
    %3460 = vmatmul.mubr.bf16.gmra.mrb[0].mxu0 %v3405
    %v3461 = vpop.f32.mrb[0].mxu0
    %v3462 = vadd.f32 0.0, %v3461
    %v3463 = vpop.f32.mrb[0].mxu0
    %v3464 = vpop.f32.mrb[0].mxu0
    %v3465 = vadd.f32 0.0, %v3464
    %v3466 = vpop.f32.mrb[0].mxu0
    %3467 = vmatprep.mubr.bf16.mxu0 0
    %3468 = vmatmul.mubr.bf16.gmra.mrb[0].mxu0 %v3406
    %v3469 = vpop.f32.mrb[0].mxu0
    %v3470 = vadd.f32 0.0, %v3469
    %v3471 = vpop.f32.mrb[0].mxu0
    %v3472 = vpop.f32.mrb[0].mxu0
    %v3473 = vadd.f32 0.0, %v3472
    %v3474 = vpop.f32.mrb[0].mxu0
    %3475 = vmatprep.mubr.bf16.mxu0 0
    %3476 = vmatmul.mubr.bf16.gmra.mrb[0].mxu0 %v3407
    %v3477 = vpop.f32.mrb[0].mxu0
    %v3478 = vadd.f32 0.0, %v3477
    %v3479 = vpop.f32.mrb[0].mxu0
    %v3480 = vpop.f32.mrb[0].mxu0
    %v3481 = vadd.f32 0.0, %v3480
    %v3482 = vpop.f32.mrb[0].mxu0
    %3483 = vmatprep.mubr.bf16.mxu0 0
    %3484 = vmatmul.mubr.bf16.gmra.mrb[0].mxu0 %v3408
    %v3485 = vpop.f32.mrb[0].mxu0
    %v3486 = vadd.f32 0.0, %v3485
    %v3487 = vpop.f32.mrb[0].mxu0
    %v3488 = vpop.f32.mrb[0].mxu0
    %v3489 = vadd.f32 0.0, %v3488
    %v3490 = vpop.f32.mrb[0].mxu0
    %3491 = vmatprep.mubr.bf16.mxu0 0
    %3492 = vmatmul.mubr.bf16.gmra.mrb[0].mxu0 %v3409
    %v3493 = vpop.f32.mrb[0].mxu0
    %v3494 = vadd.f32 0.0, %v3493
    %v3495 = vpop.f32.mrb[0].mxu0
    %v3496 = vpop.f32.mrb[0].mxu0
    %v3497 = vadd.f32 0.0, %v3496
    %v3498 = vpop.f32.mrb[0].mxu0
    %3499 = vmatprep.mubr.bf16.mxu0 0
    %3500 = vmatmul.mubr.bf16.gmra.mrb[0].mxu0 %v3410
    %v3501 = vpop.f32.mrb[0].mxu0
    %v3502 = vadd.f32 0.0, %v3501
    %v3503 = vpop.f32.mrb[0].mxu0
    %v3504 = vpop.f32.mrb[0].mxu0
    %v3505 = vadd.f32 0.0, %v3504
    %v3506 = vpop.f32.mrb[0].mxu0
    %3507 = vdwg.mxu0
    %v3508 = vrcp.pop %v3372
    %v3509 = vrcp.pop %v3374
    %v3510 = vrcp.pop %v3376
    %v3511 = vrcp.pop %v3378
    %v3512 = vrcp.pop %v3380
    %v3513 = vrcp.pop %v3382
    %v3514 = vrcp.pop %v3384
    %v3515 = vrcp.pop %v3386
    %v3516 = vrcp.pop %v3388
    %v3517 = vrcp.pop %v3390
    %v3518 = vrcp.pop %v3392
    %v3519 = vrcp.pop %v3394
    %v3520 = vrcp.pop %v3396
    %v3521 = vrcp.pop %v3398
    %v3522 = vrcp.pop %v3400
    %v3523 = vrcp.pop %v3402
    %v3524 = vmul.f32 %v3446, %v3508
    %v3525 = vmul.f32 %v3449, %v3509
    %v3526 = vmul.f32 %v3454, %v3510
    %v3527 = vmul.f32 %v3457, %v3511
    %v3528 = vmul.f32 %v3462, %v3512
    %v3529 = vmul.f32 %v3465, %v3513
    %v3530 = vmul.f32 %v3470, %v3514
    %v3531 = vmul.f32 %v3473, %v3515
    %v3532 = vmul.f32 %v3478, %v3516
    %v3533 = vmul.f32 %v3481, %v3517
    %v3534 = vmul.f32 %v3486, %v3518
    %v3535 = vmul.f32 %v3489, %v3519
    %v3536 = vmul.f32 %v3494, %v3520
    %v3537 = vmul.f32 %v3497, %v3521
    %v3538 = vmul.f32 %v3502, %v3522
    %v3539 = vmul.f32 %v3505, %v3523
    %v3540 = vpack.c.bf16 %v3525, %v3524
    %v3541 = vpack.c.bf16 %v3527, %v3526
    %v3542 = vpack.c.bf16 %v3529, %v3528
    %v3543 = vpack.c.bf16 %v3531, %v3530
    %v3544 = vpack.c.bf16 %v3533, %v3532
    %v3545 = vpack.c.bf16 %v3535, %v3534
    %v3546 = vpack.c.bf16 %v3537, %v3536
    %v3547 = vpack.c.bf16 %v3539, %v3538
    %3556 = vrot.lane.b32.xlu0 %v1924, 64
    %v3557 = vpop.permute.xlu0 %3556
    %3558 = vrot.lane.b32.xlu0 %v1927, 64
    %v3559 = vpop.permute.xlu0 %3558
    %3560 = vrot.lane.b32.xlu0 %v1930, 64
    %v3561 = vpop.permute.xlu0 %3560
    %3562 = vrot.lane.b32.xlu0 %v1933, 64
    %v3563 = vpop.permute.xlu0 %3562
    %3564 = vrot.lane.b32.xlu0 %v1936, 64
    %v3565 = vpop.permute.xlu0 %3564
    %3566 = vrot.lane.b32.xlu0 %v1939, 64
    %v3567 = vpop.permute.xlu0 %3566
    %3568 = vrot.lane.b32.xlu0 %v1942, 64
    %v3569 = vpop.permute.xlu0 %3568
    %3570 = vrot.lane.b32.xlu0 %v1945, 64
    %v3571 = vpop.permute.xlu0 %3570
    %3580 = vrot.lane.b32.xlu0 %v1925, 64
    %v3581 = vpop.permute.xlu0 %3580
    %3582 = vrot.lane.b32.xlu0 %v1928, 64
    %v3583 = vpop.permute.xlu0 %3582
    %3584 = vrot.lane.b32.xlu0 %v1931, 64
    %v3585 = vpop.permute.xlu0 %3584
    %3586 = vrot.lane.b32.xlu0 %v1934, 64
    %v3587 = vpop.permute.xlu0 %3586
    %3588 = vrot.lane.b32.xlu0 %v1937, 64
    %v3589 = vpop.permute.xlu0 %3588
    %3590 = vrot.lane.b32.xlu0 %v1940, 64
    %v3591 = vpop.permute.xlu0 %3590
    %3592 = vrot.lane.b32.xlu0 %v1943, 64
    %v3593 = vpop.permute.xlu0 %3592
    %3594 = vrot.lane.b32.xlu0 %v1946, 64
    %v3595 = vpop.permute.xlu0 %3594
    %v3597 = vsel %vm1948, %v3557, 0
    %v3600 = vsel %vm1948, %v3559, 0
    %v3603 = vsel %vm1948, %v3561, 0
    %v3606 = vsel %vm1948, %v3563, 0
    %v3609 = vsel %vm1948, %v3565, 0
    %v3612 = vsel %vm1948, %v3567, 0
    %v3615 = vsel %vm1948, %v3569, 0
    %v3618 = vsel %vm1948, %v3571, 0
    %v3621 = vsel %vm1948, %v3581, 0
    %v3624 = vsel %vm1948, %v3583, 0
    %v3627 = vsel %vm1948, %v3585, 0
    %v3630 = vsel %vm1948, %v3587, 0
    %v3633 = vsel %vm1948, %v3589, 0
    %v3636 = vsel %vm1948, %v3591, 0
    %v3639 = vsel %vm1948, %v3593, 0
    %v3642 = vsel %vm1948, %v3595, 0
    %3644 = vmatprep.subr.bf16.mxu0 0
    %3645 = vmatpush1.bf16.xpose.msra.mxu0 %v3621
    %3646 = vmatprep.subr.bf16.mxu0 0
    %3647 = vmatpush1.bf16.xpose.msra.mxu0 %v3624
    %3648 = vmatprep.subr.bf16.mxu0 0
    %3649 = vmatpush1.bf16.xpose.msra.mxu0 %v3627
    %3650 = vmatprep.subr.bf16.mxu0 0
    %3651 = vmatpush1.bf16.xpose.msra.mxu0 %v3630
    %3652 = vmatprep.subr.bf16.mxu0 0
    %3653 = vmatpush1.bf16.xpose.msra.mxu0 %v3633
    %3654 = vmatprep.subr.bf16.mxu0 0
    %3655 = vmatpush1.bf16.xpose.msra.mxu0 %v3636
    %3656 = vmatprep.subr.bf16.mxu0 0
    %3657 = vmatpush1.bf16.xpose.msra.mxu0 %v3639
    %3658 = vmatprep.subr.bf16.mxu0 0
    %3659 = vmatpush1.bf16.xpose.msra.mxu0 %v3642
    %3660 = vmatprep.subr.bf16.mxu0 0
    %3661 = vmatpush1.bf16.xpose.msra.mxu0 0
    %3662 = vmatprep.subr.bf16.mxu0 0
    %3663 = vmatpush1.bf16.xpose.msra.mxu0 0
    %3664 = vmatprep.subr.bf16.mxu0 0
    %3665 = vmatpush1.bf16.xpose.msra.mxu0 0
    %3666 = vmatprep.subr.bf16.mxu0 0
    %3667 = vmatpush1.bf16.xpose.msra.mxu0 0
    %3668 = vmatprep.subr.bf16.mxu0 0
    %3669 = vmatpush1.bf16.xpose.msra.mxu0 0
    %3670 = vmatprep.subr.bf16.mxu0 0
    %3671 = vmatpush1.bf16.xpose.msra.mxu0 0
    %3672 = vmatprep.subr.bf16.mxu0 0
    %3673 = vmatpush1.bf16.xpose.msra.mxu0 0
    %3674 = vmatprep.subr.bf16.mxu0 0
    %3675 = vmatpush1.bf16.xpose.msra.mxu0 0
    %3676 = vmatprep.mubr.bf16.mxu0 0
    %3677 = vmatmul.mubr.bf16.gmra.mrb[0].mxu0 %v3597
    %v3678 = vpop.f32.mrb[0].mxu0
    %v3679 = vadd.f32 0.0, %v3678
    %v3680 = vpop.f32.mrb[0].mxu0
    %v3681 = vpop.f32.mrb[0].mxu0
    %v3682 = vadd.f32 0.0, %v3681
    %v3683 = vpop.f32.mrb[0].mxu0
    %3684 = vmatprep.mubr.bf16.mxu0 0
    %3685 = vmatmul.mubr.bf16.gmra.mrb[0].mxu0 %v3600
    %v3686 = vpop.f32.mrb[0].mxu0
    %v3687 = vadd.f32 0.0, %v3686
    %v3688 = vpop.f32.mrb[0].mxu0
    %v3689 = vpop.f32.mrb[0].mxu0
    %v3690 = vadd.f32 0.0, %v3689
    %v3691 = vpop.f32.mrb[0].mxu0
    %3692 = vmatprep.mubr.bf16.mxu0 0
    %3693 = vmatmul.mubr.bf16.gmra.mrb[0].mxu0 %v3603
    %v3694 = vpop.f32.mrb[0].mxu0
    %v3695 = vadd.f32 0.0, %v3694
    %v3696 = vpop.f32.mrb[0].mxu0
    %v3697 = vpop.f32.mrb[0].mxu0
    %v3698 = vadd.f32 0.0, %v3697
    %v3699 = vpop.f32.mrb[0].mxu0
    %3700 = vmatprep.mubr.bf16.mxu0 0
    %3701 = vmatmul.mubr.bf16.gmra.mrb[0].mxu0 %v3606
    %v3702 = vpop.f32.mrb[0].mxu0
    %v3703 = vadd.f32 0.0, %v3702
    %v3704 = vpop.f32.mrb[0].mxu0
    %v3705 = vpop.f32.mrb[0].mxu0
    %v3706 = vadd.f32 0.0, %v3705
    %v3707 = vpop.f32.mrb[0].mxu0
    %3708 = vmatprep.mubr.bf16.mxu0 0
    %3709 = vmatmul.mubr.bf16.gmra.mrb[0].mxu0 %v3609
    %v3710 = vpop.f32.mrb[0].mxu0
    %v3711 = vadd.f32 0.0, %v3710
    %v3712 = vpop.f32.mrb[0].mxu0
    %v3713 = vpop.f32.mrb[0].mxu0
    %v3714 = vadd.f32 0.0, %v3713
    %v3715 = vpop.f32.mrb[0].mxu0
    %3716 = vmatprep.mubr.bf16.mxu0 0
    %3717 = vmatmul.mubr.bf16.gmra.mrb[0].mxu0 %v3612
    %v3718 = vpop.f32.mrb[0].mxu0
    %v3719 = vadd.f32 0.0, %v3718
    %v3720 = vpop.f32.mrb[0].mxu0
    %v3721 = vpop.f32.mrb[0].mxu0
    %v3722 = vadd.f32 0.0, %v3721
    %v3723 = vpop.f32.mrb[0].mxu0
    %3724 = vmatprep.mubr.bf16.mxu0 0
    %3725 = vmatmul.mubr.bf16.gmra.mrb[0].mxu0 %v3615
    %v3726 = vpop.f32.mrb[0].mxu0
    %v3727 = vadd.f32 0.0, %v3726
    %v3728 = vpop.f32.mrb[0].mxu0
    %v3729 = vpop.f32.mrb[0].mxu0
    %v3730 = vadd.f32 0.0, %v3729
    %v3731 = vpop.f32.mrb[0].mxu0
    %3732 = vmatprep.mubr.bf16.mxu0 0
    %3733 = vmatmul.mubr.bf16.gmra.mrb[0].mxu0 %v3618
    %v3734 = vpop.f32.mrb[0].mxu0
    %v3735 = vadd.f32 0.0, %v3734
    %v3736 = vpop.f32.mrb[0].mxu0
    %v3737 = vpop.f32.mrb[0].mxu0
    %v3738 = vadd.f32 0.0, %v3737
    %v3739 = vpop.f32.mrb[0].mxu0
    %3740 = vdwg.mxu0
    %3741 = vmax.xlane.f32.xlu0 %v3679
    %v3742 = vpop.xlane.xlu0 %3741
    %3743 = vmax.xlane.f32.xlu0 %v3682
    %v3744 = vpop.xlane.xlu0 %3743
    %3745 = vmax.xlane.f32.xlu0 %v3687
    %v3746 = vpop.xlane.xlu0 %3745
    %3747 = vmax.xlane.f32.xlu0 %v3690
    %v3748 = vpop.xlane.xlu0 %3747
    %3749 = vmax.xlane.f32.xlu0 %v3695
    %v3750 = vpop.xlane.xlu0 %3749
    %3751 = vmax.xlane.f32.xlu0 %v3698
    %v3752 = vpop.xlane.xlu0 %3751
    %3753 = vmax.xlane.f32.xlu0 %v3703
    %v3754 = vpop.xlane.xlu0 %3753
    %3755 = vmax.xlane.f32.xlu0 %v3706
    %v3756 = vpop.xlane.xlu0 %3755
    %3757 = vmax.xlane.f32.xlu0 %v3711
    %v3758 = vpop.xlane.xlu0 %3757
    %3759 = vmax.xlane.f32.xlu0 %v3714
    %v3760 = vpop.xlane.xlu0 %3759
    %3761 = vmax.xlane.f32.xlu0 %v3719
    %v3762 = vpop.xlane.xlu0 %3761
    %3763 = vmax.xlane.f32.xlu0 %v3722
    %v3764 = vpop.xlane.xlu0 %3763
    %3765 = vmax.xlane.f32.xlu0 %v3727
    %v3766 = vpop.xlane.xlu0 %3765
    %3767 = vmax.xlane.f32.xlu0 %v3730
    %v3768 = vpop.xlane.xlu0 %3767
    %3769 = vmax.xlane.f32.xlu0 %v3735
    %v3770 = vpop.xlane.xlu0 %3769
    %3771 = vmax.xlane.f32.xlu0 %v3738
    %v3772 = vpop.xlane.xlu0 %3771
    %v3773 = vsub.f32 %v3679, %v3742
    %v3774 = vsub.f32 %v3682, %v3744
    %v3775 = vsub.f32 %v3687, %v3746
    %v3776 = vsub.f32 %v3690, %v3748
    %v3777 = vsub.f32 %v3695, %v3750
    %v3778 = vsub.f32 %v3698, %v3752
    %v3779 = vsub.f32 %v3703, %v3754
    %v3780 = vsub.f32 %v3706, %v3756
    %v3781 = vsub.f32 %v3711, %v3758
    %v3782 = vsub.f32 %v3714, %v3760
    %v3783 = vsub.f32 %v3719, %v3762
    %v3784 = vsub.f32 %v3722, %v3764
    %v3785 = vsub.f32 %v3727, %v3766
    %v3786 = vsub.f32 %v3730, %v3768
    %v3787 = vsub.f32 %v3735, %v3770
    %v3788 = vsub.f32 %v3738, %v3772
    %v3789 = vmul.f32 %v3773, 1.442695
    %v3790 = vpow.pop %v3789
    %v3791 = vmul.f32 %v3774, 1.442695
    %v3792 = vpow.pop %v3791
    %v3793 = vmul.f32 %v3775, 1.442695
    %v3794 = vpow.pop %v3793
    %v3795 = vmul.f32 %v3776, 1.442695
    %v3796 = vpow.pop %v3795
    %v3797 = vmul.f32 %v3777, 1.442695
    %v3798 = vpow.pop %v3797
    %v3799 = vmul.f32 %v3778, 1.442695
    %v3800 = vpow.pop %v3799
    %v3801 = vmul.f32 %v3779, 1.442695
    %v3802 = vpow.pop %v3801
    %v3803 = vmul.f32 %v3780, 1.442695
    %v3804 = vpow.pop %v3803
    %v3805 = vmul.f32 %v3781, 1.442695
    %v3806 = vpow.pop %v3805
    %v3807 = vmul.f32 %v3782, 1.442695
    %v3808 = vpow.pop %v3807
    %v3809 = vmul.f32 %v3783, 1.442695
    %v3810 = vpow.pop %v3809
    %v3811 = vmul.f32 %v3784, 1.442695
    %v3812 = vpow.pop %v3811
    %v3813 = vmul.f32 %v3785, 1.442695
    %v3814 = vpow.pop %v3813
    %v3815 = vmul.f32 %v3786, 1.442695
    %v3816 = vpow.pop %v3815
    %v3817 = vmul.f32 %v3787, 1.442695
    %v3818 = vpow.pop %v3817
    %v3819 = vmul.f32 %v3788, 1.442695
    %v3820 = vpow.pop %v3819
    %3821 = vadd.xlane.f32.xlu0 %v3790
    %v3822 = vpop.xlane.xlu0 %3821
    %3823 = vadd.xlane.f32.xlu0 %v3792
    %v3824 = vpop.xlane.xlu0 %3823
    %3825 = vadd.xlane.f32.xlu0 %v3794
    %v3826 = vpop.xlane.xlu0 %3825
    %3827 = vadd.xlane.f32.xlu0 %v3796
    %v3828 = vpop.xlane.xlu0 %3827
    %3829 = vadd.xlane.f32.xlu0 %v3798
    %v3830 = vpop.xlane.xlu0 %3829
    %3831 = vadd.xlane.f32.xlu0 %v3800
    %v3832 = vpop.xlane.xlu0 %3831
    %3833 = vadd.xlane.f32.xlu0 %v3802
    %v3834 = vpop.xlane.xlu0 %3833
    %3835 = vadd.xlane.f32.xlu0 %v3804
    %v3836 = vpop.xlane.xlu0 %3835
    %3837 = vadd.xlane.f32.xlu0 %v3806
    %v3838 = vpop.xlane.xlu0 %3837
    %3839 = vadd.xlane.f32.xlu0 %v3808
    %v3840 = vpop.xlane.xlu0 %3839
    %3841 = vadd.xlane.f32.xlu0 %v3810
    %v3842 = vpop.xlane.xlu0 %3841
    %3843 = vadd.xlane.f32.xlu0 %v3812
    %v3844 = vpop.xlane.xlu0 %3843
    %3845 = vadd.xlane.f32.xlu0 %v3814
    %v3846 = vpop.xlane.xlu0 %3845
    %3847 = vadd.xlane.f32.xlu0 %v3816
    %v3848 = vpop.xlane.xlu0 %3847
    %3849 = vadd.xlane.f32.xlu0 %v3818
    %v3850 = vpop.xlane.xlu0 %3849
    %3851 = vadd.xlane.f32.xlu0 %v3820
    %v3852 = vpop.xlane.xlu0 %3851
    %v3853 = vpack.c.bf16 %v3792, %v3790
    %v3854 = vpack.c.bf16 %v3796, %v3794
    %v3855 = vpack.c.bf16 %v3800, %v3798
    %v3856 = vpack.c.bf16 %v3804, %v3802
    %v3857 = vpack.c.bf16 %v3808, %v3806
    %v3858 = vpack.c.bf16 %v3812, %v3810
    %v3859 = vpack.c.bf16 %v3816, %v3814
    %v3860 = vpack.c.bf16 %v3820, %v3818
    %3869 = vrot.lane.b32.xlu0 %v1926, 64
    %v3870 = vpop.permute.xlu0 %3869
    %3871 = vrot.lane.b32.xlu0 %v1929, 64
    %v3872 = vpop.permute.xlu0 %3871
    %3873 = vrot.lane.b32.xlu0 %v1932, 64
    %v3874 = vpop.permute.xlu0 %3873
    %3875 = vrot.lane.b32.xlu0 %v1935, 64
    %v3876 = vpop.permute.xlu0 %3875
    %3877 = vrot.lane.b32.xlu0 %v1938, 64
    %v3878 = vpop.permute.xlu0 %3877
    %3879 = vrot.lane.b32.xlu0 %v1941, 64
    %v3880 = vpop.permute.xlu0 %3879
    %3881 = vrot.lane.b32.xlu0 %v1944, 64
    %v3882 = vpop.permute.xlu0 %3881
    %3883 = vrot.lane.b32.xlu0 %v1947, 64
    %v3884 = vpop.permute.xlu0 %3883
    %3893 = vmatprep.subr.bf16.mxu0 0
    %3894 = vmatpush1.bf16.msra.mxu0 %v3870
    %3895 = vmatprep.subr.bf16.mxu0 0
    %3896 = vmatpush1.bf16.msra.mxu0 %v3872
    %3897 = vmatprep.subr.bf16.mxu0 0
    %3898 = vmatpush1.bf16.msra.mxu0 %v3874
    %3899 = vmatprep.subr.bf16.mxu0 0
    %3900 = vmatpush1.bf16.msra.mxu0 %v3876
    %3901 = vmatprep.subr.bf16.mxu0 0
    %3902 = vmatpush1.bf16.msra.mxu0 %v3878
    %3903 = vmatprep.subr.bf16.mxu0 0
    %3904 = vmatpush1.bf16.msra.mxu0 %v3880
    %3905 = vmatprep.subr.bf16.mxu0 0
    %3906 = vmatpush1.bf16.msra.mxu0 %v3882
    %3907 = vmatprep.subr.bf16.mxu0 0
    %3908 = vmatpush1.bf16.msra.mxu0 %v3884
    %3909 = vmatprep.subr.bf16.mxu0 0
    %3910 = vmatpush1.bf16.msra.mxu0 0
    %3911 = vmatprep.subr.bf16.mxu0 0
    %3912 = vmatpush1.bf16.msra.mxu0 0
    %3913 = vmatprep.subr.bf16.mxu0 0
    %3914 = vmatpush1.bf16.msra.mxu0 0
    %3915 = vmatprep.subr.bf16.mxu0 0
    %3916 = vmatpush1.bf16.msra.mxu0 0
    %3917 = vmatprep.subr.bf16.mxu0 0
    %3918 = vmatpush1.bf16.msra.mxu0 0
    %3919 = vmatprep.subr.bf16.mxu0 0
    %3920 = vmatpush1.bf16.msra.mxu0 0
    %3921 = vmatprep.subr.bf16.mxu0 0
    %3922 = vmatpush1.bf16.msra.mxu0 0
    %3923 = vmatprep.subr.bf16.mxu0 0
    %3924 = vmatpush1.bf16.msra.mxu0 0
    %3925 = vmatprep.mubr.bf16.mxu0 0
    %3926 = vmatmul.mubr.bf16.gmra.mrb[0].mxu0 %v3853
    %v3927 = vpop.f32.mrb[0].mxu0
    %v3928 = vadd.f32 0.0, %v3927
    %v3929 = vpop.f32.mrb[0].mxu0
    %v3930 = vpop.f32.mrb[0].mxu0
    %v3931 = vadd.f32 0.0, %v3930
    %v3932 = vpop.f32.mrb[0].mxu0
    %3933 = vmatprep.mubr.bf16.mxu0 0
    %3934 = vmatmul.mubr.bf16.gmra.mrb[0].mxu0 %v3854
    %v3935 = vpop.f32.mrb[0].mxu0
    %v3936 = vadd.f32 0.0, %v3935
    %v3937 = vpop.f32.mrb[0].mxu0
    %v3938 = vpop.f32.mrb[0].mxu0
    %v3939 = vadd.f32 0.0, %v3938
    %v3940 = vpop.f32.mrb[0].mxu0
    %3941 = vmatprep.mubr.bf16.mxu0 0
    %3942 = vmatmul.mubr.bf16.gmra.mrb[0].mxu0 %v3855
    %v3943 = vpop.f32.mrb[0].mxu0
    %v3944 = vadd.f32 0.0, %v3943
    %v3945 = vpop.f32.mrb[0].mxu0
    %v3946 = vpop.f32.mrb[0].mxu0
    %v3947 = vadd.f32 0.0, %v3946
    %v3948 = vpop.f32.mrb[0].mxu0
    %3949 = vmatprep.mubr.bf16.mxu0 0
    %3950 = vmatmul.mubr.bf16.gmra.mrb[0].mxu0 %v3856
    %v3951 = vpop.f32.mrb[0].mxu0
    %v3952 = vadd.f32 0.0, %v3951
    %v3953 = vpop.f32.mrb[0].mxu0
    %v3954 = vpop.f32.mrb[0].mxu0
    %v3955 = vadd.f32 0.0, %v3954
    %v3956 = vpop.f32.mrb[0].mxu0
    %3957 = vmatprep.mubr.bf16.mxu0 0
    %3958 = vmatmul.mubr.bf16.gmra.mrb[0].mxu0 %v3857
    %v3959 = vpop.f32.mrb[0].mxu0
    %v3960 = vadd.f32 0.0, %v3959
    %v3961 = vpop.f32.mrb[0].mxu0
    %v3962 = vpop.f32.mrb[0].mxu0
    %v3963 = vadd.f32 0.0, %v3962
    %v3964 = vpop.f32.mrb[0].mxu0
    %3965 = vmatprep.mubr.bf16.mxu0 0
    %3966 = vmatmul.mubr.bf16.gmra.mrb[0].mxu0 %v3858
    %v3967 = vpop.f32.mrb[0].mxu0
    %v3968 = vadd.f32 0.0, %v3967
    %v3969 = vpop.f32.mrb[0].mxu0
    %v3970 = vpop.f32.mrb[0].mxu0
    %v3971 = vadd.f32 0.0, %v3970
    %v3972 = vpop.f32.mrb[0].mxu0
    %3973 = vmatprep.mubr.bf16.mxu0 0
    %3974 = vmatmul.mubr.bf16.gmra.mrb[0].mxu0 %v3859
    %v3975 = vpop.f32.mrb[0].mxu0
    %v3976 = vadd.f32 0.0, %v3975
    %v3977 = vpop.f32.mrb[0].mxu0
    %v3978 = vpop.f32.mrb[0].mxu0
    %v3979 = vadd.f32 0.0, %v3978
    %v3980 = vpop.f32.mrb[0].mxu0
    %3981 = vmatprep.mubr.bf16.mxu0 0
    %3982 = vmatmul.mubr.bf16.gmra.mrb[0].mxu0 %v3860
    %v3983 = vpop.f32.mrb[0].mxu0
    %v3984 = vadd.f32 0.0, %v3983
    %v3985 = vpop.f32.mrb[0].mxu0
    %v3986 = vpop.f32.mrb[0].mxu0
    %v3987 = vadd.f32 0.0, %v3986
    %v3988 = vpop.f32.mrb[0].mxu0
    %3989 = vdwg.mxu0
    %v3990 = vrcp.pop %v3822
    %v3991 = vrcp.pop %v3824
    %v3992 = vrcp.pop %v3826
    %v3993 = vrcp.pop %v3828
    %v3994 = vrcp.pop %v3830
    %v3995 = vrcp.pop %v3832
    %v3996 = vrcp.pop %v3834
    %v3997 = vrcp.pop %v3836
    %v3998 = vrcp.pop %v3838
    %v3999 = vrcp.pop %v3840
    %v4000 = vrcp.pop %v3842
    %v4001 = vrcp.pop %v3844
    %v4002 = vrcp.pop %v3846
    %v4003 = vrcp.pop %v3848
    %v4004 = vrcp.pop %v3850
    %v4005 = vrcp.pop %v3852
    %v4006 = vmul.f32 %v3928, %v3990
    %v4007 = vmul.f32 %v3931, %v3991
    %v4008 = vmul.f32 %v3936, %v3992
    %v4009 = vmul.f32 %v3939, %v3993
    %v4010 = vmul.f32 %v3944, %v3994
    %v4011 = vmul.f32 %v3947, %v3995
    %v4012 = vmul.f32 %v3952, %v3996
    %v4013 = vmul.f32 %v3955, %v3997
    %v4014 = vmul.f32 %v3960, %v3998
    %v4015 = vmul.f32 %v3963, %v3999
    %v4016 = vmul.f32 %v3968, %v4000
    %v4017 = vmul.f32 %v3971, %v4001
    %v4018 = vmul.f32 %v3976, %v4002
    %v4019 = vmul.f32 %v3979, %v4003
    %v4020 = vmul.f32 %v3984, %v4004
    %v4021 = vmul.f32 %v3987, %v4005
    %v4022 = vpack.c.bf16 %v4007, %v4006
    %v4023 = vpack.c.bf16 %v4009, %v4008
    %v4024 = vpack.c.bf16 %v4011, %v4010
    %v4025 = vpack.c.bf16 %v4013, %v4012
    %v4026 = vpack.c.bf16 %v4015, %v4014
    %v4027 = vpack.c.bf16 %v4017, %v4016
    %v4028 = vpack.c.bf16 %v4019, %v4018
    %v4029 = vpack.c.bf16 %v4021, %v4020
    %v4031 = vsel %vm1948, %v4022, 0
    %v4034 = vsel %vm1948, %v4023, 0
    %v4037 = vsel %vm1948, %v4024, 0
    %v4040 = vsel %vm1948, %v4025, 0
    %v4043 = vsel %vm1948, %v4026, 0
    %v4046 = vsel %vm1948, %v4027, 0
    %v4049 = vsel %vm1948, %v4028, 0
    %v4052 = vsel %vm1948, %v4029, 0
    %4054 = vmatprep.subr.bf16.mxu0 0
    %4055 = vmatpush1.bf16.msra.mxu0 %v2849
    %4056 = vmatprep.subr.bf16.mxu0 0
    %4057 = vmatpush1.bf16.msra.mxu0 %v2850
    %4058 = vmatprep.subr.bf16.mxu0 0
    %4059 = vmatpush1.bf16.msra.mxu0 %v2851
    %4060 = vmatprep.subr.bf16.mxu0 0
    %4061 = vmatpush1.bf16.msra.mxu0 %v2852
    %4062 = vmatprep.subr.bf16.mxu0 0
    %4063 = vmatpush1.bf16.msra.mxu0 0
    %4064 = vmatprep.subr.bf16.mxu0 0
    %4065 = vmatpush1.bf16.msra.mxu0 0
    %4066 = vmatprep.subr.bf16.mxu0 0
    %4067 = vmatpush1.bf16.msra.mxu0 0
    %4068 = vmatprep.subr.bf16.mxu0 0
    %4069 = vmatpush1.bf16.msra.mxu0 0
    %4070 = vmatprep.subr.bf16.mxu0 0
    %4071 = vmatpush1.bf16.msra.mxu0 0
    %4072 = vmatprep.subr.bf16.mxu0 0
    %4073 = vmatpush1.bf16.msra.mxu0 0
    %4074 = vmatprep.subr.bf16.mxu0 0
    %4075 = vmatpush1.bf16.msra.mxu0 0
    %4076 = vmatprep.subr.bf16.mxu0 0
    %4077 = vmatpush1.bf16.msra.mxu0 0
    %4078 = vmatprep.subr.bf16.mxu0 0
    %4079 = vmatpush1.bf16.msra.mxu0 0
    %4080 = vmatprep.subr.bf16.mxu0 0
    %4081 = vmatpush1.bf16.msra.mxu0 0
    %4082 = vmatprep.subr.bf16.mxu0 0
    %4083 = vmatpush1.bf16.msra.mxu0 0
    %4084 = vmatprep.subr.bf16.mxu0 0
    %4085 = vmatpush1.bf16.msra.mxu0 0
    %4086 = vmatprep.mubr.bf16.mxu0 0
    %4087 = vmatmul.mubr.bf16.gmra.mrb[0].mxu0 %v4031
    %v4088 = vpop.f32.mrb[0].mxu0
    %v4089 = vadd.f32 0.0, %v4088
    %v4090 = vpop.f32.mrb[0].mxu0
    %v4091 = vpop.f32.mrb[0].mxu0
    %v4092 = vadd.f32 0.0, %v4091
    %v4093 = vpop.f32.mrb[0].mxu0
    %4094 = vmatprep.mubr.bf16.mxu0 0
    %4095 = vmatmul.mubr.bf16.gmra.mrb[0].mxu0 %v4034
    %v4096 = vpop.f32.mrb[0].mxu0
    %v4097 = vadd.f32 0.0, %v4096
    %v4098 = vpop.f32.mrb[0].mxu0
    %v4099 = vpop.f32.mrb[0].mxu0
    %v4100 = vadd.f32 0.0, %v4099
    %v4101 = vpop.f32.mrb[0].mxu0
    %4102 = vmatprep.mubr.bf16.mxu0 0
    %4103 = vmatmul.mubr.bf16.gmra.mrb[0].mxu0 %v4037
    %v4104 = vpop.f32.mrb[0].mxu0
    %v4105 = vadd.f32 0.0, %v4104
    %v4106 = vpop.f32.mrb[0].mxu0
    %v4107 = vpop.f32.mrb[0].mxu0
    %v4108 = vadd.f32 0.0, %v4107
    %v4109 = vpop.f32.mrb[0].mxu0
    %4110 = vmatprep.mubr.bf16.mxu0 0
    %4111 = vmatmul.mubr.bf16.gmra.mrb[0].mxu0 %v4040
    %v4112 = vpop.f32.mrb[0].mxu0
    %v4113 = vadd.f32 0.0, %v4112
    %v4114 = vpop.f32.mrb[0].mxu0
    %v4115 = vpop.f32.mrb[0].mxu0
    %v4116 = vadd.f32 0.0, %v4115
    %v4117 = vpop.f32.mrb[0].mxu0
    %4118 = vmatprep.mubr.bf16.mxu0 0
    %4119 = vmatmul.mubr.bf16.gmra.mrb[0].mxu0 %v4043
    %v4120 = vpop.f32.mrb[0].mxu0
    %v4121 = vadd.f32 0.0, %v4120
    %v4122 = vpop.f32.mrb[0].mxu0
    %v4123 = vpop.f32.mrb[0].mxu0
    %v4124 = vadd.f32 0.0, %v4123
    %v4125 = vpop.f32.mrb[0].mxu0
    %4126 = vmatprep.mubr.bf16.mxu0 0
    %4127 = vmatmul.mubr.bf16.gmra.mrb[0].mxu0 %v4046
    %v4128 = vpop.f32.mrb[0].mxu0
    %v4129 = vadd.f32 0.0, %v4128
    %v4130 = vpop.f32.mrb[0].mxu0
    %v4131 = vpop.f32.mrb[0].mxu0
    %v4132 = vadd.f32 0.0, %v4131
    %v4133 = vpop.f32.mrb[0].mxu0
    %4134 = vmatprep.mubr.bf16.mxu0 0
    %4135 = vmatmul.mubr.bf16.gmra.mrb[0].mxu0 %v4049
    %v4136 = vpop.f32.mrb[0].mxu0
    %v4137 = vadd.f32 0.0, %v4136
    %v4138 = vpop.f32.mrb[0].mxu0
    %v4139 = vpop.f32.mrb[0].mxu0
    %v4140 = vadd.f32 0.0, %v4139
    %v4141 = vpop.f32.mrb[0].mxu0
    %4142 = vmatprep.mubr.bf16.mxu0 0
    %4143 = vmatmul.mubr.bf16.gmra.mrb[0].mxu0 %v4052
    %v4144 = vpop.f32.mrb[0].mxu0
    %v4145 = vadd.f32 0.0, %v4144
    %v4146 = vpop.f32.mrb[0].mxu0
    %v4147 = vpop.f32.mrb[0].mxu0
    %v4148 = vadd.f32 0.0, %v4147
    %v4149 = vpop.f32.mrb[0].mxu0
    %4150 = vdwg.mxu0
    %v4152 = vsel %vm1948, %v3540, 0
    %v4155 = vsel %vm1948, %v3541, 0
    %v4158 = vsel %vm1948, %v3542, 0
    %v4161 = vsel %vm1948, %v3543, 0
    %v4164 = vsel %vm1948, %v3544, 0
    %v4167 = vsel %vm1948, %v3545, 0
    %v4170 = vsel %vm1948, %v3546, 0
    %v4173 = vsel %vm1948, %v3547, 0
    %4175 = vmatprep.subr.bf16.mxu0 0
    %4176 = vmatpush1.bf16.msra.mxu0 %v2994
    %4177 = vmatprep.subr.bf16.mxu0 0
    %4178 = vmatpush1.bf16.msra.mxu0 %v2995
    %4179 = vmatprep.subr.bf16.mxu0 0
    %4180 = vmatpush1.bf16.msra.mxu0 %v2996
    %4181 = vmatprep.subr.bf16.mxu0 0
    %4182 = vmatpush1.bf16.msra.mxu0 %v2997
    %4183 = vmatprep.subr.bf16.mxu0 0
    %4184 = vmatpush1.bf16.msra.mxu0 0
    %4185 = vmatprep.subr.bf16.mxu0 0
    %4186 = vmatpush1.bf16.msra.mxu0 0
    %4187 = vmatprep.subr.bf16.mxu0 0
    %4188 = vmatpush1.bf16.msra.mxu0 0
    %4189 = vmatprep.subr.bf16.mxu0 0
    %4190 = vmatpush1.bf16.msra.mxu0 0
    %4191 = vmatprep.subr.bf16.mxu0 0
    %4192 = vmatpush1.bf16.msra.mxu0 0
    %4193 = vmatprep.subr.bf16.mxu0 0
    %4194 = vmatpush1.bf16.msra.mxu0 0
    %4195 = vmatprep.subr.bf16.mxu0 0
    %4196 = vmatpush1.bf16.msra.mxu0 0
    %4197 = vmatprep.subr.bf16.mxu0 0
    %4198 = vmatpush1.bf16.msra.mxu0 0
    %4199 = vmatprep.subr.bf16.mxu0 0
    %4200 = vmatpush1.bf16.msra.mxu0 0
    %4201 = vmatprep.subr.bf16.mxu0 0
    %4202 = vmatpush1.bf16.msra.mxu0 0
    %4203 = vmatprep.subr.bf16.mxu0 0
    %4204 = vmatpush1.bf16.msra.mxu0 0
    %4205 = vmatprep.subr.bf16.mxu0 0
    %4206 = vmatpush1.bf16.msra.mxu0 0
    %4207 = vmatprep.mubr.bf16.mxu0 0
    %4208 = vmatmul.mubr.bf16.gmra.mrb[0].mxu0 %v4152
    %v4209 = vpop.f32.mrb[0].mxu0
    %v4210 = vadd.f32 %v4089, %v4209
    %v4211 = vpop.f32.mrb[0].mxu0
    %v4212 = vpop.f32.mrb[0].mxu0
    %v4213 = vadd.f32 %v4092, %v4212
    %v4214 = vpop.f32.mrb[0].mxu0
    %4215 = vmatprep.mubr.bf16.mxu0 0
    %4216 = vmatmul.mubr.bf16.gmra.mrb[0].mxu0 %v4155
    %v4217 = vpop.f32.mrb[0].mxu0
    %v4218 = vadd.f32 %v4097, %v4217
    %v4219 = vpop.f32.mrb[0].mxu0
    %v4220 = vpop.f32.mrb[0].mxu0
    %v4221 = vadd.f32 %v4100, %v4220
    %v4222 = vpop.f32.mrb[0].mxu0
    %4223 = vmatprep.mubr.bf16.mxu0 0
    %4224 = vmatmul.mubr.bf16.gmra.mrb[0].mxu0 %v4158
    %v4225 = vpop.f32.mrb[0].mxu0
    %v4226 = vadd.f32 %v4105, %v4225
    %v4227 = vpop.f32.mrb[0].mxu0
    %v4228 = vpop.f32.mrb[0].mxu0
    %v4229 = vadd.f32 %v4108, %v4228
    %v4230 = vpop.f32.mrb[0].mxu0
    %4231 = vmatprep.mubr.bf16.mxu0 0
    %4232 = vmatmul.mubr.bf16.gmra.mrb[0].mxu0 %v4161
    %v4233 = vpop.f32.mrb[0].mxu0
    %v4234 = vadd.f32 %v4113, %v4233
    %v4235 = vpop.f32.mrb[0].mxu0
    %v4236 = vpop.f32.mrb[0].mxu0
    %v4237 = vadd.f32 %v4116, %v4236
    %v4238 = vpop.f32.mrb[0].mxu0
    %4239 = vmatprep.mubr.bf16.mxu0 0
    %4240 = vmatmul.mubr.bf16.gmra.mrb[0].mxu0 %v4164
    %v4241 = vpop.f32.mrb[0].mxu0
    %v4242 = vadd.f32 %v4121, %v4241
    %v4243 = vpop.f32.mrb[0].mxu0
    %v4244 = vpop.f32.mrb[0].mxu0
    %v4245 = vadd.f32 %v4124, %v4244
    %v4246 = vpop.f32.mrb[0].mxu0
    %4247 = vmatprep.mubr.bf16.mxu0 0
    %4248 = vmatmul.mubr.bf16.gmra.mrb[0].mxu0 %v4167
    %v4249 = vpop.f32.mrb[0].mxu0
    %v4250 = vadd.f32 %v4129, %v4249
    %v4251 = vpop.f32.mrb[0].mxu0
    %v4252 = vpop.f32.mrb[0].mxu0
    %v4253 = vadd.f32 %v4132, %v4252
    %v4254 = vpop.f32.mrb[0].mxu0
    %4255 = vmatprep.mubr.bf16.mxu0 0
    %4256 = vmatmul.mubr.bf16.gmra.mrb[0].mxu0 %v4170
    %v4257 = vpop.f32.mrb[0].mxu0
    %v4258 = vadd.f32 %v4137, %v4257
    %v4259 = vpop.f32.mrb[0].mxu0
    %v4260 = vpop.f32.mrb[0].mxu0
    %v4261 = vadd.f32 %v4140, %v4260
    %v4262 = vpop.f32.mrb[0].mxu0
    %4263 = vmatprep.mubr.bf16.mxu0 0
    %4264 = vmatmul.mubr.bf16.gmra.mrb[0].mxu0 %v4173
    %v4265 = vpop.f32.mrb[0].mxu0
    %v4266 = vadd.f32 %v4145, %v4265
    %v4267 = vpop.f32.mrb[0].mxu0
    %v4268 = vpop.f32.mrb[0].mxu0
    %v4269 = vadd.f32 %v4148, %v4268
    %v4270 = vpop.f32.mrb[0].mxu0
    %4271 = vdwg.mxu0
    %v4272 = vadd.f32 %v4210, %v3128
    %v4273 = vadd.f32 %v4213, %v3128
    %v4274 = vadd.f32 %v4218, %v3128
    %v4275 = vadd.f32 %v4221, %v3128
    %v4276 = vadd.f32 %v4226, %v3128
    %v4277 = vadd.f32 %v4229, %v3128
    %v4278 = vadd.f32 %v4234, %v3128
    %v4279 = vadd.f32 %v4237, %v3128
    %v4280 = vadd.f32 %v4242, %v3128
    %v4281 = vadd.f32 %v4245, %v3128
    %v4282 = vadd.f32 %v4250, %v3128
    %v4283 = vadd.f32 %v4253, %v3128
    %v4284 = vadd.f32 %v4258, %v3128
    %v4285 = vadd.f32 %v4261, %v3128
    %v4286 = vadd.f32 %v4266, %v3128
    %v4287 = vadd.f32 %v4269, %v3128
    %v4288 = vadd.f32 %v1322, %v3130
    %v4289 = vadd.f32 %v1323, %v3131
    %v4290 = vadd.f32 %v1324, %v3132
    %v4291 = vadd.f32 %v1325, %v3133
    %v4292 = vadd.f32 %v1326, %v3134
    %v4293 = vadd.f32 %v1327, %v3135
    %v4294 = vadd.f32 %v1328, %v3136
    %v4295 = vadd.f32 %v1329, %v3137
    %v4296 = vadd.f32 %v1330, %v3138
    %v4297 = vadd.f32 %v1331, %v3139
    %v4298 = vadd.f32 %v1332, %v3140
    %v4299 = vadd.f32 %v1333, %v3141
    %v4300 = vadd.f32 %v1334, %v3142
    %v4301 = vadd.f32 %v1335, %v3143
    %v4302 = vadd.f32 %v1336, %v3144
    %v4303 = vadd.f32 %v1337, %v3145
    %v4304 = vadd.f32 %v1338, %v4272
    %v4305 = vadd.f32 %v1339, %v4273
    %v4306 = vadd.f32 %v1340, %v4274
    %v4307 = vadd.f32 %v1341, %v4275
    %v4308 = vadd.f32 %v1342, %v4276
    %v4309 = vadd.f32 %v1343, %v4277
    %v4310 = vadd.f32 %v1344, %v4278
    %v4311 = vadd.f32 %v1345, %v4279
    %v4312 = vadd.f32 %v1346, %v4280
    %v4313 = vadd.f32 %v1347, %v4281
    %v4314 = vadd.f32 %v1348, %v4282
    %v4315 = vadd.f32 %v1349, %v4283
    %v4316 = vadd.f32 %v1350, %v4284
    %v4317 = vadd.f32 %v1351, %v4285
    %v4318 = vadd.f32 %v1352, %v4286
    %v4319 = vadd.f32 %v1353, %v4287
    %4320 = vadd.xlane.f32.xlu0 %v4288
    %v4321 = vpop.xlane.xlu0 %4320
    %4322 = vadd.xlane.f32.xlu0 %v4289
    %v4323 = vpop.xlane.xlu0 %4322
    %4324 = vadd.xlane.f32.xlu0 %v4290
    %v4325 = vpop.xlane.xlu0 %4324
    %4326 = vadd.xlane.f32.xlu0 %v4291
    %v4327 = vpop.xlane.xlu0 %4326
    %4328 = vadd.xlane.f32.xlu0 %v4292
    %v4329 = vpop.xlane.xlu0 %4328
    %4330 = vadd.xlane.f32.xlu0 %v4293
    %v4331 = vpop.xlane.xlu0 %4330
    %4332 = vadd.xlane.f32.xlu0 %v4294
    %v4333 = vpop.xlane.xlu0 %4332
    %4334 = vadd.xlane.f32.xlu0 %v4295
    %v4335 = vpop.xlane.xlu0 %4334
    %4336 = vadd.xlane.f32.xlu0 %v4296
    %v4337 = vpop.xlane.xlu0 %4336
    %4338 = vadd.xlane.f32.xlu0 %v4297
    %v4339 = vpop.xlane.xlu0 %4338
    %4340 = vadd.xlane.f32.xlu0 %v4298
    %v4341 = vpop.xlane.xlu0 %4340
    %4342 = vadd.xlane.f32.xlu0 %v4299
    %v4343 = vpop.xlane.xlu0 %4342
    %4344 = vadd.xlane.f32.xlu0 %v4300
    %v4345 = vpop.xlane.xlu0 %4344
    %4346 = vadd.xlane.f32.xlu0 %v4301
    %v4347 = vpop.xlane.xlu0 %4346
    %4348 = vadd.xlane.f32.xlu0 %v4302
    %v4349 = vpop.xlane.xlu0 %4348
    %4350 = vadd.xlane.f32.xlu0 %v4303
    %v4351 = vpop.xlane.xlu0 %4350
    %4352 = vadd.xlane.f32.xlu0 %v4304
    %v4353 = vpop.xlane.xlu0 %4352
    %4354 = vadd.xlane.f32.xlu0 %v4305
    %v4355 = vpop.xlane.xlu0 %4354
    %4356 = vadd.xlane.f32.xlu0 %v4306
    %v4357 = vpop.xlane.xlu0 %4356
    %4358 = vadd.xlane.f32.xlu0 %v4307
    %v4359 = vpop.xlane.xlu0 %4358
    %4360 = vadd.xlane.f32.xlu0 %v4308
    %v4361 = vpop.xlane.xlu0 %4360
    %4362 = vadd.xlane.f32.xlu0 %v4309
    %v4363 = vpop.xlane.xlu0 %4362
    %4364 = vadd.xlane.f32.xlu0 %v4310
    %v4365 = vpop.xlane.xlu0 %4364
    %4366 = vadd.xlane.f32.xlu0 %v4311
    %v4367 = vpop.xlane.xlu0 %4366
    %4368 = vadd.xlane.f32.xlu0 %v4312
    %v4369 = vpop.xlane.xlu0 %4368
    %4370 = vadd.xlane.f32.xlu0 %v4313
    %v4371 = vpop.xlane.xlu0 %4370
    %4372 = vadd.xlane.f32.xlu0 %v4314
    %v4373 = vpop.xlane.xlu0 %4372
    %4374 = vadd.xlane.f32.xlu0 %v4315
    %v4375 = vpop.xlane.xlu0 %4374
    %4376 = vadd.xlane.f32.xlu0 %v4316
    %v4377 = vpop.xlane.xlu0 %4376
    %4378 = vadd.xlane.f32.xlu0 %v4317
    %v4379 = vpop.xlane.xlu0 %4378
    %4380 = vadd.xlane.f32.xlu0 %v4318
    %v4381 = vpop.xlane.xlu0 %4380
    %4382 = vadd.xlane.f32.xlu0 %v4319
    %v4383 = vpop.xlane.xlu0 %4382
    %v4384 = vrcp.pop 128.0
    %v4385 = vmul.f32 %v4321, %v4384
    %v4386 = vmul.f32 %v4323, %v4384
    %v4387 = vmul.f32 %v4325, %v4384
    %v4388 = vmul.f32 %v4327, %v4384
    %v4389 = vmul.f32 %v4329, %v4384
    %v4390 = vmul.f32 %v4331, %v4384
    %v4391 = vmul.f32 %v4333, %v4384
    %v4392 = vmul.f32 %v4335, %v4384
    %v4393 = vmul.f32 %v4337, %v4384
    %v4394 = vmul.f32 %v4339, %v4384
    %v4395 = vmul.f32 %v4341, %v4384
    %v4396 = vmul.f32 %v4343, %v4384
    %v4397 = vmul.f32 %v4345, %v4384
    %v4398 = vmul.f32 %v4347, %v4384
    %v4399 = vmul.f32 %v4349, %v4384
    %v4400 = vmul.f32 %v4351, %v4384
    %v4401 = vmul.f32 %v4353, %v4384
    %v4402 = vmul.f32 %v4355, %v4384
    %v4403 = vmul.f32 %v4357, %v4384
    %v4404 = vmul.f32 %v4359, %v4384
    %v4405 = vmul.f32 %v4361, %v4384
    %v4406 = vmul.f32 %v4363, %v4384
    %v4407 = vmul.f32 %v4365, %v4384
    %v4408 = vmul.f32 %v4367, %v4384
    %v4409 = vmul.f32 %v4369, %v4384
    %v4410 = vmul.f32 %v4371, %v4384
    %v4411 = vmul.f32 %v4373, %v4384
    %v4412 = vmul.f32 %v4375, %v4384
    %v4413 = vmul.f32 %v4377, %v4384
    %v4414 = vmul.f32 %v4379, %v4384
    %v4415 = vmul.f32 %v4381, %v4384
    %v4416 = vmul.f32 %v4383, %v4384
    %v4417 = vmul.f32 %v4288, %v4288
    %v4418 = vmul.f32 %v4289, %v4289
    %v4419 = vmul.f32 %v4290, %v4290
    %v4420 = vmul.f32 %v4291, %v4291
    %v4421 = vmul.f32 %v4292, %v4292
    %v4422 = vmul.f32 %v4293, %v4293
    %v4423 = vmul.f32 %v4294, %v4294
    %v4424 = vmul.f32 %v4295, %v4295
    %v4425 = vmul.f32 %v4296, %v4296
    %v4426 = vmul.f32 %v4297, %v4297
    %v4427 = vmul.f32 %v4298, %v4298
    %v4428 = vmul.f32 %v4299, %v4299
    %v4429 = vmul.f32 %v4300, %v4300
    %v4430 = vmul.f32 %v4301, %v4301
    %v4431 = vmul.f32 %v4302, %v4302
    %v4432 = vmul.f32 %v4303, %v4303
    %v4433 = vmul.f32 %v4304, %v4304
    %v4434 = vmul.f32 %v4305, %v4305
    %v4435 = vmul.f32 %v4306, %v4306
    %v4436 = vmul.f32 %v4307, %v4307
    %v4437 = vmul.f32 %v4308, %v4308
    %v4438 = vmul.f32 %v4309, %v4309
    %v4439 = vmul.f32 %v4310, %v4310
    %v4440 = vmul.f32 %v4311, %v4311
    %v4441 = vmul.f32 %v4312, %v4312
    %v4442 = vmul.f32 %v4313, %v4313
    %v4443 = vmul.f32 %v4314, %v4314
    %v4444 = vmul.f32 %v4315, %v4315
    %v4445 = vmul.f32 %v4316, %v4316
    %v4446 = vmul.f32 %v4317, %v4317
    %v4447 = vmul.f32 %v4318, %v4318
    %v4448 = vmul.f32 %v4319, %v4319
    %4449 = vadd.xlane.f32.xlu0 %v4417
    %v4450 = vpop.xlane.xlu0 %4449
    %4451 = vadd.xlane.f32.xlu0 %v4418
    %v4452 = vpop.xlane.xlu0 %4451
    %4453 = vadd.xlane.f32.xlu0 %v4419
    %v4454 = vpop.xlane.xlu0 %4453
    %4455 = vadd.xlane.f32.xlu0 %v4420
    %v4456 = vpop.xlane.xlu0 %4455
    %4457 = vadd.xlane.f32.xlu0 %v4421
    %v4458 = vpop.xlane.xlu0 %4457
    %4459 = vadd.xlane.f32.xlu0 %v4422
    %v4460 = vpop.xlane.xlu0 %4459
    %4461 = vadd.xlane.f32.xlu0 %v4423
    %v4462 = vpop.xlane.xlu0 %4461
    %4463 = vadd.xlane.f32.xlu0 %v4424
    %v4464 = vpop.xlane.xlu0 %4463
    %4465 = vadd.xlane.f32.xlu0 %v4425
    %v4466 = vpop.xlane.xlu0 %4465
    %4467 = vadd.xlane.f32.xlu0 %v4426
    %v4468 = vpop.xlane.xlu0 %4467
    %4469 = vadd.xlane.f32.xlu0 %v4427
    %v4470 = vpop.xlane.xlu0 %4469
    %4471 = vadd.xlane.f32.xlu0 %v4428
    %v4472 = vpop.xlane.xlu0 %4471
    %4473 = vadd.xlane.f32.xlu0 %v4429
    %v4474 = vpop.xlane.xlu0 %4473
    %4475 = vadd.xlane.f32.xlu0 %v4430
    %v4476 = vpop.xlane.xlu0 %4475
    %4477 = vadd.xlane.f32.xlu0 %v4431
    %v4478 = vpop.xlane.xlu0 %4477
    %4479 = vadd.xlane.f32.xlu0 %v4432
    %v4480 = vpop.xlane.xlu0 %4479
    %4481 = vadd.xlane.f32.xlu0 %v4433
    %v4482 = vpop.xlane.xlu0 %4481
    %4483 = vadd.xlane.f32.xlu0 %v4434
    %v4484 = vpop.xlane.xlu0 %4483
    %4485 = vadd.xlane.f32.xlu0 %v4435
    %v4486 = vpop.xlane.xlu0 %4485
    %4487 = vadd.xlane.f32.xlu0 %v4436
    %v4488 = vpop.xlane.xlu0 %4487
    %4489 = vadd.xlane.f32.xlu0 %v4437
    %v4490 = vpop.xlane.xlu0 %4489
    %4491 = vadd.xlane.f32.xlu0 %v4438
    %v4492 = vpop.xlane.xlu0 %4491
    %4493 = vadd.xlane.f32.xlu0 %v4439
    %v4494 = vpop.xlane.xlu0 %4493
    %4495 = vadd.xlane.f32.xlu0 %v4440
    %v4496 = vpop.xlane.xlu0 %4495
    %4497 = vadd.xlane.f32.xlu0 %v4441
    %v4498 = vpop.xlane.xlu0 %4497
    %4499 = vadd.xlane.f32.xlu0 %v4442
    %v4500 = vpop.xlane.xlu0 %4499
    %4501 = vadd.xlane.f32.xlu0 %v4443
    %v4502 = vpop.xlane.xlu0 %4501
    %4503 = vadd.xlane.f32.xlu0 %v4444
    %v4504 = vpop.xlane.xlu0 %4503
    %4505 = vadd.xlane.f32.xlu0 %v4445
    %v4506 = vpop.xlane.xlu0 %4505
    %4507 = vadd.xlane.f32.xlu0 %v4446
    %v4508 = vpop.xlane.xlu0 %4507
    %4509 = vadd.xlane.f32.xlu0 %v4447
    %v4510 = vpop.xlane.xlu0 %4509
    %4511 = vadd.xlane.f32.xlu0 %v4448
    %v4512 = vpop.xlane.xlu0 %4511
    %v4513 = vmul.f32 %v4450, %v4384
    %v4514 = vmul.f32 %v4452, %v4384
    %v4515 = vmul.f32 %v4454, %v4384
    %v4516 = vmul.f32 %v4456, %v4384
    %v4517 = vmul.f32 %v4458, %v4384
    %v4518 = vmul.f32 %v4460, %v4384
    %v4519 = vmul.f32 %v4462, %v4384
    %v4520 = vmul.f32 %v4464, %v4384
    %v4521 = vmul.f32 %v4466, %v4384
    %v4522 = vmul.f32 %v4468, %v4384
    %v4523 = vmul.f32 %v4470, %v4384
    %v4524 = vmul.f32 %v4472, %v4384
    %v4525 = vmul.f32 %v4474, %v4384
    %v4526 = vmul.f32 %v4476, %v4384
    %v4527 = vmul.f32 %v4478, %v4384
    %v4528 = vmul.f32 %v4480, %v4384
    %v4529 = vmul.f32 %v4482, %v4384
    %v4530 = vmul.f32 %v4484, %v4384
    %v4531 = vmul.f32 %v4486, %v4384
    %v4532 = vmul.f32 %v4488, %v4384
    %v4533 = vmul.f32 %v4490, %v4384
    %v4534 = vmul.f32 %v4492, %v4384
    %v4535 = vmul.f32 %v4494, %v4384
    %v4536 = vmul.f32 %v4496, %v4384
    %v4537 = vmul.f32 %v4498, %v4384
    %v4538 = vmul.f32 %v4500, %v4384
    %v4539 = vmul.f32 %v4502, %v4384
    %v4540 = vmul.f32 %v4504, %v4384
    %v4541 = vmul.f32 %v4506, %v4384
    %v4542 = vmul.f32 %v4508, %v4384
    %v4543 = vmul.f32 %v4510, %v4384
    %v4544 = vmul.f32 %v4512, %v4384
    %v4545 = vsub.f32 %v4288, %v4385
    %v4546 = vsub.f32 %v4289, %v4386
    %v4547 = vsub.f32 %v4290, %v4387
    %v4548 = vsub.f32 %v4291, %v4388
    %v4549 = vsub.f32 %v4292, %v4389
    %v4550 = vsub.f32 %v4293, %v4390
    %v4551 = vsub.f32 %v4294, %v4391
    %v4552 = vsub.f32 %v4295, %v4392
    %v4553 = vsub.f32 %v4296, %v4393
    %v4554 = vsub.f32 %v4297, %v4394
    %v4555 = vsub.f32 %v4298, %v4395
    %v4556 = vsub.f32 %v4299, %v4396
    %v4557 = vsub.f32 %v4300, %v4397
    %v4558 = vsub.f32 %v4301, %v4398
    %v4559 = vsub.f32 %v4302, %v4399
    %v4560 = vsub.f32 %v4303, %v4400
    %v4561 = vsub.f32 %v4304, %v4401
    %v4562 = vsub.f32 %v4305, %v4402
    %v4563 = vsub.f32 %v4306, %v4403
    %v4564 = vsub.f32 %v4307, %v4404
    %v4565 = vsub.f32 %v4308, %v4405
    %v4566 = vsub.f32 %v4309, %v4406
    %v4567 = vsub.f32 %v4310, %v4407
    %v4568 = vsub.f32 %v4311, %v4408
    %v4569 = vsub.f32 %v4312, %v4409
    %v4570 = vsub.f32 %v4313, %v4410
    %v4571 = vsub.f32 %v4314, %v4411
    %v4572 = vsub.f32 %v4315, %v4412
    %v4573 = vsub.f32 %v4316, %v4413
    %v4574 = vsub.f32 %v4317, %v4414
    %v4575 = vsub.f32 %v4318, %v4415
    %v4576 = vsub.f32 %v4319, %v4416
    %v4577 = vmul.f32 %v4385, %v4385
    %v4578 = vmul.f32 %v4386, %v4386
    %v4579 = vmul.f32 %v4387, %v4387
    %v4580 = vmul.f32 %v4388, %v4388
    %v4581 = vmul.f32 %v4389, %v4389
    %v4582 = vmul.f32 %v4390, %v4390
    %v4583 = vmul.f32 %v4391, %v4391
    %v4584 = vmul.f32 %v4392, %v4392
    %v4585 = vmul.f32 %v4393, %v4393
    %v4586 = vmul.f32 %v4394, %v4394
    %v4587 = vmul.f32 %v4395, %v4395
    %v4588 = vmul.f32 %v4396, %v4396
    %v4589 = vmul.f32 %v4397, %v4397
    %v4590 = vmul.f32 %v4398, %v4398
    %v4591 = vmul.f32 %v4399, %v4399
    %v4592 = vmul.f32 %v4400, %v4400
    %v4593 = vmul.f32 %v4401, %v4401
    %v4594 = vmul.f32 %v4402, %v4402
    %v4595 = vmul.f32 %v4403, %v4403
    %v4596 = vmul.f32 %v4404, %v4404
    %v4597 = vmul.f32 %v4405, %v4405
    %v4598 = vmul.f32 %v4406, %v4406
    %v4599 = vmul.f32 %v4407, %v4407
    %v4600 = vmul.f32 %v4408, %v4408
    %v4601 = vmul.f32 %v4409, %v4409
    %v4602 = vmul.f32 %v4410, %v4410
    %v4603 = vmul.f32 %v4411, %v4411
    %v4604 = vmul.f32 %v4412, %v4412
    %v4605 = vmul.f32 %v4413, %v4413
    %v4606 = vmul.f32 %v4414, %v4414
    %v4607 = vmul.f32 %v4415, %v4415
    %v4608 = vmul.f32 %v4416, %v4416
    %v4609 = vsub.f32 %v4513, %v4577
    %v4610 = vsub.f32 %v4514, %v4578
    %v4611 = vsub.f32 %v4515, %v4579
    %v4612 = vsub.f32 %v4516, %v4580
    %v4613 = vsub.f32 %v4517, %v4581
    %v4614 = vsub.f32 %v4518, %v4582
    %v4615 = vsub.f32 %v4519, %v4583
    %v4616 = vsub.f32 %v4520, %v4584
    %v4617 = vsub.f32 %v4521, %v4585
    %v4618 = vsub.f32 %v4522, %v4586
    %v4619 = vsub.f32 %v4523, %v4587
    %v4620 = vsub.f32 %v4524, %v4588
    %v4621 = vsub.f32 %v4525, %v4589
    %v4622 = vsub.f32 %v4526, %v4590
    %v4623 = vsub.f32 %v4527, %v4591
    %v4624 = vsub.f32 %v4528, %v4592
    %v4625 = vsub.f32 %v4529, %v4593
    %v4626 = vsub.f32 %v4530, %v4594
    %v4627 = vsub.f32 %v4531, %v4595
    %v4628 = vsub.f32 %v4532, %v4596
    %v4629 = vsub.f32 %v4533, %v4597
    %v4630 = vsub.f32 %v4534, %v4598
    %v4631 = vsub.f32 %v4535, %v4599
    %v4632 = vsub.f32 %v4536, %v4600
    %v4633 = vsub.f32 %v4537, %v4601
    %v4634 = vsub.f32 %v4538, %v4602
    %v4635 = vsub.f32 %v4539, %v4603
    %v4636 = vsub.f32 %v4540, %v4604
    %v4637 = vsub.f32 %v4541, %v4605
    %v4638 = vsub.f32 %v4542, %v4606
    %v4639 = vsub.f32 %v4543, %v4607
    %v4640 = vsub.f32 %v4544, %v4608
    %v4641 = vadd.f32 %v4609, 1e-06
    %v4642 = vadd.f32 %v4610, 1e-06
    %v4643 = vadd.f32 %v4611, 1e-06
    %v4644 = vadd.f32 %v4612, 1e-06
    %v4645 = vadd.f32 %v4613, 1e-06
    %v4646 = vadd.f32 %v4614, 1e-06
    %v4647 = vadd.f32 %v4615, 1e-06
    %v4648 = vadd.f32 %v4616, 1e-06
    %v4649 = vadd.f32 %v4617, 1e-06
    %v4650 = vadd.f32 %v4618, 1e-06
    %v4651 = vadd.f32 %v4619, 1e-06
    %v4652 = vadd.f32 %v4620, 1e-06
    %v4653 = vadd.f32 %v4621, 1e-06
    %v4654 = vadd.f32 %v4622, 1e-06
    %v4655 = vadd.f32 %v4623, 1e-06
    %v4656 = vadd.f32 %v4624, 1e-06
    %v4657 = vadd.f32 %v4625, 1e-06
    %v4658 = vadd.f32 %v4626, 1e-06
    %v4659 = vadd.f32 %v4627, 1e-06
    %v4660 = vadd.f32 %v4628, 1e-06
    %v4661 = vadd.f32 %v4629, 1e-06
    %v4662 = vadd.f32 %v4630, 1e-06
    %v4663 = vadd.f32 %v4631, 1e-06
    %v4664 = vadd.f32 %v4632, 1e-06
    %v4665 = vadd.f32 %v4633, 1e-06
    %v4666 = vadd.f32 %v4634, 1e-06
    %v4667 = vadd.f32 %v4635, 1e-06
    %v4668 = vadd.f32 %v4636, 1e-06
    %v4669 = vadd.f32 %v4637, 1e-06
    %v4670 = vadd.f32 %v4638, 1e-06
    %v4671 = vadd.f32 %v4639, 1e-06
    %v4672 = vadd.f32 %v4640, 1e-06
    %v4673 = vrsqrt.pop %v4641
    %v4674 = vrsqrt.pop %v4642
    %v4675 = vrsqrt.pop %v4643
    %v4676 = vrsqrt.pop %v4644
    %v4677 = vrsqrt.pop %v4645
    %v4678 = vrsqrt.pop %v4646
    %v4679 = vrsqrt.pop %v4647
    %v4680 = vrsqrt.pop %v4648
    %v4681 = vrsqrt.pop %v4649
    %v4682 = vrsqrt.pop %v4650
    %v4683 = vrsqrt.pop %v4651
    %v4684 = vrsqrt.pop %v4652
    %v4685 = vrsqrt.pop %v4653
    %v4686 = vrsqrt.pop %v4654
    %v4687 = vrsqrt.pop %v4655
    %v4688 = vrsqrt.pop %v4656
    %v4689 = vrsqrt.pop %v4657
    %v4690 = vrsqrt.pop %v4658
    %v4691 = vrsqrt.pop %v4659
    %v4692 = vrsqrt.pop %v4660
    %v4693 = vrsqrt.pop %v4661
    %v4694 = vrsqrt.pop %v4662
    %v4695 = vrsqrt.pop %v4663
    %v4696 = vrsqrt.pop %v4664
    %v4697 = vrsqrt.pop %v4665
    %v4698 = vrsqrt.pop %v4666
    %v4699 = vrsqrt.pop %v4667
    %v4700 = vrsqrt.pop %v4668
    %v4701 = vrsqrt.pop %v4669
    %v4702 = vrsqrt.pop %v4670
    %v4703 = vrsqrt.pop %v4671
    %v4704 = vrsqrt.pop %v4672
    %v4705 = vmul.f32 %v4545, %v4673
    %v4706 = vmul.f32 %v4546, %v4674
    %v4707 = vmul.f32 %v4547, %v4675
    %v4708 = vmul.f32 %v4548, %v4676
    %v4709 = vmul.f32 %v4549, %v4677
    %v4710 = vmul.f32 %v4550, %v4678
    %v4711 = vmul.f32 %v4551, %v4679
    %v4712 = vmul.f32 %v4552, %v4680
    %v4713 = vmul.f32 %v4553, %v4681
    %v4714 = vmul.f32 %v4554, %v4682
    %v4715 = vmul.f32 %v4555, %v4683
    %v4716 = vmul.f32 %v4556, %v4684
    %v4717 = vmul.f32 %v4557, %v4685
    %v4718 = vmul.f32 %v4558, %v4686
    %v4719 = vmul.f32 %v4559, %v4687
    %v4720 = vmul.f32 %v4560, %v4688
    %v4721 = vmul.f32 %v4561, %v4689
    %v4722 = vmul.f32 %v4562, %v4690
    %v4723 = vmul.f32 %v4563, %v4691
    %v4724 = vmul.f32 %v4564, %v4692
    %v4725 = vmul.f32 %v4565, %v4693
    %v4726 = vmul.f32 %v4566, %v4694
    %v4727 = vmul.f32 %v4567, %v4695
    %v4728 = vmul.f32 %v4568, %v4696
    %v4729 = vmul.f32 %v4569, %v4697
    %v4730 = vmul.f32 %v4570, %v4698
    %v4731 = vmul.f32 %v4571, %v4699
    %v4732 = vmul.f32 %v4572, %v4700
    %v4733 = vmul.f32 %v4573, %v4701
    %v4734 = vmul.f32 %v4574, %v4702
    %v4735 = vmul.f32 %v4575, %v4703
    %v4736 = vmul.f32 %v4576, %v4704
    %v4737 = vld [vmem:[#allocation11] sm:$0x1]
    %v4739 = vlaneseq
    %v4740 = vshrl.u32 %v4739, 7
    %v4741 = vsub.s32 0, %v4740
    %v4742 = vrot.slane %v4737, %v4741
    %v4744 = vmul.f32 %v4705, %v4742
    %v4745 = vmul.f32 %v4706, %v4742
    %v4746 = vmul.f32 %v4707, %v4742
    %v4747 = vmul.f32 %v4708, %v4742
    %v4748 = vmul.f32 %v4709, %v4742
    %v4749 = vmul.f32 %v4710, %v4742
    %v4750 = vmul.f32 %v4711, %v4742
    %v4751 = vmul.f32 %v4712, %v4742
    %v4752 = vmul.f32 %v4713, %v4742
    %v4753 = vmul.f32 %v4714, %v4742
    %v4754 = vmul.f32 %v4715, %v4742
    %v4755 = vmul.f32 %v4716, %v4742
    %v4756 = vmul.f32 %v4717, %v4742
    %v4757 = vmul.f32 %v4718, %v4742
    %v4758 = vmul.f32 %v4719, %v4742
    %v4759 = vmul.f32 %v4720, %v4742
    %v4760 = vmul.f32 %v4721, %v4742
    %v4761 = vmul.f32 %v4722, %v4742
    %v4762 = vmul.f32 %v4723, %v4742
    %v4763 = vmul.f32 %v4724, %v4742
    %v4764 = vmul.f32 %v4725, %v4742
    %v4765 = vmul.f32 %v4726, %v4742
    %v4766 = vmul.f32 %v4727, %v4742
    %v4767 = vmul.f32 %v4728, %v4742
    %v4768 = vmul.f32 %v4729, %v4742
    %v4769 = vmul.f32 %v4730, %v4742
    %v4770 = vmul.f32 %v4731, %v4742
    %v4771 = vmul.f32 %v4732, %v4742
    %v4772 = vmul.f32 %v4733, %v4742
    %v4773 = vmul.f32 %v4734, %v4742
    %v4774 = vmul.f32 %v4735, %v4742
    %v4775 = vmul.f32 %v4736, %v4742
    %v4776 = vld [vmem:[#allocation13] sm:$0x1]
    %v4778 = vlaneseq
    %v4779 = vshrl.u32 %v4778, 7
    %v4780 = vsub.s32 0, %v4779
    %v4781 = vrot.slane %v4776, %v4780
    %v4783 = vadd.f32 %v4744, %v4781
    %v4784 = vadd.f32 %v4745, %v4781
    %v4785 = vadd.f32 %v4746, %v4781
    %v4786 = vadd.f32 %v4747, %v4781
    %v4787 = vadd.f32 %v4748, %v4781
    %v4788 = vadd.f32 %v4749, %v4781
    %v4789 = vadd.f32 %v4750, %v4781
    %v4790 = vadd.f32 %v4751, %v4781
    %v4791 = vadd.f32 %v4752, %v4781
    %v4792 = vadd.f32 %v4753, %v4781
    %v4793 = vadd.f32 %v4754, %v4781
    %v4794 = vadd.f32 %v4755, %v4781
    %v4795 = vadd.f32 %v4756, %v4781
    %v4796 = vadd.f32 %v4757, %v4781
    %v4797 = vadd.f32 %v4758, %v4781
    %v4798 = vadd.f32 %v4759, %v4781
    %v4799 = vadd.f32 %v4760, %v4781
    %v4800 = vadd.f32 %v4761, %v4781
    %v4801 = vadd.f32 %v4762, %v4781
    %v4802 = vadd.f32 %v4763, %v4781
    %v4803 = vadd.f32 %v4764, %v4781
    %v4804 = vadd.f32 %v4765, %v4781
    %v4805 = vadd.f32 %v4766, %v4781
    %v4806 = vadd.f32 %v4767, %v4781
    %v4807 = vadd.f32 %v4768, %v4781
    %v4808 = vadd.f32 %v4769, %v4781
    %v4809 = vadd.f32 %v4770, %v4781
    %v4810 = vadd.f32 %v4771, %v4781
    %v4811 = vadd.f32 %v4772, %v4781
    %v4812 = vadd.f32 %v4773, %v4781
    %v4813 = vadd.f32 %v4774, %v4781
    %v4814 = vadd.f32 %v4775, %v4781
    %v4815 = vpack.c.bf16 %v4784, %v4783
    %v4816 = vpack.c.bf16 %v4786, %v4785
    %v4817 = vpack.c.bf16 %v4788, %v4787
    %v4818 = vpack.c.bf16 %v4790, %v4789
    %v4819 = vpack.c.bf16 %v4792, %v4791
    %v4820 = vpack.c.bf16 %v4794, %v4793
    %v4821 = vpack.c.bf16 %v4796, %v4795
    %v4822 = vpack.c.bf16 %v4798, %v4797
    %v4823 = vpack.c.bf16 %v4800, %v4799
    %v4824 = vpack.c.bf16 %v4802, %v4801
    %v4825 = vpack.c.bf16 %v4804, %v4803
    %v4826 = vpack.c.bf16 %v4806, %v4805
    %v4827 = vpack.c.bf16 %v4808, %v4807
    %v4828 = vpack.c.bf16 %v4810, %v4809
    %v4829 = vpack.c.bf16 %v4812, %v4811
    %v4830 = vpack.c.bf16 %v4814, %v4813
    %v4831 = vld [vmem:[#allocation14] sm:$0xf]
    %v4832 = vld [vmem:[#allocation14 + $0x4] sm:$0xf]
    %v4833 = vld [vmem:[#allocation14 + $0x8] sm:$0xf]
    %v4834 = vld [vmem:[#allocation14 + $0xc] sm:$0xf]
    %v4835 = vld [vmem:[#allocation14 + $0x10] sm:$0xf]
    %v4836 = vld [vmem:[#allocation14 + $0x14] sm:$0xf]
    %v4837 = vld [vmem:[#allocation14 + $0x18] sm:$0xf]
    %v4838 = vld [vmem:[#allocation14 + $0x1c] sm:$0xf]
    %v4839 = vld [vmem:[#allocation14 + $0x20] sm:$0xf]
    %v4840 = vld [vmem:[#allocation14 + $0x24] sm:$0xf]
    %v4841 = vld [vmem:[#allocation14 + $0x28] sm:$0xf]
    %v4842 = vld [vmem:[#allocation14 + $0x2c] sm:$0xf]
    %v4843 = vld [vmem:[#allocation14 + $0x30] sm:$0xf]
    %v4844 = vld [vmem:[#allocation14 + $0x34] sm:$0xf]
    %v4845 = vld [vmem:[#allocation14 + $0x38] sm:$0xf]
    %v4846 = vld [vmem:[#allocation14 + $0x3c] sm:$0xf]
    %v4863 = vunpack.c.l.b16 %v4831
    %v4864 = vunpack.c.l.b16 %v4832
    %v4865 = vunpack.c.l.b16 %v4833
    %v4866 = vunpack.c.l.b16 %v4834
    %v4867 = vunpack.c.l.b16 %v4835
    %v4868 = vunpack.c.l.b16 %v4836
    %v4869 = vunpack.c.l.b16 %v4837
    %v4870 = vunpack.c.l.b16 %v4838
    %v4871 = vunpack.c.l.b16 %v4839
    %v4872 = vunpack.c.l.b16 %v4840
    %v4873 = vunpack.c.l.b16 %v4841
    %v4874 = vunpack.c.l.b16 %v4842
    %v4875 = vunpack.c.l.b16 %v4843
    %v4876 = vunpack.c.l.b16 %v4844
    %v4877 = vunpack.c.l.b16 %v4845
    %v4878 = vunpack.c.l.b16 %v4846
    %v4879 = vpack.c.b16 %v4864, %v4863
    %v4880 = vpack.c.b16 %v4866, %v4865
    %v4881 = vpack.c.b16 %v4868, %v4867
    %v4882 = vpack.c.b16 %v4870, %v4869
    %v4883 = vpack.c.b16 %v4872, %v4871
    %v4884 = vpack.c.b16 %v4874, %v4873
    %v4885 = vpack.c.b16 %v4876, %v4875
    %v4886 = vpack.c.b16 %v4878, %v4877
    %4895 = vmatprep.subr.bf16.mxu0 0
    %4896 = vmatpush1.bf16.msra.mxu0 %v4879
    %4897 = vmatprep.subr.bf16.mxu0 0
    %4898 = vmatpush1.bf16.msra.mxu0 %v4880
    %4899 = vmatprep.subr.bf16.mxu0 0
    %4900 = vmatpush1.bf16.msra.mxu0 %v4881
    %4901 = vmatprep.subr.bf16.mxu0 0
    %4902 = vmatpush1.bf16.msra.mxu0 %v4882
    %4903 = vmatprep.subr.bf16.mxu0 0
    %4904 = vmatpush1.bf16.msra.mxu0 %v4883
    %4905 = vmatprep.subr.bf16.mxu0 0
    %4906 = vmatpush1.bf16.msra.mxu0 %v4884
    %4907 = vmatprep.subr.bf16.mxu0 0
    %4908 = vmatpush1.bf16.msra.mxu0 %v4885
    %4909 = vmatprep.subr.bf16.mxu0 0
    %4910 = vmatpush1.bf16.msra.mxu0 %v4886
    %4911 = vmatprep.subr.bf16.mxu0 0
    %4912 = vmatpush1.bf16.msra.mxu0 0
    %4913 = vmatprep.subr.bf16.mxu0 0
    %4914 = vmatpush1.bf16.msra.mxu0 0
    %4915 = vmatprep.subr.bf16.mxu0 0
    %4916 = vmatpush1.bf16.msra.mxu0 0
    %4917 = vmatprep.subr.bf16.mxu0 0
    %4918 = vmatpush1.bf16.msra.mxu0 0
    %4919 = vmatprep.subr.bf16.mxu0 0
    %4920 = vmatpush1.bf16.msra.mxu0 0
    %4921 = vmatprep.subr.bf16.mxu0 0
    %4922 = vmatpush1.bf16.msra.mxu0 0
    %4923 = vmatprep.subr.bf16.mxu0 0
    %4924 = vmatpush1.bf16.msra.mxu0 0
    %4925 = vmatprep.subr.bf16.mxu0 0
    %4926 = vmatpush1.bf16.msra.mxu0 0
    %4927 = vmatprep.mubr.bf16.mxu0 0
    %4928 = vmatmul.mubr.bf16.gmra.mrb[0].mxu0 %v4815
    %v4929 = vpop.f32.mrb[0].mxu0
    %v4930 = vadd.f32 0.0, %v4929
    %v4931 = vpop.f32.mrb[0].mxu0
    %v4932 = vpop.f32.mrb[0].mxu0
    %v4933 = vadd.f32 0.0, %v4932
    %v4934 = vpop.f32.mrb[0].mxu0
    %4935 = vmatprep.mubr.bf16.mxu0 0
    %4936 = vmatmul.mubr.bf16.gmra.mrb[0].mxu0 %v4816
    %v4937 = vpop.f32.mrb[0].mxu0
    %v4938 = vadd.f32 0.0, %v4937
    %v4939 = vpop.f32.mrb[0].mxu0
    %v4940 = vpop.f32.mrb[0].mxu0
    %v4941 = vadd.f32 0.0, %v4940
    %v4942 = vpop.f32.mrb[0].mxu0
    %4943 = vmatprep.mubr.bf16.mxu0 0
    %4944 = vmatmul.mubr.bf16.gmra.mrb[0].mxu0 %v4817
    %v4945 = vpop.f32.mrb[0].mxu0
    %v4946 = vadd.f32 0.0, %v4945
    %v4947 = vpop.f32.mrb[0].mxu0
    %v4948 = vpop.f32.mrb[0].mxu0
    %v4949 = vadd.f32 0.0, %v4948
    %v4950 = vpop.f32.mrb[0].mxu0
    %4951 = vmatprep.mubr.bf16.mxu0 0
    %4952 = vmatmul.mubr.bf16.gmra.mrb[0].mxu0 %v4818
    %v4953 = vpop.f32.mrb[0].mxu0
    %v4954 = vadd.f32 0.0, %v4953
    %v4955 = vpop.f32.mrb[0].mxu0
    %v4956 = vpop.f32.mrb[0].mxu0
    %v4957 = vadd.f32 0.0, %v4956
    %v4958 = vpop.f32.mrb[0].mxu0
    %4959 = vmatprep.mubr.bf16.mxu0 0
    %4960 = vmatmul.mubr.bf16.gmra.mrb[0].mxu0 %v4819
    %v4961 = vpop.f32.mrb[0].mxu0
    %v4962 = vadd.f32 0.0, %v4961
    %v4963 = vpop.f32.mrb[0].mxu0
    %v4964 = vpop.f32.mrb[0].mxu0
    %v4965 = vadd.f32 0.0, %v4964
    %v4966 = vpop.f32.mrb[0].mxu0
    %4967 = vmatprep.mubr.bf16.mxu0 0
    %4968 = vmatmul.mubr.bf16.gmra.mrb[0].mxu0 %v4820
    %v4969 = vpop.f32.mrb[0].mxu0
    %v4970 = vadd.f32 0.0, %v4969
    %v4971 = vpop.f32.mrb[0].mxu0
    %v4972 = vpop.f32.mrb[0].mxu0
    %v4973 = vadd.f32 0.0, %v4972
    %v4974 = vpop.f32.mrb[0].mxu0
    %4975 = vmatprep.mubr.bf16.mxu0 0
    %4976 = vmatmul.mubr.bf16.gmra.mrb[0].mxu0 %v4821
    %v4977 = vpop.f32.mrb[0].mxu0
    %v4978 = vadd.f32 0.0, %v4977
    %v4979 = vpop.f32.mrb[0].mxu0
    %v4980 = vpop.f32.mrb[0].mxu0
    %v4981 = vadd.f32 0.0, %v4980
    %v4982 = vpop.f32.mrb[0].mxu0
    %4983 = vmatprep.mubr.bf16.mxu0 0
    %4984 = vmatmul.mubr.bf16.gmra.mrb[0].mxu0 %v4822
    %v4985 = vpop.f32.mrb[0].mxu0
    %v4986 = vadd.f32 0.0, %v4985
    %v4987 = vpop.f32.mrb[0].mxu0
    %v4988 = vpop.f32.mrb[0].mxu0
    %v4989 = vadd.f32 0.0, %v4988
    %v4990 = vpop.f32.mrb[0].mxu0
    %4991 = vmatprep.mubr.bf16.mxu0 0
    %4992 = vmatmul.mubr.bf16.gmra.mrb[0].mxu0 %v4823
    %v4993 = vpop.f32.mrb[0].mxu0
    %v4994 = vadd.f32 0.0, %v4993
    %v4995 = vpop.f32.mrb[0].mxu0
    %v4996 = vpop.f32.mrb[0].mxu0
    %v4997 = vadd.f32 0.0, %v4996
    %v4998 = vpop.f32.mrb[0].mxu0
    %4999 = vmatprep.mubr.bf16.mxu0 0
    %5000 = vmatmul.mubr.bf16.gmra.mrb[0].mxu0 %v4824
    %v5001 = vpop.f32.mrb[0].mxu0
    %v5002 = vadd.f32 0.0, %v5001
    %v5003 = vpop.f32.mrb[0].mxu0
    %v5004 = vpop.f32.mrb[0].mxu0
    %v5005 = vadd.f32 0.0, %v5004
    %v5006 = vpop.f32.mrb[0].mxu0
    %5007 = vmatprep.mubr.bf16.mxu0 0
    %5008 = vmatmul.mubr.bf16.gmra.mrb[0].mxu0 %v4825
    %v5009 = vpop.f32.mrb[0].mxu0
    %v5010 = vadd.f32 0.0, %v5009
    %v5011 = vpop.f32.mrb[0].mxu0
    %v5012 = vpop.f32.mrb[0].mxu0
    %v5013 = vadd.f32 0.0, %v5012
    %v5014 = vpop.f32.mrb[0].mxu0
    %5015 = vmatprep.mubr.bf16.mxu0 0
    %5016 = vmatmul.mubr.bf16.gmra.mrb[0].mxu0 %v4826
    %v5017 = vpop.f32.mrb[0].mxu0
    %v5018 = vadd.f32 0.0, %v5017
    %v5019 = vpop.f32.mrb[0].mxu0
    %v5020 = vpop.f32.mrb[0].mxu0
    %v5021 = vadd.f32 0.0, %v5020
    %v5022 = vpop.f32.mrb[0].mxu0
    %5023 = vmatprep.mubr.bf16.mxu0 0
    %5024 = vmatmul.mubr.bf16.gmra.mrb[0].mxu0 %v4827
    %v5025 = vpop.f32.mrb[0].mxu0
    %v5026 = vadd.f32 0.0, %v5025
    %v5027 = vpop.f32.mrb[0].mxu0
    %v5028 = vpop.f32.mrb[0].mxu0
    %v5029 = vadd.f32 0.0, %v5028
    %v5030 = vpop.f32.mrb[0].mxu0
    %5031 = vmatprep.mubr.bf16.mxu0 0
    %5032 = vmatmul.mubr.bf16.gmra.mrb[0].mxu0 %v4828
    %v5033 = vpop.f32.mrb[0].mxu0
    %v5034 = vadd.f32 0.0, %v5033
    %v5035 = vpop.f32.mrb[0].mxu0
    %v5036 = vpop.f32.mrb[0].mxu0
    %v5037 = vadd.f32 0.0, %v5036
    %v5038 = vpop.f32.mrb[0].mxu0
    %5039 = vmatprep.mubr.bf16.mxu0 0
    %5040 = vmatmul.mubr.bf16.gmra.mrb[0].mxu0 %v4829
    %v5041 = vpop.f32.mrb[0].mxu0
    %v5042 = vadd.f32 0.0, %v5041
    %v5043 = vpop.f32.mrb[0].mxu0
    %v5044 = vpop.f32.mrb[0].mxu0
    %v5045 = vadd.f32 0.0, %v5044
    %v5046 = vpop.f32.mrb[0].mxu0
    %5047 = vmatprep.mubr.bf16.mxu0 0
    %5048 = vmatmul.mubr.bf16.gmra.mrb[0].mxu0 %v4830
    %v5049 = vpop.f32.mrb[0].mxu0
    %v5050 = vadd.f32 0.0, %v5049
    %v5051 = vpop.f32.mrb[0].mxu0
    %v5052 = vpop.f32.mrb[0].mxu0
    %v5053 = vadd.f32 0.0, %v5052
    %v5054 = vpop.f32.mrb[0].mxu0
    %5055 = vdwg.mxu0
    %v5056 = vadd.f32 %v4783, %v4930
    %v5057 = vadd.f32 %v4784, %v4933
    %v5058 = vadd.f32 %v4785, %v4938
    %v5059 = vadd.f32 %v4786, %v4941
    %v5060 = vadd.f32 %v4787, %v4946
    %v5061 = vadd.f32 %v4788, %v4949
    %v5062 = vadd.f32 %v4789, %v4954
    %v5063 = vadd.f32 %v4790, %v4957
    %v5064 = vadd.f32 %v4791, %v4962
    %v5065 = vadd.f32 %v4792, %v4965
    %v5066 = vadd.f32 %v4793, %v4970
    %v5067 = vadd.f32 %v4794, %v4973
    %v5068 = vadd.f32 %v4795, %v4978
    %v5069 = vadd.f32 %v4796, %v4981
    %v5070 = vadd.f32 %v4797, %v4986
    %v5071 = vadd.f32 %v4798, %v4989
    %v5072 = vadd.f32 %v4799, %v4994
    %v5073 = vadd.f32 %v4800, %v4997
    %v5074 = vadd.f32 %v4801, %v5002
    %v5075 = vadd.f32 %v4802, %v5005
    %v5076 = vadd.f32 %v4803, %v5010
    %v5077 = vadd.f32 %v4804, %v5013
    %v5078 = vadd.f32 %v4805, %v5018
    %v5079 = vadd.f32 %v4806, %v5021
    %v5080 = vadd.f32 %v4807, %v5026
    %v5081 = vadd.f32 %v4808, %v5029
    %v5082 = vadd.f32 %v4809, %v5034
    %v5083 = vadd.f32 %v4810, %v5037
    %v5084 = vadd.f32 %v4811, %v5042
    %v5085 = vadd.f32 %v4812, %v5045
    %v5086 = vadd.f32 %v4813, %v5050
    %v5087 = vadd.f32 %v4814, %v5053
    %5088 = vadd.xlane.f32.xlu0 %v5056
    %v5089 = vpop.xlane.xlu0 %5088
    %5090 = vadd.xlane.f32.xlu0 %v5057
    %v5091 = vpop.xlane.xlu0 %5090
    %5092 = vadd.xlane.f32.xlu0 %v5058
    %v5093 = vpop.xlane.xlu0 %5092
    %5094 = vadd.xlane.f32.xlu0 %v5059
    %v5095 = vpop.xlane.xlu0 %5094
    %5096 = vadd.xlane.f32.xlu0 %v5060
    %v5097 = vpop.xlane.xlu0 %5096
    %5098 = vadd.xlane.f32.xlu0 %v5061
    %v5099 = vpop.xlane.xlu0 %5098
    %5100 = vadd.xlane.f32.xlu0 %v5062
    %v5101 = vpop.xlane.xlu0 %5100
    %5102 = vadd.xlane.f32.xlu0 %v5063
    %v5103 = vpop.xlane.xlu0 %5102
    %5104 = vadd.xlane.f32.xlu0 %v5064
    %v5105 = vpop.xlane.xlu0 %5104
    %5106 = vadd.xlane.f32.xlu0 %v5065
    %v5107 = vpop.xlane.xlu0 %5106
    %5108 = vadd.xlane.f32.xlu0 %v5066
    %v5109 = vpop.xlane.xlu0 %5108
    %5110 = vadd.xlane.f32.xlu0 %v5067
    %v5111 = vpop.xlane.xlu0 %5110
    %5112 = vadd.xlane.f32.xlu0 %v5068
    %v5113 = vpop.xlane.xlu0 %5112
    %5114 = vadd.xlane.f32.xlu0 %v5069
    %v5115 = vpop.xlane.xlu0 %5114
    %5116 = vadd.xlane.f32.xlu0 %v5070
    %v5117 = vpop.xlane.xlu0 %5116
    %5118 = vadd.xlane.f32.xlu0 %v5071
    %v5119 = vpop.xlane.xlu0 %5118
    %5120 = vadd.xlane.f32.xlu0 %v5072
    %v5121 = vpop.xlane.xlu0 %5120
    %5122 = vadd.xlane.f32.xlu0 %v5073
    %v5123 = vpop.xlane.xlu0 %5122
    %5124 = vadd.xlane.f32.xlu0 %v5074
    %v5125 = vpop.xlane.xlu0 %5124
    %5126 = vadd.xlane.f32.xlu0 %v5075
    %v5127 = vpop.xlane.xlu0 %5126
    %5128 = vadd.xlane.f32.xlu0 %v5076
    %v5129 = vpop.xlane.xlu0 %5128
    %5130 = vadd.xlane.f32.xlu0 %v5077
    %v5131 = vpop.xlane.xlu0 %5130
    %5132 = vadd.xlane.f32.xlu0 %v5078
    %v5133 = vpop.xlane.xlu0 %5132
    %5134 = vadd.xlane.f32.xlu0 %v5079
    %v5135 = vpop.xlane.xlu0 %5134
    %5136 = vadd.xlane.f32.xlu0 %v5080
    %v5137 = vpop.xlane.xlu0 %5136
    %5138 = vadd.xlane.f32.xlu0 %v5081
    %v5139 = vpop.xlane.xlu0 %5138
    %5140 = vadd.xlane.f32.xlu0 %v5082
    %v5141 = vpop.xlane.xlu0 %5140
    %5142 = vadd.xlane.f32.xlu0 %v5083
    %v5143 = vpop.xlane.xlu0 %5142
    %5144 = vadd.xlane.f32.xlu0 %v5084
    %v5145 = vpop.xlane.xlu0 %5144
    %5146 = vadd.xlane.f32.xlu0 %v5085
    %v5147 = vpop.xlane.xlu0 %5146
    %5148 = vadd.xlane.f32.xlu0 %v5086
    %v5149 = vpop.xlane.xlu0 %5148
    %5150 = vadd.xlane.f32.xlu0 %v5087
    %v5151 = vpop.xlane.xlu0 %5150
    %v5152 = vmul.f32 %v5089, %v4384
    %v5153 = vmul.f32 %v5091, %v4384
    %v5154 = vmul.f32 %v5093, %v4384
    %v5155 = vmul.f32 %v5095, %v4384
    %v5156 = vmul.f32 %v5097, %v4384
    %v5157 = vmul.f32 %v5099, %v4384
    %v5158 = vmul.f32 %v5101, %v4384
    %v5159 = vmul.f32 %v5103, %v4384
    %v5160 = vmul.f32 %v5105, %v4384
    %v5161 = vmul.f32 %v5107, %v4384
    %v5162 = vmul.f32 %v5109, %v4384
    %v5163 = vmul.f32 %v5111, %v4384
    %v5164 = vmul.f32 %v5113, %v4384
    %v5165 = vmul.f32 %v5115, %v4384
    %v5166 = vmul.f32 %v5117, %v4384
    %v5167 = vmul.f32 %v5119, %v4384
    %v5168 = vmul.f32 %v5121, %v4384
    %v5169 = vmul.f32 %v5123, %v4384
    %v5170 = vmul.f32 %v5125, %v4384
    %v5171 = vmul.f32 %v5127, %v4384
    %v5172 = vmul.f32 %v5129, %v4384
    %v5173 = vmul.f32 %v5131, %v4384
    %v5174 = vmul.f32 %v5133, %v4384
    %v5175 = vmul.f32 %v5135, %v4384
    %v5176 = vmul.f32 %v5137, %v4384
    %v5177 = vmul.f32 %v5139, %v4384
    %v5178 = vmul.f32 %v5141, %v4384
    %v5179 = vmul.f32 %v5143, %v4384
    %v5180 = vmul.f32 %v5145, %v4384
    %v5181 = vmul.f32 %v5147, %v4384
    %v5182 = vmul.f32 %v5149, %v4384
    %v5183 = vmul.f32 %v5151, %v4384
    %v5184 = vmul.f32 %v5056, %v5056
    %v5185 = vmul.f32 %v5057, %v5057
    %v5186 = vmul.f32 %v5058, %v5058
    %v5187 = vmul.f32 %v5059, %v5059
    %v5188 = vmul.f32 %v5060, %v5060
    %v5189 = vmul.f32 %v5061, %v5061
    %v5190 = vmul.f32 %v5062, %v5062
    %v5191 = vmul.f32 %v5063, %v5063
    %v5192 = vmul.f32 %v5064, %v5064
    %v5193 = vmul.f32 %v5065, %v5065
    %v5194 = vmul.f32 %v5066, %v5066
    %v5195 = vmul.f32 %v5067, %v5067
    %v5196 = vmul.f32 %v5068, %v5068
    %v5197 = vmul.f32 %v5069, %v5069
    %v5198 = vmul.f32 %v5070, %v5070
    %v5199 = vmul.f32 %v5071, %v5071
    %v5200 = vmul.f32 %v5072, %v5072
    %v5201 = vmul.f32 %v5073, %v5073
    %v5202 = vmul.f32 %v5074, %v5074
    %v5203 = vmul.f32 %v5075, %v5075
    %v5204 = vmul.f32 %v5076, %v5076
    %v5205 = vmul.f32 %v5077, %v5077
    %v5206 = vmul.f32 %v5078, %v5078
    %v5207 = vmul.f32 %v5079, %v5079
    %v5208 = vmul.f32 %v5080, %v5080
    %v5209 = vmul.f32 %v5081, %v5081
    %v5210 = vmul.f32 %v5082, %v5082
    %v5211 = vmul.f32 %v5083, %v5083
    %v5212 = vmul.f32 %v5084, %v5084
    %v5213 = vmul.f32 %v5085, %v5085
    %v5214 = vmul.f32 %v5086, %v5086
    %v5215 = vmul.f32 %v5087, %v5087
    %5216 = vadd.xlane.f32.xlu0 %v5184
    %v5217 = vpop.xlane.xlu0 %5216
    %5218 = vadd.xlane.f32.xlu0 %v5185
    %v5219 = vpop.xlane.xlu0 %5218
    %5220 = vadd.xlane.f32.xlu0 %v5186
    %v5221 = vpop.xlane.xlu0 %5220
    %5222 = vadd.xlane.f32.xlu0 %v5187
    %v5223 = vpop.xlane.xlu0 %5222
    %5224 = vadd.xlane.f32.xlu0 %v5188
    %v5225 = vpop.xlane.xlu0 %5224
    %5226 = vadd.xlane.f32.xlu0 %v5189
    %v5227 = vpop.xlane.xlu0 %5226
    %5228 = vadd.xlane.f32.xlu0 %v5190
    %v5229 = vpop.xlane.xlu0 %5228
    %5230 = vadd.xlane.f32.xlu0 %v5191
    %v5231 = vpop.xlane.xlu0 %5230
    %5232 = vadd.xlane.f32.xlu0 %v5192
    %v5233 = vpop.xlane.xlu0 %5232
    %5234 = vadd.xlane.f32.xlu0 %v5193
    %v5235 = vpop.xlane.xlu0 %5234
    %5236 = vadd.xlane.f32.xlu0 %v5194
    %v5237 = vpop.xlane.xlu0 %5236
    %5238 = vadd.xlane.f32.xlu0 %v5195
    %v5239 = vpop.xlane.xlu0 %5238
    %5240 = vadd.xlane.f32.xlu0 %v5196
    %v5241 = vpop.xlane.xlu0 %5240
    %5242 = vadd.xlane.f32.xlu0 %v5197
    %v5243 = vpop.xlane.xlu0 %5242
    %5244 = vadd.xlane.f32.xlu0 %v5198
    %v5245 = vpop.xlane.xlu0 %5244
    %5246 = vadd.xlane.f32.xlu0 %v5199
    %v5247 = vpop.xlane.xlu0 %5246
    %5248 = vadd.xlane.f32.xlu0 %v5200
    %v5249 = vpop.xlane.xlu0 %5248
    %5250 = vadd.xlane.f32.xlu0 %v5201
    %v5251 = vpop.xlane.xlu0 %5250
    %5252 = vadd.xlane.f32.xlu0 %v5202
    %v5253 = vpop.xlane.xlu0 %5252
    %5254 = vadd.xlane.f32.xlu0 %v5203
    %v5255 = vpop.xlane.xlu0 %5254
    %5256 = vadd.xlane.f32.xlu0 %v5204
    %v5257 = vpop.xlane.xlu0 %5256
    %5258 = vadd.xlane.f32.xlu0 %v5205
    %v5259 = vpop.xlane.xlu0 %5258
    %5260 = vadd.xlane.f32.xlu0 %v5206
    %v5261 = vpop.xlane.xlu0 %5260
    %5262 = vadd.xlane.f32.xlu0 %v5207
    %v5263 = vpop.xlane.xlu0 %5262
    %5264 = vadd.xlane.f32.xlu0 %v5208
    %v5265 = vpop.xlane.xlu0 %5264
    %5266 = vadd.xlane.f32.xlu0 %v5209
    %v5267 = vpop.xlane.xlu0 %5266
    %5268 = vadd.xlane.f32.xlu0 %v5210
    %v5269 = vpop.xlane.xlu0 %5268
    %5270 = vadd.xlane.f32.xlu0 %v5211
    %v5271 = vpop.xlane.xlu0 %5270
    %5272 = vadd.xlane.f32.xlu0 %v5212
    %v5273 = vpop.xlane.xlu0 %5272
    %5274 = vadd.xlane.f32.xlu0 %v5213
    %v5275 = vpop.xlane.xlu0 %5274
    %5276 = vadd.xlane.f32.xlu0 %v5214
    %v5277 = vpop.xlane.xlu0 %5276
    %5278 = vadd.xlane.f32.xlu0 %v5215
    %v5279 = vpop.xlane.xlu0 %5278
    %v5280 = vmul.f32 %v5217, %v4384
    %v5281 = vmul.f32 %v5219, %v4384
    %v5282 = vmul.f32 %v5221, %v4384
    %v5283 = vmul.f32 %v5223, %v4384
    %v5284 = vmul.f32 %v5225, %v4384
    %v5285 = vmul.f32 %v5227, %v4384
    %v5286 = vmul.f32 %v5229, %v4384
    %v5287 = vmul.f32 %v5231, %v4384
    %v5288 = vmul.f32 %v5233, %v4384
    %v5289 = vmul.f32 %v5235, %v4384
    %v5290 = vmul.f32 %v5237, %v4384
    %v5291 = vmul.f32 %v5239, %v4384
    %v5292 = vmul.f32 %v5241, %v4384
    %v5293 = vmul.f32 %v5243, %v4384
    %v5294 = vmul.f32 %v5245, %v4384
    %v5295 = vmul.f32 %v5247, %v4384
    %v5296 = vmul.f32 %v5249, %v4384
    %v5297 = vmul.f32 %v5251, %v4384
    %v5298 = vmul.f32 %v5253, %v4384
    %v5299 = vmul.f32 %v5255, %v4384
    %v5300 = vmul.f32 %v5257, %v4384
    %v5301 = vmul.f32 %v5259, %v4384
    %v5302 = vmul.f32 %v5261, %v4384
    %v5303 = vmul.f32 %v5263, %v4384
    %v5304 = vmul.f32 %v5265, %v4384
    %v5305 = vmul.f32 %v5267, %v4384
    %v5306 = vmul.f32 %v5269, %v4384
    %v5307 = vmul.f32 %v5271, %v4384
    %v5308 = vmul.f32 %v5273, %v4384
    %v5309 = vmul.f32 %v5275, %v4384
    %v5310 = vmul.f32 %v5277, %v4384
    %v5311 = vmul.f32 %v5279, %v4384
    %v5312 = vsub.f32 %v5056, %v5152
    %v5313 = vsub.f32 %v5057, %v5153
    %v5314 = vsub.f32 %v5058, %v5154
    %v5315 = vsub.f32 %v5059, %v5155
    %v5316 = vsub.f32 %v5060, %v5156
    %v5317 = vsub.f32 %v5061, %v5157
    %v5318 = vsub.f32 %v5062, %v5158
    %v5319 = vsub.f32 %v5063, %v5159
    %v5320 = vsub.f32 %v5064, %v5160
    %v5321 = vsub.f32 %v5065, %v5161
    %v5322 = vsub.f32 %v5066, %v5162
    %v5323 = vsub.f32 %v5067, %v5163
    %v5324 = vsub.f32 %v5068, %v5164
    %v5325 = vsub.f32 %v5069, %v5165
    %v5326 = vsub.f32 %v5070, %v5166
    %v5327 = vsub.f32 %v5071, %v5167
    %v5328 = vsub.f32 %v5072, %v5168
    %v5329 = vsub.f32 %v5073, %v5169
    %v5330 = vsub.f32 %v5074, %v5170
    %v5331 = vsub.f32 %v5075, %v5171
    %v5332 = vsub.f32 %v5076, %v5172
    %v5333 = vsub.f32 %v5077, %v5173
    %v5334 = vsub.f32 %v5078, %v5174
    %v5335 = vsub.f32 %v5079, %v5175
    %v5336 = vsub.f32 %v5080, %v5176
    %v5337 = vsub.f32 %v5081, %v5177
    %v5338 = vsub.f32 %v5082, %v5178
    %v5339 = vsub.f32 %v5083, %v5179
    %v5340 = vsub.f32 %v5084, %v5180
    %v5341 = vsub.f32 %v5085, %v5181
    %v5342 = vsub.f32 %v5086, %v5182
    %v5343 = vsub.f32 %v5087, %v5183
    %v5344 = vmul.f32 %v5152, %v5152
    %v5345 = vmul.f32 %v5153, %v5153
    %v5346 = vmul.f32 %v5154, %v5154
    %v5347 = vmul.f32 %v5155, %v5155
    %v5348 = vmul.f32 %v5156, %v5156
    %v5349 = vmul.f32 %v5157, %v5157
    %v5350 = vmul.f32 %v5158, %v5158
    %v5351 = vmul.f32 %v5159, %v5159
    %v5352 = vmul.f32 %v5160, %v5160
    %v5353 = vmul.f32 %v5161, %v5161
    %v5354 = vmul.f32 %v5162, %v5162
    %v5355 = vmul.f32 %v5163, %v5163
    %v5356 = vmul.f32 %v5164, %v5164
    %v5357 = vmul.f32 %v5165, %v5165
    %v5358 = vmul.f32 %v5166, %v5166
    %v5359 = vmul.f32 %v5167, %v5167
    %v5360 = vmul.f32 %v5168, %v5168
    %v5361 = vmul.f32 %v5169, %v5169
    %v5362 = vmul.f32 %v5170, %v5170
    %v5363 = vmul.f32 %v5171, %v5171
    %v5364 = vmul.f32 %v5172, %v5172
    %v5365 = vmul.f32 %v5173, %v5173
    %v5366 = vmul.f32 %v5174, %v5174
    %v5367 = vmul.f32 %v5175, %v5175
    %v5368 = vmul.f32 %v5176, %v5176
    %v5369 = vmul.f32 %v5177, %v5177
    %v5370 = vmul.f32 %v5178, %v5178
    %v5371 = vmul.f32 %v5179, %v5179
    %v5372 = vmul.f32 %v5180, %v5180
    %v5373 = vmul.f32 %v5181, %v5181
    %v5374 = vmul.f32 %v5182, %v5182
    %v5375 = vmul.f32 %v5183, %v5183
    %v5376 = vsub.f32 %v5280, %v5344
    %v5377 = vsub.f32 %v5281, %v5345
    %v5378 = vsub.f32 %v5282, %v5346
    %v5379 = vsub.f32 %v5283, %v5347
    %v5380 = vsub.f32 %v5284, %v5348
    %v5381 = vsub.f32 %v5285, %v5349
    %v5382 = vsub.f32 %v5286, %v5350
    %v5383 = vsub.f32 %v5287, %v5351
    %v5384 = vsub.f32 %v5288, %v5352
    %v5385 = vsub.f32 %v5289, %v5353
    %v5386 = vsub.f32 %v5290, %v5354
    %v5387 = vsub.f32 %v5291, %v5355
    %v5388 = vsub.f32 %v5292, %v5356
    %v5389 = vsub.f32 %v5293, %v5357
    %v5390 = vsub.f32 %v5294, %v5358
    %v5391 = vsub.f32 %v5295, %v5359
    %v5392 = vsub.f32 %v5296, %v5360
    %v5393 = vsub.f32 %v5297, %v5361
    %v5394 = vsub.f32 %v5298, %v5362
    %v5395 = vsub.f32 %v5299, %v5363
    %v5396 = vsub.f32 %v5300, %v5364
    %v5397 = vsub.f32 %v5301, %v5365
    %v5398 = vsub.f32 %v5302, %v5366
    %v5399 = vsub.f32 %v5303, %v5367
    %v5400 = vsub.f32 %v5304, %v5368
    %v5401 = vsub.f32 %v5305, %v5369
    %v5402 = vsub.f32 %v5306, %v5370
    %v5403 = vsub.f32 %v5307, %v5371
    %v5404 = vsub.f32 %v5308, %v5372
    %v5405 = vsub.f32 %v5309, %v5373
    %v5406 = vsub.f32 %v5310, %v5374
    %v5407 = vsub.f32 %v5311, %v5375
    %v5408 = vadd.f32 %v5376, 1e-06
    %v5409 = vadd.f32 %v5377, 1e-06
    %v5410 = vadd.f32 %v5378, 1e-06
    %v5411 = vadd.f32 %v5379, 1e-06
    %v5412 = vadd.f32 %v5380, 1e-06
    %v5413 = vadd.f32 %v5381, 1e-06
    %v5414 = vadd.f32 %v5382, 1e-06
    %v5415 = vadd.f32 %v5383, 1e-06
    %v5416 = vadd.f32 %v5384, 1e-06
    %v5417 = vadd.f32 %v5385, 1e-06
    %v5418 = vadd.f32 %v5386, 1e-06
    %v5419 = vadd.f32 %v5387, 1e-06
    %v5420 = vadd.f32 %v5388, 1e-06
    %v5421 = vadd.f32 %v5389, 1e-06
    %v5422 = vadd.f32 %v5390, 1e-06
    %v5423 = vadd.f32 %v5391, 1e-06
    %v5424 = vadd.f32 %v5392, 1e-06
    %v5425 = vadd.f32 %v5393, 1e-06
    %v5426 = vadd.f32 %v5394, 1e-06
    %v5427 = vadd.f32 %v5395, 1e-06
    %v5428 = vadd.f32 %v5396, 1e-06
    %v5429 = vadd.f32 %v5397, 1e-06
    %v5430 = vadd.f32 %v5398, 1e-06
    %v5431 = vadd.f32 %v5399, 1e-06
    %v5432 = vadd.f32 %v5400, 1e-06
    %v5433 = vadd.f32 %v5401, 1e-06
    %v5434 = vadd.f32 %v5402, 1e-06
    %v5435 = vadd.f32 %v5403, 1e-06
    %v5436 = vadd.f32 %v5404, 1e-06
    %v5437 = vadd.f32 %v5405, 1e-06
    %v5438 = vadd.f32 %v5406, 1e-06
    %v5439 = vadd.f32 %v5407, 1e-06
    %v5440 = vrsqrt.pop %v5408
    %v5441 = vrsqrt.pop %v5409
    %v5442 = vrsqrt.pop %v5410
    %v5443 = vrsqrt.pop %v5411
    %v5444 = vrsqrt.pop %v5412
    %v5445 = vrsqrt.pop %v5413
    %v5446 = vrsqrt.pop %v5414
    %v5447 = vrsqrt.pop %v5415
    %v5448 = vrsqrt.pop %v5416
    %v5449 = vrsqrt.pop %v5417
    %v5450 = vrsqrt.pop %v5418
    %v5451 = vrsqrt.pop %v5419
    %v5452 = vrsqrt.pop %v5420
    %v5453 = vrsqrt.pop %v5421
    %v5454 = vrsqrt.pop %v5422
    %v5455 = vrsqrt.pop %v5423
    %v5456 = vrsqrt.pop %v5424
    %v5457 = vrsqrt.pop %v5425
    %v5458 = vrsqrt.pop %v5426
    %v5459 = vrsqrt.pop %v5427
    %v5460 = vrsqrt.pop %v5428
    %v5461 = vrsqrt.pop %v5429
    %v5462 = vrsqrt.pop %v5430
    %v5463 = vrsqrt.pop %v5431
    %v5464 = vrsqrt.pop %v5432
    %v5465 = vrsqrt.pop %v5433
    %v5466 = vrsqrt.pop %v5434
    %v5467 = vrsqrt.pop %v5435
    %v5468 = vrsqrt.pop %v5436
    %v5469 = vrsqrt.pop %v5437
    %v5470 = vrsqrt.pop %v5438
    %v5471 = vrsqrt.pop %v5439
    %v5472 = vmul.f32 %v5312, %v5440
    %v5473 = vmul.f32 %v5313, %v5441
    %v5474 = vmul.f32 %v5314, %v5442
    %v5475 = vmul.f32 %v5315, %v5443
    %v5476 = vmul.f32 %v5316, %v5444
    %v5477 = vmul.f32 %v5317, %v5445
    %v5478 = vmul.f32 %v5318, %v5446
    %v5479 = vmul.f32 %v5319, %v5447
    %v5480 = vmul.f32 %v5320, %v5448
    %v5481 = vmul.f32 %v5321, %v5449
    %v5482 = vmul.f32 %v5322, %v5450
    %v5483 = vmul.f32 %v5323, %v5451
    %v5484 = vmul.f32 %v5324, %v5452
    %v5485 = vmul.f32 %v5325, %v5453
    %v5486 = vmul.f32 %v5326, %v5454
    %v5487 = vmul.f32 %v5327, %v5455
    %v5488 = vmul.f32 %v5328, %v5456
    %v5489 = vmul.f32 %v5329, %v5457
    %v5490 = vmul.f32 %v5330, %v5458
    %v5491 = vmul.f32 %v5331, %v5459
    %v5492 = vmul.f32 %v5332, %v5460
    %v5493 = vmul.f32 %v5333, %v5461
    %v5494 = vmul.f32 %v5334, %v5462
    %v5495 = vmul.f32 %v5335, %v5463
    %v5496 = vmul.f32 %v5336, %v5464
    %v5497 = vmul.f32 %v5337, %v5465
    %v5498 = vmul.f32 %v5338, %v5466
    %v5499 = vmul.f32 %v5339, %v5467
    %v5500 = vmul.f32 %v5340, %v5468
    %v5501 = vmul.f32 %v5341, %v5469
    %v5502 = vmul.f32 %v5342, %v5470
    %v5503 = vmul.f32 %v5343, %v5471
    %v5504 = vld [vmem:[#allocation16] sm:$0x1]
    %v5506 = vlaneseq
    %v5507 = vshrl.u32 %v5506, 7
    %v5508 = vsub.s32 0, %v5507
    %v5509 = vrot.slane %v5504, %v5508
    %v5511 = vmul.f32 %v5472, %v5509
    %v5512 = vmul.f32 %v5473, %v5509
    %v5513 = vmul.f32 %v5474, %v5509
    %v5514 = vmul.f32 %v5475, %v5509
    %v5515 = vmul.f32 %v5476, %v5509
    %v5516 = vmul.f32 %v5477, %v5509
    %v5517 = vmul.f32 %v5478, %v5509
    %v5518 = vmul.f32 %v5479, %v5509
    %v5519 = vmul.f32 %v5480, %v5509
    %v5520 = vmul.f32 %v5481, %v5509
    %v5521 = vmul.f32 %v5482, %v5509
    %v5522 = vmul.f32 %v5483, %v5509
    %v5523 = vmul.f32 %v5484, %v5509
    %v5524 = vmul.f32 %v5485, %v5509
    %v5525 = vmul.f32 %v5486, %v5509
    %v5526 = vmul.f32 %v5487, %v5509
    %v5527 = vmul.f32 %v5488, %v5509
    %v5528 = vmul.f32 %v5489, %v5509
    %v5529 = vmul.f32 %v5490, %v5509
    %v5530 = vmul.f32 %v5491, %v5509
    %v5531 = vmul.f32 %v5492, %v5509
    %v5532 = vmul.f32 %v5493, %v5509
    %v5533 = vmul.f32 %v5494, %v5509
    %v5534 = vmul.f32 %v5495, %v5509
    %v5535 = vmul.f32 %v5496, %v5509
    %v5536 = vmul.f32 %v5497, %v5509
    %v5537 = vmul.f32 %v5498, %v5509
    %v5538 = vmul.f32 %v5499, %v5509
    %v5539 = vmul.f32 %v5500, %v5509
    %v5540 = vmul.f32 %v5501, %v5509
    %v5541 = vmul.f32 %v5502, %v5509
    %v5542 = vmul.f32 %v5503, %v5509
    %v5543 = vld [vmem:[#allocation17] sm:$0x1]
    %v5545 = vlaneseq
    %v5546 = vshrl.u32 %v5545, 7
    %v5547 = vsub.s32 0, %v5546
    %v5548 = vrot.slane %v5543, %v5547
    %v5550 = vadd.f32 %v5511, %v5548
    %v5551 = vadd.f32 %v5512, %v5548
    %v5552 = vadd.f32 %v5513, %v5548
    %v5553 = vadd.f32 %v5514, %v5548
    %v5554 = vadd.f32 %v5515, %v5548
    %v5555 = vadd.f32 %v5516, %v5548
    %v5556 = vadd.f32 %v5517, %v5548
    %v5557 = vadd.f32 %v5518, %v5548
    %v5558 = vadd.f32 %v5519, %v5548
    %v5559 = vadd.f32 %v5520, %v5548
    %v5560 = vadd.f32 %v5521, %v5548
    %v5561 = vadd.f32 %v5522, %v5548
    %v5562 = vadd.f32 %v5523, %v5548
    %v5563 = vadd.f32 %v5524, %v5548
    %v5564 = vadd.f32 %v5525, %v5548
    %v5565 = vadd.f32 %v5526, %v5548
    %v5566 = vadd.f32 %v5527, %v5548
    %v5567 = vadd.f32 %v5528, %v5548
    %v5568 = vadd.f32 %v5529, %v5548
    %v5569 = vadd.f32 %v5530, %v5548
    %v5570 = vadd.f32 %v5531, %v5548
    %v5571 = vadd.f32 %v5532, %v5548
    %v5572 = vadd.f32 %v5533, %v5548
    %v5573 = vadd.f32 %v5534, %v5548
    %v5574 = vadd.f32 %v5535, %v5548
    %v5575 = vadd.f32 %v5536, %v5548
    %v5576 = vadd.f32 %v5537, %v5548
    %v5577 = vadd.f32 %v5538, %v5548
    %v5578 = vadd.f32 %v5539, %v5548
    %v5579 = vadd.f32 %v5540, %v5548
    %v5580 = vadd.f32 %v5541, %v5548
    %v5581 = vadd.f32 %v5542, %v5548
    %s5582 = scalar_lea.vmem [#allocation8], 64
    %v5583 = vld [vmem:[%s5582] sm:$0xf]
    %v5584 = vld [vmem:[%s5582 + $0x4] sm:$0xf]
    %v5585 = vld [vmem:[%s5582 + $0x8] sm:$0xf]
    %v5586 = vld [vmem:[%s5582 + $0xc] sm:$0xf]
    %v5587 = vld [vmem:[%s5582 + $0x10] sm:$0xf]
    %v5588 = vld [vmem:[%s5582 + $0x14] sm:$0xf]
    %v5589 = vld [vmem:[%s5582 + $0x18] sm:$0xf]
    %v5590 = vld [vmem:[%s5582 + $0x1c] sm:$0xf]
    %v5591 = vld [vmem:[%s5582 + $0x20] sm:$0xf]
    %v5592 = vld [vmem:[%s5582 + $0x24] sm:$0xf]
    %v5593 = vld [vmem:[%s5582 + $0x28] sm:$0xf]
    %v5594 = vld [vmem:[%s5582 + $0x2c] sm:$0xf]
    %v5595 = vld [vmem:[%s5582 + $0x30] sm:$0xf]
    %v5596 = vld [vmem:[%s5582 + $0x34] sm:$0xf]
    %v5597 = vld [vmem:[%s5582 + $0x38] sm:$0xf]
    %v5598 = vld [vmem:[%s5582 + $0x3c] sm:$0xf]
    %v5599 = vpack.c.bf16 %v5551, %v5550
    %v5600 = vpack.c.bf16 %v5553, %v5552
    %v5601 = vpack.c.bf16 %v5555, %v5554
    %v5602 = vpack.c.bf16 %v5557, %v5556
    %v5603 = vpack.c.bf16 %v5559, %v5558
    %v5604 = vpack.c.bf16 %v5561, %v5560
    %v5605 = vpack.c.bf16 %v5563, %v5562
    %v5606 = vpack.c.bf16 %v5565, %v5564
    %v5607 = vpack.c.bf16 %v5567, %v5566
    %v5608 = vpack.c.bf16 %v5569, %v5568
    %v5609 = vpack.c.bf16 %v5571, %v5570
    %v5610 = vpack.c.bf16 %v5573, %v5572
    %v5611 = vpack.c.bf16 %v5575, %v5574
    %v5612 = vpack.c.bf16 %v5577, %v5576
    %v5613 = vpack.c.bf16 %v5579, %v5578
    %v5614 = vpack.c.bf16 %v5581, %v5580
    %s5615 = scalar_lea.vmem [#allocation7], 192
    %v5616 = vld [vmem:[%s5615] sm:$0xff]
    %v5617 = vld [vmem:[%s5615 + $0x8] sm:$0xf]
    %v5618 = vld [vmem:[%s5615 + $0xc] sm:$0xff]
    %v5619 = vld [vmem:[%s5615 + $0x14] sm:$0xf]
    %v5620 = vld [vmem:[%s5615 + $0x18] sm:$0xff]
    %v5621 = vld [vmem:[%s5615 + $0x20] sm:$0xf]
    %v5622 = vld [vmem:[%s5615 + $0x24] sm:$0xff]
    %v5623 = vld [vmem:[%s5615 + $0x2c] sm:$0xf]
    %v5624 = vld [vmem:[%s5615 + $0x30] sm:$0xff]
    %v5625 = vld [vmem:[%s5615 + $0x38] sm:$0xf]
    %v5626 = vld [vmem:[%s5615 + $0x3c] sm:$0xff]
    %v5627 = vld [vmem:[%s5615 + $0x44] sm:$0xf]
    %v5628 = vld [vmem:[%s5615 + $0x48] sm:$0xff]
    %v5629 = vld [vmem:[%s5615 + $0x50] sm:$0xf]
    %v5630 = vld [vmem:[%s5615 + $0x54] sm:$0xff]
    %v5631 = vld [vmem:[%s5615 + $0x5c] sm:$0xf]
    %v5632 = vld [vmem:[%s5615 + $0x60] sm:$0xff]
    %v5633 = vld [vmem:[%s5615 + $0x68] sm:$0xf]
    %v5634 = vld [vmem:[%s5615 + $0x6c] sm:$0xff]
    %v5635 = vld [vmem:[%s5615 + $0x74] sm:$0xf]
    %v5636 = vld [vmem:[%s5615 + $0x78] sm:$0xff]
    %v5637 = vld [vmem:[%s5615 + $0x80] sm:$0xf]
    %v5638 = vld [vmem:[%s5615 + $0x84] sm:$0xff]
    %v5639 = vld [vmem:[%s5615 + $0x8c] sm:$0xf]
    %v5640 = vld [vmem:[%s5615 + $0x90] sm:$0xff]
    %v5641 = vld [vmem:[%s5615 + $0x98] sm:$0xf]
    %v5642 = vld [vmem:[%s5615 + $0x9c] sm:$0xff]
    %v5643 = vld [vmem:[%s5615 + $0xa4] sm:$0xf]
    %v5644 = vld [vmem:[%s5615 + $0xa8] sm:$0xff]
    %v5645 = vld [vmem:[%s5615 + $0xb0] sm:$0xf]
    %v5646 = vld [vmem:[%s5615 + $0xb4] sm:$0xff]
    %v5647 = vld [vmem:[%s5615 + $0xbc] sm:$0xf]
    %v5680 = vunpack.c.l.b16 %v5616
    %v5681 = vunpack.c.h.b16 %v5616
    %v5682 = vunpack.c.l.b16 %v5617
    %v5683 = vunpack.c.l.b16 %v5618
    %v5684 = vunpack.c.h.b16 %v5618
    %v5685 = vunpack.c.l.b16 %v5619
    %v5686 = vunpack.c.l.b16 %v5620
    %v5687 = vunpack.c.h.b16 %v5620
    %v5688 = vunpack.c.l.b16 %v5621
    %v5689 = vunpack.c.l.b16 %v5622
    %v5690 = vunpack.c.h.b16 %v5622
    %v5691 = vunpack.c.l.b16 %v5623
    %v5692 = vunpack.c.l.b16 %v5624
    %v5693 = vunpack.c.h.b16 %v5624
    %v5694 = vunpack.c.l.b16 %v5625
    %v5695 = vunpack.c.l.b16 %v5626
    %v5696 = vunpack.c.h.b16 %v5626
    %v5697 = vunpack.c.l.b16 %v5627
    %v5698 = vunpack.c.l.b16 %v5628
    %v5699 = vunpack.c.h.b16 %v5628
    %v5700 = vunpack.c.l.b16 %v5629
    %v5701 = vunpack.c.l.b16 %v5630
    %v5702 = vunpack.c.h.b16 %v5630
    %v5703 = vunpack.c.l.b16 %v5631
    %v5704 = vunpack.c.l.b16 %v5632
    %v5705 = vunpack.c.h.b16 %v5632
    %v5706 = vunpack.c.l.b16 %v5633
    %v5707 = vunpack.c.l.b16 %v5634
    %v5708 = vunpack.c.h.b16 %v5634
    %v5709 = vunpack.c.l.b16 %v5635
    %v5710 = vunpack.c.l.b16 %v5636
    %v5711 = vunpack.c.h.b16 %v5636
    %v5712 = vunpack.c.l.b16 %v5637
    %v5713 = vunpack.c.l.b16 %v5638
    %v5714 = vunpack.c.h.b16 %v5638
    %v5715 = vunpack.c.l.b16 %v5639
    %v5716 = vunpack.c.l.b16 %v5640
    %v5717 = vunpack.c.h.b16 %v5640
    %v5718 = vunpack.c.l.b16 %v5641
    %v5719 = vunpack.c.l.b16 %v5642
    %v5720 = vunpack.c.h.b16 %v5642
    %v5721 = vunpack.c.l.b16 %v5643
    %v5722 = vunpack.c.l.b16 %v5644
    %v5723 = vunpack.c.h.b16 %v5644
    %v5724 = vunpack.c.l.b16 %v5645
    %v5725 = vunpack.c.l.b16 %v5646
    %v5726 = vunpack.c.h.b16 %v5646
    %v5727 = vunpack.c.l.b16 %v5647
    %v5728 = vpack.c.b16 %v5683, %v5680
    %v5729 = vpack.c.b16 %v5684, %v5681
    %v5730 = vpack.c.b16 %v5685, %v5682
    %v5731 = vpack.c.b16 %v5689, %v5686
    %v5732 = vpack.c.b16 %v5690, %v5687
    %v5733 = vpack.c.b16 %v5691, %v5688
    %v5734 = vpack.c.b16 %v5695, %v5692
    %v5735 = vpack.c.b16 %v5696, %v5693
    %v5736 = vpack.c.b16 %v5697, %v5694
    %v5737 = vpack.c.b16 %v5701, %v5698
    %v5738 = vpack.c.b16 %v5702, %v5699
    %v5739 = vpack.c.b16 %v5703, %v5700
    %v5740 = vpack.c.b16 %v5707, %v5704
    %v5741 = vpack.c.b16 %v5708, %v5705
    %v5742 = vpack.c.b16 %v5709, %v5706
    %v5743 = vpack.c.b16 %v5713, %v5710
    %v5744 = vpack.c.b16 %v5714, %v5711
    %v5745 = vpack.c.b16 %v5715, %v5712
    %v5746 = vpack.c.b16 %v5719, %v5716
    %v5747 = vpack.c.b16 %v5720, %v5717
    %v5748 = vpack.c.b16 %v5721, %v5718
    %v5749 = vpack.c.b16 %v5725, %v5722
    %v5750 = vpack.c.b16 %v5726, %v5723
    %v5751 = vpack.c.b16 %v5727, %v5724
    %5776 = vmatprep.subr.bf16.mxu0 %v5729
    %5777 = vmatpush1.bf16.msra.mxu0 %v5728
    %5778 = vmatprep.subr.bf16.mxu0 %v5732
    %5779 = vmatpush1.bf16.msra.mxu0 %v5731
    %5780 = vmatprep.subr.bf16.mxu0 %v5735
    %5781 = vmatpush1.bf16.msra.mxu0 %v5734
    %5782 = vmatprep.subr.bf16.mxu0 %v5738
    %5783 = vmatpush1.bf16.msra.mxu0 %v5737
    %5784 = vmatprep.subr.bf16.mxu0 %v5741
    %5785 = vmatpush1.bf16.msra.mxu0 %v5740
    %5786 = vmatprep.subr.bf16.mxu0 %v5744
    %5787 = vmatpush1.bf16.msra.mxu0 %v5743
    %5788 = vmatprep.subr.bf16.mxu0 %v5747
    %5789 = vmatpush1.bf16.msra.mxu0 %v5746
    %5790 = vmatprep.subr.bf16.mxu0 %v5750
    %5791 = vmatpush1.bf16.msra.mxu0 %v5749
    %5792 = vmatprep.subr.bf16.mxu0 0
    %5793 = vmatpush1.bf16.msra.mxu0 0
    %5794 = vmatprep.subr.bf16.mxu0 0
    %5795 = vmatpush1.bf16.msra.mxu0 0
    %5796 = vmatprep.subr.bf16.mxu0 0
    %5797 = vmatpush1.bf16.msra.mxu0 0
    %5798 = vmatprep.subr.bf16.mxu0 0
    %5799 = vmatpush1.bf16.msra.mxu0 0
    %5800 = vmatprep.subr.bf16.mxu0 0
    %5801 = vmatpush1.bf16.msra.mxu0 0
    %5802 = vmatprep.subr.bf16.mxu0 0
    %5803 = vmatpush1.bf16.msra.mxu0 0
    %5804 = vmatprep.subr.bf16.mxu0 0
    %5805 = vmatpush1.bf16.msra.mxu0 0
    %5806 = vmatprep.subr.bf16.mxu0 0
    %5807 = vmatpush1.bf16.msra.mxu0 0
    %5808 = vmatprep.mubr.bf16.mxu0 0
    %5809 = vmatmul.mubr.bf16.gmra.mrb[0].mxu0 %v5599
    %v5810 = vpop.f32.mrb[0].mxu0
    %v5811 = vadd.f32 0.0, %v5810
    %v5812 = vpop.f32.mrb[0].mxu0
    %v5813 = vadd.f32 0.0, %v5812
    %v5814 = vpop.f32.mrb[0].mxu0
    %v5815 = vadd.f32 0.0, %v5814
    %v5816 = vpop.f32.mrb[0].mxu0
    %v5817 = vadd.f32 0.0, %v5816
    %5818 = vmatprep.mubr.bf16.mxu0 0
    %5819 = vmatmul.mubr.bf16.gmra.mrb[0].mxu0 %v5600
    %v5820 = vpop.f32.mrb[0].mxu0
    %v5821 = vadd.f32 0.0, %v5820
    %v5822 = vpop.f32.mrb[0].mxu0
    %v5823 = vadd.f32 0.0, %v5822
    %v5824 = vpop.f32.mrb[0].mxu0
    %v5825 = vadd.f32 0.0, %v5824
    %v5826 = vpop.f32.mrb[0].mxu0
    %v5827 = vadd.f32 0.0, %v5826
    %5828 = vmatprep.mubr.bf16.mxu0 0
    %5829 = vmatmul.mubr.bf16.gmra.mrb[0].mxu0 %v5601
    %v5830 = vpop.f32.mrb[0].mxu0
    %v5831 = vadd.f32 0.0, %v5830
    %v5832 = vpop.f32.mrb[0].mxu0
    %v5833 = vadd.f32 0.0, %v5832
    %v5834 = vpop.f32.mrb[0].mxu0
    %v5835 = vadd.f32 0.0, %v5834
    %v5836 = vpop.f32.mrb[0].mxu0
    %v5837 = vadd.f32 0.0, %v5836
    %5838 = vmatprep.mubr.bf16.mxu0 0
    %5839 = vmatmul.mubr.bf16.gmra.mrb[0].mxu0 %v5602
    %v5840 = vpop.f32.mrb[0].mxu0
    %v5841 = vadd.f32 0.0, %v5840
    %v5842 = vpop.f32.mrb[0].mxu0
    %v5843 = vadd.f32 0.0, %v5842
    %v5844 = vpop.f32.mrb[0].mxu0
    %v5845 = vadd.f32 0.0, %v5844
    %v5846 = vpop.f32.mrb[0].mxu0
    %v5847 = vadd.f32 0.0, %v5846
    %5848 = vmatprep.mubr.bf16.mxu0 0
    %5849 = vmatmul.mubr.bf16.gmra.mrb[0].mxu0 %v5603
    %v5850 = vpop.f32.mrb[0].mxu0
    %v5851 = vadd.f32 0.0, %v5850
    %v5852 = vpop.f32.mrb[0].mxu0
    %v5853 = vadd.f32 0.0, %v5852
    %v5854 = vpop.f32.mrb[0].mxu0
    %v5855 = vadd.f32 0.0, %v5854
    %v5856 = vpop.f32.mrb[0].mxu0
    %v5857 = vadd.f32 0.0, %v5856
    %5858 = vmatprep.mubr.bf16.mxu0 0
    %5859 = vmatmul.mubr.bf16.gmra.mrb[0].mxu0 %v5604
    %v5860 = vpop.f32.mrb[0].mxu0
    %v5861 = vadd.f32 0.0, %v5860
    %v5862 = vpop.f32.mrb[0].mxu0
    %v5863 = vadd.f32 0.0, %v5862
    %v5864 = vpop.f32.mrb[0].mxu0
    %v5865 = vadd.f32 0.0, %v5864
    %v5866 = vpop.f32.mrb[0].mxu0
    %v5867 = vadd.f32 0.0, %v5866
    %5868 = vmatprep.mubr.bf16.mxu0 0
    %5869 = vmatmul.mubr.bf16.gmra.mrb[0].mxu0 %v5605
    %v5870 = vpop.f32.mrb[0].mxu0
    %v5871 = vadd.f32 0.0, %v5870
    %v5872 = vpop.f32.mrb[0].mxu0
    %v5873 = vadd.f32 0.0, %v5872
    %v5874 = vpop.f32.mrb[0].mxu0
    %v5875 = vadd.f32 0.0, %v5874
    %v5876 = vpop.f32.mrb[0].mxu0
    %v5877 = vadd.f32 0.0, %v5876
    %5878 = vmatprep.mubr.bf16.mxu0 0
    %5879 = vmatmul.mubr.bf16.gmra.mrb[0].mxu0 %v5606
    %v5880 = vpop.f32.mrb[0].mxu0
    %v5881 = vadd.f32 0.0, %v5880
    %v5882 = vpop.f32.mrb[0].mxu0
    %v5883 = vadd.f32 0.0, %v5882
    %v5884 = vpop.f32.mrb[0].mxu0
    %v5885 = vadd.f32 0.0, %v5884
    %v5886 = vpop.f32.mrb[0].mxu0
    %v5887 = vadd.f32 0.0, %v5886
    %5888 = vmatprep.mubr.bf16.mxu0 0
    %5889 = vmatmul.mubr.bf16.gmra.mrb[0].mxu0 %v5607
    %v5890 = vpop.f32.mrb[0].mxu0
    %v5891 = vadd.f32 0.0, %v5890
    %v5892 = vpop.f32.mrb[0].mxu0
    %v5893 = vadd.f32 0.0, %v5892
    %v5894 = vpop.f32.mrb[0].mxu0
    %v5895 = vadd.f32 0.0, %v5894
    %v5896 = vpop.f32.mrb[0].mxu0
    %v5897 = vadd.f32 0.0, %v5896
    %5898 = vmatprep.mubr.bf16.mxu0 0
    %5899 = vmatmul.mubr.bf16.gmra.mrb[0].mxu0 %v5608
    %v5900 = vpop.f32.mrb[0].mxu0
    %v5901 = vadd.f32 0.0, %v5900
    %v5902 = vpop.f32.mrb[0].mxu0
    %v5903 = vadd.f32 0.0, %v5902
    %v5904 = vpop.f32.mrb[0].mxu0
    %v5905 = vadd.f32 0.0, %v5904
    %v5906 = vpop.f32.mrb[0].mxu0
    %v5907 = vadd.f32 0.0, %v5906
    %5908 = vmatprep.mubr.bf16.mxu0 0
    %5909 = vmatmul.mubr.bf16.gmra.mrb[0].mxu0 %v5609
    %v5910 = vpop.f32.mrb[0].mxu0
    %v5911 = vadd.f32 0.0, %v5910
    %v5912 = vpop.f32.mrb[0].mxu0
    %v5913 = vadd.f32 0.0, %v5912
    %v5914 = vpop.f32.mrb[0].mxu0
    %v5915 = vadd.f32 0.0, %v5914
    %v5916 = vpop.f32.mrb[0].mxu0
    %v5917 = vadd.f32 0.0, %v5916
    %5918 = vmatprep.mubr.bf16.mxu0 0
    %5919 = vmatmul.mubr.bf16.gmra.mrb[0].mxu0 %v5610
    %v5920 = vpop.f32.mrb[0].mxu0
    %v5921 = vadd.f32 0.0, %v5920
    %v5922 = vpop.f32.mrb[0].mxu0
    %v5923 = vadd.f32 0.0, %v5922
    %v5924 = vpop.f32.mrb[0].mxu0
    %v5925 = vadd.f32 0.0, %v5924
    %v5926 = vpop.f32.mrb[0].mxu0
    %v5927 = vadd.f32 0.0, %v5926
    %5928 = vmatprep.mubr.bf16.mxu0 0
    %5929 = vmatmul.mubr.bf16.gmra.mrb[0].mxu0 %v5611
    %v5930 = vpop.f32.mrb[0].mxu0
    %v5931 = vadd.f32 0.0, %v5930
    %v5932 = vpop.f32.mrb[0].mxu0
    %v5933 = vadd.f32 0.0, %v5932
    %v5934 = vpop.f32.mrb[0].mxu0
    %v5935 = vadd.f32 0.0, %v5934
    %v5936 = vpop.f32.mrb[0].mxu0
    %v5937 = vadd.f32 0.0, %v5936
    %5938 = vmatprep.mubr.bf16.mxu0 0
    %5939 = vmatmul.mubr.bf16.gmra.mrb[0].mxu0 %v5612
    %v5940 = vpop.f32.mrb[0].mxu0
    %v5941 = vadd.f32 0.0, %v5940
    %v5942 = vpop.f32.mrb[0].mxu0
    %v5943 = vadd.f32 0.0, %v5942
    %v5944 = vpop.f32.mrb[0].mxu0
    %v5945 = vadd.f32 0.0, %v5944
    %v5946 = vpop.f32.mrb[0].mxu0
    %v5947 = vadd.f32 0.0, %v5946
    %5948 = vmatprep.mubr.bf16.mxu0 0
    %5949 = vmatmul.mubr.bf16.gmra.mrb[0].mxu0 %v5613
    %v5950 = vpop.f32.mrb[0].mxu0
    %v5951 = vadd.f32 0.0, %v5950
    %v5952 = vpop.f32.mrb[0].mxu0
    %v5953 = vadd.f32 0.0, %v5952
    %v5954 = vpop.f32.mrb[0].mxu0
    %v5955 = vadd.f32 0.0, %v5954
    %v5956 = vpop.f32.mrb[0].mxu0
    %v5957 = vadd.f32 0.0, %v5956
    %5958 = vmatprep.mubr.bf16.mxu0 0
    %5959 = vmatmul.mubr.bf16.gmra.mrb[0].mxu0 %v5614
    %v5960 = vpop.f32.mrb[0].mxu0
    %v5961 = vadd.f32 0.0, %v5960
    %v5962 = vpop.f32.mrb[0].mxu0
    %v5963 = vadd.f32 0.0, %v5962
    %v5964 = vpop.f32.mrb[0].mxu0
    %v5965 = vadd.f32 0.0, %v5964
    %v5966 = vpop.f32.mrb[0].mxu0
    %v5967 = vadd.f32 0.0, %v5966
    %5968 = vdwg.mxu0
    %5969 = vmatprep.subr.bf16.mxu0 0
    %5970 = vmatpush1.bf16.msra.mxu0 %v5730
    %5971 = vmatprep.subr.bf16.mxu0 0
    %5972 = vmatpush1.bf16.msra.mxu0 %v5733
    %5973 = vmatprep.subr.bf16.mxu0 0
    %5974 = vmatpush1.bf16.msra.mxu0 %v5736
    %5975 = vmatprep.subr.bf16.mxu0 0
    %5976 = vmatpush1.bf16.msra.mxu0 %v5739
    %5977 = vmatprep.subr.bf16.mxu0 0
    %5978 = vmatpush1.bf16.msra.mxu0 %v5742
    %5979 = vmatprep.subr.bf16.mxu0 0
    %5980 = vmatpush1.bf16.msra.mxu0 %v5745
    %5981 = vmatprep.subr.bf16.mxu0 0
    %5982 = vmatpush1.bf16.msra.mxu0 %v5748
    %5983 = vmatprep.subr.bf16.mxu0 0
    %5984 = vmatpush1.bf16.msra.mxu0 %v5751
    %5985 = vmatprep.subr.bf16.mxu0 0
    %5986 = vmatpush1.bf16.msra.mxu0 0
    %5987 = vmatprep.subr.bf16.mxu0 0
    %5988 = vmatpush1.bf16.msra.mxu0 0
    %5989 = vmatprep.subr.bf16.mxu0 0
    %5990 = vmatpush1.bf16.msra.mxu0 0
    %5991 = vmatprep.subr.bf16.mxu0 0
    %5992 = vmatpush1.bf16.msra.mxu0 0
    %5993 = vmatprep.subr.bf16.mxu0 0
    %5994 = vmatpush1.bf16.msra.mxu0 0
    %5995 = vmatprep.subr.bf16.mxu0 0
    %5996 = vmatpush1.bf16.msra.mxu0 0
    %5997 = vmatprep.subr.bf16.mxu0 0
    %5998 = vmatpush1.bf16.msra.mxu0 0
    %5999 = vmatprep.subr.bf16.mxu0 0
    %6000 = vmatpush1.bf16.msra.mxu0 0
    %6001 = vmatprep.mubr.bf16.mxu0 0
    %6002 = vmatmul.mubr.bf16.gmra.mrb[0].mxu0 %v5599
    %v6003 = vpop.f32.mrb[0].mxu0
    %v6004 = vadd.f32 0.0, %v6003
    %v6005 = vpop.f32.mrb[0].mxu0
    %v6006 = vpop.f32.mrb[0].mxu0
    %v6007 = vadd.f32 0.0, %v6006
    %v6008 = vpop.f32.mrb[0].mxu0
    %6009 = vmatprep.mubr.bf16.mxu0 0
    %6010 = vmatmul.mubr.bf16.gmra.mrb[0].mxu0 %v5600
    %v6011 = vpop.f32.mrb[0].mxu0
    %v6012 = vadd.f32 0.0, %v6011
    %v6013 = vpop.f32.mrb[0].mxu0
    %v6014 = vpop.f32.mrb[0].mxu0
    %v6015 = vadd.f32 0.0, %v6014
    %v6016 = vpop.f32.mrb[0].mxu0
    %6017 = vmatprep.mubr.bf16.mxu0 0
    %6018 = vmatmul.mubr.bf16.gmra.mrb[0].mxu0 %v5601
    %v6019 = vpop.f32.mrb[0].mxu0
    %v6020 = vadd.f32 0.0, %v6019
    %v6021 = vpop.f32.mrb[0].mxu0
    %v6022 = vpop.f32.mrb[0].mxu0
    %v6023 = vadd.f32 0.0, %v6022
    %v6024 = vpop.f32.mrb[0].mxu0
    %6025 = vmatprep.mubr.bf16.mxu0 0
    %6026 = vmatmul.mubr.bf16.gmra.mrb[0].mxu0 %v5602
    %v6027 = vpop.f32.mrb[0].mxu0
    %v6028 = vadd.f32 0.0, %v6027
    %v6029 = vpop.f32.mrb[0].mxu0
    %v6030 = vpop.f32.mrb[0].mxu0
    %v6031 = vadd.f32 0.0, %v6030
    %v6032 = vpop.f32.mrb[0].mxu0
    %6033 = vmatprep.mubr.bf16.mxu0 0
    %6034 = vmatmul.mubr.bf16.gmra.mrb[0].mxu0 %v5603
    %v6035 = vpop.f32.mrb[0].mxu0
    %v6036 = vadd.f32 0.0, %v6035
    %v6037 = vpop.f32.mrb[0].mxu0
    %v6038 = vpop.f32.mrb[0].mxu0
    %v6039 = vadd.f32 0.0, %v6038
    %v6040 = vpop.f32.mrb[0].mxu0
    %6041 = vmatprep.mubr.bf16.mxu0 0
    %6042 = vmatmul.mubr.bf16.gmra.mrb[0].mxu0 %v5604
    %v6043 = vpop.f32.mrb[0].mxu0
    %v6044 = vadd.f32 0.0, %v6043
    %v6045 = vpop.f32.mrb[0].mxu0
    %v6046 = vpop.f32.mrb[0].mxu0
    %v6047 = vadd.f32 0.0, %v6046
    %v6048 = vpop.f32.mrb[0].mxu0
    %6049 = vmatprep.mubr.bf16.mxu0 0
    %6050 = vmatmul.mubr.bf16.gmra.mrb[0].mxu0 %v5605
    %v6051 = vpop.f32.mrb[0].mxu0
    %v6052 = vadd.f32 0.0, %v6051
    %v6053 = vpop.f32.mrb[0].mxu0
    %v6054 = vpop.f32.mrb[0].mxu0
    %v6055 = vadd.f32 0.0, %v6054
    %v6056 = vpop.f32.mrb[0].mxu0
    %6057 = vmatprep.mubr.bf16.mxu0 0
    %6058 = vmatmul.mubr.bf16.gmra.mrb[0].mxu0 %v5606
    %v6059 = vpop.f32.mrb[0].mxu0
    %v6060 = vadd.f32 0.0, %v6059
    %v6061 = vpop.f32.mrb[0].mxu0
    %v6062 = vpop.f32.mrb[0].mxu0
    %v6063 = vadd.f32 0.0, %v6062
    %v6064 = vpop.f32.mrb[0].mxu0
    %6065 = vmatprep.mubr.bf16.mxu0 0
    %6066 = vmatmul.mubr.bf16.gmra.mrb[0].mxu0 %v5607
    %v6067 = vpop.f32.mrb[0].mxu0
    %v6068 = vadd.f32 0.0, %v6067
    %v6069 = vpop.f32.mrb[0].mxu0
    %v6070 = vpop.f32.mrb[0].mxu0
    %v6071 = vadd.f32 0.0, %v6070
    %v6072 = vpop.f32.mrb[0].mxu0
    %6073 = vmatprep.mubr.bf16.mxu0 0
    %6074 = vmatmul.mubr.bf16.gmra.mrb[0].mxu0 %v5608
    %v6075 = vpop.f32.mrb[0].mxu0
    %v6076 = vadd.f32 0.0, %v6075
    %v6077 = vpop.f32.mrb[0].mxu0
    %v6078 = vpop.f32.mrb[0].mxu0
    %v6079 = vadd.f32 0.0, %v6078
    %v6080 = vpop.f32.mrb[0].mxu0
    %6081 = vmatprep.mubr.bf16.mxu0 0
    %6082 = vmatmul.mubr.bf16.gmra.mrb[0].mxu0 %v5609
    %v6083 = vpop.f32.mrb[0].mxu0
    %v6084 = vadd.f32 0.0, %v6083
    %v6085 = vpop.f32.mrb[0].mxu0
    %v6086 = vpop.f32.mrb[0].mxu0
    %v6087 = vadd.f32 0.0, %v6086
    %v6088 = vpop.f32.mrb[0].mxu0
    %6089 = vmatprep.mubr.bf16.mxu0 0
    %6090 = vmatmul.mubr.bf16.gmra.mrb[0].mxu0 %v5610
    %v6091 = vpop.f32.mrb[0].mxu0
    %v6092 = vadd.f32 0.0, %v6091
    %v6093 = vpop.f32.mrb[0].mxu0
    %v6094 = vpop.f32.mrb[0].mxu0
    %v6095 = vadd.f32 0.0, %v6094
    %v6096 = vpop.f32.mrb[0].mxu0
    %6097 = vmatprep.mubr.bf16.mxu0 0
    %6098 = vmatmul.mubr.bf16.gmra.mrb[0].mxu0 %v5611
    %v6099 = vpop.f32.mrb[0].mxu0
    %v6100 = vadd.f32 0.0, %v6099
    %v6101 = vpop.f32.mrb[0].mxu0
    %v6102 = vpop.f32.mrb[0].mxu0
    %v6103 = vadd.f32 0.0, %v6102
    %v6104 = vpop.f32.mrb[0].mxu0
    %6105 = vmatprep.mubr.bf16.mxu0 0
    %6106 = vmatmul.mubr.bf16.gmra.mrb[0].mxu0 %v5612
    %v6107 = vpop.f32.mrb[0].mxu0
    %v6108 = vadd.f32 0.0, %v6107
    %v6109 = vpop.f32.mrb[0].mxu0
    %v6110 = vpop.f32.mrb[0].mxu0
    %v6111 = vadd.f32 0.0, %v6110
    %v6112 = vpop.f32.mrb[0].mxu0
    %6113 = vmatprep.mubr.bf16.mxu0 0
    %6114 = vmatmul.mubr.bf16.gmra.mrb[0].mxu0 %v5613
    %v6115 = vpop.f32.mrb[0].mxu0
    %v6116 = vadd.f32 0.0, %v6115
    %v6117 = vpop.f32.mrb[0].mxu0
    %v6118 = vpop.f32.mrb[0].mxu0
    %v6119 = vadd.f32 0.0, %v6118
    %v6120 = vpop.f32.mrb[0].mxu0
    %6121 = vmatprep.mubr.bf16.mxu0 0
    %6122 = vmatmul.mubr.bf16.gmra.mrb[0].mxu0 %v5614
    %v6123 = vpop.f32.mrb[0].mxu0
    %v6124 = vadd.f32 0.0, %v6123
    %v6125 = vpop.f32.mrb[0].mxu0
    %v6126 = vpop.f32.mrb[0].mxu0
    %v6127 = vadd.f32 0.0, %v6126
    %v6128 = vpop.f32.mrb[0].mxu0
    %6129 = vdwg.mxu0
    %v6130 = vpack.c.bf16 %v5815, %v5811
    %v6131 = vpack.c.bf16 %v5817, %v5813
    %v6132 = vpack.c.bf16 %v6007, %v6004
    %v6133 = vpack.c.bf16 %v5825, %v5821
    %v6134 = vpack.c.bf16 %v5827, %v5823
    %v6135 = vpack.c.bf16 %v6015, %v6012
    %v6136 = vpack.c.bf16 %v5835, %v5831
    %v6137 = vpack.c.bf16 %v5837, %v5833
    %v6138 = vpack.c.bf16 %v6023, %v6020
    %v6139 = vpack.c.bf16 %v5845, %v5841
    %v6140 = vpack.c.bf16 %v5847, %v5843
    %v6141 = vpack.c.bf16 %v6031, %v6028
    %v6142 = vpack.c.bf16 %v5855, %v5851
    %v6143 = vpack.c.bf16 %v5857, %v5853
    %v6144 = vpack.c.bf16 %v6039, %v6036
    %v6145 = vpack.c.bf16 %v5865, %v5861
    %v6146 = vpack.c.bf16 %v5867, %v5863
    %v6147 = vpack.c.bf16 %v6047, %v6044
    %v6148 = vpack.c.bf16 %v5875, %v5871
    %v6149 = vpack.c.bf16 %v5877, %v5873
    %v6150 = vpack.c.bf16 %v6055, %v6052
    %v6151 = vpack.c.bf16 %v5885, %v5881
    %v6152 = vpack.c.bf16 %v5887, %v5883
    %v6153 = vpack.c.bf16 %v6063, %v6060
    %v6154 = vpack.c.bf16 %v5895, %v5891
    %v6155 = vpack.c.bf16 %v5897, %v5893
    %v6156 = vpack.c.bf16 %v6071, %v6068
    %v6157 = vpack.c.bf16 %v5905, %v5901
    %v6158 = vpack.c.bf16 %v5907, %v5903
    %v6159 = vpack.c.bf16 %v6079, %v6076
    %v6160 = vpack.c.bf16 %v5915, %v5911
    %v6161 = vpack.c.bf16 %v5917, %v5913
    %v6162 = vpack.c.bf16 %v6087, %v6084
    %v6163 = vpack.c.bf16 %v5925, %v5921
    %v6164 = vpack.c.bf16 %v5927, %v5923
    %v6165 = vpack.c.bf16 %v6095, %v6092
    %v6166 = vpack.c.bf16 %v5935, %v5931
    %v6167 = vpack.c.bf16 %v5937, %v5933
    %v6168 = vpack.c.bf16 %v6103, %v6100
    %v6169 = vpack.c.bf16 %v5945, %v5941
    %v6170 = vpack.c.bf16 %v5947, %v5943
    %v6171 = vpack.c.bf16 %v6111, %v6108
    %v6172 = vpack.c.bf16 %v5955, %v5951
    %v6173 = vpack.c.bf16 %v5957, %v5953
    %v6174 = vpack.c.bf16 %v6119, %v6116
    %v6175 = vpack.c.bf16 %v5965, %v5961
    %v6176 = vpack.c.bf16 %v5967, %v5963
    %v6177 = vpack.c.bf16 %v6127, %v6124
    %v6179 = vsel %vm1948, %v6130, 0
    %v6182 = vsel %vm1948, %v6133, 0
    %v6185 = vsel %vm1948, %v6136, 0
    %v6188 = vsel %vm1948, %v6139, 0
    %v6191 = vsel %vm1948, %v6142, 0
    %v6194 = vsel %vm1948, %v6145, 0
    %v6197 = vsel %vm1948, %v6148, 0
    %v6200 = vsel %vm1948, %v6151, 0
    %v6203 = vsel %vm1948, %v6131, 0
    %v6206 = vsel %vm1948, %v6134, 0
    %v6209 = vsel %vm1948, %v6137, 0
    %v6212 = vsel %vm1948, %v6140, 0
    %v6215 = vsel %vm1948, %v6143, 0
    %v6218 = vsel %vm1948, %v6146, 0
    %v6221 = vsel %vm1948, %v6149, 0
    %v6224 = vsel %vm1948, %v6152, 0
    %6226 = vmatprep.subr.bf16.mxu0 0
    %6227 = vmatpush1.bf16.xpose.msra.mxu0 %v6203
    %6228 = vmatprep.subr.bf16.mxu0 0
    %6229 = vmatpush1.bf16.xpose.msra.mxu0 %v6206
    %6230 = vmatprep.subr.bf16.mxu0 0
    %6231 = vmatpush1.bf16.xpose.msra.mxu0 %v6209
    %6232 = vmatprep.subr.bf16.mxu0 0
    %6233 = vmatpush1.bf16.xpose.msra.mxu0 %v6212
    %6234 = vmatprep.subr.bf16.mxu0 0
    %6235 = vmatpush1.bf16.xpose.msra.mxu0 %v6215
    %6236 = vmatprep.subr.bf16.mxu0 0
    %6237 = vmatpush1.bf16.xpose.msra.mxu0 %v6218
    %6238 = vmatprep.subr.bf16.mxu0 0
    %6239 = vmatpush1.bf16.xpose.msra.mxu0 %v6221
    %6240 = vmatprep.subr.bf16.mxu0 0
    %6241 = vmatpush1.bf16.xpose.msra.mxu0 %v6224
    %6242 = vmatprep.subr.bf16.mxu0 0
    %6243 = vmatpush1.bf16.xpose.msra.mxu0 0
    %6244 = vmatprep.subr.bf16.mxu0 0
    %6245 = vmatpush1.bf16.xpose.msra.mxu0 0
    %6246 = vmatprep.subr.bf16.mxu0 0
    %6247 = vmatpush1.bf16.xpose.msra.mxu0 0
    %6248 = vmatprep.subr.bf16.mxu0 0
    %6249 = vmatpush1.bf16.xpose.msra.mxu0 0
    %6250 = vmatprep.subr.bf16.mxu0 0
    %6251 = vmatpush1.bf16.xpose.msra.mxu0 0
    %6252 = vmatprep.subr.bf16.mxu0 0
    %6253 = vmatpush1.bf16.xpose.msra.mxu0 0
    %6254 = vmatprep.subr.bf16.mxu0 0
    %6255 = vmatpush1.bf16.xpose.msra.mxu0 0
    %6256 = vmatprep.subr.bf16.mxu0 0
    %6257 = vmatpush1.bf16.xpose.msra.mxu0 0
    %6258 = vmatprep.mubr.bf16.mxu0 0
    %6259 = vmatmul.mubr.bf16.gmra.mrb[0].mxu0 %v6179
    %v6260 = vpop.f32.mrb[0].mxu0
    %v6261 = vadd.f32 0.0, %v6260
    %v6262 = vpop.f32.mrb[0].mxu0
    %v6263 = vpop.f32.mrb[0].mxu0
    %v6264 = vadd.f32 0.0, %v6263
    %v6265 = vpop.f32.mrb[0].mxu0
    %6266 = vmatprep.mubr.bf16.mxu0 0
    %6267 = vmatmul.mubr.bf16.gmra.mrb[0].mxu0 %v6182
    %v6268 = vpop.f32.mrb[0].mxu0
    %v6269 = vadd.f32 0.0, %v6268
    %v6270 = vpop.f32.mrb[0].mxu0
    %v6271 = vpop.f32.mrb[0].mxu0
    %v6272 = vadd.f32 0.0, %v6271
    %v6273 = vpop.f32.mrb[0].mxu0
    %6274 = vmatprep.mubr.bf16.mxu0 0
    %6275 = vmatmul.mubr.bf16.gmra.mrb[0].mxu0 %v6185
    %v6276 = vpop.f32.mrb[0].mxu0
    %v6277 = vadd.f32 0.0, %v6276
    %v6278 = vpop.f32.mrb[0].mxu0
    %v6279 = vpop.f32.mrb[0].mxu0
    %v6280 = vadd.f32 0.0, %v6279
    %v6281 = vpop.f32.mrb[0].mxu0
    %6282 = vmatprep.mubr.bf16.mxu0 0
    %6283 = vmatmul.mubr.bf16.gmra.mrb[0].mxu0 %v6188
    %v6284 = vpop.f32.mrb[0].mxu0
    %v6285 = vadd.f32 0.0, %v6284
    %v6286 = vpop.f32.mrb[0].mxu0
    %v6287 = vpop.f32.mrb[0].mxu0
    %v6288 = vadd.f32 0.0, %v6287
    %v6289 = vpop.f32.mrb[0].mxu0
    %6290 = vmatprep.mubr.bf16.mxu0 0
    %6291 = vmatmul.mubr.bf16.gmra.mrb[0].mxu0 %v6191
    %v6292 = vpop.f32.mrb[0].mxu0
    %v6293 = vadd.f32 0.0, %v6292
    %v6294 = vpop.f32.mrb[0].mxu0
    %v6295 = vpop.f32.mrb[0].mxu0
    %v6296 = vadd.f32 0.0, %v6295
    %v6297 = vpop.f32.mrb[0].mxu0
    %6298 = vmatprep.mubr.bf16.mxu0 0
    %6299 = vmatmul.mubr.bf16.gmra.mrb[0].mxu0 %v6194
    %v6300 = vpop.f32.mrb[0].mxu0
    %v6301 = vadd.f32 0.0, %v6300
    %v6302 = vpop.f32.mrb[0].mxu0
    %v6303 = vpop.f32.mrb[0].mxu0
    %v6304 = vadd.f32 0.0, %v6303
    %v6305 = vpop.f32.mrb[0].mxu0
    %6306 = vmatprep.mubr.bf16.mxu0 0
    %6307 = vmatmul.mubr.bf16.gmra.mrb[0].mxu0 %v6197
    %v6308 = vpop.f32.mrb[0].mxu0
    %v6309 = vadd.f32 0.0, %v6308
    %v6310 = vpop.f32.mrb[0].mxu0
    %v6311 = vpop.f32.mrb[0].mxu0
    %v6312 = vadd.f32 0.0, %v6311
    %v6313 = vpop.f32.mrb[0].mxu0
    %6314 = vmatprep.mubr.bf16.mxu0 0
    %6315 = vmatmul.mubr.bf16.gmra.mrb[0].mxu0 %v6200
    %v6316 = vpop.f32.mrb[0].mxu0
    %v6317 = vadd.f32 0.0, %v6316
    %v6318 = vpop.f32.mrb[0].mxu0
    %v6319 = vpop.f32.mrb[0].mxu0
    %v6320 = vadd.f32 0.0, %v6319
    %v6321 = vpop.f32.mrb[0].mxu0
    %6322 = vdwg.mxu0
    %6323 = vmax.xlane.f32.xlu0 %v6261
    %v6324 = vpop.xlane.xlu0 %6323
    %6325 = vmax.xlane.f32.xlu0 %v6264
    %v6326 = vpop.xlane.xlu0 %6325
    %6327 = vmax.xlane.f32.xlu0 %v6269
    %v6328 = vpop.xlane.xlu0 %6327
    %6329 = vmax.xlane.f32.xlu0 %v6272
    %v6330 = vpop.xlane.xlu0 %6329
    %6331 = vmax.xlane.f32.xlu0 %v6277
    %v6332 = vpop.xlane.xlu0 %6331
    %6333 = vmax.xlane.f32.xlu0 %v6280
    %v6334 = vpop.xlane.xlu0 %6333
    %6335 = vmax.xlane.f32.xlu0 %v6285
    %v6336 = vpop.xlane.xlu0 %6335
    %6337 = vmax.xlane.f32.xlu0 %v6288
    %v6338 = vpop.xlane.xlu0 %6337
    %6339 = vmax.xlane.f32.xlu0 %v6293
    %v6340 = vpop.xlane.xlu0 %6339
    %6341 = vmax.xlane.f32.xlu0 %v6296
    %v6342 = vpop.xlane.xlu0 %6341
    %6343 = vmax.xlane.f32.xlu0 %v6301
    %v6344 = vpop.xlane.xlu0 %6343
    %6345 = vmax.xlane.f32.xlu0 %v6304
    %v6346 = vpop.xlane.xlu0 %6345
    %6347 = vmax.xlane.f32.xlu0 %v6309
    %v6348 = vpop.xlane.xlu0 %6347
    %6349 = vmax.xlane.f32.xlu0 %v6312
    %v6350 = vpop.xlane.xlu0 %6349
    %6351 = vmax.xlane.f32.xlu0 %v6317
    %v6352 = vpop.xlane.xlu0 %6351
    %6353 = vmax.xlane.f32.xlu0 %v6320
    %v6354 = vpop.xlane.xlu0 %6353
    %v6355 = vsub.f32 %v6261, %v6324
    %v6356 = vsub.f32 %v6264, %v6326
    %v6357 = vsub.f32 %v6269, %v6328
    %v6358 = vsub.f32 %v6272, %v6330
    %v6359 = vsub.f32 %v6277, %v6332
    %v6360 = vsub.f32 %v6280, %v6334
    %v6361 = vsub.f32 %v6285, %v6336
    %v6362 = vsub.f32 %v6288, %v6338
    %v6363 = vsub.f32 %v6293, %v6340
    %v6364 = vsub.f32 %v6296, %v6342
    %v6365 = vsub.f32 %v6301, %v6344
    %v6366 = vsub.f32 %v6304, %v6346
    %v6367 = vsub.f32 %v6309, %v6348
    %v6368 = vsub.f32 %v6312, %v6350
    %v6369 = vsub.f32 %v6317, %v6352
    %v6370 = vsub.f32 %v6320, %v6354
    %v6371 = vmul.f32 %v6355, 1.442695
    %v6372 = vpow.pop %v6371
    %v6373 = vmul.f32 %v6356, 1.442695
    %v6374 = vpow.pop %v6373
    %v6375 = vmul.f32 %v6357, 1.442695
    %v6376 = vpow.pop %v6375
    %v6377 = vmul.f32 %v6358, 1.442695
    %v6378 = vpow.pop %v6377
    %v6379 = vmul.f32 %v6359, 1.442695
    %v6380 = vpow.pop %v6379
    %v6381 = vmul.f32 %v6360, 1.442695
    %v6382 = vpow.pop %v6381
    %v6383 = vmul.f32 %v6361, 1.442695
    %v6384 = vpow.pop %v6383
    %v6385 = vmul.f32 %v6362, 1.442695
    %v6386 = vpow.pop %v6385
    %v6387 = vmul.f32 %v6363, 1.442695
    %v6388 = vpow.pop %v6387
    %v6389 = vmul.f32 %v6364, 1.442695
    %v6390 = vpow.pop %v6389
    %v6391 = vmul.f32 %v6365, 1.442695
    %v6392 = vpow.pop %v6391
    %v6393 = vmul.f32 %v6366, 1.442695
    %v6394 = vpow.pop %v6393
    %v6395 = vmul.f32 %v6367, 1.442695
    %v6396 = vpow.pop %v6395
    %v6397 = vmul.f32 %v6368, 1.442695
    %v6398 = vpow.pop %v6397
    %v6399 = vmul.f32 %v6369, 1.442695
    %v6400 = vpow.pop %v6399
    %v6401 = vmul.f32 %v6370, 1.442695
    %v6402 = vpow.pop %v6401
    %6403 = vadd.xlane.f32.xlu0 %v6372
    %v6404 = vpop.xlane.xlu0 %6403
    %6405 = vadd.xlane.f32.xlu0 %v6374
    %v6406 = vpop.xlane.xlu0 %6405
    %6407 = vadd.xlane.f32.xlu0 %v6376
    %v6408 = vpop.xlane.xlu0 %6407
    %6409 = vadd.xlane.f32.xlu0 %v6378
    %v6410 = vpop.xlane.xlu0 %6409
    %6411 = vadd.xlane.f32.xlu0 %v6380
    %v6412 = vpop.xlane.xlu0 %6411
    %6413 = vadd.xlane.f32.xlu0 %v6382
    %v6414 = vpop.xlane.xlu0 %6413
    %6415 = vadd.xlane.f32.xlu0 %v6384
    %v6416 = vpop.xlane.xlu0 %6415
    %6417 = vadd.xlane.f32.xlu0 %v6386
    %v6418 = vpop.xlane.xlu0 %6417
    %6419 = vadd.xlane.f32.xlu0 %v6388
    %v6420 = vpop.xlane.xlu0 %6419
    %6421 = vadd.xlane.f32.xlu0 %v6390
    %v6422 = vpop.xlane.xlu0 %6421
    %6423 = vadd.xlane.f32.xlu0 %v6392
    %v6424 = vpop.xlane.xlu0 %6423
    %6425 = vadd.xlane.f32.xlu0 %v6394
    %v6426 = vpop.xlane.xlu0 %6425
    %6427 = vadd.xlane.f32.xlu0 %v6396
    %v6428 = vpop.xlane.xlu0 %6427
    %6429 = vadd.xlane.f32.xlu0 %v6398
    %v6430 = vpop.xlane.xlu0 %6429
    %6431 = vadd.xlane.f32.xlu0 %v6400
    %v6432 = vpop.xlane.xlu0 %6431
    %6433 = vadd.xlane.f32.xlu0 %v6402
    %v6434 = vpop.xlane.xlu0 %6433
    %v6435 = vpack.c.bf16 %v6374, %v6372
    %v6436 = vpack.c.bf16 %v6378, %v6376
    %v6437 = vpack.c.bf16 %v6382, %v6380
    %v6438 = vpack.c.bf16 %v6386, %v6384
    %v6439 = vpack.c.bf16 %v6390, %v6388
    %v6440 = vpack.c.bf16 %v6394, %v6392
    %v6441 = vpack.c.bf16 %v6398, %v6396
    %v6442 = vpack.c.bf16 %v6402, %v6400
    %6443 = vmatprep.subr.bf16.mxu0 0
    %6444 = vmatpush1.bf16.msra.mxu0 %v6132
    %6445 = vmatprep.subr.bf16.mxu0 0
    %6446 = vmatpush1.bf16.msra.mxu0 %v6135
    %6447 = vmatprep.subr.bf16.mxu0 0
    %6448 = vmatpush1.bf16.msra.mxu0 %v6138
    %6449 = vmatprep.subr.bf16.mxu0 0
    %6450 = vmatpush1.bf16.msra.mxu0 %v6141
    %6451 = vmatprep.subr.bf16.mxu0 0
    %6452 = vmatpush1.bf16.msra.mxu0 %v6144
    %6453 = vmatprep.subr.bf16.mxu0 0
    %6454 = vmatpush1.bf16.msra.mxu0 %v6147
    %6455 = vmatprep.subr.bf16.mxu0 0
    %6456 = vmatpush1.bf16.msra.mxu0 %v6150
    %6457 = vmatprep.subr.bf16.mxu0 0
    %6458 = vmatpush1.bf16.msra.mxu0 %v6153
    %6459 = vmatprep.subr.bf16.mxu0 0
    %6460 = vmatpush1.bf16.msra.mxu0 0
    %6461 = vmatprep.subr.bf16.mxu0 0
    %6462 = vmatpush1.bf16.msra.mxu0 0
    %6463 = vmatprep.subr.bf16.mxu0 0
    %6464 = vmatpush1.bf16.msra.mxu0 0
    %6465 = vmatprep.subr.bf16.mxu0 0
    %6466 = vmatpush1.bf16.msra.mxu0 0
    %6467 = vmatprep.subr.bf16.mxu0 0
    %6468 = vmatpush1.bf16.msra.mxu0 0
    %6469 = vmatprep.subr.bf16.mxu0 0
    %6470 = vmatpush1.bf16.msra.mxu0 0
    %6471 = vmatprep.subr.bf16.mxu0 0
    %6472 = vmatpush1.bf16.msra.mxu0 0
    %6473 = vmatprep.subr.bf16.mxu0 0
    %6474 = vmatpush1.bf16.msra.mxu0 0
    %6475 = vmatprep.mubr.bf16.mxu0 0
    %6476 = vmatmul.mubr.bf16.gmra.mrb[0].mxu0 %v6435
    %v6477 = vpop.f32.mrb[0].mxu0
    %v6478 = vadd.f32 0.0, %v6477
    %v6479 = vpop.f32.mrb[0].mxu0
    %v6480 = vpop.f32.mrb[0].mxu0
    %v6481 = vadd.f32 0.0, %v6480
    %v6482 = vpop.f32.mrb[0].mxu0
    %6483 = vmatprep.mubr.bf16.mxu0 0
    %6484 = vmatmul.mubr.bf16.gmra.mrb[0].mxu0 %v6436
    %v6485 = vpop.f32.mrb[0].mxu0
    %v6486 = vadd.f32 0.0, %v6485
    %v6487 = vpop.f32.mrb[0].mxu0
    %v6488 = vpop.f32.mrb[0].mxu0
    %v6489 = vadd.f32 0.0, %v6488
    %v6490 = vpop.f32.mrb[0].mxu0
    %6491 = vmatprep.mubr.bf16.mxu0 0
    %6492 = vmatmul.mubr.bf16.gmra.mrb[0].mxu0 %v6437
    %v6493 = vpop.f32.mrb[0].mxu0
    %v6494 = vadd.f32 0.0, %v6493
    %v6495 = vpop.f32.mrb[0].mxu0
    %v6496 = vpop.f32.mrb[0].mxu0
    %v6497 = vadd.f32 0.0, %v6496
    %v6498 = vpop.f32.mrb[0].mxu0
    %6499 = vmatprep.mubr.bf16.mxu0 0
    %6500 = vmatmul.mubr.bf16.gmra.mrb[0].mxu0 %v6438
    %v6501 = vpop.f32.mrb[0].mxu0
    %v6502 = vadd.f32 0.0, %v6501
    %v6503 = vpop.f32.mrb[0].mxu0
    %v6504 = vpop.f32.mrb[0].mxu0
    %v6505 = vadd.f32 0.0, %v6504
    %v6506 = vpop.f32.mrb[0].mxu0
    %6507 = vmatprep.mubr.bf16.mxu0 0
    %6508 = vmatmul.mubr.bf16.gmra.mrb[0].mxu0 %v6439
    %v6509 = vpop.f32.mrb[0].mxu0
    %v6510 = vadd.f32 0.0, %v6509
    %v6511 = vpop.f32.mrb[0].mxu0
    %v6512 = vpop.f32.mrb[0].mxu0
    %v6513 = vadd.f32 0.0, %v6512
    %v6514 = vpop.f32.mrb[0].mxu0
    %6515 = vmatprep.mubr.bf16.mxu0 0
    %6516 = vmatmul.mubr.bf16.gmra.mrb[0].mxu0 %v6440
    %v6517 = vpop.f32.mrb[0].mxu0
    %v6518 = vadd.f32 0.0, %v6517
    %v6519 = vpop.f32.mrb[0].mxu0
    %v6520 = vpop.f32.mrb[0].mxu0
    %v6521 = vadd.f32 0.0, %v6520
    %v6522 = vpop.f32.mrb[0].mxu0
    %6523 = vmatprep.mubr.bf16.mxu0 0
    %6524 = vmatmul.mubr.bf16.gmra.mrb[0].mxu0 %v6441
    %v6525 = vpop.f32.mrb[0].mxu0
    %v6526 = vadd.f32 0.0, %v6525
    %v6527 = vpop.f32.mrb[0].mxu0
    %v6528 = vpop.f32.mrb[0].mxu0
    %v6529 = vadd.f32 0.0, %v6528
    %v6530 = vpop.f32.mrb[0].mxu0
    %6531 = vmatprep.mubr.bf16.mxu0 0
    %6532 = vmatmul.mubr.bf16.gmra.mrb[0].mxu0 %v6442
    %v6533 = vpop.f32.mrb[0].mxu0
    %v6534 = vadd.f32 0.0, %v6533
    %v6535 = vpop.f32.mrb[0].mxu0
    %v6536 = vpop.f32.mrb[0].mxu0
    %v6537 = vadd.f32 0.0, %v6536
    %v6538 = vpop.f32.mrb[0].mxu0
    %6539 = vdwg.mxu0
    %v6540 = vrcp.pop %v6404
    %v6541 = vrcp.pop %v6406
    %v6542 = vrcp.pop %v6408
    %v6543 = vrcp.pop %v6410
    %v6544 = vrcp.pop %v6412
    %v6545 = vrcp.pop %v6414
    %v6546 = vrcp.pop %v6416
    %v6547 = vrcp.pop %v6418
    %v6548 = vrcp.pop %v6420
    %v6549 = vrcp.pop %v6422
    %v6550 = vrcp.pop %v6424
    %v6551 = vrcp.pop %v6426
    %v6552 = vrcp.pop %v6428
    %v6553 = vrcp.pop %v6430
    %v6554 = vrcp.pop %v6432
    %v6555 = vrcp.pop %v6434
    %v6556 = vmul.f32 %v6478, %v6540
    %v6557 = vmul.f32 %v6481, %v6541
    %v6558 = vmul.f32 %v6486, %v6542
    %v6559 = vmul.f32 %v6489, %v6543
    %v6560 = vmul.f32 %v6494, %v6544
    %v6561 = vmul.f32 %v6497, %v6545
    %v6562 = vmul.f32 %v6502, %v6546
    %v6563 = vmul.f32 %v6505, %v6547
    %v6564 = vmul.f32 %v6510, %v6548
    %v6565 = vmul.f32 %v6513, %v6549
    %v6566 = vmul.f32 %v6518, %v6550
    %v6567 = vmul.f32 %v6521, %v6551
    %v6568 = vmul.f32 %v6526, %v6552
    %v6569 = vmul.f32 %v6529, %v6553
    %v6570 = vmul.f32 %v6534, %v6554
    %v6571 = vmul.f32 %v6537, %v6555
    %v6572 = vpack.c.bf16 %v6557, %v6556
    %v6573 = vpack.c.bf16 %v6559, %v6558
    %v6574 = vpack.c.bf16 %v6561, %v6560
    %v6575 = vpack.c.bf16 %v6563, %v6562
    %v6576 = vpack.c.bf16 %v6565, %v6564
    %v6577 = vpack.c.bf16 %v6567, %v6566
    %v6578 = vpack.c.bf16 %v6569, %v6568
    %v6579 = vpack.c.bf16 %v6571, %v6570
    %6588 = vrot.lane.b32.xlu0 %v6130, 64
    %v6589 = vpop.permute.xlu0 %6588
    %6590 = vrot.lane.b32.xlu0 %v6133, 64
    %v6591 = vpop.permute.xlu0 %6590
    %6592 = vrot.lane.b32.xlu0 %v6136, 64
    %v6593 = vpop.permute.xlu0 %6592
    %6594 = vrot.lane.b32.xlu0 %v6139, 64
    %v6595 = vpop.permute.xlu0 %6594
    %6596 = vrot.lane.b32.xlu0 %v6142, 64
    %v6597 = vpop.permute.xlu0 %6596
    %6598 = vrot.lane.b32.xlu0 %v6145, 64
    %v6599 = vpop.permute.xlu0 %6598
    %6600 = vrot.lane.b32.xlu0 %v6148, 64
    %v6601 = vpop.permute.xlu0 %6600
    %6602 = vrot.lane.b32.xlu0 %v6151, 64
    %v6603 = vpop.permute.xlu0 %6602
    %6612 = vrot.lane.b32.xlu0 %v6131, 64
    %v6613 = vpop.permute.xlu0 %6612
    %6614 = vrot.lane.b32.xlu0 %v6134, 64
    %v6615 = vpop.permute.xlu0 %6614
    %6616 = vrot.lane.b32.xlu0 %v6137, 64
    %v6617 = vpop.permute.xlu0 %6616
    %6618 = vrot.lane.b32.xlu0 %v6140, 64
    %v6619 = vpop.permute.xlu0 %6618
    %6620 = vrot.lane.b32.xlu0 %v6143, 64
    %v6621 = vpop.permute.xlu0 %6620
    %6622 = vrot.lane.b32.xlu0 %v6146, 64
    %v6623 = vpop.permute.xlu0 %6622
    %6624 = vrot.lane.b32.xlu0 %v6149, 64
    %v6625 = vpop.permute.xlu0 %6624
    %6626 = vrot.lane.b32.xlu0 %v6152, 64
    %v6627 = vpop.permute.xlu0 %6626
    %v6629 = vsel %vm1948, %v6589, 0
    %v6632 = vsel %vm1948, %v6591, 0
    %v6635 = vsel %vm1948, %v6593, 0
    %v6638 = vsel %vm1948, %v6595, 0
    %v6641 = vsel %vm1948, %v6597, 0
    %v6644 = vsel %vm1948, %v6599, 0
    %v6647 = vsel %vm1948, %v6601, 0
    %v6650 = vsel %vm1948, %v6603, 0
    %v6653 = vsel %vm1948, %v6613, 0
    %v6656 = vsel %vm1948, %v6615, 0
    %v6659 = vsel %vm1948, %v6617, 0
    %v6662 = vsel %vm1948, %v6619, 0
    %v6665 = vsel %vm1948, %v6621, 0
    %v6668 = vsel %vm1948, %v6623, 0
    %v6671 = vsel %vm1948, %v6625, 0
    %v6674 = vsel %vm1948, %v6627, 0
    %6676 = vmatprep.subr.bf16.mxu0 0
    %6677 = vmatpush1.bf16.xpose.msra.mxu0 %v6653
    %6678 = vmatprep.subr.bf16.mxu0 0
    %6679 = vmatpush1.bf16.xpose.msra.mxu0 %v6656
    %6680 = vmatprep.subr.bf16.mxu0 0
    %6681 = vmatpush1.bf16.xpose.msra.mxu0 %v6659
    %6682 = vmatprep.subr.bf16.mxu0 0
    %6683 = vmatpush1.bf16.xpose.msra.mxu0 %v6662
    %6684 = vmatprep.subr.bf16.mxu0 0
    %6685 = vmatpush1.bf16.xpose.msra.mxu0 %v6665
    %6686 = vmatprep.subr.bf16.mxu0 0
    %6687 = vmatpush1.bf16.xpose.msra.mxu0 %v6668
    %6688 = vmatprep.subr.bf16.mxu0 0
    %6689 = vmatpush1.bf16.xpose.msra.mxu0 %v6671
    %6690 = vmatprep.subr.bf16.mxu0 0
    %6691 = vmatpush1.bf16.xpose.msra.mxu0 %v6674
    %6692 = vmatprep.subr.bf16.mxu0 0
    %6693 = vmatpush1.bf16.xpose.msra.mxu0 0
    %6694 = vmatprep.subr.bf16.mxu0 0
    %6695 = vmatpush1.bf16.xpose.msra.mxu0 0
    %6696 = vmatprep.subr.bf16.mxu0 0
    %6697 = vmatpush1.bf16.xpose.msra.mxu0 0
    %6698 = vmatprep.subr.bf16.mxu0 0
    %6699 = vmatpush1.bf16.xpose.msra.mxu0 0
    %6700 = vmatprep.subr.bf16.mxu0 0
    %6701 = vmatpush1.bf16.xpose.msra.mxu0 0
    %6702 = vmatprep.subr.bf16.mxu0 0
    %6703 = vmatpush1.bf16.xpose.msra.mxu0 0
    %6704 = vmatprep.subr.bf16.mxu0 0
    %6705 = vmatpush1.bf16.xpose.msra.mxu0 0
    %6706 = vmatprep.subr.bf16.mxu0 0
    %6707 = vmatpush1.bf16.xpose.msra.mxu0 0
    %6708 = vmatprep.mubr.bf16.mxu0 0
    %6709 = vmatmul.mubr.bf16.gmra.mrb[0].mxu0 %v6629
    %v6710 = vpop.f32.mrb[0].mxu0
    %v6711 = vadd.f32 0.0, %v6710
    %v6712 = vpop.f32.mrb[0].mxu0
    %v6713 = vpop.f32.mrb[0].mxu0
    %v6714 = vadd.f32 0.0, %v6713
    %v6715 = vpop.f32.mrb[0].mxu0
    %6716 = vmatprep.mubr.bf16.mxu0 0
    %6717 = vmatmul.mubr.bf16.gmra.mrb[0].mxu0 %v6632
    %v6718 = vpop.f32.mrb[0].mxu0
    %v6719 = vadd.f32 0.0, %v6718
    %v6720 = vpop.f32.mrb[0].mxu0
    %v6721 = vpop.f32.mrb[0].mxu0
    %v6722 = vadd.f32 0.0, %v6721
    %v6723 = vpop.f32.mrb[0].mxu0
    %6724 = vmatprep.mubr.bf16.mxu0 0
    %6725 = vmatmul.mubr.bf16.gmra.mrb[0].mxu0 %v6635
    %v6726 = vpop.f32.mrb[0].mxu0
    %v6727 = vadd.f32 0.0, %v6726
    %v6728 = vpop.f32.mrb[0].mxu0
    %v6729 = vpop.f32.mrb[0].mxu0
    %v6730 = vadd.f32 0.0, %v6729
    %v6731 = vpop.f32.mrb[0].mxu0
    %6732 = vmatprep.mubr.bf16.mxu0 0
    %6733 = vmatmul.mubr.bf16.gmra.mrb[0].mxu0 %v6638
    %v6734 = vpop.f32.mrb[0].mxu0
    %v6735 = vadd.f32 0.0, %v6734
    %v6736 = vpop.f32.mrb[0].mxu0
    %v6737 = vpop.f32.mrb[0].mxu0
    %v6738 = vadd.f32 0.0, %v6737
    %v6739 = vpop.f32.mrb[0].mxu0
    %6740 = vmatprep.mubr.bf16.mxu0 0
    %6741 = vmatmul.mubr.bf16.gmra.mrb[0].mxu0 %v6641
    %v6742 = vpop.f32.mrb[0].mxu0
    %v6743 = vadd.f32 0.0, %v6742
    %v6744 = vpop.f32.mrb[0].mxu0
    %v6745 = vpop.f32.mrb[0].mxu0
    %v6746 = vadd.f32 0.0, %v6745
    %v6747 = vpop.f32.mrb[0].mxu0
    %6748 = vmatprep.mubr.bf16.mxu0 0
    %6749 = vmatmul.mubr.bf16.gmra.mrb[0].mxu0 %v6644
    %v6750 = vpop.f32.mrb[0].mxu0
    %v6751 = vadd.f32 0.0, %v6750
    %v6752 = vpop.f32.mrb[0].mxu0
    %v6753 = vpop.f32.mrb[0].mxu0
    %v6754 = vadd.f32 0.0, %v6753
    %v6755 = vpop.f32.mrb[0].mxu0
    %6756 = vmatprep.mubr.bf16.mxu0 0
    %6757 = vmatmul.mubr.bf16.gmra.mrb[0].mxu0 %v6647
    %v6758 = vpop.f32.mrb[0].mxu0
    %v6759 = vadd.f32 0.0, %v6758
    %v6760 = vpop.f32.mrb[0].mxu0
    %v6761 = vpop.f32.mrb[0].mxu0
    %v6762 = vadd.f32 0.0, %v6761
    %v6763 = vpop.f32.mrb[0].mxu0
    %6764 = vmatprep.mubr.bf16.mxu0 0
    %6765 = vmatmul.mubr.bf16.gmra.mrb[0].mxu0 %v6650
    %v6766 = vpop.f32.mrb[0].mxu0
    %v6767 = vadd.f32 0.0, %v6766
    %v6768 = vpop.f32.mrb[0].mxu0
    %v6769 = vpop.f32.mrb[0].mxu0
    %v6770 = vadd.f32 0.0, %v6769
    %v6771 = vpop.f32.mrb[0].mxu0
    %6772 = vdwg.mxu0
    %6773 = vmax.xlane.f32.xlu0 %v6711
    %v6774 = vpop.xlane.xlu0 %6773
    %6775 = vmax.xlane.f32.xlu0 %v6714
    %v6776 = vpop.xlane.xlu0 %6775
    %6777 = vmax.xlane.f32.xlu0 %v6719
    %v6778 = vpop.xlane.xlu0 %6777
    %6779 = vmax.xlane.f32.xlu0 %v6722
    %v6780 = vpop.xlane.xlu0 %6779
    %6781 = vmax.xlane.f32.xlu0 %v6727
    %v6782 = vpop.xlane.xlu0 %6781
    %6783 = vmax.xlane.f32.xlu0 %v6730
    %v6784 = vpop.xlane.xlu0 %6783
    %6785 = vmax.xlane.f32.xlu0 %v6735
    %v6786 = vpop.xlane.xlu0 %6785
    %6787 = vmax.xlane.f32.xlu0 %v6738
    %v6788 = vpop.xlane.xlu0 %6787
    %6789 = vmax.xlane.f32.xlu0 %v6743
    %v6790 = vpop.xlane.xlu0 %6789
    %6791 = vmax.xlane.f32.xlu0 %v6746
    %v6792 = vpop.xlane.xlu0 %6791
    %6793 = vmax.xlane.f32.xlu0 %v6751
    %v6794 = vpop.xlane.xlu0 %6793
    %6795 = vmax.xlane.f32.xlu0 %v6754
    %v6796 = vpop.xlane.xlu0 %6795
    %6797 = vmax.xlane.f32.xlu0 %v6759
    %v6798 = vpop.xlane.xlu0 %6797
    %6799 = vmax.xlane.f32.xlu0 %v6762
    %v6800 = vpop.xlane.xlu0 %6799
    %6801 = vmax.xlane.f32.xlu0 %v6767
    %v6802 = vpop.xlane.xlu0 %6801
    %6803 = vmax.xlane.f32.xlu0 %v6770
    %v6804 = vpop.xlane.xlu0 %6803
    %v6805 = vsub.f32 %v6711, %v6774
    %v6806 = vsub.f32 %v6714, %v6776
    %v6807 = vsub.f32 %v6719, %v6778
    %v6808 = vsub.f32 %v6722, %v6780
    %v6809 = vsub.f32 %v6727, %v6782
    %v6810 = vsub.f32 %v6730, %v6784
    %v6811 = vsub.f32 %v6735, %v6786
    %v6812 = vsub.f32 %v6738, %v6788
    %v6813 = vsub.f32 %v6743, %v6790
    %v6814 = vsub.f32 %v6746, %v6792
    %v6815 = vsub.f32 %v6751, %v6794
    %v6816 = vsub.f32 %v6754, %v6796
    %v6817 = vsub.f32 %v6759, %v6798
    %v6818 = vsub.f32 %v6762, %v6800
    %v6819 = vsub.f32 %v6767, %v6802
    %v6820 = vsub.f32 %v6770, %v6804
    %v6821 = vmul.f32 %v6805, 1.442695
    %v6822 = vpow.pop %v6821
    %v6823 = vmul.f32 %v6806, 1.442695
    %v6824 = vpow.pop %v6823
    %v6825 = vmul.f32 %v6807, 1.442695
    %v6826 = vpow.pop %v6825
    %v6827 = vmul.f32 %v6808, 1.442695
    %v6828 = vpow.pop %v6827
    %v6829 = vmul.f32 %v6809, 1.442695
    %v6830 = vpow.pop %v6829
    %v6831 = vmul.f32 %v6810, 1.442695
    %v6832 = vpow.pop %v6831
    %v6833 = vmul.f32 %v6811, 1.442695
    %v6834 = vpow.pop %v6833
    %v6835 = vmul.f32 %v6812, 1.442695
    %v6836 = vpow.pop %v6835
    %v6837 = vmul.f32 %v6813, 1.442695
    %v6838 = vpow.pop %v6837
    %v6839 = vmul.f32 %v6814, 1.442695
    %v6840 = vpow.pop %v6839
    %v6841 = vmul.f32 %v6815, 1.442695
    %v6842 = vpow.pop %v6841
    %v6843 = vmul.f32 %v6816, 1.442695
    %v6844 = vpow.pop %v6843
    %v6845 = vmul.f32 %v6817, 1.442695
    %v6846 = vpow.pop %v6845
    %v6847 = vmul.f32 %v6818, 1.442695
    %v6848 = vpow.pop %v6847
    %v6849 = vmul.f32 %v6819, 1.442695
    %v6850 = vpow.pop %v6849
    %v6851 = vmul.f32 %v6820, 1.442695
    %v6852 = vpow.pop %v6851
    %6853 = vadd.xlane.f32.xlu0 %v6822
    %v6854 = vpop.xlane.xlu0 %6853
    %6855 = vadd.xlane.f32.xlu0 %v6824
    %v6856 = vpop.xlane.xlu0 %6855
    %6857 = vadd.xlane.f32.xlu0 %v6826
    %v6858 = vpop.xlane.xlu0 %6857
    %6859 = vadd.xlane.f32.xlu0 %v6828
    %v6860 = vpop.xlane.xlu0 %6859
    %6861 = vadd.xlane.f32.xlu0 %v6830
    %v6862 = vpop.xlane.xlu0 %6861
    %6863 = vadd.xlane.f32.xlu0 %v6832
    %v6864 = vpop.xlane.xlu0 %6863
    %6865 = vadd.xlane.f32.xlu0 %v6834
    %v6866 = vpop.xlane.xlu0 %6865
    %6867 = vadd.xlane.f32.xlu0 %v6836
    %v6868 = vpop.xlane.xlu0 %6867
    %6869 = vadd.xlane.f32.xlu0 %v6838
    %v6870 = vpop.xlane.xlu0 %6869
    %6871 = vadd.xlane.f32.xlu0 %v6840
    %v6872 = vpop.xlane.xlu0 %6871
    %6873 = vadd.xlane.f32.xlu0 %v6842
    %v6874 = vpop.xlane.xlu0 %6873
    %6875 = vadd.xlane.f32.xlu0 %v6844
    %v6876 = vpop.xlane.xlu0 %6875
    %6877 = vadd.xlane.f32.xlu0 %v6846
    %v6878 = vpop.xlane.xlu0 %6877
    %6879 = vadd.xlane.f32.xlu0 %v6848
    %v6880 = vpop.xlane.xlu0 %6879
    %6881 = vadd.xlane.f32.xlu0 %v6850
    %v6882 = vpop.xlane.xlu0 %6881
    %6883 = vadd.xlane.f32.xlu0 %v6852
    %v6884 = vpop.xlane.xlu0 %6883
    %v6885 = vpack.c.bf16 %v6824, %v6822
    %v6886 = vpack.c.bf16 %v6828, %v6826
    %v6887 = vpack.c.bf16 %v6832, %v6830
    %v6888 = vpack.c.bf16 %v6836, %v6834
    %v6889 = vpack.c.bf16 %v6840, %v6838
    %v6890 = vpack.c.bf16 %v6844, %v6842
    %v6891 = vpack.c.bf16 %v6848, %v6846
    %v6892 = vpack.c.bf16 %v6852, %v6850
    %6901 = vrot.lane.b32.xlu0 %v6132, 64
    %v6902 = vpop.permute.xlu0 %6901
    %6903 = vrot.lane.b32.xlu0 %v6135, 64
    %v6904 = vpop.permute.xlu0 %6903
    %6905 = vrot.lane.b32.xlu0 %v6138, 64
    %v6906 = vpop.permute.xlu0 %6905
    %6907 = vrot.lane.b32.xlu0 %v6141, 64
    %v6908 = vpop.permute.xlu0 %6907
    %6909 = vrot.lane.b32.xlu0 %v6144, 64
    %v6910 = vpop.permute.xlu0 %6909
    %6911 = vrot.lane.b32.xlu0 %v6147, 64
    %v6912 = vpop.permute.xlu0 %6911
    %6913 = vrot.lane.b32.xlu0 %v6150, 64
    %v6914 = vpop.permute.xlu0 %6913
    %6915 = vrot.lane.b32.xlu0 %v6153, 64
    %v6916 = vpop.permute.xlu0 %6915
    %6925 = vmatprep.subr.bf16.mxu0 0
    %6926 = vmatpush1.bf16.msra.mxu0 %v6902
    %6927 = vmatprep.subr.bf16.mxu0 0
    %6928 = vmatpush1.bf16.msra.mxu0 %v6904
    %6929 = vmatprep.subr.bf16.mxu0 0
    %6930 = vmatpush1.bf16.msra.mxu0 %v6906
    %6931 = vmatprep.subr.bf16.mxu0 0
    %6932 = vmatpush1.bf16.msra.mxu0 %v6908
    %6933 = vmatprep.subr.bf16.mxu0 0
    %6934 = vmatpush1.bf16.msra.mxu0 %v6910
    %6935 = vmatprep.subr.bf16.mxu0 0
    %6936 = vmatpush1.bf16.msra.mxu0 %v6912
    %6937 = vmatprep.subr.bf16.mxu0 0
    %6938 = vmatpush1.bf16.msra.mxu0 %v6914
    %6939 = vmatprep.subr.bf16.mxu0 0
    %6940 = vmatpush1.bf16.msra.mxu0 %v6916
    %6941 = vmatprep.subr.bf16.mxu0 0
    %6942 = vmatpush1.bf16.msra.mxu0 0
    %6943 = vmatprep.subr.bf16.mxu0 0
    %6944 = vmatpush1.bf16.msra.mxu0 0
    %6945 = vmatprep.subr.bf16.mxu0 0
    %6946 = vmatpush1.bf16.msra.mxu0 0
    %6947 = vmatprep.subr.bf16.mxu0 0
    %6948 = vmatpush1.bf16.msra.mxu0 0
    %6949 = vmatprep.subr.bf16.mxu0 0
    %6950 = vmatpush1.bf16.msra.mxu0 0
    %6951 = vmatprep.subr.bf16.mxu0 0
    %6952 = vmatpush1.bf16.msra.mxu0 0
    %6953 = vmatprep.subr.bf16.mxu0 0
    %6954 = vmatpush1.bf16.msra.mxu0 0
    %6955 = vmatprep.subr.bf16.mxu0 0
    %6956 = vmatpush1.bf16.msra.mxu0 0
    %6957 = vmatprep.mubr.bf16.mxu0 0
    %6958 = vmatmul.mubr.bf16.gmra.mrb[0].mxu0 %v6885
    %v6959 = vpop.f32.mrb[0].mxu0
    %v6960 = vadd.f32 0.0, %v6959
    %v6961 = vpop.f32.mrb[0].mxu0
    %v6962 = vpop.f32.mrb[0].mxu0
    %v6963 = vadd.f32 0.0, %v6962
    %v6964 = vpop.f32.mrb[0].mxu0
    %6965 = vmatprep.mubr.bf16.mxu0 0
    %6966 = vmatmul.mubr.bf16.gmra.mrb[0].mxu0 %v6886
    %v6967 = vpop.f32.mrb[0].mxu0
    %v6968 = vadd.f32 0.0, %v6967
    %v6969 = vpop.f32.mrb[0].mxu0
    %v6970 = vpop.f32.mrb[0].mxu0
    %v6971 = vadd.f32 0.0, %v6970
    %v6972 = vpop.f32.mrb[0].mxu0
    %6973 = vmatprep.mubr.bf16.mxu0 0
    %6974 = vmatmul.mubr.bf16.gmra.mrb[0].mxu0 %v6887
    %v6975 = vpop.f32.mrb[0].mxu0
    %v6976 = vadd.f32 0.0, %v6975
    %v6977 = vpop.f32.mrb[0].mxu0
    %v6978 = vpop.f32.mrb[0].mxu0
    %v6979 = vadd.f32 0.0, %v6978
    %v6980 = vpop.f32.mrb[0].mxu0
    %6981 = vmatprep.mubr.bf16.mxu0 0
    %6982 = vmatmul.mubr.bf16.gmra.mrb[0].mxu0 %v6888
    %v6983 = vpop.f32.mrb[0].mxu0
    %v6984 = vadd.f32 0.0, %v6983
    %v6985 = vpop.f32.mrb[0].mxu0
    %v6986 = vpop.f32.mrb[0].mxu0
    %v6987 = vadd.f32 0.0, %v6986
    %v6988 = vpop.f32.mrb[0].mxu0
    %6989 = vmatprep.mubr.bf16.mxu0 0
    %6990 = vmatmul.mubr.bf16.gmra.mrb[0].mxu0 %v6889
    %v6991 = vpop.f32.mrb[0].mxu0
    %v6992 = vadd.f32 0.0, %v6991
    %v6993 = vpop.f32.mrb[0].mxu0
    %v6994 = vpop.f32.mrb[0].mxu0
    %v6995 = vadd.f32 0.0, %v6994
    %v6996 = vpop.f32.mrb[0].mxu0
    %6997 = vmatprep.mubr.bf16.mxu0 0
    %6998 = vmatmul.mubr.bf16.gmra.mrb[0].mxu0 %v6890
    %v6999 = vpop.f32.mrb[0].mxu0
    %v7000 = vadd.f32 0.0, %v6999
    %v7001 = vpop.f32.mrb[0].mxu0
    %v7002 = vpop.f32.mrb[0].mxu0
    %v7003 = vadd.f32 0.0, %v7002
    %v7004 = vpop.f32.mrb[0].mxu0
    %7005 = vmatprep.mubr.bf16.mxu0 0
    %7006 = vmatmul.mubr.bf16.gmra.mrb[0].mxu0 %v6891
    %v7007 = vpop.f32.mrb[0].mxu0
    %v7008 = vadd.f32 0.0, %v7007
    %v7009 = vpop.f32.mrb[0].mxu0
    %v7010 = vpop.f32.mrb[0].mxu0
    %v7011 = vadd.f32 0.0, %v7010
    %v7012 = vpop.f32.mrb[0].mxu0
    %7013 = vmatprep.mubr.bf16.mxu0 0
    %7014 = vmatmul.mubr.bf16.gmra.mrb[0].mxu0 %v6892
    %v7015 = vpop.f32.mrb[0].mxu0
    %v7016 = vadd.f32 0.0, %v7015
    %v7017 = vpop.f32.mrb[0].mxu0
    %v7018 = vpop.f32.mrb[0].mxu0
    %v7019 = vadd.f32 0.0, %v7018
    %v7020 = vpop.f32.mrb[0].mxu0
    %7021 = vdwg.mxu0
    %v7022 = vrcp.pop %v6854
    %v7023 = vrcp.pop %v6856
    %v7024 = vrcp.pop %v6858
    %v7025 = vrcp.pop %v6860
    %v7026 = vrcp.pop %v6862
    %v7027 = vrcp.pop %v6864
    %v7028 = vrcp.pop %v6866
    %v7029 = vrcp.pop %v6868
    %v7030 = vrcp.pop %v6870
    %v7031 = vrcp.pop %v6872
    %v7032 = vrcp.pop %v6874
    %v7033 = vrcp.pop %v6876
    %v7034 = vrcp.pop %v6878
    %v7035 = vrcp.pop %v6880
    %v7036 = vrcp.pop %v6882
    %v7037 = vrcp.pop %v6884
    %v7038 = vmul.f32 %v6960, %v7022
    %v7039 = vmul.f32 %v6963, %v7023
    %v7040 = vmul.f32 %v6968, %v7024
    %v7041 = vmul.f32 %v6971, %v7025
    %v7042 = vmul.f32 %v6976, %v7026
    %v7043 = vmul.f32 %v6979, %v7027
    %v7044 = vmul.f32 %v6984, %v7028
    %v7045 = vmul.f32 %v6987, %v7029
    %v7046 = vmul.f32 %v6992, %v7030
    %v7047 = vmul.f32 %v6995, %v7031
    %v7048 = vmul.f32 %v7000, %v7032
    %v7049 = vmul.f32 %v7003, %v7033
    %v7050 = vmul.f32 %v7008, %v7034
    %v7051 = vmul.f32 %v7011, %v7035
    %v7052 = vmul.f32 %v7016, %v7036
    %v7053 = vmul.f32 %v7019, %v7037
    %v7054 = vpack.c.bf16 %v7039, %v7038
    %v7055 = vpack.c.bf16 %v7041, %v7040
    %v7056 = vpack.c.bf16 %v7043, %v7042
    %v7057 = vpack.c.bf16 %v7045, %v7044
    %v7058 = vpack.c.bf16 %v7047, %v7046
    %v7059 = vpack.c.bf16 %v7049, %v7048
    %v7060 = vpack.c.bf16 %v7051, %v7050
    %v7061 = vpack.c.bf16 %v7053, %v7052
    %v7070 = vunpack.c.l.b16 %v5591
    %v7071 = vunpack.c.l.b16 %v5592
    %v7072 = vunpack.c.l.b16 %v5593
    %v7073 = vunpack.c.l.b16 %v5594
    %v7074 = vunpack.c.l.b16 %v5595
    %v7075 = vunpack.c.l.b16 %v5596
    %v7076 = vunpack.c.l.b16 %v5597
    %v7077 = vunpack.c.l.b16 %v5598
    %v7078 = vpack.c.b16 %v7071, %v7070
    %v7079 = vpack.c.b16 %v7073, %v7072
    %v7080 = vpack.c.b16 %v7075, %v7074
    %v7081 = vpack.c.b16 %v7077, %v7076
    %v7087 = vsel %vm1948, %v7054, 0
    %v7090 = vsel %vm1948, %v7055, 0
    %v7093 = vsel %vm1948, %v7056, 0
    %v7096 = vsel %vm1948, %v7057, 0
    %v7099 = vsel %vm1948, %v7058, 0
    %v7102 = vsel %vm1948, %v7059, 0
    %v7105 = vsel %vm1948, %v7060, 0
    %v7108 = vsel %vm1948, %v7061, 0
    %7110 = vmatprep.subr.bf16.mxu0 0
    %7111 = vmatpush1.bf16.msra.mxu0 %v7078
    %7112 = vmatprep.subr.bf16.mxu0 0
    %7113 = vmatpush1.bf16.msra.mxu0 %v7079
    %7114 = vmatprep.subr.bf16.mxu0 0
    %7115 = vmatpush1.bf16.msra.mxu0 %v7080
    %7116 = vmatprep.subr.bf16.mxu0 0
    %7117 = vmatpush1.bf16.msra.mxu0 %v7081
    %7118 = vmatprep.subr.bf16.mxu0 0
    %7119 = vmatpush1.bf16.msra.mxu0 0
    %7120 = vmatprep.subr.bf16.mxu0 0
    %7121 = vmatpush1.bf16.msra.mxu0 0
    %7122 = vmatprep.subr.bf16.mxu0 0
    %7123 = vmatpush1.bf16.msra.mxu0 0
    %7124 = vmatprep.subr.bf16.mxu0 0
    %7125 = vmatpush1.bf16.msra.mxu0 0
    %7126 = vmatprep.subr.bf16.mxu0 0
    %7127 = vmatpush1.bf16.msra.mxu0 0
    %7128 = vmatprep.subr.bf16.mxu0 0
    %7129 = vmatpush1.bf16.msra.mxu0 0
    %7130 = vmatprep.subr.bf16.mxu0 0
    %7131 = vmatpush1.bf16.msra.mxu0 0
    %7132 = vmatprep.subr.bf16.mxu0 0
    %7133 = vmatpush1.bf16.msra.mxu0 0
    %7134 = vmatprep.subr.bf16.mxu0 0
    %7135 = vmatpush1.bf16.msra.mxu0 0
    %7136 = vmatprep.subr.bf16.mxu0 0
    %7137 = vmatpush1.bf16.msra.mxu0 0
    %7138 = vmatprep.subr.bf16.mxu0 0
    %7139 = vmatpush1.bf16.msra.mxu0 0
    %7140 = vmatprep.subr.bf16.mxu0 0
    %7141 = vmatpush1.bf16.msra.mxu0 0
    %7142 = vmatprep.mubr.bf16.mxu0 0
    %7143 = vmatmul.mubr.bf16.gmra.mrb[0].mxu0 %v7087
    %v7144 = vpop.f32.mrb[0].mxu0
    %v7145 = vadd.f32 0.0, %v7144
    %v7146 = vpop.f32.mrb[0].mxu0
    %v7147 = vpop.f32.mrb[0].mxu0
    %v7148 = vadd.f32 0.0, %v7147
    %v7149 = vpop.f32.mrb[0].mxu0
    %7150 = vmatprep.mubr.bf16.mxu0 0
    %7151 = vmatmul.mubr.bf16.gmra.mrb[0].mxu0 %v7090
    %v7152 = vpop.f32.mrb[0].mxu0
    %v7153 = vadd.f32 0.0, %v7152
    %v7154 = vpop.f32.mrb[0].mxu0
    %v7155 = vpop.f32.mrb[0].mxu0
    %v7156 = vadd.f32 0.0, %v7155
    %v7157 = vpop.f32.mrb[0].mxu0
    %7158 = vmatprep.mubr.bf16.mxu0 0
    %7159 = vmatmul.mubr.bf16.gmra.mrb[0].mxu0 %v7093
    %v7160 = vpop.f32.mrb[0].mxu0
    %v7161 = vadd.f32 0.0, %v7160
    %v7162 = vpop.f32.mrb[0].mxu0
    %v7163 = vpop.f32.mrb[0].mxu0
    %v7164 = vadd.f32 0.0, %v7163
    %v7165 = vpop.f32.mrb[0].mxu0
    %7166 = vmatprep.mubr.bf16.mxu0 0
    %7167 = vmatmul.mubr.bf16.gmra.mrb[0].mxu0 %v7096
    %v7168 = vpop.f32.mrb[0].mxu0
    %v7169 = vadd.f32 0.0, %v7168
    %v7170 = vpop.f32.mrb[0].mxu0
    %v7171 = vpop.f32.mrb[0].mxu0
    %v7172 = vadd.f32 0.0, %v7171
    %v7173 = vpop.f32.mrb[0].mxu0
    %7174 = vmatprep.mubr.bf16.mxu0 0
    %7175 = vmatmul.mubr.bf16.gmra.mrb[0].mxu0 %v7099
    %v7176 = vpop.f32.mrb[0].mxu0
    %v7177 = vadd.f32 0.0, %v7176
    %v7178 = vpop.f32.mrb[0].mxu0
    %v7179 = vpop.f32.mrb[0].mxu0
    %v7180 = vadd.f32 0.0, %v7179
    %v7181 = vpop.f32.mrb[0].mxu0
    %7182 = vmatprep.mubr.bf16.mxu0 0
    %7183 = vmatmul.mubr.bf16.gmra.mrb[0].mxu0 %v7102
    %v7184 = vpop.f32.mrb[0].mxu0
    %v7185 = vadd.f32 0.0, %v7184
    %v7186 = vpop.f32.mrb[0].mxu0
    %v7187 = vpop.f32.mrb[0].mxu0
    %v7188 = vadd.f32 0.0, %v7187
    %v7189 = vpop.f32.mrb[0].mxu0
    %7190 = vmatprep.mubr.bf16.mxu0 0
    %7191 = vmatmul.mubr.bf16.gmra.mrb[0].mxu0 %v7105
    %v7192 = vpop.f32.mrb[0].mxu0
    %v7193 = vadd.f32 0.0, %v7192
    %v7194 = vpop.f32.mrb[0].mxu0
    %v7195 = vpop.f32.mrb[0].mxu0
    %v7196 = vadd.f32 0.0, %v7195
    %v7197 = vpop.f32.mrb[0].mxu0
    %7198 = vmatprep.mubr.bf16.mxu0 0
    %7199 = vmatmul.mubr.bf16.gmra.mrb[0].mxu0 %v7108
    %v7200 = vpop.f32.mrb[0].mxu0
    %v7201 = vadd.f32 0.0, %v7200
    %v7202 = vpop.f32.mrb[0].mxu0
    %v7203 = vpop.f32.mrb[0].mxu0
    %v7204 = vadd.f32 0.0, %v7203
    %v7205 = vpop.f32.mrb[0].mxu0
    %7206 = vdwg.mxu0
    %v7215 = vunpack.c.l.b16 %v5583
    %v7216 = vunpack.c.l.b16 %v5584
    %v7217 = vunpack.c.l.b16 %v5585
    %v7218 = vunpack.c.l.b16 %v5586
    %v7219 = vunpack.c.l.b16 %v5587
    %v7220 = vunpack.c.l.b16 %v5588
    %v7221 = vunpack.c.l.b16 %v5589
    %v7222 = vunpack.c.l.b16 %v5590
    %v7223 = vpack.c.b16 %v7216, %v7215
    %v7224 = vpack.c.b16 %v7218, %v7217
    %v7225 = vpack.c.b16 %v7220, %v7219
    %v7226 = vpack.c.b16 %v7222, %v7221
    %v7232 = vsel %vm1948, %v6572, 0
    %v7235 = vsel %vm1948, %v6573, 0
    %v7238 = vsel %vm1948, %v6574, 0
    %v7241 = vsel %vm1948, %v6575, 0
    %v7244 = vsel %vm1948, %v6576, 0
    %v7247 = vsel %vm1948, %v6577, 0
    %v7250 = vsel %vm1948, %v6578, 0
    %v7253 = vsel %vm1948, %v6579, 0
    %7255 = vmatprep.subr.bf16.mxu0 0
    %7256 = vmatpush1.bf16.msra.mxu0 %v7223
    %7257 = vmatprep.subr.bf16.mxu0 0
    %7258 = vmatpush1.bf16.msra.mxu0 %v7224
    %7259 = vmatprep.subr.bf16.mxu0 0
    %7260 = vmatpush1.bf16.msra.mxu0 %v7225
    %7261 = vmatprep.subr.bf16.mxu0 0
    %7262 = vmatpush1.bf16.msra.mxu0 %v7226
    %7263 = vmatprep.subr.bf16.mxu0 0
    %7264 = vmatpush1.bf16.msra.mxu0 0
    %7265 = vmatprep.subr.bf16.mxu0 0
    %7266 = vmatpush1.bf16.msra.mxu0 0
    %7267 = vmatprep.subr.bf16.mxu0 0
    %7268 = vmatpush1.bf16.msra.mxu0 0
    %7269 = vmatprep.subr.bf16.mxu0 0
    %7270 = vmatpush1.bf16.msra.mxu0 0
    %7271 = vmatprep.subr.bf16.mxu0 0
    %7272 = vmatpush1.bf16.msra.mxu0 0
    %7273 = vmatprep.subr.bf16.mxu0 0
    %7274 = vmatpush1.bf16.msra.mxu0 0
    %7275 = vmatprep.subr.bf16.mxu0 0
    %7276 = vmatpush1.bf16.msra.mxu0 0
    %7277 = vmatprep.subr.bf16.mxu0 0
    %7278 = vmatpush1.bf16.msra.mxu0 0
    %7279 = vmatprep.subr.bf16.mxu0 0
    %7280 = vmatpush1.bf16.msra.mxu0 0
    %7281 = vmatprep.subr.bf16.mxu0 0
    %7282 = vmatpush1.bf16.msra.mxu0 0
    %7283 = vmatprep.subr.bf16.mxu0 0
    %7284 = vmatpush1.bf16.msra.mxu0 0
    %7285 = vmatprep.subr.bf16.mxu0 0
    %7286 = vmatpush1.bf16.msra.mxu0 0
    %7287 = vmatprep.mubr.bf16.mxu0 0
    %7288 = vmatmul.mubr.bf16.gmra.mrb[0].mxu0 %v7232
    %v7289 = vpop.f32.mrb[0].mxu0
    %v7290 = vadd.f32 %v7145, %v7289
    %v7291 = vpop.f32.mrb[0].mxu0
    %v7292 = vpop.f32.mrb[0].mxu0
    %v7293 = vadd.f32 %v7148, %v7292
    %v7294 = vpop.f32.mrb[0].mxu0
    %7295 = vmatprep.mubr.bf16.mxu0 0
    %7296 = vmatmul.mubr.bf16.gmra.mrb[0].mxu0 %v7235
    %v7297 = vpop.f32.mrb[0].mxu0
    %v7298 = vadd.f32 %v7153, %v7297
    %v7299 = vpop.f32.mrb[0].mxu0
    %v7300 = vpop.f32.mrb[0].mxu0
    %v7301 = vadd.f32 %v7156, %v7300
    %v7302 = vpop.f32.mrb[0].mxu0
    %7303 = vmatprep.mubr.bf16.mxu0 0
    %7304 = vmatmul.mubr.bf16.gmra.mrb[0].mxu0 %v7238
    %v7305 = vpop.f32.mrb[0].mxu0
    %v7306 = vadd.f32 %v7161, %v7305
    %v7307 = vpop.f32.mrb[0].mxu0
    %v7308 = vpop.f32.mrb[0].mxu0
    %v7309 = vadd.f32 %v7164, %v7308
    %v7310 = vpop.f32.mrb[0].mxu0
    %7311 = vmatprep.mubr.bf16.mxu0 0
    %7312 = vmatmul.mubr.bf16.gmra.mrb[0].mxu0 %v7241
    %v7313 = vpop.f32.mrb[0].mxu0
    %v7314 = vadd.f32 %v7169, %v7313
    %v7315 = vpop.f32.mrb[0].mxu0
    %v7316 = vpop.f32.mrb[0].mxu0
    %v7317 = vadd.f32 %v7172, %v7316
    %v7318 = vpop.f32.mrb[0].mxu0
    %7319 = vmatprep.mubr.bf16.mxu0 0
    %7320 = vmatmul.mubr.bf16.gmra.mrb[0].mxu0 %v7244
    %v7321 = vpop.f32.mrb[0].mxu0
    %v7322 = vadd.f32 %v7177, %v7321
    %v7323 = vpop.f32.mrb[0].mxu0
    %v7324 = vpop.f32.mrb[0].mxu0
    %v7325 = vadd.f32 %v7180, %v7324
    %v7326 = vpop.f32.mrb[0].mxu0
    %7327 = vmatprep.mubr.bf16.mxu0 0
    %7328 = vmatmul.mubr.bf16.gmra.mrb[0].mxu0 %v7247
    %v7329 = vpop.f32.mrb[0].mxu0
    %v7330 = vadd.f32 %v7185, %v7329
    %v7331 = vpop.f32.mrb[0].mxu0
    %v7332 = vpop.f32.mrb[0].mxu0
    %v7333 = vadd.f32 %v7188, %v7332
    %v7334 = vpop.f32.mrb[0].mxu0
    %7335 = vmatprep.mubr.bf16.mxu0 0
    %7336 = vmatmul.mubr.bf16.gmra.mrb[0].mxu0 %v7250
    %v7337 = vpop.f32.mrb[0].mxu0
    %v7338 = vadd.f32 %v7193, %v7337
    %v7339 = vpop.f32.mrb[0].mxu0
    %v7340 = vpop.f32.mrb[0].mxu0
    %v7341 = vadd.f32 %v7196, %v7340
    %v7342 = vpop.f32.mrb[0].mxu0
    %7343 = vmatprep.mubr.bf16.mxu0 0
    %7344 = vmatmul.mubr.bf16.gmra.mrb[0].mxu0 %v7253
    %v7345 = vpop.f32.mrb[0].mxu0
    %v7346 = vadd.f32 %v7201, %v7345
    %v7347 = vpop.f32.mrb[0].mxu0
    %v7348 = vpop.f32.mrb[0].mxu0
    %v7349 = vadd.f32 %v7204, %v7348
    %v7350 = vpop.f32.mrb[0].mxu0
    %7351 = vdwg.mxu0
    %s7352 = scalar_lea.vmem [#allocation10], 1
    %v7353 = vld [vmem:[%s7352] sm:$0x1]
    %v7355 = vlaneseq
    %v7356 = vshrl.u32 %v7355, 7
    %v7357 = vsub.s32 0, %v7356
    %v7358 = vrot.slane %v7353, %v7357
    %v7360 = vadd.f32 %v7290, %v7358
    %v7361 = vadd.f32 %v7293, %v7358
    %v7362 = vadd.f32 %v7298, %v7358
    %v7363 = vadd.f32 %v7301, %v7358
    %v7364 = vadd.f32 %v7306, %v7358
    %v7365 = vadd.f32 %v7309, %v7358
    %v7366 = vadd.f32 %v7314, %v7358
    %v7367 = vadd.f32 %v7317, %v7358
    %v7368 = vadd.f32 %v7322, %v7358
    %v7369 = vadd.f32 %v7325, %v7358
    %v7370 = vadd.f32 %v7330, %v7358
    %v7371 = vadd.f32 %v7333, %v7358
    %v7372 = vadd.f32 %v7338, %v7358
    %v7373 = vadd.f32 %v7341, %v7358
    %v7374 = vadd.f32 %v7346, %v7358
    %v7375 = vadd.f32 %v7349, %v7358
    %v7377 = vsel %vm1948, %v6154, 0
    %v7380 = vsel %vm1948, %v6157, 0
    %v7383 = vsel %vm1948, %v6160, 0
    %v7386 = vsel %vm1948, %v6163, 0
    %v7389 = vsel %vm1948, %v6166, 0
    %v7392 = vsel %vm1948, %v6169, 0
    %v7395 = vsel %vm1948, %v6172, 0
    %v7398 = vsel %vm1948, %v6175, 0
    %v7401 = vsel %vm1948, %v6155, 0
    %v7404 = vsel %vm1948, %v6158, 0
    %v7407 = vsel %vm1948, %v6161, 0
    %v7410 = vsel %vm1948, %v6164, 0
    %v7413 = vsel %vm1948, %v6167, 0
    %v7416 = vsel %vm1948, %v6170, 0
    %v7419 = vsel %vm1948, %v6173, 0
    %v7422 = vsel %vm1948, %v6176, 0
    %7424 = vmatprep.subr.bf16.mxu0 0
    %7425 = vmatpush1.bf16.xpose.msra.mxu0 %v7401
    %7426 = vmatprep.subr.bf16.mxu0 0
    %7427 = vmatpush1.bf16.xpose.msra.mxu0 %v7404
    %7428 = vmatprep.subr.bf16.mxu0 0
    %7429 = vmatpush1.bf16.xpose.msra.mxu0 %v7407
    %7430 = vmatprep.subr.bf16.mxu0 0
    %7431 = vmatpush1.bf16.xpose.msra.mxu0 %v7410
    %7432 = vmatprep.subr.bf16.mxu0 0
    %7433 = vmatpush1.bf16.xpose.msra.mxu0 %v7413
    %7434 = vmatprep.subr.bf16.mxu0 0
    %7435 = vmatpush1.bf16.xpose.msra.mxu0 %v7416
    %7436 = vmatprep.subr.bf16.mxu0 0
    %7437 = vmatpush1.bf16.xpose.msra.mxu0 %v7419
    %7438 = vmatprep.subr.bf16.mxu0 0
    %7439 = vmatpush1.bf16.xpose.msra.mxu0 %v7422
    %7440 = vmatprep.subr.bf16.mxu0 0
    %7441 = vmatpush1.bf16.xpose.msra.mxu0 0
    %7442 = vmatprep.subr.bf16.mxu0 0
    %7443 = vmatpush1.bf16.xpose.msra.mxu0 0
    %7444 = vmatprep.subr.bf16.mxu0 0
    %7445 = vmatpush1.bf16.xpose.msra.mxu0 0
    %7446 = vmatprep.subr.bf16.mxu0 0
    %7447 = vmatpush1.bf16.xpose.msra.mxu0 0
    %7448 = vmatprep.subr.bf16.mxu0 0
    %7449 = vmatpush1.bf16.xpose.msra.mxu0 0
    %7450 = vmatprep.subr.bf16.mxu0 0
    %7451 = vmatpush1.bf16.xpose.msra.mxu0 0
    %7452 = vmatprep.subr.bf16.mxu0 0
    %7453 = vmatpush1.bf16.xpose.msra.mxu0 0
    %7454 = vmatprep.subr.bf16.mxu0 0
    %7455 = vmatpush1.bf16.xpose.msra.mxu0 0
    %7456 = vmatprep.mubr.bf16.mxu0 0
    %7457 = vmatmul.mubr.bf16.gmra.mrb[0].mxu0 %v7377
    %v7458 = vpop.f32.mrb[0].mxu0
    %v7459 = vadd.f32 0.0, %v7458
    %v7460 = vpop.f32.mrb[0].mxu0
    %v7461 = vpop.f32.mrb[0].mxu0
    %v7462 = vadd.f32 0.0, %v7461
    %v7463 = vpop.f32.mrb[0].mxu0
    %7464 = vmatprep.mubr.bf16.mxu0 0
    %7465 = vmatmul.mubr.bf16.gmra.mrb[0].mxu0 %v7380
    %v7466 = vpop.f32.mrb[0].mxu0
    %v7467 = vadd.f32 0.0, %v7466
    %v7468 = vpop.f32.mrb[0].mxu0
    %v7469 = vpop.f32.mrb[0].mxu0
    %v7470 = vadd.f32 0.0, %v7469
    %v7471 = vpop.f32.mrb[0].mxu0
    %7472 = vmatprep.mubr.bf16.mxu0 0
    %7473 = vmatmul.mubr.bf16.gmra.mrb[0].mxu0 %v7383
    %v7474 = vpop.f32.mrb[0].mxu0
    %v7475 = vadd.f32 0.0, %v7474
    %v7476 = vpop.f32.mrb[0].mxu0
    %v7477 = vpop.f32.mrb[0].mxu0
    %v7478 = vadd.f32 0.0, %v7477
    %v7479 = vpop.f32.mrb[0].mxu0
    %7480 = vmatprep.mubr.bf16.mxu0 0
    %7481 = vmatmul.mubr.bf16.gmra.mrb[0].mxu0 %v7386
    %v7482 = vpop.f32.mrb[0].mxu0
    %v7483 = vadd.f32 0.0, %v7482
    %v7484 = vpop.f32.mrb[0].mxu0
    %v7485 = vpop.f32.mrb[0].mxu0
    %v7486 = vadd.f32 0.0, %v7485
    %v7487 = vpop.f32.mrb[0].mxu0
    %7488 = vmatprep.mubr.bf16.mxu0 0
    %7489 = vmatmul.mubr.bf16.gmra.mrb[0].mxu0 %v7389
    %v7490 = vpop.f32.mrb[0].mxu0
    %v7491 = vadd.f32 0.0, %v7490
    %v7492 = vpop.f32.mrb[0].mxu0
    %v7493 = vpop.f32.mrb[0].mxu0
    %v7494 = vadd.f32 0.0, %v7493
    %v7495 = vpop.f32.mrb[0].mxu0
    %7496 = vmatprep.mubr.bf16.mxu0 0
    %7497 = vmatmul.mubr.bf16.gmra.mrb[0].mxu0 %v7392
    %v7498 = vpop.f32.mrb[0].mxu0
    %v7499 = vadd.f32 0.0, %v7498
    %v7500 = vpop.f32.mrb[0].mxu0
    %v7501 = vpop.f32.mrb[0].mxu0
    %v7502 = vadd.f32 0.0, %v7501
    %v7503 = vpop.f32.mrb[0].mxu0
    %7504 = vmatprep.mubr.bf16.mxu0 0
    %7505 = vmatmul.mubr.bf16.gmra.mrb[0].mxu0 %v7395
    %v7506 = vpop.f32.mrb[0].mxu0
    %v7507 = vadd.f32 0.0, %v7506
    %v7508 = vpop.f32.mrb[0].mxu0
    %v7509 = vpop.f32.mrb[0].mxu0
    %v7510 = vadd.f32 0.0, %v7509
    %v7511 = vpop.f32.mrb[0].mxu0
    %7512 = vmatprep.mubr.bf16.mxu0 0
    %7513 = vmatmul.mubr.bf16.gmra.mrb[0].mxu0 %v7398
    %v7514 = vpop.f32.mrb[0].mxu0
    %v7515 = vadd.f32 0.0, %v7514
    %v7516 = vpop.f32.mrb[0].mxu0
    %v7517 = vpop.f32.mrb[0].mxu0
    %v7518 = vadd.f32 0.0, %v7517
    %v7519 = vpop.f32.mrb[0].mxu0
    %7520 = vdwg.mxu0
    %7521 = vmax.xlane.f32.xlu0 %v7459
    %v7522 = vpop.xlane.xlu0 %7521
    %7523 = vmax.xlane.f32.xlu0 %v7462
    %v7524 = vpop.xlane.xlu0 %7523
    %7525 = vmax.xlane.f32.xlu0 %v7467
    %v7526 = vpop.xlane.xlu0 %7525
    %7527 = vmax.xlane.f32.xlu0 %v7470
    %v7528 = vpop.xlane.xlu0 %7527
    %7529 = vmax.xlane.f32.xlu0 %v7475
    %v7530 = vpop.xlane.xlu0 %7529
    %7531 = vmax.xlane.f32.xlu0 %v7478
    %v7532 = vpop.xlane.xlu0 %7531
    %7533 = vmax.xlane.f32.xlu0 %v7483
    %v7534 = vpop.xlane.xlu0 %7533
    %7535 = vmax.xlane.f32.xlu0 %v7486
    %v7536 = vpop.xlane.xlu0 %7535
    %7537 = vmax.xlane.f32.xlu0 %v7491
    %v7538 = vpop.xlane.xlu0 %7537
    %7539 = vmax.xlane.f32.xlu0 %v7494
    %v7540 = vpop.xlane.xlu0 %7539
    %7541 = vmax.xlane.f32.xlu0 %v7499
    %v7542 = vpop.xlane.xlu0 %7541
    %7543 = vmax.xlane.f32.xlu0 %v7502
    %v7544 = vpop.xlane.xlu0 %7543
    %7545 = vmax.xlane.f32.xlu0 %v7507
    %v7546 = vpop.xlane.xlu0 %7545
    %7547 = vmax.xlane.f32.xlu0 %v7510
    %v7548 = vpop.xlane.xlu0 %7547
    %7549 = vmax.xlane.f32.xlu0 %v7515
    %v7550 = vpop.xlane.xlu0 %7549
    %7551 = vmax.xlane.f32.xlu0 %v7518
    %v7552 = vpop.xlane.xlu0 %7551
    %v7553 = vsub.f32 %v7459, %v7522
    %v7554 = vsub.f32 %v7462, %v7524
    %v7555 = vsub.f32 %v7467, %v7526
    %v7556 = vsub.f32 %v7470, %v7528
    %v7557 = vsub.f32 %v7475, %v7530
    %v7558 = vsub.f32 %v7478, %v7532
    %v7559 = vsub.f32 %v7483, %v7534
    %v7560 = vsub.f32 %v7486, %v7536
    %v7561 = vsub.f32 %v7491, %v7538
    %v7562 = vsub.f32 %v7494, %v7540
    %v7563 = vsub.f32 %v7499, %v7542
    %v7564 = vsub.f32 %v7502, %v7544
    %v7565 = vsub.f32 %v7507, %v7546
    %v7566 = vsub.f32 %v7510, %v7548
    %v7567 = vsub.f32 %v7515, %v7550
    %v7568 = vsub.f32 %v7518, %v7552
    %v7569 = vmul.f32 %v7553, 1.442695
    %v7570 = vpow.pop %v7569
    %v7571 = vmul.f32 %v7554, 1.442695
    %v7572 = vpow.pop %v7571
    %v7573 = vmul.f32 %v7555, 1.442695
    %v7574 = vpow.pop %v7573
    %v7575 = vmul.f32 %v7556, 1.442695
    %v7576 = vpow.pop %v7575
    %v7577 = vmul.f32 %v7557, 1.442695
    %v7578 = vpow.pop %v7577
    %v7579 = vmul.f32 %v7558, 1.442695
    %v7580 = vpow.pop %v7579
    %v7581 = vmul.f32 %v7559, 1.442695
    %v7582 = vpow.pop %v7581
    %v7583 = vmul.f32 %v7560, 1.442695
    %v7584 = vpow.pop %v7583
    %v7585 = vmul.f32 %v7561, 1.442695
    %v7586 = vpow.pop %v7585
    %v7587 = vmul.f32 %v7562, 1.442695
    %v7588 = vpow.pop %v7587
    %v7589 = vmul.f32 %v7563, 1.442695
    %v7590 = vpow.pop %v7589
    %v7591 = vmul.f32 %v7564, 1.442695
    %v7592 = vpow.pop %v7591
    %v7593 = vmul.f32 %v7565, 1.442695
    %v7594 = vpow.pop %v7593
    %v7595 = vmul.f32 %v7566, 1.442695
    %v7596 = vpow.pop %v7595
    %v7597 = vmul.f32 %v7567, 1.442695
    %v7598 = vpow.pop %v7597
    %v7599 = vmul.f32 %v7568, 1.442695
    %v7600 = vpow.pop %v7599
    %7601 = vadd.xlane.f32.xlu0 %v7570
    %v7602 = vpop.xlane.xlu0 %7601
    %7603 = vadd.xlane.f32.xlu0 %v7572
    %v7604 = vpop.xlane.xlu0 %7603
    %7605 = vadd.xlane.f32.xlu0 %v7574
    %v7606 = vpop.xlane.xlu0 %7605
    %7607 = vadd.xlane.f32.xlu0 %v7576
    %v7608 = vpop.xlane.xlu0 %7607
    %7609 = vadd.xlane.f32.xlu0 %v7578
    %v7610 = vpop.xlane.xlu0 %7609
    %7611 = vadd.xlane.f32.xlu0 %v7580
    %v7612 = vpop.xlane.xlu0 %7611
    %7613 = vadd.xlane.f32.xlu0 %v7582
    %v7614 = vpop.xlane.xlu0 %7613
    %7615 = vadd.xlane.f32.xlu0 %v7584
    %v7616 = vpop.xlane.xlu0 %7615
    %7617 = vadd.xlane.f32.xlu0 %v7586
    %v7618 = vpop.xlane.xlu0 %7617
    %7619 = vadd.xlane.f32.xlu0 %v7588
    %v7620 = vpop.xlane.xlu0 %7619
    %7621 = vadd.xlane.f32.xlu0 %v7590
    %v7622 = vpop.xlane.xlu0 %7621
    %7623 = vadd.xlane.f32.xlu0 %v7592
    %v7624 = vpop.xlane.xlu0 %7623
    %7625 = vadd.xlane.f32.xlu0 %v7594
    %v7626 = vpop.xlane.xlu0 %7625
    %7627 = vadd.xlane.f32.xlu0 %v7596
    %v7628 = vpop.xlane.xlu0 %7627
    %7629 = vadd.xlane.f32.xlu0 %v7598
    %v7630 = vpop.xlane.xlu0 %7629
    %7631 = vadd.xlane.f32.xlu0 %v7600
    %v7632 = vpop.xlane.xlu0 %7631
    %v7633 = vpack.c.bf16 %v7572, %v7570
    %v7634 = vpack.c.bf16 %v7576, %v7574
    %v7635 = vpack.c.bf16 %v7580, %v7578
    %v7636 = vpack.c.bf16 %v7584, %v7582
    %v7637 = vpack.c.bf16 %v7588, %v7586
    %v7638 = vpack.c.bf16 %v7592, %v7590
    %v7639 = vpack.c.bf16 %v7596, %v7594
    %v7640 = vpack.c.bf16 %v7600, %v7598
    %7641 = vmatprep.subr.bf16.mxu0 0
    %7642 = vmatpush1.bf16.msra.mxu0 %v6156
    %7643 = vmatprep.subr.bf16.mxu0 0
    %7644 = vmatpush1.bf16.msra.mxu0 %v6159
    %7645 = vmatprep.subr.bf16.mxu0 0
    %7646 = vmatpush1.bf16.msra.mxu0 %v6162
    %7647 = vmatprep.subr.bf16.mxu0 0
    %7648 = vmatpush1.bf16.msra.mxu0 %v6165
    %7649 = vmatprep.subr.bf16.mxu0 0
    %7650 = vmatpush1.bf16.msra.mxu0 %v6168
    %7651 = vmatprep.subr.bf16.mxu0 0
    %7652 = vmatpush1.bf16.msra.mxu0 %v6171
    %7653 = vmatprep.subr.bf16.mxu0 0
    %7654 = vmatpush1.bf16.msra.mxu0 %v6174
    %7655 = vmatprep.subr.bf16.mxu0 0
    %7656 = vmatpush1.bf16.msra.mxu0 %v6177
    %7657 = vmatprep.subr.bf16.mxu0 0
    %7658 = vmatpush1.bf16.msra.mxu0 0
    %7659 = vmatprep.subr.bf16.mxu0 0
    %7660 = vmatpush1.bf16.msra.mxu0 0
    %7661 = vmatprep.subr.bf16.mxu0 0
    %7662 = vmatpush1.bf16.msra.mxu0 0
    %7663 = vmatprep.subr.bf16.mxu0 0
    %7664 = vmatpush1.bf16.msra.mxu0 0
    %7665 = vmatprep.subr.bf16.mxu0 0
    %7666 = vmatpush1.bf16.msra.mxu0 0
    %7667 = vmatprep.subr.bf16.mxu0 0
    %7668 = vmatpush1.bf16.msra.mxu0 0
    %7669 = vmatprep.subr.bf16.mxu0 0
    %7670 = vmatpush1.bf16.msra.mxu0 0
    %7671 = vmatprep.subr.bf16.mxu0 0
    %7672 = vmatpush1.bf16.msra.mxu0 0
    %7673 = vmatprep.mubr.bf16.mxu0 0
    %7674 = vmatmul.mubr.bf16.gmra.mrb[0].mxu0 %v7633
    %v7675 = vpop.f32.mrb[0].mxu0
    %v7676 = vadd.f32 0.0, %v7675
    %v7677 = vpop.f32.mrb[0].mxu0
    %v7678 = vpop.f32.mrb[0].mxu0
    %v7679 = vadd.f32 0.0, %v7678
    %v7680 = vpop.f32.mrb[0].mxu0
    %7681 = vmatprep.mubr.bf16.mxu0 0
    %7682 = vmatmul.mubr.bf16.gmra.mrb[0].mxu0 %v7634
    %v7683 = vpop.f32.mrb[0].mxu0
    %v7684 = vadd.f32 0.0, %v7683
    %v7685 = vpop.f32.mrb[0].mxu0
    %v7686 = vpop.f32.mrb[0].mxu0
    %v7687 = vadd.f32 0.0, %v7686
    %v7688 = vpop.f32.mrb[0].mxu0
    %7689 = vmatprep.mubr.bf16.mxu0 0
    %7690 = vmatmul.mubr.bf16.gmra.mrb[0].mxu0 %v7635
    %v7691 = vpop.f32.mrb[0].mxu0
    %v7692 = vadd.f32 0.0, %v7691
    %v7693 = vpop.f32.mrb[0].mxu0
    %v7694 = vpop.f32.mrb[0].mxu0
    %v7695 = vadd.f32 0.0, %v7694
    %v7696 = vpop.f32.mrb[0].mxu0
    %7697 = vmatprep.mubr.bf16.mxu0 0
    %7698 = vmatmul.mubr.bf16.gmra.mrb[0].mxu0 %v7636
    %v7699 = vpop.f32.mrb[0].mxu0
    %v7700 = vadd.f32 0.0, %v7699
    %v7701 = vpop.f32.mrb[0].mxu0
    %v7702 = vpop.f32.mrb[0].mxu0
    %v7703 = vadd.f32 0.0, %v7702
    %v7704 = vpop.f32.mrb[0].mxu0
    %7705 = vmatprep.mubr.bf16.mxu0 0
    %7706 = vmatmul.mubr.bf16.gmra.mrb[0].mxu0 %v7637
    %v7707 = vpop.f32.mrb[0].mxu0
    %v7708 = vadd.f32 0.0, %v7707
    %v7709 = vpop.f32.mrb[0].mxu0
    %v7710 = vpop.f32.mrb[0].mxu0
    %v7711 = vadd.f32 0.0, %v7710
    %v7712 = vpop.f32.mrb[0].mxu0
    %7713 = vmatprep.mubr.bf16.mxu0 0
    %7714 = vmatmul.mubr.bf16.gmra.mrb[0].mxu0 %v7638
    %v7715 = vpop.f32.mrb[0].mxu0
    %v7716 = vadd.f32 0.0, %v7715
    %v7717 = vpop.f32.mrb[0].mxu0
    %v7718 = vpop.f32.mrb[0].mxu0
    %v7719 = vadd.f32 0.0, %v7718
    %v7720 = vpop.f32.mrb[0].mxu0
    %7721 = vmatprep.mubr.bf16.mxu0 0
    %7722 = vmatmul.mubr.bf16.gmra.mrb[0].mxu0 %v7639
    %v7723 = vpop.f32.mrb[0].mxu0
    %v7724 = vadd.f32 0.0, %v7723
    %v7725 = vpop.f32.mrb[0].mxu0
    %v7726 = vpop.f32.mrb[0].mxu0
    %v7727 = vadd.f32 0.0, %v7726
    %v7728 = vpop.f32.mrb[0].mxu0
    %7729 = vmatprep.mubr.bf16.mxu0 0
    %7730 = vmatmul.mubr.bf16.gmra.mrb[0].mxu0 %v7640
    %v7731 = vpop.f32.mrb[0].mxu0
    %v7732 = vadd.f32 0.0, %v7731
    %v7733 = vpop.f32.mrb[0].mxu0
    %v7734 = vpop.f32.mrb[0].mxu0
    %v7735 = vadd.f32 0.0, %v7734
    %v7736 = vpop.f32.mrb[0].mxu0
    %7737 = vdwg.mxu0
    %v7738 = vrcp.pop %v7602
    %v7739 = vrcp.pop %v7604
    %v7740 = vrcp.pop %v7606
    %v7741 = vrcp.pop %v7608
    %v7742 = vrcp.pop %v7610
    %v7743 = vrcp.pop %v7612
    %v7744 = vrcp.pop %v7614
    %v7745 = vrcp.pop %v7616
    %v7746 = vrcp.pop %v7618
    %v7747 = vrcp.pop %v7620
    %v7748 = vrcp.pop %v7622
    %v7749 = vrcp.pop %v7624
    %v7750 = vrcp.pop %v7626
    %v7751 = vrcp.pop %v7628
    %v7752 = vrcp.pop %v7630
    %v7753 = vrcp.pop %v7632
    %v7754 = vmul.f32 %v7676, %v7738
    %v7755 = vmul.f32 %v7679, %v7739
    %v7756 = vmul.f32 %v7684, %v7740
    %v7757 = vmul.f32 %v7687, %v7741
    %v7758 = vmul.f32 %v7692, %v7742
    %v7759 = vmul.f32 %v7695, %v7743
    %v7760 = vmul.f32 %v7700, %v7744
    %v7761 = vmul.f32 %v7703, %v7745
    %v7762 = vmul.f32 %v7708, %v7746
    %v7763 = vmul.f32 %v7711, %v7747
    %v7764 = vmul.f32 %v7716, %v7748
    %v7765 = vmul.f32 %v7719, %v7749
    %v7766 = vmul.f32 %v7724, %v7750
    %v7767 = vmul.f32 %v7727, %v7751
    %v7768 = vmul.f32 %v7732, %v7752
    %v7769 = vmul.f32 %v7735, %v7753
    %v7770 = vpack.c.bf16 %v7755, %v7754
    %v7771 = vpack.c.bf16 %v7757, %v7756
    %v7772 = vpack.c.bf16 %v7759, %v7758
    %v7773 = vpack.c.bf16 %v7761, %v7760
    %v7774 = vpack.c.bf16 %v7763, %v7762
    %v7775 = vpack.c.bf16 %v7765, %v7764
    %v7776 = vpack.c.bf16 %v7767, %v7766
    %v7777 = vpack.c.bf16 %v7769, %v7768
    %7786 = vrot.lane.b32.xlu0 %v6154, 64
    %v7787 = vpop.permute.xlu0 %7786
    %7788 = vrot.lane.b32.xlu0 %v6157, 64
    %v7789 = vpop.permute.xlu0 %7788
    %7790 = vrot.lane.b32.xlu0 %v6160, 64
    %v7791 = vpop.permute.xlu0 %7790
    %7792 = vrot.lane.b32.xlu0 %v6163, 64
    %v7793 = vpop.permute.xlu0 %7792
    %7794 = vrot.lane.b32.xlu0 %v6166, 64
    %v7795 = vpop.permute.xlu0 %7794
    %7796 = vrot.lane.b32.xlu0 %v6169, 64
    %v7797 = vpop.permute.xlu0 %7796
    %7798 = vrot.lane.b32.xlu0 %v6172, 64
    %v7799 = vpop.permute.xlu0 %7798
    %7800 = vrot.lane.b32.xlu0 %v6175, 64
    %v7801 = vpop.permute.xlu0 %7800
    %7810 = vrot.lane.b32.xlu0 %v6155, 64
    %v7811 = vpop.permute.xlu0 %7810
    %7812 = vrot.lane.b32.xlu0 %v6158, 64
    %v7813 = vpop.permute.xlu0 %7812
    %7814 = vrot.lane.b32.xlu0 %v6161, 64
    %v7815 = vpop.permute.xlu0 %7814
    %7816 = vrot.lane.b32.xlu0 %v6164, 64
    %v7817 = vpop.permute.xlu0 %7816
    %7818 = vrot.lane.b32.xlu0 %v6167, 64
    %v7819 = vpop.permute.xlu0 %7818
    %7820 = vrot.lane.b32.xlu0 %v6170, 64
    %v7821 = vpop.permute.xlu0 %7820
    %7822 = vrot.lane.b32.xlu0 %v6173, 64
    %v7823 = vpop.permute.xlu0 %7822
    %7824 = vrot.lane.b32.xlu0 %v6176, 64
    %v7825 = vpop.permute.xlu0 %7824
    %v7827 = vsel %vm1948, %v7787, 0
    %v7830 = vsel %vm1948, %v7789, 0
    %v7833 = vsel %vm1948, %v7791, 0
    %v7836 = vsel %vm1948, %v7793, 0
    %v7839 = vsel %vm1948, %v7795, 0
    %v7842 = vsel %vm1948, %v7797, 0
    %v7845 = vsel %vm1948, %v7799, 0
    %v7848 = vsel %vm1948, %v7801, 0
    %v7851 = vsel %vm1948, %v7811, 0
    %v7854 = vsel %vm1948, %v7813, 0
    %v7857 = vsel %vm1948, %v7815, 0
    %v7860 = vsel %vm1948, %v7817, 0
    %v7863 = vsel %vm1948, %v7819, 0
    %v7866 = vsel %vm1948, %v7821, 0
    %v7869 = vsel %vm1948, %v7823, 0
    %v7872 = vsel %vm1948, %v7825, 0
    %7874 = vmatprep.subr.bf16.mxu0 0
    %7875 = vmatpush1.bf16.xpose.msra.mxu0 %v7851
    %7876 = vmatprep.subr.bf16.mxu0 0
    %7877 = vmatpush1.bf16.xpose.msra.mxu0 %v7854
    %7878 = vmatprep.subr.bf16.mxu0 0
    %7879 = vmatpush1.bf16.xpose.msra.mxu0 %v7857
    %7880 = vmatprep.subr.bf16.mxu0 0
    %7881 = vmatpush1.bf16.xpose.msra.mxu0 %v7860
    %7882 = vmatprep.subr.bf16.mxu0 0
    %7883 = vmatpush1.bf16.xpose.msra.mxu0 %v7863
    %7884 = vmatprep.subr.bf16.mxu0 0
    %7885 = vmatpush1.bf16.xpose.msra.mxu0 %v7866
    %7886 = vmatprep.subr.bf16.mxu0 0
    %7887 = vmatpush1.bf16.xpose.msra.mxu0 %v7869
    %7888 = vmatprep.subr.bf16.mxu0 0
    %7889 = vmatpush1.bf16.xpose.msra.mxu0 %v7872
    %7890 = vmatprep.subr.bf16.mxu0 0
    %7891 = vmatpush1.bf16.xpose.msra.mxu0 0
    %7892 = vmatprep.subr.bf16.mxu0 0
    %7893 = vmatpush1.bf16.xpose.msra.mxu0 0
    %7894 = vmatprep.subr.bf16.mxu0 0
    %7895 = vmatpush1.bf16.xpose.msra.mxu0 0
    %7896 = vmatprep.subr.bf16.mxu0 0
    %7897 = vmatpush1.bf16.xpose.msra.mxu0 0
    %7898 = vmatprep.subr.bf16.mxu0 0
    %7899 = vmatpush1.bf16.xpose.msra.mxu0 0
    %7900 = vmatprep.subr.bf16.mxu0 0
    %7901 = vmatpush1.bf16.xpose.msra.mxu0 0
    %7902 = vmatprep.subr.bf16.mxu0 0
    %7903 = vmatpush1.bf16.xpose.msra.mxu0 0
    %7904 = vmatprep.subr.bf16.mxu0 0
    %7905 = vmatpush1.bf16.xpose.msra.mxu0 0
    %7906 = vmatprep.mubr.bf16.mxu0 0
    %7907 = vmatmul.mubr.bf16.gmra.mrb[0].mxu0 %v7827
    %v7908 = vpop.f32.mrb[0].mxu0
    %v7909 = vadd.f32 0.0, %v7908
    %v7910 = vpop.f32.mrb[0].mxu0
    %v7911 = vpop.f32.mrb[0].mxu0
    %v7912 = vadd.f32 0.0, %v7911
    %v7913 = vpop.f32.mrb[0].mxu0
    %7914 = vmatprep.mubr.bf16.mxu0 0
    %7915 = vmatmul.mubr.bf16.gmra.mrb[0].mxu0 %v7830
    %v7916 = vpop.f32.mrb[0].mxu0
    %v7917 = vadd.f32 0.0, %v7916
    %v7918 = vpop.f32.mrb[0].mxu0
    %v7919 = vpop.f32.mrb[0].mxu0
    %v7920 = vadd.f32 0.0, %v7919
    %v7921 = vpop.f32.mrb[0].mxu0
    %7922 = vmatprep.mubr.bf16.mxu0 0
    %7923 = vmatmul.mubr.bf16.gmra.mrb[0].mxu0 %v7833
    %v7924 = vpop.f32.mrb[0].mxu0
    %v7925 = vadd.f32 0.0, %v7924
    %v7926 = vpop.f32.mrb[0].mxu0
    %v7927 = vpop.f32.mrb[0].mxu0
    %v7928 = vadd.f32 0.0, %v7927
    %v7929 = vpop.f32.mrb[0].mxu0
    %7930 = vmatprep.mubr.bf16.mxu0 0
    %7931 = vmatmul.mubr.bf16.gmra.mrb[0].mxu0 %v7836
    %v7932 = vpop.f32.mrb[0].mxu0
    %v7933 = vadd.f32 0.0, %v7932
    %v7934 = vpop.f32.mrb[0].mxu0
    %v7935 = vpop.f32.mrb[0].mxu0
    %v7936 = vadd.f32 0.0, %v7935
    %v7937 = vpop.f32.mrb[0].mxu0
    %7938 = vmatprep.mubr.bf16.mxu0 0
    %7939 = vmatmul.mubr.bf16.gmra.mrb[0].mxu0 %v7839
    %v7940 = vpop.f32.mrb[0].mxu0
    %v7941 = vadd.f32 0.0, %v7940
    %v7942 = vpop.f32.mrb[0].mxu0
    %v7943 = vpop.f32.mrb[0].mxu0
    %v7944 = vadd.f32 0.0, %v7943
    %v7945 = vpop.f32.mrb[0].mxu0
    %7946 = vmatprep.mubr.bf16.mxu0 0
    %7947 = vmatmul.mubr.bf16.gmra.mrb[0].mxu0 %v7842
    %v7948 = vpop.f32.mrb[0].mxu0
    %v7949 = vadd.f32 0.0, %v7948
    %v7950 = vpop.f32.mrb[0].mxu0
    %v7951 = vpop.f32.mrb[0].mxu0
    %v7952 = vadd.f32 0.0, %v7951
    %v7953 = vpop.f32.mrb[0].mxu0
    %7954 = vmatprep.mubr.bf16.mxu0 0
    %7955 = vmatmul.mubr.bf16.gmra.mrb[0].mxu0 %v7845
    %v7956 = vpop.f32.mrb[0].mxu0
    %v7957 = vadd.f32 0.0, %v7956
    %v7958 = vpop.f32.mrb[0].mxu0
    %v7959 = vpop.f32.mrb[0].mxu0
    %v7960 = vadd.f32 0.0, %v7959
    %v7961 = vpop.f32.mrb[0].mxu0
    %7962 = vmatprep.mubr.bf16.mxu0 0
    %7963 = vmatmul.mubr.bf16.gmra.mrb[0].mxu0 %v7848
    %v7964 = vpop.f32.mrb[0].mxu0
    %v7965 = vadd.f32 0.0, %v7964
    %v7966 = vpop.f32.mrb[0].mxu0
    %v7967 = vpop.f32.mrb[0].mxu0
    %v7968 = vadd.f32 0.0, %v7967
    %v7969 = vpop.f32.mrb[0].mxu0
    %7970 = vdwg.mxu0
    %7971 = vmax.xlane.f32.xlu0 %v7909
    %v7972 = vpop.xlane.xlu0 %7971
    %7973 = vmax.xlane.f32.xlu0 %v7912
    %v7974 = vpop.xlane.xlu0 %7973
    %7975 = vmax.xlane.f32.xlu0 %v7917
    %v7976 = vpop.xlane.xlu0 %7975
    %7977 = vmax.xlane.f32.xlu0 %v7920
    %v7978 = vpop.xlane.xlu0 %7977
    %7979 = vmax.xlane.f32.xlu0 %v7925
    %v7980 = vpop.xlane.xlu0 %7979
    %7981 = vmax.xlane.f32.xlu0 %v7928
    %v7982 = vpop.xlane.xlu0 %7981
    %7983 = vmax.xlane.f32.xlu0 %v7933
    %v7984 = vpop.xlane.xlu0 %7983
    %7985 = vmax.xlane.f32.xlu0 %v7936
    %v7986 = vpop.xlane.xlu0 %7985
    %7987 = vmax.xlane.f32.xlu0 %v7941
    %v7988 = vpop.xlane.xlu0 %7987
    %7989 = vmax.xlane.f32.xlu0 %v7944
    %v7990 = vpop.xlane.xlu0 %7989
    %7991 = vmax.xlane.f32.xlu0 %v7949
    %v7992 = vpop.xlane.xlu0 %7991
    %7993 = vmax.xlane.f32.xlu0 %v7952
    %v7994 = vpop.xlane.xlu0 %7993
    %7995 = vmax.xlane.f32.xlu0 %v7957
    %v7996 = vpop.xlane.xlu0 %7995
    %7997 = vmax.xlane.f32.xlu0 %v7960
    %v7998 = vpop.xlane.xlu0 %7997
    %7999 = vmax.xlane.f32.xlu0 %v7965
    %v8000 = vpop.xlane.xlu0 %7999
    %8001 = vmax.xlane.f32.xlu0 %v7968
    %v8002 = vpop.xlane.xlu0 %8001
    %v8003 = vsub.f32 %v7909, %v7972
    %v8004 = vsub.f32 %v7912, %v7974
    %v8005 = vsub.f32 %v7917, %v7976
    %v8006 = vsub.f32 %v7920, %v7978
    %v8007 = vsub.f32 %v7925, %v7980
    %v8008 = vsub.f32 %v7928, %v7982
    %v8009 = vsub.f32 %v7933, %v7984
    %v8010 = vsub.f32 %v7936, %v7986
    %v8011 = vsub.f32 %v7941, %v7988
    %v8012 = vsub.f32 %v7944, %v7990
    %v8013 = vsub.f32 %v7949, %v7992
    %v8014 = vsub.f32 %v7952, %v7994
    %v8015 = vsub.f32 %v7957, %v7996
    %v8016 = vsub.f32 %v7960, %v7998
    %v8017 = vsub.f32 %v7965, %v8000
    %v8018 = vsub.f32 %v7968, %v8002
    %v8019 = vmul.f32 %v8003, 1.442695
    %v8020 = vpow.pop %v8019
    %v8021 = vmul.f32 %v8004, 1.442695
    %v8022 = vpow.pop %v8021
    %v8023 = vmul.f32 %v8005, 1.442695
    %v8024 = vpow.pop %v8023
    %v8025 = vmul.f32 %v8006, 1.442695
    %v8026 = vpow.pop %v8025
    %v8027 = vmul.f32 %v8007, 1.442695
    %v8028 = vpow.pop %v8027
    %v8029 = vmul.f32 %v8008, 1.442695
    %v8030 = vpow.pop %v8029
    %v8031 = vmul.f32 %v8009, 1.442695
    %v8032 = vpow.pop %v8031
    %v8033 = vmul.f32 %v8010, 1.442695
    %v8034 = vpow.pop %v8033
    %v8035 = vmul.f32 %v8011, 1.442695
    %v8036 = vpow.pop %v8035
    %v8037 = vmul.f32 %v8012, 1.442695
    %v8038 = vpow.pop %v8037
    %v8039 = vmul.f32 %v8013, 1.442695
    %v8040 = vpow.pop %v8039
    %v8041 = vmul.f32 %v8014, 1.442695
    %v8042 = vpow.pop %v8041
    %v8043 = vmul.f32 %v8015, 1.442695
    %v8044 = vpow.pop %v8043
    %v8045 = vmul.f32 %v8016, 1.442695
    %v8046 = vpow.pop %v8045
    %v8047 = vmul.f32 %v8017, 1.442695
    %v8048 = vpow.pop %v8047
    %v8049 = vmul.f32 %v8018, 1.442695
    %v8050 = vpow.pop %v8049
    %8051 = vadd.xlane.f32.xlu0 %v8020
    %v8052 = vpop.xlane.xlu0 %8051
    %8053 = vadd.xlane.f32.xlu0 %v8022
    %v8054 = vpop.xlane.xlu0 %8053
    %8055 = vadd.xlane.f32.xlu0 %v8024
    %v8056 = vpop.xlane.xlu0 %8055
    %8057 = vadd.xlane.f32.xlu0 %v8026
    %v8058 = vpop.xlane.xlu0 %8057
    %8059 = vadd.xlane.f32.xlu0 %v8028
    %v8060 = vpop.xlane.xlu0 %8059
    %8061 = vadd.xlane.f32.xlu0 %v8030
    %v8062 = vpop.xlane.xlu0 %8061
    %8063 = vadd.xlane.f32.xlu0 %v8032
    %v8064 = vpop.xlane.xlu0 %8063
    %8065 = vadd.xlane.f32.xlu0 %v8034
    %v8066 = vpop.xlane.xlu0 %8065
    %8067 = vadd.xlane.f32.xlu0 %v8036
    %v8068 = vpop.xlane.xlu0 %8067
    %8069 = vadd.xlane.f32.xlu0 %v8038
    %v8070 = vpop.xlane.xlu0 %8069
    %8071 = vadd.xlane.f32.xlu0 %v8040
    %v8072 = vpop.xlane.xlu0 %8071
    %8073 = vadd.xlane.f32.xlu0 %v8042
    %v8074 = vpop.xlane.xlu0 %8073
    %8075 = vadd.xlane.f32.xlu0 %v8044
    %v8076 = vpop.xlane.xlu0 %8075
    %8077 = vadd.xlane.f32.xlu0 %v8046
    %v8078 = vpop.xlane.xlu0 %8077
    %8079 = vadd.xlane.f32.xlu0 %v8048
    %v8080 = vpop.xlane.xlu0 %8079
    %8081 = vadd.xlane.f32.xlu0 %v8050
    %v8082 = vpop.xlane.xlu0 %8081
    %v8083 = vpack.c.bf16 %v8022, %v8020
    %v8084 = vpack.c.bf16 %v8026, %v8024
    %v8085 = vpack.c.bf16 %v8030, %v8028
    %v8086 = vpack.c.bf16 %v8034, %v8032
    %v8087 = vpack.c.bf16 %v8038, %v8036
    %v8088 = vpack.c.bf16 %v8042, %v8040
    %v8089 = vpack.c.bf16 %v8046, %v8044
    %v8090 = vpack.c.bf16 %v8050, %v8048
    %8099 = vrot.lane.b32.xlu0 %v6156, 64
    %v8100 = vpop.permute.xlu0 %8099
    %8101 = vrot.lane.b32.xlu0 %v6159, 64
    %v8102 = vpop.permute.xlu0 %8101
    %8103 = vrot.lane.b32.xlu0 %v6162, 64
    %v8104 = vpop.permute.xlu0 %8103
    %8105 = vrot.lane.b32.xlu0 %v6165, 64
    %v8106 = vpop.permute.xlu0 %8105
    %8107 = vrot.lane.b32.xlu0 %v6168, 64
    %v8108 = vpop.permute.xlu0 %8107
    %8109 = vrot.lane.b32.xlu0 %v6171, 64
    %v8110 = vpop.permute.xlu0 %8109
    %8111 = vrot.lane.b32.xlu0 %v6174, 64
    %v8112 = vpop.permute.xlu0 %8111
    %8113 = vrot.lane.b32.xlu0 %v6177, 64
    %v8114 = vpop.permute.xlu0 %8113
    %8123 = vmatprep.subr.bf16.mxu0 0
    %8124 = vmatpush1.bf16.msra.mxu0 %v8100
    %8125 = vmatprep.subr.bf16.mxu0 0
    %8126 = vmatpush1.bf16.msra.mxu0 %v8102
    %8127 = vmatprep.subr.bf16.mxu0 0
    %8128 = vmatpush1.bf16.msra.mxu0 %v8104
    %8129 = vmatprep.subr.bf16.mxu0 0
    %8130 = vmatpush1.bf16.msra.mxu0 %v8106
    %8131 = vmatprep.subr.bf16.mxu0 0
    %8132 = vmatpush1.bf16.msra.mxu0 %v8108
    %8133 = vmatprep.subr.bf16.mxu0 0
    %8134 = vmatpush1.bf16.msra.mxu0 %v8110
    %8135 = vmatprep.subr.bf16.mxu0 0
    %8136 = vmatpush1.bf16.msra.mxu0 %v8112
    %8137 = vmatprep.subr.bf16.mxu0 0
    %8138 = vmatpush1.bf16.msra.mxu0 %v8114
    %8139 = vmatprep.subr.bf16.mxu0 0
    %8140 = vmatpush1.bf16.msra.mxu0 0
    %8141 = vmatprep.subr.bf16.mxu0 0
    %8142 = vmatpush1.bf16.msra.mxu0 0
    %8143 = vmatprep.subr.bf16.mxu0 0
    %8144 = vmatpush1.bf16.msra.mxu0 0
    %8145 = vmatprep.subr.bf16.mxu0 0
    %8146 = vmatpush1.bf16.msra.mxu0 0
    %8147 = vmatprep.subr.bf16.mxu0 0
    %8148 = vmatpush1.bf16.msra.mxu0 0
    %8149 = vmatprep.subr.bf16.mxu0 0
    %8150 = vmatpush1.bf16.msra.mxu0 0
    %8151 = vmatprep.subr.bf16.mxu0 0
    %8152 = vmatpush1.bf16.msra.mxu0 0
    %8153 = vmatprep.subr.bf16.mxu0 0
    %8154 = vmatpush1.bf16.msra.mxu0 0
    %8155 = vmatprep.mubr.bf16.mxu0 0
    %8156 = vmatmul.mubr.bf16.gmra.mrb[0].mxu0 %v8083
    %v8157 = vpop.f32.mrb[0].mxu0
    %v8158 = vadd.f32 0.0, %v8157
    %v8159 = vpop.f32.mrb[0].mxu0
    %v8160 = vpop.f32.mrb[0].mxu0
    %v8161 = vadd.f32 0.0, %v8160
    %v8162 = vpop.f32.mrb[0].mxu0
    %8163 = vmatprep.mubr.bf16.mxu0 0
    %8164 = vmatmul.mubr.bf16.gmra.mrb[0].mxu0 %v8084
    %v8165 = vpop.f32.mrb[0].mxu0
    %v8166 = vadd.f32 0.0, %v8165
    %v8167 = vpop.f32.mrb[0].mxu0
    %v8168 = vpop.f32.mrb[0].mxu0
    %v8169 = vadd.f32 0.0, %v8168
    %v8170 = vpop.f32.mrb[0].mxu0
    %8171 = vmatprep.mubr.bf16.mxu0 0
    %8172 = vmatmul.mubr.bf16.gmra.mrb[0].mxu0 %v8085
    %v8173 = vpop.f32.mrb[0].mxu0
    %v8174 = vadd.f32 0.0, %v8173
    %v8175 = vpop.f32.mrb[0].mxu0
    %v8176 = vpop.f32.mrb[0].mxu0
    %v8177 = vadd.f32 0.0, %v8176
    %v8178 = vpop.f32.mrb[0].mxu0
    %8179 = vmatprep.mubr.bf16.mxu0 0
    %8180 = vmatmul.mubr.bf16.gmra.mrb[0].mxu0 %v8086
    %v8181 = vpop.f32.mrb[0].mxu0
    %v8182 = vadd.f32 0.0, %v8181
    %v8183 = vpop.f32.mrb[0].mxu0
    %v8184 = vpop.f32.mrb[0].mxu0
    %v8185 = vadd.f32 0.0, %v8184
    %v8186 = vpop.f32.mrb[0].mxu0
    %8187 = vmatprep.mubr.bf16.mxu0 0
    %8188 = vmatmul.mubr.bf16.gmra.mrb[0].mxu0 %v8087
    %v8189 = vpop.f32.mrb[0].mxu0
    %v8190 = vadd.f32 0.0, %v8189
    %v8191 = vpop.f32.mrb[0].mxu0
    %v8192 = vpop.f32.mrb[0].mxu0
    %v8193 = vadd.f32 0.0, %v8192
    %v8194 = vpop.f32.mrb[0].mxu0
    %8195 = vmatprep.mubr.bf16.mxu0 0
    %8196 = vmatmul.mubr.bf16.gmra.mrb[0].mxu0 %v8088
    %v8197 = vpop.f32.mrb[0].mxu0
    %v8198 = vadd.f32 0.0, %v8197
    %v8199 = vpop.f32.mrb[0].mxu0
    %v8200 = vpop.f32.mrb[0].mxu0
    %v8201 = vadd.f32 0.0, %v8200
    %v8202 = vpop.f32.mrb[0].mxu0
    %8203 = vmatprep.mubr.bf16.mxu0 0
    %8204 = vmatmul.mubr.bf16.gmra.mrb[0].mxu0 %v8089
    %v8205 = vpop.f32.mrb[0].mxu0
    %v8206 = vadd.f32 0.0, %v8205
    %v8207 = vpop.f32.mrb[0].mxu0
    %v8208 = vpop.f32.mrb[0].mxu0
    %v8209 = vadd.f32 0.0, %v8208
    %v8210 = vpop.f32.mrb[0].mxu0
    %8211 = vmatprep.mubr.bf16.mxu0 0
    %8212 = vmatmul.mubr.bf16.gmra.mrb[0].mxu0 %v8090
    %v8213 = vpop.f32.mrb[0].mxu0
    %v8214 = vadd.f32 0.0, %v8213
    %v8215 = vpop.f32.mrb[0].mxu0
    %v8216 = vpop.f32.mrb[0].mxu0
    %v8217 = vadd.f32 0.0, %v8216
    %v8218 = vpop.f32.mrb[0].mxu0
    %8219 = vdwg.mxu0
    %v8220 = vrcp.pop %v8052
    %v8221 = vrcp.pop %v8054
    %v8222 = vrcp.pop %v8056
    %v8223 = vrcp.pop %v8058
    %v8224 = vrcp.pop %v8060
    %v8225 = vrcp.pop %v8062
    %v8226 = vrcp.pop %v8064
    %v8227 = vrcp.pop %v8066
    %v8228 = vrcp.pop %v8068
    %v8229 = vrcp.pop %v8070
    %v8230 = vrcp.pop %v8072
    %v8231 = vrcp.pop %v8074
    %v8232 = vrcp.pop %v8076
    %v8233 = vrcp.pop %v8078
    %v8234 = vrcp.pop %v8080
    %v8235 = vrcp.pop %v8082
    %v8236 = vmul.f32 %v8158, %v8220
    %v8237 = vmul.f32 %v8161, %v8221
    %v8238 = vmul.f32 %v8166, %v8222
    %v8239 = vmul.f32 %v8169, %v8223
    %v8240 = vmul.f32 %v8174, %v8224
    %v8241 = vmul.f32 %v8177, %v8225
    %v8242 = vmul.f32 %v8182, %v8226
    %v8243 = vmul.f32 %v8185, %v8227
    %v8244 = vmul.f32 %v8190, %v8228
    %v8245 = vmul.f32 %v8193, %v8229
    %v8246 = vmul.f32 %v8198, %v8230
    %v8247 = vmul.f32 %v8201, %v8231
    %v8248 = vmul.f32 %v8206, %v8232
    %v8249 = vmul.f32 %v8209, %v8233
    %v8250 = vmul.f32 %v8214, %v8234
    %v8251 = vmul.f32 %v8217, %v8235
    %v8252 = vpack.c.bf16 %v8237, %v8236
    %v8253 = vpack.c.bf16 %v8239, %v8238
    %v8254 = vpack.c.bf16 %v8241, %v8240
    %v8255 = vpack.c.bf16 %v8243, %v8242
    %v8256 = vpack.c.bf16 %v8245, %v8244
    %v8257 = vpack.c.bf16 %v8247, %v8246
    %v8258 = vpack.c.bf16 %v8249, %v8248
    %v8259 = vpack.c.bf16 %v8251, %v8250
    %v8261 = vsel %vm1948, %v8252, 0
    %v8264 = vsel %vm1948, %v8253, 0
    %v8267 = vsel %vm1948, %v8254, 0
    %v8270 = vsel %vm1948, %v8255, 0
    %v8273 = vsel %vm1948, %v8256, 0
    %v8276 = vsel %vm1948, %v8257, 0
    %v8279 = vsel %vm1948, %v8258, 0
    %v8282 = vsel %vm1948, %v8259, 0
    %8284 = vmatprep.subr.bf16.mxu0 0
    %8285 = vmatpush1.bf16.msra.mxu0 %v7078
    %8286 = vmatprep.subr.bf16.mxu0 0
    %8287 = vmatpush1.bf16.msra.mxu0 %v7079
    %8288 = vmatprep.subr.bf16.mxu0 0
    %8289 = vmatpush1.bf16.msra.mxu0 %v7080
    %8290 = vmatprep.subr.bf16.mxu0 0
    %8291 = vmatpush1.bf16.msra.mxu0 %v7081
    %8292 = vmatprep.subr.bf16.mxu0 0
    %8293 = vmatpush1.bf16.msra.mxu0 0
    %8294 = vmatprep.subr.bf16.mxu0 0
    %8295 = vmatpush1.bf16.msra.mxu0 0
    %8296 = vmatprep.subr.bf16.mxu0 0
    %8297 = vmatpush1.bf16.msra.mxu0 0
    %8298 = vmatprep.subr.bf16.mxu0 0
    %8299 = vmatpush1.bf16.msra.mxu0 0
    %8300 = vmatprep.subr.bf16.mxu0 0
    %8301 = vmatpush1.bf16.msra.mxu0 0
    %8302 = vmatprep.subr.bf16.mxu0 0
    %8303 = vmatpush1.bf16.msra.mxu0 0
    %8304 = vmatprep.subr.bf16.mxu0 0
    %8305 = vmatpush1.bf16.msra.mxu0 0
    %8306 = vmatprep.subr.bf16.mxu0 0
    %8307 = vmatpush1.bf16.msra.mxu0 0
    %8308 = vmatprep.subr.bf16.mxu0 0
    %8309 = vmatpush1.bf16.msra.mxu0 0
    %8310 = vmatprep.subr.bf16.mxu0 0
    %8311 = vmatpush1.bf16.msra.mxu0 0
    %8312 = vmatprep.subr.bf16.mxu0 0
    %8313 = vmatpush1.bf16.msra.mxu0 0
    %8314 = vmatprep.subr.bf16.mxu0 0
    %8315 = vmatpush1.bf16.msra.mxu0 0
    %8316 = vmatprep.mubr.bf16.mxu0 0
    %8317 = vmatmul.mubr.bf16.gmra.mrb[0].mxu0 %v8261
    %v8318 = vpop.f32.mrb[0].mxu0
    %v8319 = vadd.f32 0.0, %v8318
    %v8320 = vpop.f32.mrb[0].mxu0
    %v8321 = vpop.f32.mrb[0].mxu0
    %v8322 = vadd.f32 0.0, %v8321
    %v8323 = vpop.f32.mrb[0].mxu0
    %8324 = vmatprep.mubr.bf16.mxu0 0
    %8325 = vmatmul.mubr.bf16.gmra.mrb[0].mxu0 %v8264
    %v8326 = vpop.f32.mrb[0].mxu0
    %v8327 = vadd.f32 0.0, %v8326
    %v8328 = vpop.f32.mrb[0].mxu0
    %v8329 = vpop.f32.mrb[0].mxu0
    %v8330 = vadd.f32 0.0, %v8329
    %v8331 = vpop.f32.mrb[0].mxu0
    %8332 = vmatprep.mubr.bf16.mxu0 0
    %8333 = vmatmul.mubr.bf16.gmra.mrb[0].mxu0 %v8267
    %v8334 = vpop.f32.mrb[0].mxu0
    %v8335 = vadd.f32 0.0, %v8334
    %v8336 = vpop.f32.mrb[0].mxu0
    %v8337 = vpop.f32.mrb[0].mxu0
    %v8338 = vadd.f32 0.0, %v8337
    %v8339 = vpop.f32.mrb[0].mxu0
    %8340 = vmatprep.mubr.bf16.mxu0 0
    %8341 = vmatmul.mubr.bf16.gmra.mrb[0].mxu0 %v8270
    %v8342 = vpop.f32.mrb[0].mxu0
    %v8343 = vadd.f32 0.0, %v8342
    %v8344 = vpop.f32.mrb[0].mxu0
    %v8345 = vpop.f32.mrb[0].mxu0
    %v8346 = vadd.f32 0.0, %v8345
    %v8347 = vpop.f32.mrb[0].mxu0
    %8348 = vmatprep.mubr.bf16.mxu0 0
    %8349 = vmatmul.mubr.bf16.gmra.mrb[0].mxu0 %v8273
    %v8350 = vpop.f32.mrb[0].mxu0
    %v8351 = vadd.f32 0.0, %v8350
    %v8352 = vpop.f32.mrb[0].mxu0
    %v8353 = vpop.f32.mrb[0].mxu0
    %v8354 = vadd.f32 0.0, %v8353
    %v8355 = vpop.f32.mrb[0].mxu0
    %8356 = vmatprep.mubr.bf16.mxu0 0
    %8357 = vmatmul.mubr.bf16.gmra.mrb[0].mxu0 %v8276
    %v8358 = vpop.f32.mrb[0].mxu0
    %v8359 = vadd.f32 0.0, %v8358
    %v8360 = vpop.f32.mrb[0].mxu0
    %v8361 = vpop.f32.mrb[0].mxu0
    %v8362 = vadd.f32 0.0, %v8361
    %v8363 = vpop.f32.mrb[0].mxu0
    %8364 = vmatprep.mubr.bf16.mxu0 0
    %8365 = vmatmul.mubr.bf16.gmra.mrb[0].mxu0 %v8279
    %v8366 = vpop.f32.mrb[0].mxu0
    %v8367 = vadd.f32 0.0, %v8366
    %v8368 = vpop.f32.mrb[0].mxu0
    %v8369 = vpop.f32.mrb[0].mxu0
    %v8370 = vadd.f32 0.0, %v8369
    %v8371 = vpop.f32.mrb[0].mxu0
    %8372 = vmatprep.mubr.bf16.mxu0 0
    %8373 = vmatmul.mubr.bf16.gmra.mrb[0].mxu0 %v8282
    %v8374 = vpop.f32.mrb[0].mxu0
    %v8375 = vadd.f32 0.0, %v8374
    %v8376 = vpop.f32.mrb[0].mxu0
    %v8377 = vpop.f32.mrb[0].mxu0
    %v8378 = vadd.f32 0.0, %v8377
    %v8379 = vpop.f32.mrb[0].mxu0
    %8380 = vdwg.mxu0
    %v8382 = vsel %vm1948, %v7770, 0
    %v8385 = vsel %vm1948, %v7771, 0
    %v8388 = vsel %vm1948, %v7772, 0
    %v8391 = vsel %vm1948, %v7773, 0
    %v8394 = vsel %vm1948, %v7774, 0
    %v8397 = vsel %vm1948, %v7775, 0
    %v8400 = vsel %vm1948, %v7776, 0
    %v8403 = vsel %vm1948, %v7777, 0
    %8405 = vmatprep.subr.bf16.mxu0 0
    %8406 = vmatpush1.bf16.msra.mxu0 %v7223
    %8407 = vmatprep.subr.bf16.mxu0 0
    %8408 = vmatpush1.bf16.msra.mxu0 %v7224
    %8409 = vmatprep.subr.bf16.mxu0 0
    %8410 = vmatpush1.bf16.msra.mxu0 %v7225
    %8411 = vmatprep.subr.bf16.mxu0 0
    %8412 = vmatpush1.bf16.msra.mxu0 %v7226
    %8413 = vmatprep.subr.bf16.mxu0 0
    %8414 = vmatpush1.bf16.msra.mxu0 0
    %8415 = vmatprep.subr.bf16.mxu0 0
    %8416 = vmatpush1.bf16.msra.mxu0 0
    %8417 = vmatprep.subr.bf16.mxu0 0
    %8418 = vmatpush1.bf16.msra.mxu0 0
    %8419 = vmatprep.subr.bf16.mxu0 0
    %8420 = vmatpush1.bf16.msra.mxu0 0
    %8421 = vmatprep.subr.bf16.mxu0 0
    %8422 = vmatpush1.bf16.msra.mxu0 0
    %8423 = vmatprep.subr.bf16.mxu0 0
    %8424 = vmatpush1.bf16.msra.mxu0 0
    %8425 = vmatprep.subr.bf16.mxu0 0
    %8426 = vmatpush1.bf16.msra.mxu0 0
    %8427 = vmatprep.subr.bf16.mxu0 0
    %8428 = vmatpush1.bf16.msra.mxu0 0
    %8429 = vmatprep.subr.bf16.mxu0 0
    %8430 = vmatpush1.bf16.msra.mxu0 0
    %8431 = vmatprep.subr.bf16.mxu0 0
    %8432 = vmatpush1.bf16.msra.mxu0 0
    %8433 = vmatprep.subr.bf16.mxu0 0
    %8434 = vmatpush1.bf16.msra.mxu0 0
    %8435 = vmatprep.subr.bf16.mxu0 0
    %8436 = vmatpush1.bf16.msra.mxu0 0
    %8437 = vmatprep.mubr.bf16.mxu0 0
    %8438 = vmatmul.mubr.bf16.gmra.mrb[0].mxu0 %v8382
    %v8439 = vpop.f32.mrb[0].mxu0
    %v8440 = vadd.f32 %v8319, %v8439
    %v8441 = vpop.f32.mrb[0].mxu0
    %v8442 = vpop.f32.mrb[0].mxu0
    %v8443 = vadd.f32 %v8322, %v8442
    %v8444 = vpop.f32.mrb[0].mxu0
    %8445 = vmatprep.mubr.bf16.mxu0 0
    %8446 = vmatmul.mubr.bf16.gmra.mrb[0].mxu0 %v8385
    %v8447 = vpop.f32.mrb[0].mxu0
    %v8448 = vadd.f32 %v8327, %v8447
    %v8449 = vpop.f32.mrb[0].mxu0
    %v8450 = vpop.f32.mrb[0].mxu0
    %v8451 = vadd.f32 %v8330, %v8450
    %v8452 = vpop.f32.mrb[0].mxu0
    %8453 = vmatprep.mubr.bf16.mxu0 0
    %8454 = vmatmul.mubr.bf16.gmra.mrb[0].mxu0 %v8388
    %v8455 = vpop.f32.mrb[0].mxu0
    %v8456 = vadd.f32 %v8335, %v8455
    %v8457 = vpop.f32.mrb[0].mxu0
    %v8458 = vpop.f32.mrb[0].mxu0
    %v8459 = vadd.f32 %v8338, %v8458
    %v8460 = vpop.f32.mrb[0].mxu0
    %8461 = vmatprep.mubr.bf16.mxu0 0
    %8462 = vmatmul.mubr.bf16.gmra.mrb[0].mxu0 %v8391
    %v8463 = vpop.f32.mrb[0].mxu0
    %v8464 = vadd.f32 %v8343, %v8463
    %v8465 = vpop.f32.mrb[0].mxu0
    %v8466 = vpop.f32.mrb[0].mxu0
    %v8467 = vadd.f32 %v8346, %v8466
    %v8468 = vpop.f32.mrb[0].mxu0
    %8469 = vmatprep.mubr.bf16.mxu0 0
    %8470 = vmatmul.mubr.bf16.gmra.mrb[0].mxu0 %v8394
    %v8471 = vpop.f32.mrb[0].mxu0
    %v8472 = vadd.f32 %v8351, %v8471
    %v8473 = vpop.f32.mrb[0].mxu0
    %v8474 = vpop.f32.mrb[0].mxu0
    %v8475 = vadd.f32 %v8354, %v8474
    %v8476 = vpop.f32.mrb[0].mxu0
    %8477 = vmatprep.mubr.bf16.mxu0 0
    %8478 = vmatmul.mubr.bf16.gmra.mrb[0].mxu0 %v8397
    %v8479 = vpop.f32.mrb[0].mxu0
    %v8480 = vadd.f32 %v8359, %v8479
    %v8481 = vpop.f32.mrb[0].mxu0
    %v8482 = vpop.f32.mrb[0].mxu0
    %v8483 = vadd.f32 %v8362, %v8482
    %v8484 = vpop.f32.mrb[0].mxu0
    %8485 = vmatprep.mubr.bf16.mxu0 0
    %8486 = vmatmul.mubr.bf16.gmra.mrb[0].mxu0 %v8400
    %v8487 = vpop.f32.mrb[0].mxu0
    %v8488 = vadd.f32 %v8367, %v8487
    %v8489 = vpop.f32.mrb[0].mxu0
    %v8490 = vpop.f32.mrb[0].mxu0
    %v8491 = vadd.f32 %v8370, %v8490
    %v8492 = vpop.f32.mrb[0].mxu0
    %8493 = vmatprep.mubr.bf16.mxu0 0
    %8494 = vmatmul.mubr.bf16.gmra.mrb[0].mxu0 %v8403
    %v8495 = vpop.f32.mrb[0].mxu0
    %v8496 = vadd.f32 %v8375, %v8495
    %v8497 = vpop.f32.mrb[0].mxu0
    %v8498 = vpop.f32.mrb[0].mxu0
    %v8499 = vadd.f32 %v8378, %v8498
    %v8500 = vpop.f32.mrb[0].mxu0
    %8501 = vdwg.mxu0
    %v8502 = vadd.f32 %v8440, %v7358
    %v8503 = vadd.f32 %v8443, %v7358
    %v8504 = vadd.f32 %v8448, %v7358
    %v8505 = vadd.f32 %v8451, %v7358
    %v8506 = vadd.f32 %v8456, %v7358
    %v8507 = vadd.f32 %v8459, %v7358
    %v8508 = vadd.f32 %v8464, %v7358
    %v8509 = vadd.f32 %v8467, %v7358
    %v8510 = vadd.f32 %v8472, %v7358
    %v8511 = vadd.f32 %v8475, %v7358
    %v8512 = vadd.f32 %v8480, %v7358
    %v8513 = vadd.f32 %v8483, %v7358
    %v8514 = vadd.f32 %v8488, %v7358
    %v8515 = vadd.f32 %v8491, %v7358
    %v8516 = vadd.f32 %v8496, %v7358
    %v8517 = vadd.f32 %v8499, %v7358
    %v8518 = vadd.f32 %v5550, %v7360
    %v8519 = vadd.f32 %v5551, %v7361
    %v8520 = vadd.f32 %v5552, %v7362
    %v8521 = vadd.f32 %v5553, %v7363
    %v8522 = vadd.f32 %v5554, %v7364
    %v8523 = vadd.f32 %v5555, %v7365
    %v8524 = vadd.f32 %v5556, %v7366
    %v8525 = vadd.f32 %v5557, %v7367
    %v8526 = vadd.f32 %v5558, %v7368
    %v8527 = vadd.f32 %v5559, %v7369
    %v8528 = vadd.f32 %v5560, %v7370
    %v8529 = vadd.f32 %v5561, %v7371
    %v8530 = vadd.f32 %v5562, %v7372
    %v8531 = vadd.f32 %v5563, %v7373
    %v8532 = vadd.f32 %v5564, %v7374
    %v8533 = vadd.f32 %v5565, %v7375
    %v8534 = vadd.f32 %v5566, %v8502
    %v8535 = vadd.f32 %v5567, %v8503
    %v8536 = vadd.f32 %v5568, %v8504
    %v8537 = vadd.f32 %v5569, %v8505
    %v8538 = vadd.f32 %v5570, %v8506
    %v8539 = vadd.f32 %v5571, %v8507
    %v8540 = vadd.f32 %v5572, %v8508
    %v8541 = vadd.f32 %v5573, %v8509
    %v8542 = vadd.f32 %v5574, %v8510
    %v8543 = vadd.f32 %v5575, %v8511
    %v8544 = vadd.f32 %v5576, %v8512
    %v8545 = vadd.f32 %v5577, %v8513
    %v8546 = vadd.f32 %v5578, %v8514
    %v8547 = vadd.f32 %v5579, %v8515
    %v8548 = vadd.f32 %v5580, %v8516
    %v8549 = vadd.f32 %v5581, %v8517
    %8550 = vadd.xlane.f32.xlu0 %v8518
    %v8551 = vpop.xlane.xlu0 %8550
    %8552 = vadd.xlane.f32.xlu0 %v8519
    %v8553 = vpop.xlane.xlu0 %8552
    %8554 = vadd.xlane.f32.xlu0 %v8520
    %v8555 = vpop.xlane.xlu0 %8554
    %8556 = vadd.xlane.f32.xlu0 %v8521
    %v8557 = vpop.xlane.xlu0 %8556
    %8558 = vadd.xlane.f32.xlu0 %v8522
    %v8559 = vpop.xlane.xlu0 %8558
    %8560 = vadd.xlane.f32.xlu0 %v8523
    %v8561 = vpop.xlane.xlu0 %8560
    %8562 = vadd.xlane.f32.xlu0 %v8524
    %v8563 = vpop.xlane.xlu0 %8562
    %8564 = vadd.xlane.f32.xlu0 %v8525
    %v8565 = vpop.xlane.xlu0 %8564
    %8566 = vadd.xlane.f32.xlu0 %v8526
    %v8567 = vpop.xlane.xlu0 %8566
    %8568 = vadd.xlane.f32.xlu0 %v8527
    %v8569 = vpop.xlane.xlu0 %8568
    %8570 = vadd.xlane.f32.xlu0 %v8528
    %v8571 = vpop.xlane.xlu0 %8570
    %8572 = vadd.xlane.f32.xlu0 %v8529
    %v8573 = vpop.xlane.xlu0 %8572
    %8574 = vadd.xlane.f32.xlu0 %v8530
    %v8575 = vpop.xlane.xlu0 %8574
    %8576 = vadd.xlane.f32.xlu0 %v8531
    %v8577 = vpop.xlane.xlu0 %8576
    %8578 = vadd.xlane.f32.xlu0 %v8532
    %v8579 = vpop.xlane.xlu0 %8578
    %8580 = vadd.xlane.f32.xlu0 %v8533
    %v8581 = vpop.xlane.xlu0 %8580
    %8582 = vadd.xlane.f32.xlu0 %v8534
    %v8583 = vpop.xlane.xlu0 %8582
    %8584 = vadd.xlane.f32.xlu0 %v8535
    %v8585 = vpop.xlane.xlu0 %8584
    %8586 = vadd.xlane.f32.xlu0 %v8536
    %v8587 = vpop.xlane.xlu0 %8586
    %8588 = vadd.xlane.f32.xlu0 %v8537
    %v8589 = vpop.xlane.xlu0 %8588
    %8590 = vadd.xlane.f32.xlu0 %v8538
    %v8591 = vpop.xlane.xlu0 %8590
    %8592 = vadd.xlane.f32.xlu0 %v8539
    %v8593 = vpop.xlane.xlu0 %8592
    %8594 = vadd.xlane.f32.xlu0 %v8540
    %v8595 = vpop.xlane.xlu0 %8594
    %8596 = vadd.xlane.f32.xlu0 %v8541
    %v8597 = vpop.xlane.xlu0 %8596
    %8598 = vadd.xlane.f32.xlu0 %v8542
    %v8599 = vpop.xlane.xlu0 %8598
    %8600 = vadd.xlane.f32.xlu0 %v8543
    %v8601 = vpop.xlane.xlu0 %8600
    %8602 = vadd.xlane.f32.xlu0 %v8544
    %v8603 = vpop.xlane.xlu0 %8602
    %8604 = vadd.xlane.f32.xlu0 %v8545
    %v8605 = vpop.xlane.xlu0 %8604
    %8606 = vadd.xlane.f32.xlu0 %v8546
    %v8607 = vpop.xlane.xlu0 %8606
    %8608 = vadd.xlane.f32.xlu0 %v8547
    %v8609 = vpop.xlane.xlu0 %8608
    %8610 = vadd.xlane.f32.xlu0 %v8548
    %v8611 = vpop.xlane.xlu0 %8610
    %8612 = vadd.xlane.f32.xlu0 %v8549
    %v8613 = vpop.xlane.xlu0 %8612
    %v8614 = vmul.f32 %v8551, %v4384
    %v8615 = vmul.f32 %v8553, %v4384
    %v8616 = vmul.f32 %v8555, %v4384
    %v8617 = vmul.f32 %v8557, %v4384
    %v8618 = vmul.f32 %v8559, %v4384
    %v8619 = vmul.f32 %v8561, %v4384
    %v8620 = vmul.f32 %v8563, %v4384
    %v8621 = vmul.f32 %v8565, %v4384
    %v8622 = vmul.f32 %v8567, %v4384
    %v8623 = vmul.f32 %v8569, %v4384
    %v8624 = vmul.f32 %v8571, %v4384
    %v8625 = vmul.f32 %v8573, %v4384
    %v8626 = vmul.f32 %v8575, %v4384
    %v8627 = vmul.f32 %v8577, %v4384
    %v8628 = vmul.f32 %v8579, %v4384
    %v8629 = vmul.f32 %v8581, %v4384
    %v8630 = vmul.f32 %v8583, %v4384
    %v8631 = vmul.f32 %v8585, %v4384
    %v8632 = vmul.f32 %v8587, %v4384
    %v8633 = vmul.f32 %v8589, %v4384
    %v8634 = vmul.f32 %v8591, %v4384
    %v8635 = vmul.f32 %v8593, %v4384
    %v8636 = vmul.f32 %v8595, %v4384
    %v8637 = vmul.f32 %v8597, %v4384
    %v8638 = vmul.f32 %v8599, %v4384
    %v8639 = vmul.f32 %v8601, %v4384
    %v8640 = vmul.f32 %v8603, %v4384
    %v8641 = vmul.f32 %v8605, %v4384
    %v8642 = vmul.f32 %v8607, %v4384
    %v8643 = vmul.f32 %v8609, %v4384
    %v8644 = vmul.f32 %v8611, %v4384
    %v8645 = vmul.f32 %v8613, %v4384
    %v8646 = vmul.f32 %v8518, %v8518
    %v8647 = vmul.f32 %v8519, %v8519
    %v8648 = vmul.f32 %v8520, %v8520
    %v8649 = vmul.f32 %v8521, %v8521
    %v8650 = vmul.f32 %v8522, %v8522
    %v8651 = vmul.f32 %v8523, %v8523
    %v8652 = vmul.f32 %v8524, %v8524
    %v8653 = vmul.f32 %v8525, %v8525
    %v8654 = vmul.f32 %v8526, %v8526
    %v8655 = vmul.f32 %v8527, %v8527
    %v8656 = vmul.f32 %v8528, %v8528
    %v8657 = vmul.f32 %v8529, %v8529
    %v8658 = vmul.f32 %v8530, %v8530
    %v8659 = vmul.f32 %v8531, %v8531
    %v8660 = vmul.f32 %v8532, %v8532
    %v8661 = vmul.f32 %v8533, %v8533
    %v8662 = vmul.f32 %v8534, %v8534
    %v8663 = vmul.f32 %v8535, %v8535
    %v8664 = vmul.f32 %v8536, %v8536
    %v8665 = vmul.f32 %v8537, %v8537
    %v8666 = vmul.f32 %v8538, %v8538
    %v8667 = vmul.f32 %v8539, %v8539
    %v8668 = vmul.f32 %v8540, %v8540
    %v8669 = vmul.f32 %v8541, %v8541
    %v8670 = vmul.f32 %v8542, %v8542
    %v8671 = vmul.f32 %v8543, %v8543
    %v8672 = vmul.f32 %v8544, %v8544
    %v8673 = vmul.f32 %v8545, %v8545
    %v8674 = vmul.f32 %v8546, %v8546
    %v8675 = vmul.f32 %v8547, %v8547
    %v8676 = vmul.f32 %v8548, %v8548
    %v8677 = vmul.f32 %v8549, %v8549
    %8678 = vadd.xlane.f32.xlu0 %v8646
    %v8679 = vpop.xlane.xlu0 %8678
    %8680 = vadd.xlane.f32.xlu0 %v8647
    %v8681 = vpop.xlane.xlu0 %8680
    %8682 = vadd.xlane.f32.xlu0 %v8648
    %v8683 = vpop.xlane.xlu0 %8682
    %8684 = vadd.xlane.f32.xlu0 %v8649
    %v8685 = vpop.xlane.xlu0 %8684
    %8686 = vadd.xlane.f32.xlu0 %v8650
    %v8687 = vpop.xlane.xlu0 %8686
    %8688 = vadd.xlane.f32.xlu0 %v8651
    %v8689 = vpop.xlane.xlu0 %8688
    %8690 = vadd.xlane.f32.xlu0 %v8652
    %v8691 = vpop.xlane.xlu0 %8690
    %8692 = vadd.xlane.f32.xlu0 %v8653
    %v8693 = vpop.xlane.xlu0 %8692
    %8694 = vadd.xlane.f32.xlu0 %v8654
    %v8695 = vpop.xlane.xlu0 %8694
    %8696 = vadd.xlane.f32.xlu0 %v8655
    %v8697 = vpop.xlane.xlu0 %8696
    %8698 = vadd.xlane.f32.xlu0 %v8656
    %v8699 = vpop.xlane.xlu0 %8698
    %8700 = vadd.xlane.f32.xlu0 %v8657
    %v8701 = vpop.xlane.xlu0 %8700
    %8702 = vadd.xlane.f32.xlu0 %v8658
    %v8703 = vpop.xlane.xlu0 %8702
    %8704 = vadd.xlane.f32.xlu0 %v8659
    %v8705 = vpop.xlane.xlu0 %8704
    %8706 = vadd.xlane.f32.xlu0 %v8660
    %v8707 = vpop.xlane.xlu0 %8706
    %8708 = vadd.xlane.f32.xlu0 %v8661
    %v8709 = vpop.xlane.xlu0 %8708
    %8710 = vadd.xlane.f32.xlu0 %v8662
    %v8711 = vpop.xlane.xlu0 %8710
    %8712 = vadd.xlane.f32.xlu0 %v8663
    %v8713 = vpop.xlane.xlu0 %8712
    %8714 = vadd.xlane.f32.xlu0 %v8664
    %v8715 = vpop.xlane.xlu0 %8714
    %8716 = vadd.xlane.f32.xlu0 %v8665
    %v8717 = vpop.xlane.xlu0 %8716
    %8718 = vadd.xlane.f32.xlu0 %v8666
    %v8719 = vpop.xlane.xlu0 %8718
    %8720 = vadd.xlane.f32.xlu0 %v8667
    %v8721 = vpop.xlane.xlu0 %8720
    %8722 = vadd.xlane.f32.xlu0 %v8668
    %v8723 = vpop.xlane.xlu0 %8722
    %8724 = vadd.xlane.f32.xlu0 %v8669
    %v8725 = vpop.xlane.xlu0 %8724
    %8726 = vadd.xlane.f32.xlu0 %v8670
    %v8727 = vpop.xlane.xlu0 %8726
    %8728 = vadd.xlane.f32.xlu0 %v8671
    %v8729 = vpop.xlane.xlu0 %8728
    %8730 = vadd.xlane.f32.xlu0 %v8672
    %v8731 = vpop.xlane.xlu0 %8730
    %8732 = vadd.xlane.f32.xlu0 %v8673
    %v8733 = vpop.xlane.xlu0 %8732
    %8734 = vadd.xlane.f32.xlu0 %v8674
    %v8735 = vpop.xlane.xlu0 %8734
    %8736 = vadd.xlane.f32.xlu0 %v8675
    %v8737 = vpop.xlane.xlu0 %8736
    %8738 = vadd.xlane.f32.xlu0 %v8676
    %v8739 = vpop.xlane.xlu0 %8738
    %8740 = vadd.xlane.f32.xlu0 %v8677
    %v8741 = vpop.xlane.xlu0 %8740
    %v8742 = vmul.f32 %v8679, %v4384
    %v8743 = vmul.f32 %v8681, %v4384
    %v8744 = vmul.f32 %v8683, %v4384
    %v8745 = vmul.f32 %v8685, %v4384
    %v8746 = vmul.f32 %v8687, %v4384
    %v8747 = vmul.f32 %v8689, %v4384
    %v8748 = vmul.f32 %v8691, %v4384
    %v8749 = vmul.f32 %v8693, %v4384
    %v8750 = vmul.f32 %v8695, %v4384
    %v8751 = vmul.f32 %v8697, %v4384
    %v8752 = vmul.f32 %v8699, %v4384
    %v8753 = vmul.f32 %v8701, %v4384
    %v8754 = vmul.f32 %v8703, %v4384
    %v8755 = vmul.f32 %v8705, %v4384
    %v8756 = vmul.f32 %v8707, %v4384
    %v8757 = vmul.f32 %v8709, %v4384
    %v8758 = vmul.f32 %v8711, %v4384
    %v8759 = vmul.f32 %v8713, %v4384
    %v8760 = vmul.f32 %v8715, %v4384
    %v8761 = vmul.f32 %v8717, %v4384
    %v8762 = vmul.f32 %v8719, %v4384
    %v8763 = vmul.f32 %v8721, %v4384
    %v8764 = vmul.f32 %v8723, %v4384
    %v8765 = vmul.f32 %v8725, %v4384
    %v8766 = vmul.f32 %v8727, %v4384
    %v8767 = vmul.f32 %v8729, %v4384
    %v8768 = vmul.f32 %v8731, %v4384
    %v8769 = vmul.f32 %v8733, %v4384
    %v8770 = vmul.f32 %v8735, %v4384
    %v8771 = vmul.f32 %v8737, %v4384
    %v8772 = vmul.f32 %v8739, %v4384
    %v8773 = vmul.f32 %v8741, %v4384
    %v8774 = vsub.f32 %v8518, %v8614
    %v8775 = vsub.f32 %v8519, %v8615
    %v8776 = vsub.f32 %v8520, %v8616
    %v8777 = vsub.f32 %v8521, %v8617
    %v8778 = vsub.f32 %v8522, %v8618
    %v8779 = vsub.f32 %v8523, %v8619
    %v8780 = vsub.f32 %v8524, %v8620
    %v8781 = vsub.f32 %v8525, %v8621
    %v8782 = vsub.f32 %v8526, %v8622
    %v8783 = vsub.f32 %v8527, %v8623
    %v8784 = vsub.f32 %v8528, %v8624
    %v8785 = vsub.f32 %v8529, %v8625
    %v8786 = vsub.f32 %v8530, %v8626
    %v8787 = vsub.f32 %v8531, %v8627
    %v8788 = vsub.f32 %v8532, %v8628
    %v8789 = vsub.f32 %v8533, %v8629
    %v8790 = vsub.f32 %v8534, %v8630
    %v8791 = vsub.f32 %v8535, %v8631
    %v8792 = vsub.f32 %v8536, %v8632
    %v8793 = vsub.f32 %v8537, %v8633
    %v8794 = vsub.f32 %v8538, %v8634
    %v8795 = vsub.f32 %v8539, %v8635
    %v8796 = vsub.f32 %v8540, %v8636
    %v8797 = vsub.f32 %v8541, %v8637
    %v8798 = vsub.f32 %v8542, %v8638
    %v8799 = vsub.f32 %v8543, %v8639
    %v8800 = vsub.f32 %v8544, %v8640
    %v8801 = vsub.f32 %v8545, %v8641
    %v8802 = vsub.f32 %v8546, %v8642
    %v8803 = vsub.f32 %v8547, %v8643
    %v8804 = vsub.f32 %v8548, %v8644
    %v8805 = vsub.f32 %v8549, %v8645
    %v8806 = vmul.f32 %v8614, %v8614
    %v8807 = vmul.f32 %v8615, %v8615
    %v8808 = vmul.f32 %v8616, %v8616
    %v8809 = vmul.f32 %v8617, %v8617
    %v8810 = vmul.f32 %v8618, %v8618
    %v8811 = vmul.f32 %v8619, %v8619
    %v8812 = vmul.f32 %v8620, %v8620
    %v8813 = vmul.f32 %v8621, %v8621
    %v8814 = vmul.f32 %v8622, %v8622
    %v8815 = vmul.f32 %v8623, %v8623
    %v8816 = vmul.f32 %v8624, %v8624
    %v8817 = vmul.f32 %v8625, %v8625
    %v8818 = vmul.f32 %v8626, %v8626
    %v8819 = vmul.f32 %v8627, %v8627
    %v8820 = vmul.f32 %v8628, %v8628
    %v8821 = vmul.f32 %v8629, %v8629
    %v8822 = vmul.f32 %v8630, %v8630
    %v8823 = vmul.f32 %v8631, %v8631
    %v8824 = vmul.f32 %v8632, %v8632
    %v8825 = vmul.f32 %v8633, %v8633
    %v8826 = vmul.f32 %v8634, %v8634
    %v8827 = vmul.f32 %v8635, %v8635
    %v8828 = vmul.f32 %v8636, %v8636
    %v8829 = vmul.f32 %v8637, %v8637
    %v8830 = vmul.f32 %v8638, %v8638
    %v8831 = vmul.f32 %v8639, %v8639
    %v8832 = vmul.f32 %v8640, %v8640
    %v8833 = vmul.f32 %v8641, %v8641
    %v8834 = vmul.f32 %v8642, %v8642
    %v8835 = vmul.f32 %v8643, %v8643
    %v8836 = vmul.f32 %v8644, %v8644
    %v8837 = vmul.f32 %v8645, %v8645
    %v8838 = vsub.f32 %v8742, %v8806
    %v8839 = vsub.f32 %v8743, %v8807
    %v8840 = vsub.f32 %v8744, %v8808
    %v8841 = vsub.f32 %v8745, %v8809
    %v8842 = vsub.f32 %v8746, %v8810
    %v8843 = vsub.f32 %v8747, %v8811
    %v8844 = vsub.f32 %v8748, %v8812
    %v8845 = vsub.f32 %v8749, %v8813
    %v8846 = vsub.f32 %v8750, %v8814
    %v8847 = vsub.f32 %v8751, %v8815
    %v8848 = vsub.f32 %v8752, %v8816
    %v8849 = vsub.f32 %v8753, %v8817
    %v8850 = vsub.f32 %v8754, %v8818
    %v8851 = vsub.f32 %v8755, %v8819
    %v8852 = vsub.f32 %v8756, %v8820
    %v8853 = vsub.f32 %v8757, %v8821
    %v8854 = vsub.f32 %v8758, %v8822
    %v8855 = vsub.f32 %v8759, %v8823
    %v8856 = vsub.f32 %v8760, %v8824
    %v8857 = vsub.f32 %v8761, %v8825
    %v8858 = vsub.f32 %v8762, %v8826
    %v8859 = vsub.f32 %v8763, %v8827
    %v8860 = vsub.f32 %v8764, %v8828
    %v8861 = vsub.f32 %v8765, %v8829
    %v8862 = vsub.f32 %v8766, %v8830
    %v8863 = vsub.f32 %v8767, %v8831
    %v8864 = vsub.f32 %v8768, %v8832
    %v8865 = vsub.f32 %v8769, %v8833
    %v8866 = vsub.f32 %v8770, %v8834
    %v8867 = vsub.f32 %v8771, %v8835
    %v8868 = vsub.f32 %v8772, %v8836
    %v8869 = vsub.f32 %v8773, %v8837
    %v8870 = vadd.f32 %v8838, 1e-06
    %v8871 = vadd.f32 %v8839, 1e-06
    %v8872 = vadd.f32 %v8840, 1e-06
    %v8873 = vadd.f32 %v8841, 1e-06
    %v8874 = vadd.f32 %v8842, 1e-06
    %v8875 = vadd.f32 %v8843, 1e-06
    %v8876 = vadd.f32 %v8844, 1e-06
    %v8877 = vadd.f32 %v8845, 1e-06
    %v8878 = vadd.f32 %v8846, 1e-06
    %v8879 = vadd.f32 %v8847, 1e-06
    %v8880 = vadd.f32 %v8848, 1e-06
    %v8881 = vadd.f32 %v8849, 1e-06
    %v8882 = vadd.f32 %v8850, 1e-06
    %v8883 = vadd.f32 %v8851, 1e-06
    %v8884 = vadd.f32 %v8852, 1e-06
    %v8885 = vadd.f32 %v8853, 1e-06
    %v8886 = vadd.f32 %v8854, 1e-06
    %v8887 = vadd.f32 %v8855, 1e-06
    %v8888 = vadd.f32 %v8856, 1e-06
    %v8889 = vadd.f32 %v8857, 1e-06
    %v8890 = vadd.f32 %v8858, 1e-06
    %v8891 = vadd.f32 %v8859, 1e-06
    %v8892 = vadd.f32 %v8860, 1e-06
    %v8893 = vadd.f32 %v8861, 1e-06
    %v8894 = vadd.f32 %v8862, 1e-06
    %v8895 = vadd.f32 %v8863, 1e-06
    %v8896 = vadd.f32 %v8864, 1e-06
    %v8897 = vadd.f32 %v8865, 1e-06
    %v8898 = vadd.f32 %v8866, 1e-06
    %v8899 = vadd.f32 %v8867, 1e-06
    %v8900 = vadd.f32 %v8868, 1e-06
    %v8901 = vadd.f32 %v8869, 1e-06
    %v8902 = vrsqrt.pop %v8870
    %v8903 = vrsqrt.pop %v8871
    %v8904 = vrsqrt.pop %v8872
    %v8905 = vrsqrt.pop %v8873
    %v8906 = vrsqrt.pop %v8874
    %v8907 = vrsqrt.pop %v8875
    %v8908 = vrsqrt.pop %v8876
    %v8909 = vrsqrt.pop %v8877
    %v8910 = vrsqrt.pop %v8878
    %v8911 = vrsqrt.pop %v8879
    %v8912 = vrsqrt.pop %v8880
    %v8913 = vrsqrt.pop %v8881
    %v8914 = vrsqrt.pop %v8882
    %v8915 = vrsqrt.pop %v8883
    %v8916 = vrsqrt.pop %v8884
    %v8917 = vrsqrt.pop %v8885
    %v8918 = vrsqrt.pop %v8886
    %v8919 = vrsqrt.pop %v8887
    %v8920 = vrsqrt.pop %v8888
    %v8921 = vrsqrt.pop %v8889
    %v8922 = vrsqrt.pop %v8890
    %v8923 = vrsqrt.pop %v8891
    %v8924 = vrsqrt.pop %v8892
    %v8925 = vrsqrt.pop %v8893
    %v8926 = vrsqrt.pop %v8894
    %v8927 = vrsqrt.pop %v8895
    %v8928 = vrsqrt.pop %v8896
    %v8929 = vrsqrt.pop %v8897
    %v8930 = vrsqrt.pop %v8898
    %v8931 = vrsqrt.pop %v8899
    %v8932 = vrsqrt.pop %v8900
    %v8933 = vrsqrt.pop %v8901
    %v8934 = vmul.f32 %v8774, %v8902
    %v8935 = vmul.f32 %v8775, %v8903
    %v8936 = vmul.f32 %v8776, %v8904
    %v8937 = vmul.f32 %v8777, %v8905
    %v8938 = vmul.f32 %v8778, %v8906
    %v8939 = vmul.f32 %v8779, %v8907
    %v8940 = vmul.f32 %v8780, %v8908
    %v8941 = vmul.f32 %v8781, %v8909
    %v8942 = vmul.f32 %v8782, %v8910
    %v8943 = vmul.f32 %v8783, %v8911
    %v8944 = vmul.f32 %v8784, %v8912
    %v8945 = vmul.f32 %v8785, %v8913
    %v8946 = vmul.f32 %v8786, %v8914
    %v8947 = vmul.f32 %v8787, %v8915
    %v8948 = vmul.f32 %v8788, %v8916
    %v8949 = vmul.f32 %v8789, %v8917
    %v8950 = vmul.f32 %v8790, %v8918
    %v8951 = vmul.f32 %v8791, %v8919
    %v8952 = vmul.f32 %v8792, %v8920
    %v8953 = vmul.f32 %v8793, %v8921
    %v8954 = vmul.f32 %v8794, %v8922
    %v8955 = vmul.f32 %v8795, %v8923
    %v8956 = vmul.f32 %v8796, %v8924
    %v8957 = vmul.f32 %v8797, %v8925
    %v8958 = vmul.f32 %v8798, %v8926
    %v8959 = vmul.f32 %v8799, %v8927
    %v8960 = vmul.f32 %v8800, %v8928
    %v8961 = vmul.f32 %v8801, %v8929
    %v8962 = vmul.f32 %v8802, %v8930
    %v8963 = vmul.f32 %v8803, %v8931
    %v8964 = vmul.f32 %v8804, %v8932
    %v8965 = vmul.f32 %v8805, %v8933
    %s8966 = scalar_lea.vmem [#allocation11], 1
    %v8967 = vld [vmem:[%s8966] sm:$0x1]
    %v8969 = vlaneseq
    %v8970 = vshrl.u32 %v8969, 7
    %v8971 = vsub.s32 0, %v8970
    %v8972 = vrot.slane %v8967, %v8971
    %v8974 = vmul.f32 %v8934, %v8972
    %v8975 = vmul.f32 %v8935, %v8972
    %v8976 = vmul.f32 %v8936, %v8972
    %v8977 = vmul.f32 %v8937, %v8972
    %v8978 = vmul.f32 %v8938, %v8972
    %v8979 = vmul.f32 %v8939, %v8972
    %v8980 = vmul.f32 %v8940, %v8972
    %v8981 = vmul.f32 %v8941, %v8972
    %v8982 = vmul.f32 %v8942, %v8972
    %v8983 = vmul.f32 %v8943, %v8972
    %v8984 = vmul.f32 %v8944, %v8972
    %v8985 = vmul.f32 %v8945, %v8972
    %v8986 = vmul.f32 %v8946, %v8972
    %v8987 = vmul.f32 %v8947, %v8972
    %v8988 = vmul.f32 %v8948, %v8972
    %v8989 = vmul.f32 %v8949, %v8972
    %v8990 = vmul.f32 %v8950, %v8972
    %v8991 = vmul.f32 %v8951, %v8972
    %v8992 = vmul.f32 %v8952, %v8972
    %v8993 = vmul.f32 %v8953, %v8972
    %v8994 = vmul.f32 %v8954, %v8972
    %v8995 = vmul.f32 %v8955, %v8972
    %v8996 = vmul.f32 %v8956, %v8972
    %v8997 = vmul.f32 %v8957, %v8972
    %v8998 = vmul.f32 %v8958, %v8972
    %v8999 = vmul.f32 %v8959, %v8972
    %v9000 = vmul.f32 %v8960, %v8972
    %v9001 = vmul.f32 %v8961, %v8972
    %v9002 = vmul.f32 %v8962, %v8972
    %v9003 = vmul.f32 %v8963, %v8972
    %v9004 = vmul.f32 %v8964, %v8972
    %v9005 = vmul.f32 %v8965, %v8972
    %s9006 = scalar_lea.vmem [#allocation13], 1
    %v9007 = vld [vmem:[%s9006] sm:$0x1]
    %v9009 = vlaneseq
    %v9010 = vshrl.u32 %v9009, 7
    %v9011 = vsub.s32 0, %v9010
    %v9012 = vrot.slane %v9007, %v9011
    %v9014 = vadd.f32 %v8974, %v9012
    %v9015 = vadd.f32 %v8975, %v9012
    %v9016 = vadd.f32 %v8976, %v9012
    %v9017 = vadd.f32 %v8977, %v9012
    %v9018 = vadd.f32 %v8978, %v9012
    %v9019 = vadd.f32 %v8979, %v9012
    %v9020 = vadd.f32 %v8980, %v9012
    %v9021 = vadd.f32 %v8981, %v9012
    %v9022 = vadd.f32 %v8982, %v9012
    %v9023 = vadd.f32 %v8983, %v9012
    %v9024 = vadd.f32 %v8984, %v9012
    %v9025 = vadd.f32 %v8985, %v9012
    %v9026 = vadd.f32 %v8986, %v9012
    %v9027 = vadd.f32 %v8987, %v9012
    %v9028 = vadd.f32 %v8988, %v9012
    %v9029 = vadd.f32 %v8989, %v9012
    %v9030 = vadd.f32 %v8990, %v9012
    %v9031 = vadd.f32 %v8991, %v9012
    %v9032 = vadd.f32 %v8992, %v9012
    %v9033 = vadd.f32 %v8993, %v9012
    %v9034 = vadd.f32 %v8994, %v9012
    %v9035 = vadd.f32 %v8995, %v9012
    %v9036 = vadd.f32 %v8996, %v9012
    %v9037 = vadd.f32 %v8997, %v9012
    %v9038 = vadd.f32 %v8998, %v9012
    %v9039 = vadd.f32 %v8999, %v9012
    %v9040 = vadd.f32 %v9000, %v9012
    %v9041 = vadd.f32 %v9001, %v9012
    %v9042 = vadd.f32 %v9002, %v9012
    %v9043 = vadd.f32 %v9003, %v9012
    %v9044 = vadd.f32 %v9004, %v9012
    %v9045 = vadd.f32 %v9005, %v9012
    %v9046 = vpack.c.bf16 %v9015, %v9014
    %v9047 = vpack.c.bf16 %v9017, %v9016
    %v9048 = vpack.c.bf16 %v9019, %v9018
    %v9049 = vpack.c.bf16 %v9021, %v9020
    %v9050 = vpack.c.bf16 %v9023, %v9022
    %v9051 = vpack.c.bf16 %v9025, %v9024
    %v9052 = vpack.c.bf16 %v9027, %v9026
    %v9053 = vpack.c.bf16 %v9029, %v9028
    %v9054 = vpack.c.bf16 %v9031, %v9030
    %v9055 = vpack.c.bf16 %v9033, %v9032
    %v9056 = vpack.c.bf16 %v9035, %v9034
    %v9057 = vpack.c.bf16 %v9037, %v9036
    %v9058 = vpack.c.bf16 %v9039, %v9038
    %v9059 = vpack.c.bf16 %v9041, %v9040
    %v9060 = vpack.c.bf16 %v9043, %v9042
    %v9061 = vpack.c.bf16 %v9045, %v9044
    %s9062 = scalar_lea.vmem [#allocation14], 64
    %v9063 = vld [vmem:[%s9062] sm:$0xf]
    %v9064 = vld [vmem:[%s9062 + $0x4] sm:$0xf]
    %v9065 = vld [vmem:[%s9062 + $0x8] sm:$0xf]
    %v9066 = vld [vmem:[%s9062 + $0xc] sm:$0xf]
    %v9067 = vld [vmem:[%s9062 + $0x10] sm:$0xf]
    %v9068 = vld [vmem:[%s9062 + $0x14] sm:$0xf]
    %v9069 = vld [vmem:[%s9062 + $0x18] sm:$0xf]
    %v9070 = vld [vmem:[%s9062 + $0x1c] sm:$0xf]
    %v9071 = vld [vmem:[%s9062 + $0x20] sm:$0xf]
    %v9072 = vld [vmem:[%s9062 + $0x24] sm:$0xf]
    %v9073 = vld [vmem:[%s9062 + $0x28] sm:$0xf]
    %v9074 = vld [vmem:[%s9062 + $0x2c] sm:$0xf]
    %v9075 = vld [vmem:[%s9062 + $0x30] sm:$0xf]
    %v9076 = vld [vmem:[%s9062 + $0x34] sm:$0xf]
    %v9077 = vld [vmem:[%s9062 + $0x38] sm:$0xf]
    %v9078 = vld [vmem:[%s9062 + $0x3c] sm:$0xf]
    %v9095 = vunpack.c.l.b16 %v9063
    %v9096 = vunpack.c.l.b16 %v9064
    %v9097 = vunpack.c.l.b16 %v9065
    %v9098 = vunpack.c.l.b16 %v9066
    %v9099 = vunpack.c.l.b16 %v9067
    %v9100 = vunpack.c.l.b16 %v9068
    %v9101 = vunpack.c.l.b16 %v9069
    %v9102 = vunpack.c.l.b16 %v9070
    %v9103 = vunpack.c.l.b16 %v9071
    %v9104 = vunpack.c.l.b16 %v9072
    %v9105 = vunpack.c.l.b16 %v9073
    %v9106 = vunpack.c.l.b16 %v9074
    %v9107 = vunpack.c.l.b16 %v9075
    %v9108 = vunpack.c.l.b16 %v9076
    %v9109 = vunpack.c.l.b16 %v9077
    %v9110 = vunpack.c.l.b16 %v9078
    %v9111 = vpack.c.b16 %v9096, %v9095
    %v9112 = vpack.c.b16 %v9098, %v9097
    %v9113 = vpack.c.b16 %v9100, %v9099
    %v9114 = vpack.c.b16 %v9102, %v9101
    %v9115 = vpack.c.b16 %v9104, %v9103
    %v9116 = vpack.c.b16 %v9106, %v9105
    %v9117 = vpack.c.b16 %v9108, %v9107
    %v9118 = vpack.c.b16 %v9110, %v9109
    %9127 = vmatprep.subr.bf16.mxu0 0
    %9128 = vmatpush1.bf16.msra.mxu0 %v9111
    %9129 = vmatprep.subr.bf16.mxu0 0
    %9130 = vmatpush1.bf16.msra.mxu0 %v9112
    %9131 = vmatprep.subr.bf16.mxu0 0
    %9132 = vmatpush1.bf16.msra.mxu0 %v9113
    %9133 = vmatprep.subr.bf16.mxu0 0
    %9134 = vmatpush1.bf16.msra.mxu0 %v9114
    %9135 = vmatprep.subr.bf16.mxu0 0
    %9136 = vmatpush1.bf16.msra.mxu0 %v9115
    %9137 = vmatprep.subr.bf16.mxu0 0
    %9138 = vmatpush1.bf16.msra.mxu0 %v9116
    %9139 = vmatprep.subr.bf16.mxu0 0
    %9140 = vmatpush1.bf16.msra.mxu0 %v9117
    %9141 = vmatprep.subr.bf16.mxu0 0
    %9142 = vmatpush1.bf16.msra.mxu0 %v9118
    %9143 = vmatprep.subr.bf16.mxu0 0
    %9144 = vmatpush1.bf16.msra.mxu0 0
    %9145 = vmatprep.subr.bf16.mxu0 0
    %9146 = vmatpush1.bf16.msra.mxu0 0
    %9147 = vmatprep.subr.bf16.mxu0 0
    %9148 = vmatpush1.bf16.msra.mxu0 0
    %9149 = vmatprep.subr.bf16.mxu0 0
    %9150 = vmatpush1.bf16.msra.mxu0 0
    %9151 = vmatprep.subr.bf16.mxu0 0
    %9152 = vmatpush1.bf16.msra.mxu0 0
    %9153 = vmatprep.subr.bf16.mxu0 0
    %9154 = vmatpush1.bf16.msra.mxu0 0
    %9155 = vmatprep.subr.bf16.mxu0 0
    %9156 = vmatpush1.bf16.msra.mxu0 0
    %9157 = vmatprep.subr.bf16.mxu0 0
    %9158 = vmatpush1.bf16.msra.mxu0 0
    %9159 = vmatprep.mubr.bf16.mxu0 0
    %9160 = vmatmul.mubr.bf16.gmra.mrb[0].mxu0 %v9046
    %v9161 = vpop.f32.mrb[0].mxu0
    %v9162 = vadd.f32 0.0, %v9161
    %v9163 = vpop.f32.mrb[0].mxu0
    %v9164 = vpop.f32.mrb[0].mxu0
    %v9165 = vadd.f32 0.0, %v9164
    %v9166 = vpop.f32.mrb[0].mxu0
    %9167 = vmatprep.mubr.bf16.mxu0 0
    %9168 = vmatmul.mubr.bf16.gmra.mrb[0].mxu0 %v9047
    %v9169 = vpop.f32.mrb[0].mxu0
    %v9170 = vadd.f32 0.0, %v9169
    %v9171 = vpop.f32.mrb[0].mxu0
    %v9172 = vpop.f32.mrb[0].mxu0
    %v9173 = vadd.f32 0.0, %v9172
    %v9174 = vpop.f32.mrb[0].mxu0
    %9175 = vmatprep.mubr.bf16.mxu0 0
    %9176 = vmatmul.mubr.bf16.gmra.mrb[0].mxu0 %v9048
    %v9177 = vpop.f32.mrb[0].mxu0
    %v9178 = vadd.f32 0.0, %v9177
    %v9179 = vpop.f32.mrb[0].mxu0
    %v9180 = vpop.f32.mrb[0].mxu0
    %v9181 = vadd.f32 0.0, %v9180
    %v9182 = vpop.f32.mrb[0].mxu0
    %9183 = vmatprep.mubr.bf16.mxu0 0
    %9184 = vmatmul.mubr.bf16.gmra.mrb[0].mxu0 %v9049
    %v9185 = vpop.f32.mrb[0].mxu0
    %v9186 = vadd.f32 0.0, %v9185
    %v9187 = vpop.f32.mrb[0].mxu0
    %v9188 = vpop.f32.mrb[0].mxu0
    %v9189 = vadd.f32 0.0, %v9188
    %v9190 = vpop.f32.mrb[0].mxu0
    %9191 = vmatprep.mubr.bf16.mxu0 0
    %9192 = vmatmul.mubr.bf16.gmra.mrb[0].mxu0 %v9050
    %v9193 = vpop.f32.mrb[0].mxu0
    %v9194 = vadd.f32 0.0, %v9193
    %v9195 = vpop.f32.mrb[0].mxu0
    %v9196 = vpop.f32.mrb[0].mxu0
    %v9197 = vadd.f32 0.0, %v9196
    %v9198 = vpop.f32.mrb[0].mxu0
    %9199 = vmatprep.mubr.bf16.mxu0 0
    %9200 = vmatmul.mubr.bf16.gmra.mrb[0].mxu0 %v9051
    %v9201 = vpop.f32.mrb[0].mxu0
    %v9202 = vadd.f32 0.0, %v9201
    %v9203 = vpop.f32.mrb[0].mxu0
    %v9204 = vpop.f32.mrb[0].mxu0
    %v9205 = vadd.f32 0.0, %v9204
    %v9206 = vpop.f32.mrb[0].mxu0
    %9207 = vmatprep.mubr.bf16.mxu0 0
    %9208 = vmatmul.mubr.bf16.gmra.mrb[0].mxu0 %v9052
    %v9209 = vpop.f32.mrb[0].mxu0
    %v9210 = vadd.f32 0.0, %v9209
    %v9211 = vpop.f32.mrb[0].mxu0
    %v9212 = vpop.f32.mrb[0].mxu0
    %v9213 = vadd.f32 0.0, %v9212
    %v9214 = vpop.f32.mrb[0].mxu0
    %9215 = vmatprep.mubr.bf16.mxu0 0
    %9216 = vmatmul.mubr.bf16.gmra.mrb[0].mxu0 %v9053
    %v9217 = vpop.f32.mrb[0].mxu0
    %v9218 = vadd.f32 0.0, %v9217
    %v9219 = vpop.f32.mrb[0].mxu0
    %v9220 = vpop.f32.mrb[0].mxu0
    %v9221 = vadd.f32 0.0, %v9220
    %v9222 = vpop.f32.mrb[0].mxu0
    %9223 = vmatprep.mubr.bf16.mxu0 0
    %9224 = vmatmul.mubr.bf16.gmra.mrb[0].mxu0 %v9054
    %v9225 = vpop.f32.mrb[0].mxu0
    %v9226 = vadd.f32 0.0, %v9225
    %v9227 = vpop.f32.mrb[0].mxu0
    %v9228 = vpop.f32.mrb[0].mxu0
    %v9229 = vadd.f32 0.0, %v9228
    %v9230 = vpop.f32.mrb[0].mxu0
    %9231 = vmatprep.mubr.bf16.mxu0 0
    %9232 = vmatmul.mubr.bf16.gmra.mrb[0].mxu0 %v9055
    %v9233 = vpop.f32.mrb[0].mxu0
    %v9234 = vadd.f32 0.0, %v9233
    %v9235 = vpop.f32.mrb[0].mxu0
    %v9236 = vpop.f32.mrb[0].mxu0
    %v9237 = vadd.f32 0.0, %v9236
    %v9238 = vpop.f32.mrb[0].mxu0
    %9239 = vmatprep.mubr.bf16.mxu0 0
    %9240 = vmatmul.mubr.bf16.gmra.mrb[0].mxu0 %v9056
    %v9241 = vpop.f32.mrb[0].mxu0
    %v9242 = vadd.f32 0.0, %v9241
    %v9243 = vpop.f32.mrb[0].mxu0
    %v9244 = vpop.f32.mrb[0].mxu0
    %v9245 = vadd.f32 0.0, %v9244
    %v9246 = vpop.f32.mrb[0].mxu0
    %9247 = vmatprep.mubr.bf16.mxu0 0
    %9248 = vmatmul.mubr.bf16.gmra.mrb[0].mxu0 %v9057
    %v9249 = vpop.f32.mrb[0].mxu0
    %v9250 = vadd.f32 0.0, %v9249
    %v9251 = vpop.f32.mrb[0].mxu0
    %v9252 = vpop.f32.mrb[0].mxu0
    %v9253 = vadd.f32 0.0, %v9252
    %v9254 = vpop.f32.mrb[0].mxu0
    %9255 = vmatprep.mubr.bf16.mxu0 0
    %9256 = vmatmul.mubr.bf16.gmra.mrb[0].mxu0 %v9058
    %v9257 = vpop.f32.mrb[0].mxu0
    %v9258 = vadd.f32 0.0, %v9257
    %v9259 = vpop.f32.mrb[0].mxu0
    %v9260 = vpop.f32.mrb[0].mxu0
    %v9261 = vadd.f32 0.0, %v9260
    %v9262 = vpop.f32.mrb[0].mxu0
    %9263 = vmatprep.mubr.bf16.mxu0 0
    %9264 = vmatmul.mubr.bf16.gmra.mrb[0].mxu0 %v9059
    %v9265 = vpop.f32.mrb[0].mxu0
    %v9266 = vadd.f32 0.0, %v9265
    %v9267 = vpop.f32.mrb[0].mxu0
    %v9268 = vpop.f32.mrb[0].mxu0
    %v9269 = vadd.f32 0.0, %v9268
    %v9270 = vpop.f32.mrb[0].mxu0
    %9271 = vmatprep.mubr.bf16.mxu0 0
    %9272 = vmatmul.mubr.bf16.gmra.mrb[0].mxu0 %v9060
    %v9273 = vpop.f32.mrb[0].mxu0
    %v9274 = vadd.f32 0.0, %v9273
    %v9275 = vpop.f32.mrb[0].mxu0
    %v9276 = vpop.f32.mrb[0].mxu0
    %v9277 = vadd.f32 0.0, %v9276
    %v9278 = vpop.f32.mrb[0].mxu0
    %9279 = vmatprep.mubr.bf16.mxu0 0
    %9280 = vmatmul.mubr.bf16.gmra.mrb[0].mxu0 %v9061
    %v9281 = vpop.f32.mrb[0].mxu0
    %v9282 = vadd.f32 0.0, %v9281
    %v9283 = vpop.f32.mrb[0].mxu0
    %v9284 = vpop.f32.mrb[0].mxu0
    %v9285 = vadd.f32 0.0, %v9284
    %v9286 = vpop.f32.mrb[0].mxu0
    %9287 = vdwg.mxu0
    %v9288 = vadd.f32 %v9014, %v9162
    %v9289 = vadd.f32 %v9015, %v9165
    %v9290 = vadd.f32 %v9016, %v9170
    %v9291 = vadd.f32 %v9017, %v9173
    %v9292 = vadd.f32 %v9018, %v9178
    %v9293 = vadd.f32 %v9019, %v9181
    %v9294 = vadd.f32 %v9020, %v9186
    %v9295 = vadd.f32 %v9021, %v9189
    %v9296 = vadd.f32 %v9022, %v9194
    %v9297 = vadd.f32 %v9023, %v9197
    %v9298 = vadd.f32 %v9024, %v9202
    %v9299 = vadd.f32 %v9025, %v9205
    %v9300 = vadd.f32 %v9026, %v9210
    %v9301 = vadd.f32 %v9027, %v9213
    %v9302 = vadd.f32 %v9028, %v9218
    %v9303 = vadd.f32 %v9029, %v9221
    %v9304 = vadd.f32 %v9030, %v9226
    %v9305 = vadd.f32 %v9031, %v9229
    %v9306 = vadd.f32 %v9032, %v9234
    %v9307 = vadd.f32 %v9033, %v9237
    %v9308 = vadd.f32 %v9034, %v9242
    %v9309 = vadd.f32 %v9035, %v9245
    %v9310 = vadd.f32 %v9036, %v9250
    %v9311 = vadd.f32 %v9037, %v9253
    %v9312 = vadd.f32 %v9038, %v9258
    %v9313 = vadd.f32 %v9039, %v9261
    %v9314 = vadd.f32 %v9040, %v9266
    %v9315 = vadd.f32 %v9041, %v9269
    %v9316 = vadd.f32 %v9042, %v9274
    %v9317 = vadd.f32 %v9043, %v9277
    %v9318 = vadd.f32 %v9044, %v9282
    %v9319 = vadd.f32 %v9045, %v9285
    %9320 = vadd.xlane.f32.xlu0 %v9288
    %v9321 = vpop.xlane.xlu0 %9320
    %9322 = vadd.xlane.f32.xlu0 %v9289
    %v9323 = vpop.xlane.xlu0 %9322
    %9324 = vadd.xlane.f32.xlu0 %v9290
    %v9325 = vpop.xlane.xlu0 %9324
    %9326 = vadd.xlane.f32.xlu0 %v9291
    %v9327 = vpop.xlane.xlu0 %9326
    %9328 = vadd.xlane.f32.xlu0 %v9292
    %v9329 = vpop.xlane.xlu0 %9328
    %9330 = vadd.xlane.f32.xlu0 %v9293
    %v9331 = vpop.xlane.xlu0 %9330
    %9332 = vadd.xlane.f32.xlu0 %v9294
    %v9333 = vpop.xlane.xlu0 %9332
    %9334 = vadd.xlane.f32.xlu0 %v9295
    %v9335 = vpop.xlane.xlu0 %9334
    %9336 = vadd.xlane.f32.xlu0 %v9296
    %v9337 = vpop.xlane.xlu0 %9336
    %9338 = vadd.xlane.f32.xlu0 %v9297
    %v9339 = vpop.xlane.xlu0 %9338
    %9340 = vadd.xlane.f32.xlu0 %v9298
    %v9341 = vpop.xlane.xlu0 %9340
    %9342 = vadd.xlane.f32.xlu0 %v9299
    %v9343 = vpop.xlane.xlu0 %9342
    %9344 = vadd.xlane.f32.xlu0 %v9300
    %v9345 = vpop.xlane.xlu0 %9344
    %9346 = vadd.xlane.f32.xlu0 %v9301
    %v9347 = vpop.xlane.xlu0 %9346
    %9348 = vadd.xlane.f32.xlu0 %v9302
    %v9349 = vpop.xlane.xlu0 %9348
    %9350 = vadd.xlane.f32.xlu0 %v9303
    %v9351 = vpop.xlane.xlu0 %9350
    %9352 = vadd.xlane.f32.xlu0 %v9304
    %v9353 = vpop.xlane.xlu0 %9352
    %9354 = vadd.xlane.f32.xlu0 %v9305
    %v9355 = vpop.xlane.xlu0 %9354
    %9356 = vadd.xlane.f32.xlu0 %v9306
    %v9357 = vpop.xlane.xlu0 %9356
    %9358 = vadd.xlane.f32.xlu0 %v9307
    %v9359 = vpop.xlane.xlu0 %9358
    %9360 = vadd.xlane.f32.xlu0 %v9308
    %v9361 = vpop.xlane.xlu0 %9360
    %9362 = vadd.xlane.f32.xlu0 %v9309
    %v9363 = vpop.xlane.xlu0 %9362
    %9364 = vadd.xlane.f32.xlu0 %v9310
    %v9365 = vpop.xlane.xlu0 %9364
    %9366 = vadd.xlane.f32.xlu0 %v9311
    %v9367 = vpop.xlane.xlu0 %9366
    %9368 = vadd.xlane.f32.xlu0 %v9312
    %v9369 = vpop.xlane.xlu0 %9368
    %9370 = vadd.xlane.f32.xlu0 %v9313
    %v9371 = vpop.xlane.xlu0 %9370
    %9372 = vadd.xlane.f32.xlu0 %v9314
    %v9373 = vpop.xlane.xlu0 %9372
    %9374 = vadd.xlane.f32.xlu0 %v9315
    %v9375 = vpop.xlane.xlu0 %9374
    %9376 = vadd.xlane.f32.xlu0 %v9316
    %v9377 = vpop.xlane.xlu0 %9376
    %9378 = vadd.xlane.f32.xlu0 %v9317
    %v9379 = vpop.xlane.xlu0 %9378
    %9380 = vadd.xlane.f32.xlu0 %v9318
    %v9381 = vpop.xlane.xlu0 %9380
    %9382 = vadd.xlane.f32.xlu0 %v9319
    %v9383 = vpop.xlane.xlu0 %9382
    %v9384 = vmul.f32 %v9321, %v4384
    %v9385 = vmul.f32 %v9323, %v4384
    %v9386 = vmul.f32 %v9325, %v4384
    %v9387 = vmul.f32 %v9327, %v4384
    %v9388 = vmul.f32 %v9329, %v4384
    %v9389 = vmul.f32 %v9331, %v4384
    %v9390 = vmul.f32 %v9333, %v4384
    %v9391 = vmul.f32 %v9335, %v4384
    %v9392 = vmul.f32 %v9337, %v4384
    %v9393 = vmul.f32 %v9339, %v4384
    %v9394 = vmul.f32 %v9341, %v4384
    %v9395 = vmul.f32 %v9343, %v4384
    %v9396 = vmul.f32 %v9345, %v4384
    %v9397 = vmul.f32 %v9347, %v4384
    %v9398 = vmul.f32 %v9349, %v4384
    %v9399 = vmul.f32 %v9351, %v4384
    %v9400 = vmul.f32 %v9353, %v4384
    %v9401 = vmul.f32 %v9355, %v4384
    %v9402 = vmul.f32 %v9357, %v4384
    %v9403 = vmul.f32 %v9359, %v4384
    %v9404 = vmul.f32 %v9361, %v4384
    %v9405 = vmul.f32 %v9363, %v4384
    %v9406 = vmul.f32 %v9365, %v4384
    %v9407 = vmul.f32 %v9367, %v4384
    %v9408 = vmul.f32 %v9369, %v4384
    %v9409 = vmul.f32 %v9371, %v4384
    %v9410 = vmul.f32 %v9373, %v4384
    %v9411 = vmul.f32 %v9375, %v4384
    %v9412 = vmul.f32 %v9377, %v4384
    %v9413 = vmul.f32 %v9379, %v4384
    %v9414 = vmul.f32 %v9381, %v4384
    %v9415 = vmul.f32 %v9383, %v4384
    %v9416 = vmul.f32 %v9288, %v9288
    %v9417 = vmul.f32 %v9289, %v9289
    %v9418 = vmul.f32 %v9290, %v9290
    %v9419 = vmul.f32 %v9291, %v9291
    %v9420 = vmul.f32 %v9292, %v9292
    %v9421 = vmul.f32 %v9293, %v9293
    %v9422 = vmul.f32 %v9294, %v9294
    %v9423 = vmul.f32 %v9295, %v9295
    %v9424 = vmul.f32 %v9296, %v9296
    %v9425 = vmul.f32 %v9297, %v9297
    %v9426 = vmul.f32 %v9298, %v9298
    %v9427 = vmul.f32 %v9299, %v9299
    %v9428 = vmul.f32 %v9300, %v9300
    %v9429 = vmul.f32 %v9301, %v9301
    %v9430 = vmul.f32 %v9302, %v9302
    %v9431 = vmul.f32 %v9303, %v9303
    %v9432 = vmul.f32 %v9304, %v9304
    %v9433 = vmul.f32 %v9305, %v9305
    %v9434 = vmul.f32 %v9306, %v9306
    %v9435 = vmul.f32 %v9307, %v9307
    %v9436 = vmul.f32 %v9308, %v9308
    %v9437 = vmul.f32 %v9309, %v9309
    %v9438 = vmul.f32 %v9310, %v9310
    %v9439 = vmul.f32 %v9311, %v9311
    %v9440 = vmul.f32 %v9312, %v9312
    %v9441 = vmul.f32 %v9313, %v9313
    %v9442 = vmul.f32 %v9314, %v9314
    %v9443 = vmul.f32 %v9315, %v9315
    %v9444 = vmul.f32 %v9316, %v9316
    %v9445 = vmul.f32 %v9317, %v9317
    %v9446 = vmul.f32 %v9318, %v9318
    %v9447 = vmul.f32 %v9319, %v9319
    %9448 = vadd.xlane.f32.xlu0 %v9416
    %v9449 = vpop.xlane.xlu0 %9448
    %9450 = vadd.xlane.f32.xlu0 %v9417
    %v9451 = vpop.xlane.xlu0 %9450
    %9452 = vadd.xlane.f32.xlu0 %v9418
    %v9453 = vpop.xlane.xlu0 %9452
    %9454 = vadd.xlane.f32.xlu0 %v9419
    %v9455 = vpop.xlane.xlu0 %9454
    %9456 = vadd.xlane.f32.xlu0 %v9420
    %v9457 = vpop.xlane.xlu0 %9456
    %9458 = vadd.xlane.f32.xlu0 %v9421
    %v9459 = vpop.xlane.xlu0 %9458
    %9460 = vadd.xlane.f32.xlu0 %v9422
    %v9461 = vpop.xlane.xlu0 %9460
    %9462 = vadd.xlane.f32.xlu0 %v9423
    %v9463 = vpop.xlane.xlu0 %9462
    %9464 = vadd.xlane.f32.xlu0 %v9424
    %v9465 = vpop.xlane.xlu0 %9464
    %9466 = vadd.xlane.f32.xlu0 %v9425
    %v9467 = vpop.xlane.xlu0 %9466
    %9468 = vadd.xlane.f32.xlu0 %v9426
    %v9469 = vpop.xlane.xlu0 %9468
    %9470 = vadd.xlane.f32.xlu0 %v9427
    %v9471 = vpop.xlane.xlu0 %9470
    %9472 = vadd.xlane.f32.xlu0 %v9428
    %v9473 = vpop.xlane.xlu0 %9472
    %9474 = vadd.xlane.f32.xlu0 %v9429
    %v9475 = vpop.xlane.xlu0 %9474
    %9476 = vadd.xlane.f32.xlu0 %v9430
    %v9477 = vpop.xlane.xlu0 %9476
    %9478 = vadd.xlane.f32.xlu0 %v9431
    %v9479 = vpop.xlane.xlu0 %9478
    %9480 = vadd.xlane.f32.xlu0 %v9432
    %v9481 = vpop.xlane.xlu0 %9480
    %9482 = vadd.xlane.f32.xlu0 %v9433
    %v9483 = vpop.xlane.xlu0 %9482
    %9484 = vadd.xlane.f32.xlu0 %v9434
    %v9485 = vpop.xlane.xlu0 %9484
    %9486 = vadd.xlane.f32.xlu0 %v9435
    %v9487 = vpop.xlane.xlu0 %9486
    %9488 = vadd.xlane.f32.xlu0 %v9436
    %v9489 = vpop.xlane.xlu0 %9488
    %9490 = vadd.xlane.f32.xlu0 %v9437
    %v9491 = vpop.xlane.xlu0 %9490
    %9492 = vadd.xlane.f32.xlu0 %v9438
    %v9493 = vpop.xlane.xlu0 %9492
    %9494 = vadd.xlane.f32.xlu0 %v9439
    %v9495 = vpop.xlane.xlu0 %9494
    %9496 = vadd.xlane.f32.xlu0 %v9440
    %v9497 = vpop.xlane.xlu0 %9496
    %9498 = vadd.xlane.f32.xlu0 %v9441
    %v9499 = vpop.xlane.xlu0 %9498
    %9500 = vadd.xlane.f32.xlu0 %v9442
    %v9501 = vpop.xlane.xlu0 %9500
    %9502 = vadd.xlane.f32.xlu0 %v9443
    %v9503 = vpop.xlane.xlu0 %9502
    %9504 = vadd.xlane.f32.xlu0 %v9444
    %v9505 = vpop.xlane.xlu0 %9504
    %9506 = vadd.xlane.f32.xlu0 %v9445
    %v9507 = vpop.xlane.xlu0 %9506
    %9508 = vadd.xlane.f32.xlu0 %v9446
    %v9509 = vpop.xlane.xlu0 %9508
    %9510 = vadd.xlane.f32.xlu0 %v9447
    %v9511 = vpop.xlane.xlu0 %9510
    %v9512 = vmul.f32 %v9449, %v4384
    %v9513 = vmul.f32 %v9451, %v4384
    %v9514 = vmul.f32 %v9453, %v4384
    %v9515 = vmul.f32 %v9455, %v4384
    %v9516 = vmul.f32 %v9457, %v4384
    %v9517 = vmul.f32 %v9459, %v4384
    %v9518 = vmul.f32 %v9461, %v4384
    %v9519 = vmul.f32 %v9463, %v4384
    %v9520 = vmul.f32 %v9465, %v4384
    %v9521 = vmul.f32 %v9467, %v4384
    %v9522 = vmul.f32 %v9469, %v4384
    %v9523 = vmul.f32 %v9471, %v4384
    %v9524 = vmul.f32 %v9473, %v4384
    %v9525 = vmul.f32 %v9475, %v4384
    %v9526 = vmul.f32 %v9477, %v4384
    %v9527 = vmul.f32 %v9479, %v4384
    %v9528 = vmul.f32 %v9481, %v4384
    %v9529 = vmul.f32 %v9483, %v4384
    %v9530 = vmul.f32 %v9485, %v4384
    %v9531 = vmul.f32 %v9487, %v4384
    %v9532 = vmul.f32 %v9489, %v4384
    %v9533 = vmul.f32 %v9491, %v4384
    %v9534 = vmul.f32 %v9493, %v4384
    %v9535 = vmul.f32 %v9495, %v4384
    %v9536 = vmul.f32 %v9497, %v4384
    %v9537 = vmul.f32 %v9499, %v4384
    %v9538 = vmul.f32 %v9501, %v4384
    %v9539 = vmul.f32 %v9503, %v4384
    %v9540 = vmul.f32 %v9505, %v4384
    %v9541 = vmul.f32 %v9507, %v4384
    %v9542 = vmul.f32 %v9509, %v4384
    %v9543 = vmul.f32 %v9511, %v4384
    %v9544 = vsub.f32 %v9288, %v9384
    %v9545 = vsub.f32 %v9289, %v9385
    %v9546 = vsub.f32 %v9290, %v9386
    %v9547 = vsub.f32 %v9291, %v9387
    %v9548 = vsub.f32 %v9292, %v9388
    %v9549 = vsub.f32 %v9293, %v9389
    %v9550 = vsub.f32 %v9294, %v9390
    %v9551 = vsub.f32 %v9295, %v9391
    %v9552 = vsub.f32 %v9296, %v9392
    %v9553 = vsub.f32 %v9297, %v9393
    %v9554 = vsub.f32 %v9298, %v9394
    %v9555 = vsub.f32 %v9299, %v9395
    %v9556 = vsub.f32 %v9300, %v9396
    %v9557 = vsub.f32 %v9301, %v9397
    %v9558 = vsub.f32 %v9302, %v9398
    %v9559 = vsub.f32 %v9303, %v9399
    %v9560 = vsub.f32 %v9304, %v9400
    %v9561 = vsub.f32 %v9305, %v9401
    %v9562 = vsub.f32 %v9306, %v9402
    %v9563 = vsub.f32 %v9307, %v9403
    %v9564 = vsub.f32 %v9308, %v9404
    %v9565 = vsub.f32 %v9309, %v9405
    %v9566 = vsub.f32 %v9310, %v9406
    %v9567 = vsub.f32 %v9311, %v9407
    %v9568 = vsub.f32 %v9312, %v9408
    %v9569 = vsub.f32 %v9313, %v9409
    %v9570 = vsub.f32 %v9314, %v9410
    %v9571 = vsub.f32 %v9315, %v9411
    %v9572 = vsub.f32 %v9316, %v9412
    %v9573 = vsub.f32 %v9317, %v9413
    %v9574 = vsub.f32 %v9318, %v9414
    %v9575 = vsub.f32 %v9319, %v9415
    %v9576 = vmul.f32 %v9384, %v9384
    %v9577 = vmul.f32 %v9385, %v9385
    %v9578 = vmul.f32 %v9386, %v9386
    %v9579 = vmul.f32 %v9387, %v9387
    %v9580 = vmul.f32 %v9388, %v9388
    %v9581 = vmul.f32 %v9389, %v9389
    %v9582 = vmul.f32 %v9390, %v9390
    %v9583 = vmul.f32 %v9391, %v9391
    %v9584 = vmul.f32 %v9392, %v9392
    %v9585 = vmul.f32 %v9393, %v9393
    %v9586 = vmul.f32 %v9394, %v9394
    %v9587 = vmul.f32 %v9395, %v9395
    %v9588 = vmul.f32 %v9396, %v9396
    %v9589 = vmul.f32 %v9397, %v9397
    %v9590 = vmul.f32 %v9398, %v9398
    %v9591 = vmul.f32 %v9399, %v9399
    %v9592 = vmul.f32 %v9400, %v9400
    %v9593 = vmul.f32 %v9401, %v9401
    %v9594 = vmul.f32 %v9402, %v9402
    %v9595 = vmul.f32 %v9403, %v9403
    %v9596 = vmul.f32 %v9404, %v9404
    %v9597 = vmul.f32 %v9405, %v9405
    %v9598 = vmul.f32 %v9406, %v9406
    %v9599 = vmul.f32 %v9407, %v9407
    %v9600 = vmul.f32 %v9408, %v9408
    %v9601 = vmul.f32 %v9409, %v9409
    %v9602 = vmul.f32 %v9410, %v9410
    %v9603 = vmul.f32 %v9411, %v9411
    %v9604 = vmul.f32 %v9412, %v9412
    %v9605 = vmul.f32 %v9413, %v9413
    %v9606 = vmul.f32 %v9414, %v9414
    %v9607 = vmul.f32 %v9415, %v9415
    %v9608 = vsub.f32 %v9512, %v9576
    %v9609 = vsub.f32 %v9513, %v9577
    %v9610 = vsub.f32 %v9514, %v9578
    %v9611 = vsub.f32 %v9515, %v9579
    %v9612 = vsub.f32 %v9516, %v9580
    %v9613 = vsub.f32 %v9517, %v9581
    %v9614 = vsub.f32 %v9518, %v9582
    %v9615 = vsub.f32 %v9519, %v9583
    %v9616 = vsub.f32 %v9520, %v9584
    %v9617 = vsub.f32 %v9521, %v9585
    %v9618 = vsub.f32 %v9522, %v9586
    %v9619 = vsub.f32 %v9523, %v9587
    %v9620 = vsub.f32 %v9524, %v9588
    %v9621 = vsub.f32 %v9525, %v9589
    %v9622 = vsub.f32 %v9526, %v9590
    %v9623 = vsub.f32 %v9527, %v9591
    %v9624 = vsub.f32 %v9528, %v9592
    %v9625 = vsub.f32 %v9529, %v9593
    %v9626 = vsub.f32 %v9530, %v9594
    %v9627 = vsub.f32 %v9531, %v9595
    %v9628 = vsub.f32 %v9532, %v9596
    %v9629 = vsub.f32 %v9533, %v9597
    %v9630 = vsub.f32 %v9534, %v9598
    %v9631 = vsub.f32 %v9535, %v9599
    %v9632 = vsub.f32 %v9536, %v9600
    %v9633 = vsub.f32 %v9537, %v9601
    %v9634 = vsub.f32 %v9538, %v9602
    %v9635 = vsub.f32 %v9539, %v9603
    %v9636 = vsub.f32 %v9540, %v9604
    %v9637 = vsub.f32 %v9541, %v9605
    %v9638 = vsub.f32 %v9542, %v9606
    %v9639 = vsub.f32 %v9543, %v9607
    %v9640 = vadd.f32 %v9608, 1e-06
    %v9641 = vadd.f32 %v9609, 1e-06
    %v9642 = vadd.f32 %v9610, 1e-06
    %v9643 = vadd.f32 %v9611, 1e-06
    %v9644 = vadd.f32 %v9612, 1e-06
    %v9645 = vadd.f32 %v9613, 1e-06
    %v9646 = vadd.f32 %v9614, 1e-06
    %v9647 = vadd.f32 %v9615, 1e-06
    %v9648 = vadd.f32 %v9616, 1e-06
    %v9649 = vadd.f32 %v9617, 1e-06
    %v9650 = vadd.f32 %v9618, 1e-06
    %v9651 = vadd.f32 %v9619, 1e-06
    %v9652 = vadd.f32 %v9620, 1e-06
    %v9653 = vadd.f32 %v9621, 1e-06
    %v9654 = vadd.f32 %v9622, 1e-06
    %v9655 = vadd.f32 %v9623, 1e-06
    %v9656 = vadd.f32 %v9624, 1e-06
    %v9657 = vadd.f32 %v9625, 1e-06
    %v9658 = vadd.f32 %v9626, 1e-06
    %v9659 = vadd.f32 %v9627, 1e-06
    %v9660 = vadd.f32 %v9628, 1e-06
    %v9661 = vadd.f32 %v9629, 1e-06
    %v9662 = vadd.f32 %v9630, 1e-06
    %v9663 = vadd.f32 %v9631, 1e-06
    %v9664 = vadd.f32 %v9632, 1e-06
    %v9665 = vadd.f32 %v9633, 1e-06
    %v9666 = vadd.f32 %v9634, 1e-06
    %v9667 = vadd.f32 %v9635, 1e-06
    %v9668 = vadd.f32 %v9636, 1e-06
    %v9669 = vadd.f32 %v9637, 1e-06
    %v9670 = vadd.f32 %v9638, 1e-06
    %v9671 = vadd.f32 %v9639, 1e-06
    %v9672 = vrsqrt.pop %v9640
    %v9673 = vrsqrt.pop %v9641
    %v9674 = vrsqrt.pop %v9642
    %v9675 = vrsqrt.pop %v9643
    %v9676 = vrsqrt.pop %v9644
    %v9677 = vrsqrt.pop %v9645
    %v9678 = vrsqrt.pop %v9646
    %v9679 = vrsqrt.pop %v9647
    %v9680 = vrsqrt.pop %v9648
    %v9681 = vrsqrt.pop %v9649
    %v9682 = vrsqrt.pop %v9650
    %v9683 = vrsqrt.pop %v9651
    %v9684 = vrsqrt.pop %v9652
    %v9685 = vrsqrt.pop %v9653
    %v9686 = vrsqrt.pop %v9654
    %v9687 = vrsqrt.pop %v9655
    %v9688 = vrsqrt.pop %v9656
    %v9689 = vrsqrt.pop %v9657
    %v9690 = vrsqrt.pop %v9658
    %v9691 = vrsqrt.pop %v9659
    %v9692 = vrsqrt.pop %v9660
    %v9693 = vrsqrt.pop %v9661
    %v9694 = vrsqrt.pop %v9662
    %v9695 = vrsqrt.pop %v9663
    %v9696 = vrsqrt.pop %v9664
    %v9697 = vrsqrt.pop %v9665
    %v9698 = vrsqrt.pop %v9666
    %v9699 = vrsqrt.pop %v9667
    %v9700 = vrsqrt.pop %v9668
    %v9701 = vrsqrt.pop %v9669
    %v9702 = vrsqrt.pop %v9670
    %v9703 = vrsqrt.pop %v9671
    %v9704 = vmul.f32 %v9544, %v9672
    %v9705 = vmul.f32 %v9545, %v9673
    %v9706 = vmul.f32 %v9546, %v9674
    %v9707 = vmul.f32 %v9547, %v9675
    %v9708 = vmul.f32 %v9548, %v9676
    %v9709 = vmul.f32 %v9549, %v9677
    %v9710 = vmul.f32 %v9550, %v9678
    %v9711 = vmul.f32 %v9551, %v9679
    %v9712 = vmul.f32 %v9552, %v9680
    %v9713 = vmul.f32 %v9553, %v9681
    %v9714 = vmul.f32 %v9554, %v9682
    %v9715 = vmul.f32 %v9555, %v9683
    %v9716 = vmul.f32 %v9556, %v9684
    %v9717 = vmul.f32 %v9557, %v9685
    %v9718 = vmul.f32 %v9558, %v9686
    %v9719 = vmul.f32 %v9559, %v9687
    %v9720 = vmul.f32 %v9560, %v9688
    %v9721 = vmul.f32 %v9561, %v9689
    %v9722 = vmul.f32 %v9562, %v9690
    %v9723 = vmul.f32 %v9563, %v9691
    %v9724 = vmul.f32 %v9564, %v9692
    %v9725 = vmul.f32 %v9565, %v9693
    %v9726 = vmul.f32 %v9566, %v9694
    %v9727 = vmul.f32 %v9567, %v9695
    %v9728 = vmul.f32 %v9568, %v9696
    %v9729 = vmul.f32 %v9569, %v9697
    %v9730 = vmul.f32 %v9570, %v9698
    %v9731 = vmul.f32 %v9571, %v9699
    %v9732 = vmul.f32 %v9572, %v9700
    %v9733 = vmul.f32 %v9573, %v9701
    %v9734 = vmul.f32 %v9574, %v9702
    %v9735 = vmul.f32 %v9575, %v9703
    %s9736 = scalar_lea.vmem [#allocation16], 1
    %v9737 = vld [vmem:[%s9736] sm:$0x1]
    %v9739 = vlaneseq
    %v9740 = vshrl.u32 %v9739, 7
    %v9741 = vsub.s32 0, %v9740
    %v9742 = vrot.slane %v9737, %v9741
    %v9744 = vmul.f32 %v9704, %v9742
    %v9745 = vmul.f32 %v9705, %v9742
    %v9746 = vmul.f32 %v9706, %v9742
    %v9747 = vmul.f32 %v9707, %v9742
    %v9748 = vmul.f32 %v9708, %v9742
    %v9749 = vmul.f32 %v9709, %v9742
    %v9750 = vmul.f32 %v9710, %v9742
    %v9751 = vmul.f32 %v9711, %v9742
    %v9752 = vmul.f32 %v9712, %v9742
    %v9753 = vmul.f32 %v9713, %v9742
    %v9754 = vmul.f32 %v9714, %v9742
    %v9755 = vmul.f32 %v9715, %v9742
    %v9756 = vmul.f32 %v9716, %v9742
    %v9757 = vmul.f32 %v9717, %v9742
    %v9758 = vmul.f32 %v9718, %v9742
    %v9759 = vmul.f32 %v9719, %v9742
    %v9760 = vmul.f32 %v9720, %v9742
    %v9761 = vmul.f32 %v9721, %v9742
    %v9762 = vmul.f32 %v9722, %v9742
    %v9763 = vmul.f32 %v9723, %v9742
    %v9764 = vmul.f32 %v9724, %v9742
    %v9765 = vmul.f32 %v9725, %v9742
    %v9766 = vmul.f32 %v9726, %v9742
    %v9767 = vmul.f32 %v9727, %v9742
    %v9768 = vmul.f32 %v9728, %v9742
    %v9769 = vmul.f32 %v9729, %v9742
    %v9770 = vmul.f32 %v9730, %v9742
    %v9771 = vmul.f32 %v9731, %v9742
    %v9772 = vmul.f32 %v9732, %v9742
    %v9773 = vmul.f32 %v9733, %v9742
    %v9774 = vmul.f32 %v9734, %v9742
    %v9775 = vmul.f32 %v9735, %v9742
    %s9776 = scalar_lea.vmem [#allocation17], 1
    %v9777 = vld [vmem:[%s9776] sm:$0x1]
    %v9779 = vlaneseq
    %v9780 = vshrl.u32 %v9779, 7
    %v9781 = vsub.s32 0, %v9780
    %v9782 = vrot.slane %v9777, %v9781
    %v9784 = vadd.f32 %v9744, %v9782
    %v9785 = vadd.f32 %v9745, %v9782
    %v9786 = vadd.f32 %v9746, %v9782
    %v9787 = vadd.f32 %v9747, %v9782
    %v9788 = vadd.f32 %v9748, %v9782
    %v9789 = vadd.f32 %v9749, %v9782
    %v9790 = vadd.f32 %v9750, %v9782
    %v9791 = vadd.f32 %v9751, %v9782
    %v9792 = vadd.f32 %v9752, %v9782
    %v9793 = vadd.f32 %v9753, %v9782
    %v9794 = vadd.f32 %v9754, %v9782
    %v9795 = vadd.f32 %v9755, %v9782
    %v9796 = vadd.f32 %v9756, %v9782
    %v9797 = vadd.f32 %v9757, %v9782
    %v9798 = vadd.f32 %v9758, %v9782
    %v9799 = vadd.f32 %v9759, %v9782
    %v9800 = vadd.f32 %v9760, %v9782
    %v9801 = vadd.f32 %v9761, %v9782
    %v9802 = vadd.f32 %v9762, %v9782
    %v9803 = vadd.f32 %v9763, %v9782
    %v9804 = vadd.f32 %v9764, %v9782
    %v9805 = vadd.f32 %v9765, %v9782
    %v9806 = vadd.f32 %v9766, %v9782
    %v9807 = vadd.f32 %v9767, %v9782
    %v9808 = vadd.f32 %v9768, %v9782
    %v9809 = vadd.f32 %v9769, %v9782
    %v9810 = vadd.f32 %v9770, %v9782
    %v9811 = vadd.f32 %v9771, %v9782
    %v9812 = vadd.f32 %v9772, %v9782
    %v9813 = vadd.f32 %v9773, %v9782
    %v9814 = vadd.f32 %v9774, %v9782
    %v9815 = vadd.f32 %v9775, %v9782
    %v9816 = vld [vmem:[%s2] sm:$0x3]
    %v9817 = vpack.c.bf16 %v9785, %v9784
    %v9818 = vpack.c.bf16 %v9787, %v9786
    %v9819 = vpack.c.bf16 %v9789, %v9788
    %v9820 = vpack.c.bf16 %v9791, %v9790
    %v9821 = vpack.c.bf16 %v9793, %v9792
    %v9822 = vpack.c.bf16 %v9795, %v9794
    %v9823 = vpack.c.bf16 %v9797, %v9796
    %v9824 = vpack.c.bf16 %v9799, %v9798
    %v9825 = vpack.c.bf16 %v9801, %v9800
    %v9826 = vpack.c.bf16 %v9803, %v9802
    %v9827 = vpack.c.bf16 %v9805, %v9804
    %v9828 = vpack.c.bf16 %v9807, %v9806
    %v9829 = vpack.c.bf16 %v9809, %v9808
    %v9830 = vpack.c.bf16 %v9811, %v9810
    %v9831 = vpack.c.bf16 %v9813, %v9812
    %v9832 = vpack.c.bf16 %v9815, %v9814
    %v9835 = vunpack.c.l.s4 1966171168
    %v9836 = vunpack.c.0.s8 %v9835
    %v9837 = vlaneseq
    %v9838 = vshrl.u32 %v9837, 7
    %v9839 = vsub.s32 %v9836, %v9838
    %v9840 = vrot.slane %v9816, %v9839
    %v9841 = vcombine.high %v9840, %v9840
    %v9843 = vunpack.c.l.s4 1966171168
    %v9844 = vunpack.c.0.s8 %v9843
    %v9845 = vlaneseq
    %v9846 = vshrl.u32 %v9845, 7
    %v9847 = vsub.s32 %v9844, %v9846
    %v9848 = vrot.slane %v9840, %v9847
    %v9850 = vunpack.c.l.s4 1966171168
    %v9851 = vunpack.c.0.s8 %v9850
    %v9852 = vlaneseq
    %v9853 = vshrl.u32 %v9852, 7
    %v9854 = vsub.s32 %v9851, %v9853
    %v9855 = vrot.slane %v9841, %v9854
    %9858 = vmatprep.subr.bf16.mxu0 0
    %9859 = vmatpush1.bf16.msra.mxu0 %v9817
    %9860 = vmatprep.subr.bf16.mxu0 0
    %9861 = vmatpush1.bf16.msra.mxu0 %v9818
    %9862 = vmatprep.subr.bf16.mxu0 0
    %9863 = vmatpush1.bf16.msra.mxu0 %v9819
    %9864 = vmatprep.subr.bf16.mxu0 0
    %9865 = vmatpush1.bf16.msra.mxu0 %v9820
    %9866 = vmatprep.subr.bf16.mxu0 0
    %9867 = vmatpush1.bf16.msra.mxu0 %v9821
    %9868 = vmatprep.subr.bf16.mxu0 0
    %9869 = vmatpush1.bf16.msra.mxu0 %v9822
    %9870 = vmatprep.subr.bf16.mxu0 0
    %9871 = vmatpush1.bf16.msra.mxu0 %v9823
    %9872 = vmatprep.subr.bf16.mxu0 0
    %9873 = vmatpush1.bf16.msra.mxu0 %v9824
    %9874 = vmatprep.subr.bf16.mxu0 0
    %9875 = vmatpush1.bf16.msra.mxu0 %v9825
    %9876 = vmatprep.subr.bf16.mxu0 0
    %9877 = vmatpush1.bf16.msra.mxu0 %v9826
    %9878 = vmatprep.subr.bf16.mxu0 0
    %9879 = vmatpush1.bf16.msra.mxu0 %v9827
    %9880 = vmatprep.subr.bf16.mxu0 0
    %9881 = vmatpush1.bf16.msra.mxu0 %v9828
    %9882 = vmatprep.subr.bf16.mxu0 0
    %9883 = vmatpush1.bf16.msra.mxu0 %v9829
    %9884 = vmatprep.subr.bf16.mxu0 0
    %9885 = vmatpush1.bf16.msra.mxu0 %v9830
    %9886 = vmatprep.subr.bf16.mxu0 0
    %9887 = vmatpush1.bf16.msra.mxu0 %v9831
    %9888 = vmatprep.subr.bf16.mxu0 0
    %9889 = vmatpush1.bf16.msra.mxu0 %v9832
    %9890 = vmatprep.mubr.bf16.mxu0 %v9855
    %9891 = vmatmul.mubr.bf16.gmra.mrb[0].mxu0 %v9848
    %v9892 = vpop.f32.mrb[0].mxu0
    %v9893 = vadd.f32 0.0, %v9892
    %v9894 = vpop.f32.mrb[0].mxu0
    %v9895 = vpop.f32.mrb[0].mxu0
    %v9896 = vpop.f32.mrb[0].mxu0
    %9897 = vdwg.mxu0
    %v9898 = vpack.c.bf16 %v9893, %v9893
    %v9899 = vld [vmem:[#allocation19] sm:$0xff]
    %v9900 = vld [vmem:[#allocation19 + $0x8] sm:$0xff]
    %v9901 = vld [vmem:[#allocation19 + $0x10] sm:$0xff]
    %v9902 = vld [vmem:[#allocation19 + $0x18] sm:$0xff]
    %v9903 = vld [vmem:[#allocation19 + $0x20] sm:$0xff]
    %v9904 = vld [vmem:[#allocation19 + $0x28] sm:$0xff]
    %v9905 = vld [vmem:[#allocation19 + $0x30] sm:$0xff]
    %v9906 = vld [vmem:[#allocation19 + $0x38] sm:$0xff]
    %v9907 = vld [vmem:[#allocation19 + $0x40] sm:$0xff]
    %v9908 = vld [vmem:[#allocation19 + $0x48] sm:$0xff]
    %v9909 = vld [vmem:[#allocation19 + $0x50] sm:$0xff]
    %v9910 = vld [vmem:[#allocation19 + $0x58] sm:$0xff]
    %v9911 = vld [vmem:[#allocation19 + $0x60] sm:$0xff]
    %v9912 = vld [vmem:[#allocation19 + $0x68] sm:$0xff]
    %v9913 = vld [vmem:[#allocation19 + $0x70] sm:$0xff]
    %v9914 = vld [vmem:[#allocation19 + $0x78] sm:$0xff]
    %v9915 = vld [vmem:[#allocation19 + $0x80] sm:$0xff]
    %v9916 = vld [vmem:[#allocation19 + $0x88] sm:$0xff]
    %v9917 = vld [vmem:[#allocation19 + $0x90] sm:$0xff]
    %v9918 = vld [vmem:[#allocation19 + $0x98] sm:$0xff]
    %v9919 = vld [vmem:[#allocation19 + $0xa0] sm:$0xff]
    %v9920 = vld [vmem:[#allocation19 + $0xa8] sm:$0xff]
    %v9921 = vld [vmem:[#allocation19 + $0xb0] sm:$0xff]
    %v9922 = vld [vmem:[#allocation19 + $0xb8] sm:$0xff]
    %v9923 = vld [vmem:[#allocation19 + $0xc0] sm:$0xff]
    %v9924 = vld [vmem:[#allocation19 + $0xc8] sm:$0xff]
    %v9925 = vld [vmem:[#allocation19 + $0xd0] sm:$0xff]
    %v9926 = vld [vmem:[#allocation19 + $0xd8] sm:$0xff]
    %v9927 = vld [vmem:[#allocation19 + $0xe0] sm:$0xff]
    %v9928 = vld [vmem:[#allocation19 + $0xe8] sm:$0xff]
    %v9929 = vld [vmem:[#allocation19 + $0xf0] sm:$0xff]
    %v9930 = vld [vmem:[#allocation19 + $0xf8] sm:$0xff]
    %v9931 = vld [vmem:[#allocation20] sm:$0xf]
    %v9933 = vlaneseq
    %v9934 = vshrl.u32 %v9933, 7
    %v9935 = vsub.s32 0, %v9934
    %v9936 = vrot.slane %v9931, %v9935
    %v9937 = vlaneseq
    %v9938 = vshrl.u32 %v9937, 7
    %v9939 = vsub.s32 1, %v9938
    %v9940 = vrot.slane %v9931, %v9939
    %v9941 = vlaneseq
    %v9942 = vshrl.u32 %v9941, 7
    %v9943 = vsub.s32 2, %v9942
    %v9944 = vrot.slane %v9931, %v9943
    %v9945 = vlaneseq
    %v9946 = vshrl.u32 %v9945, 7
    %v9947 = vsub.s32 3, %v9946
    %v9948 = vrot.slane %v9931, %v9947
    %v9985 = vunpack.c.l.b16 %v9899
    %v9986 = vunpack.c.h.b16 %v9899
    %v9987 = vunpack.c.l.b16 %v9900
    %v9988 = vunpack.c.h.b16 %v9900
    %v9989 = vunpack.c.l.b16 %v9901
    %v9990 = vunpack.c.h.b16 %v9901
    %v9991 = vunpack.c.l.b16 %v9902
    %v9992 = vunpack.c.h.b16 %v9902
    %v9993 = vunpack.c.l.b16 %v9903
    %v9994 = vunpack.c.h.b16 %v9903
    %v9995 = vunpack.c.l.b16 %v9904
    %v9996 = vunpack.c.h.b16 %v9904
    %v9997 = vunpack.c.l.b16 %v9905
    %v9998 = vunpack.c.h.b16 %v9905
    %v9999 = vunpack.c.l.b16 %v9906
    %v10000 = vunpack.c.h.b16 %v9906
    %v10001 = vunpack.c.l.b16 %v9907
    %v10002 = vunpack.c.h.b16 %v9907
    %v10003 = vunpack.c.l.b16 %v9908
    %v10004 = vunpack.c.h.b16 %v9908
    %v10005 = vunpack.c.l.b16 %v9909
    %v10006 = vunpack.c.h.b16 %v9909
    %v10007 = vunpack.c.l.b16 %v9910
    %v10008 = vunpack.c.h.b16 %v9910
    %v10009 = vunpack.c.l.b16 %v9911
    %v10010 = vunpack.c.h.b16 %v9911
    %v10011 = vunpack.c.l.b16 %v9912
    %v10012 = vunpack.c.h.b16 %v9912
    %v10013 = vunpack.c.l.b16 %v9913
    %v10014 = vunpack.c.h.b16 %v9913
    %v10015 = vunpack.c.l.b16 %v9914
    %v10016 = vunpack.c.h.b16 %v9914
    %v10017 = vunpack.c.l.b16 %v9915
    %v10018 = vunpack.c.h.b16 %v9915
    %v10019 = vunpack.c.l.b16 %v9916
    %v10020 = vunpack.c.h.b16 %v9916
    %v10021 = vunpack.c.l.b16 %v9917
    %v10022 = vunpack.c.h.b16 %v9917
    %v10023 = vunpack.c.l.b16 %v9918
    %v10024 = vunpack.c.h.b16 %v9918
    %v10025 = vunpack.c.l.b16 %v9919
    %v10026 = vunpack.c.h.b16 %v9919
    %v10027 = vunpack.c.l.b16 %v9920
    %v10028 = vunpack.c.h.b16 %v9920
    %v10029 = vunpack.c.l.b16 %v9921
    %v10030 = vunpack.c.h.b16 %v9921
    %v10031 = vunpack.c.l.b16 %v9922
    %v10032 = vunpack.c.h.b16 %v9922
    %v10033 = vunpack.c.l.b16 %v9923
    %v10034 = vunpack.c.h.b16 %v9923
    %v10035 = vunpack.c.l.b16 %v9924
    %v10036 = vunpack.c.h.b16 %v9924
    %v10037 = vunpack.c.l.b16 %v9925
    %v10038 = vunpack.c.h.b16 %v9925
    %v10039 = vunpack.c.l.b16 %v9926
    %v10040 = vunpack.c.h.b16 %v9926
    %v10041 = vunpack.c.l.b16 %v9927
    %v10042 = vunpack.c.h.b16 %v9927
    %v10043 = vunpack.c.l.b16 %v9928
    %v10044 = vunpack.c.h.b16 %v9928
    %v10045 = vunpack.c.l.b16 %v9929
    %v10046 = vunpack.c.h.b16 %v9929
    %v10047 = vunpack.c.l.b16 %v9930
    %v10048 = vunpack.c.h.b16 %v9930
    %v10049 = vpack.c.b16 %v9989, %v9985
    %v10050 = vpack.c.b16 %v9990, %v9986
    %v10051 = vpack.c.b16 %v9991, %v9987
    %v10052 = vpack.c.b16 %v9992, %v9988
    %v10053 = vpack.c.b16 %v9997, %v9993
    %v10054 = vpack.c.b16 %v9998, %v9994
    %v10055 = vpack.c.b16 %v9999, %v9995
    %v10056 = vpack.c.b16 %v10000, %v9996
    %v10057 = vpack.c.b16 %v10005, %v10001
    %v10058 = vpack.c.b16 %v10006, %v10002
    %v10059 = vpack.c.b16 %v10007, %v10003
    %v10060 = vpack.c.b16 %v10008, %v10004
    %v10061 = vpack.c.b16 %v10013, %v10009
    %v10062 = vpack.c.b16 %v10014, %v10010
    %v10063 = vpack.c.b16 %v10015, %v10011
    %v10064 = vpack.c.b16 %v10016, %v10012
    %v10065 = vpack.c.b16 %v10021, %v10017
    %v10066 = vpack.c.b16 %v10022, %v10018
    %v10067 = vpack.c.b16 %v10023, %v10019
    %v10068 = vpack.c.b16 %v10024, %v10020
    %v10069 = vpack.c.b16 %v10029, %v10025
    %v10070 = vpack.c.b16 %v10030, %v10026
    %v10071 = vpack.c.b16 %v10031, %v10027
    %v10072 = vpack.c.b16 %v10032, %v10028
    %v10073 = vpack.c.b16 %v10037, %v10033
    %v10074 = vpack.c.b16 %v10038, %v10034
    %v10075 = vpack.c.b16 %v10039, %v10035
    %v10076 = vpack.c.b16 %v10040, %v10036
    %v10077 = vpack.c.b16 %v10045, %v10041
    %v10078 = vpack.c.b16 %v10046, %v10042
    %v10079 = vpack.c.b16 %v10047, %v10043
    %v10080 = vpack.c.b16 %v10048, %v10044
    %10113 = vmatprep.subr.bf16.mxu0 %v10050
    %10114 = vmatpush1.bf16.msra.mxu0 %v10049
    %10115 = vmatprep.subr.bf16.mxu0 %v10054
    %10116 = vmatpush1.bf16.msra.mxu0 %v10053
    %10117 = vmatprep.subr.bf16.mxu0 %v10058
    %10118 = vmatpush1.bf16.msra.mxu0 %v10057
    %10119 = vmatprep.subr.bf16.mxu0 %v10062
    %10120 = vmatpush1.bf16.msra.mxu0 %v10061
    %10121 = vmatprep.subr.bf16.mxu0 %v10066
    %10122 = vmatpush1.bf16.msra.mxu0 %v10065
    %10123 = vmatprep.subr.bf16.mxu0 %v10070
    %10124 = vmatpush1.bf16.msra.mxu0 %v10069
    %10125 = vmatprep.subr.bf16.mxu0 %v10074
    %10126 = vmatpush1.bf16.msra.mxu0 %v10073
    %10127 = vmatprep.subr.bf16.mxu0 %v10078
    %10128 = vmatpush1.bf16.msra.mxu0 %v10077
    %10129 = vmatprep.subr.bf16.mxu0 0
    %10130 = vmatpush1.bf16.msra.mxu0 0
    %10131 = vmatprep.subr.bf16.mxu0 0
    %10132 = vmatpush1.bf16.msra.mxu0 0
    %10133 = vmatprep.subr.bf16.mxu0 0
    %10134 = vmatpush1.bf16.msra.mxu0 0
    %10135 = vmatprep.subr.bf16.mxu0 0
    %10136 = vmatpush1.bf16.msra.mxu0 0
    %10137 = vmatprep.subr.bf16.mxu0 0
    %10138 = vmatpush1.bf16.msra.mxu0 0
    %10139 = vmatprep.subr.bf16.mxu0 0
    %10140 = vmatpush1.bf16.msra.mxu0 0
    %10141 = vmatprep.subr.bf16.mxu0 0
    %10142 = vmatpush1.bf16.msra.mxu0 0
    %10143 = vmatprep.subr.bf16.mxu0 0
    %10144 = vmatpush1.bf16.msra.mxu0 0
    %10145 = vmatprep.mubr.bf16.mxu0 0
    %10146 = vmatmul.mubr.bf16.gmra.mrb[0].mxu0 %v9898
    %v10147 = vpop.f32.mrb[0].mxu0
    %v10148 = vadd.f32 %v9936, %v10147
    %v10149 = vpop.f32.mrb[0].mxu0
    %v10150 = vadd.f32 %v9940, %v10149
    %v10151 = vpop.f32.mrb[0].mxu0
    %v10152 = vpop.f32.mrb[0].mxu0
    %10153 = vdwg.mxu0
    %10154 = vmatprep.subr.bf16.mxu0 %v10052
    %10155 = vmatpush1.bf16.msra.mxu0 %v10051
    %10156 = vmatprep.subr.bf16.mxu0 %v10056
    %10157 = vmatpush1.bf16.msra.mxu0 %v10055
    %10158 = vmatprep.subr.bf16.mxu0 %v10060
    %10159 = vmatpush1.bf16.msra.mxu0 %v10059
    %10160 = vmatprep.subr.bf16.mxu0 %v10064
    %10161 = vmatpush1.bf16.msra.mxu0 %v10063
    %10162 = vmatprep.subr.bf16.mxu0 %v10068
    %10163 = vmatpush1.bf16.msra.mxu0 %v10067
    %10164 = vmatprep.subr.bf16.mxu0 %v10072
    %10165 = vmatpush1.bf16.msra.mxu0 %v10071
    %10166 = vmatprep.subr.bf16.mxu0 %v10076
    %10167 = vmatpush1.bf16.msra.mxu0 %v10075
    %10168 = vmatprep.subr.bf16.mxu0 %v10080
    %10169 = vmatpush1.bf16.msra.mxu0 %v10079
    %10170 = vmatprep.subr.bf16.mxu0 0
    %10171 = vmatpush1.bf16.msra.mxu0 0
    %10172 = vmatprep.subr.bf16.mxu0 0
    %10173 = vmatpush1.bf16.msra.mxu0 0
    %10174 = vmatprep.subr.bf16.mxu0 0
    %10175 = vmatpush1.bf16.msra.mxu0 0
    %10176 = vmatprep.subr.bf16.mxu0 0
    %10177 = vmatpush1.bf16.msra.mxu0 0
    %10178 = vmatprep.subr.bf16.mxu0 0
    %10179 = vmatpush1.bf16.msra.mxu0 0
    %10180 = vmatprep.subr.bf16.mxu0 0
    %10181 = vmatpush1.bf16.msra.mxu0 0
    %10182 = vmatprep.subr.bf16.mxu0 0
    %10183 = vmatpush1.bf16.msra.mxu0 0
    %10184 = vmatprep.subr.bf16.mxu0 0
    %10185 = vmatpush1.bf16.msra.mxu0 0
    %10186 = vmatprep.mubr.bf16.mxu0 0
    %10187 = vmatmul.mubr.bf16.gmra.mrb[0].mxu0 %v9898
    %v10188 = vpop.f32.mrb[0].mxu0
    %v10189 = vadd.f32 %v9944, %v10188
    %v10190 = vpop.f32.mrb[0].mxu0
    %v10191 = vadd.f32 %v9948, %v10190
    %v10192 = vpop.f32.mrb[0].mxu0
    %v10193 = vpop.f32.mrb[0].mxu0
    %10194 = vdwg.mxu0
    %v10195 = vmax.f32 %v10148, 0.0
    %v10196 = vmax.f32 %v10150, 0.0
    %v10197 = vmax.f32 %v10189, 0.0
    %v10198 = vmax.f32 %v10191, 0.0
    %v10199 = vmin.f32 %v10195, 6.0
    %v10200 = vmin.f32 %v10196, 6.0
    %v10201 = vmin.f32 %v10197, 6.0
    %v10202 = vmin.f32 %v10198, 6.0
    %v10203 = vpack.c.bf16 %v10199, %v10199
    %v10204 = vpack.c.bf16 %v10200, %v10200
    %v10205 = vpack.c.bf16 %v10201, %v10201
    %v10206 = vpack.c.bf16 %v10202, %v10202
    %v10207 = vld [vmem:[#allocation22] sm:$0xff]
    %v10208 = vld [vmem:[#allocation22 + $0x8] sm:$0xff]
    %v10209 = vld [vmem:[#allocation22 + $0x10] sm:$0xff]
    %v10210 = vld [vmem:[#allocation22 + $0x18] sm:$0xff]
    %v10211 = vld [vmem:[#allocation22 + $0x20] sm:$0xff]
    %v10212 = vld [vmem:[#allocation22 + $0x28] sm:$0xff]
    %v10213 = vld [vmem:[#allocation22 + $0x30] sm:$0xff]
    %v10214 = vld [vmem:[#allocation22 + $0x38] sm:$0xff]
    %v10215 = vld [vmem:[#allocation22 + $0x40] sm:$0xff]
    %v10216 = vld [vmem:[#allocation22 + $0x48] sm:$0xff]
    %v10217 = vld [vmem:[#allocation22 + $0x50] sm:$0xff]
    %v10218 = vld [vmem:[#allocation22 + $0x58] sm:$0xff]
    %v10219 = vld [vmem:[#allocation22 + $0x60] sm:$0xff]
    %v10220 = vld [vmem:[#allocation22 + $0x68] sm:$0xff]
    %v10221 = vld [vmem:[#allocation22 + $0x70] sm:$0xff]
    %v10222 = vld [vmem:[#allocation22 + $0x78] sm:$0xff]
    %v10223 = vld [vmem:[#allocation22 + $0x80] sm:$0xff]
    %v10224 = vld [vmem:[#allocation22 + $0x88] sm:$0xff]
    %v10225 = vld [vmem:[#allocation22 + $0x90] sm:$0xff]
    %v10226 = vld [vmem:[#allocation22 + $0x98] sm:$0xff]
    %v10227 = vld [vmem:[#allocation22 + $0xa0] sm:$0xff]
    %v10228 = vld [vmem:[#allocation22 + $0xa8] sm:$0xff]
    %v10229 = vld [vmem:[#allocation22 + $0xb0] sm:$0xff]
    %v10230 = vld [vmem:[#allocation22 + $0xb8] sm:$0xff]
    %v10231 = vld [vmem:[#allocation22 + $0xc0] sm:$0xff]
    %v10232 = vld [vmem:[#allocation22 + $0xc8] sm:$0xff]
    %v10233 = vld [vmem:[#allocation22 + $0xd0] sm:$0xff]
    %v10234 = vld [vmem:[#allocation22 + $0xd8] sm:$0xff]
    %v10235 = vld [vmem:[#allocation22 + $0xe0] sm:$0xff]
    %v10236 = vld [vmem:[#allocation22 + $0xe8] sm:$0xff]
    %v10237 = vld [vmem:[#allocation22 + $0xf0] sm:$0xff]
    %v10238 = vld [vmem:[#allocation22 + $0xf8] sm:$0xff]
    %v10239 = vld [vmem:[#allocation22 + $0x100] sm:$0xff]
    %v10240 = vld [vmem:[#allocation22 + $0x108] sm:$0xff]
    %v10241 = vld [vmem:[#allocation22 + $0x110] sm:$0xff]
    %v10242 = vld [vmem:[#allocation22 + $0x118] sm:$0xff]
    %v10243 = vld [vmem:[#allocation22 + $0x120] sm:$0xff]
    %v10244 = vld [vmem:[#allocation22 + $0x128] sm:$0xff]
    %v10245 = vld [vmem:[#allocation22 + $0x130] sm:$0xff]
    %v10246 = vld [vmem:[#allocation22 + $0x138] sm:$0xff]
    %v10247 = vld [vmem:[#allocation22 + $0x140] sm:$0xff]
    %v10248 = vld [vmem:[#allocation22 + $0x148] sm:$0xff]
    %v10249 = vld [vmem:[#allocation22 + $0x150] sm:$0xff]
    %v10250 = vld [vmem:[#allocation22 + $0x158] sm:$0xff]
    %v10251 = vld [vmem:[#allocation22 + $0x160] sm:$0xff]
    %v10252 = vld [vmem:[#allocation22 + $0x168] sm:$0xff]
    %v10253 = vld [vmem:[#allocation22 + $0x170] sm:$0xff]
    %v10254 = vld [vmem:[#allocation22 + $0x178] sm:$0xff]
    %v10255 = vld [vmem:[#allocation22 + $0x180] sm:$0xff]
    %v10256 = vld [vmem:[#allocation22 + $0x188] sm:$0xff]
    %v10257 = vld [vmem:[#allocation22 + $0x190] sm:$0xff]
    %v10258 = vld [vmem:[#allocation22 + $0x198] sm:$0xff]
    %v10259 = vld [vmem:[#allocation22 + $0x1a0] sm:$0xff]
    %v10260 = vld [vmem:[#allocation22 + $0x1a8] sm:$0xff]
    %v10261 = vld [vmem:[#allocation22 + $0x1b0] sm:$0xff]
    %v10262 = vld [vmem:[#allocation22 + $0x1b8] sm:$0xff]
    %v10263 = vld [vmem:[#allocation22 + $0x1c0] sm:$0xff]
    %v10264 = vld [vmem:[#allocation22 + $0x1c8] sm:$0xff]
    %v10265 = vld [vmem:[#allocation22 + $0x1d0] sm:$0xff]
    %v10266 = vld [vmem:[#allocation22 + $0x1d8] sm:$0xff]
    %v10267 = vld [vmem:[#allocation22 + $0x1e0] sm:$0xff]
    %v10268 = vld [vmem:[#allocation22 + $0x1e8] sm:$0xff]
    %v10269 = vld [vmem:[#allocation22 + $0x1f0] sm:$0xff]
    %v10270 = vld [vmem:[#allocation22 + $0x1f8] sm:$0xff]
    %v10271 = vld [vmem:[#allocation23] sm:$0x3]
    %v10273 = vlaneseq
    %v10274 = vshrl.u32 %v10273, 7
    %v10275 = vsub.s32 0, %v10274
    %v10276 = vrot.slane %v10271, %v10275
    %v10277 = vlaneseq
    %v10278 = vshrl.u32 %v10277, 7
    %v10279 = vsub.s32 1, %v10278
    %v10280 = vrot.slane %v10271, %v10279
    %v10347 = vunpack.c.l.b16 %v10207
    %v10348 = vunpack.c.h.b16 %v10207
    %v10349 = vunpack.c.l.b16 %v10208
    %v10350 = vunpack.c.h.b16 %v10208
    %v10351 = vunpack.c.l.b16 %v10209
    %v10352 = vunpack.c.h.b16 %v10209
    %v10353 = vunpack.c.l.b16 %v10210
    %v10354 = vunpack.c.h.b16 %v10210
    %v10355 = vunpack.c.l.b16 %v10211
    %v10356 = vunpack.c.h.b16 %v10211
    %v10357 = vunpack.c.l.b16 %v10212
    %v10358 = vunpack.c.h.b16 %v10212
    %v10359 = vunpack.c.l.b16 %v10213
    %v10360 = vunpack.c.h.b16 %v10213
    %v10361 = vunpack.c.l.b16 %v10214
    %v10362 = vunpack.c.h.b16 %v10214
    %v10363 = vunpack.c.l.b16 %v10215
    %v10364 = vunpack.c.h.b16 %v10215
    %v10365 = vunpack.c.l.b16 %v10216
    %v10366 = vunpack.c.h.b16 %v10216
    %v10367 = vunpack.c.l.b16 %v10217
    %v10368 = vunpack.c.h.b16 %v10217
    %v10369 = vunpack.c.l.b16 %v10218
    %v10370 = vunpack.c.h.b16 %v10218
    %v10371 = vunpack.c.l.b16 %v10219
    %v10372 = vunpack.c.h.b16 %v10219
    %v10373 = vunpack.c.l.b16 %v10220
    %v10374 = vunpack.c.h.b16 %v10220
    %v10375 = vunpack.c.l.b16 %v10221
    %v10376 = vunpack.c.h.b16 %v10221
    %v10377 = vunpack.c.l.b16 %v10222
    %v10378 = vunpack.c.h.b16 %v10222
    %v10379 = vunpack.c.l.b16 %v10223
    %v10380 = vunpack.c.h.b16 %v10223
    %v10381 = vunpack.c.l.b16 %v10224
    %v10382 = vunpack.c.h.b16 %v10224
    %v10383 = vunpack.c.l.b16 %v10225
    %v10384 = vunpack.c.h.b16 %v10225
    %v10385 = vunpack.c.l.b16 %v10226
    %v10386 = vunpack.c.h.b16 %v10226
    %v10387 = vunpack.c.l.b16 %v10227
    %v10388 = vunpack.c.h.b16 %v10227
    %v10389 = vunpack.c.l.b16 %v10228
    %v10390 = vunpack.c.h.b16 %v10228
    %v10391 = vunpack.c.l.b16 %v10229
    %v10392 = vunpack.c.h.b16 %v10229
    %v10393 = vunpack.c.l.b16 %v10230
    %v10394 = vunpack.c.h.b16 %v10230
    %v10395 = vunpack.c.l.b16 %v10231
    %v10396 = vunpack.c.h.b16 %v10231
    %v10397 = vunpack.c.l.b16 %v10232
    %v10398 = vunpack.c.h.b16 %v10232
    %v10399 = vunpack.c.l.b16 %v10233
    %v10400 = vunpack.c.h.b16 %v10233
    %v10401 = vunpack.c.l.b16 %v10234
    %v10402 = vunpack.c.h.b16 %v10234
    %v10403 = vunpack.c.l.b16 %v10235
    %v10404 = vunpack.c.h.b16 %v10235
    %v10405 = vunpack.c.l.b16 %v10236
    %v10406 = vunpack.c.h.b16 %v10236
    %v10407 = vunpack.c.l.b16 %v10237
    %v10408 = vunpack.c.h.b16 %v10237
    %v10409 = vunpack.c.l.b16 %v10238
    %v10410 = vunpack.c.h.b16 %v10238
    %v10411 = vunpack.c.l.b16 %v10239
    %v10412 = vunpack.c.h.b16 %v10239
    %v10413 = vunpack.c.l.b16 %v10240
    %v10414 = vunpack.c.h.b16 %v10240
    %v10415 = vunpack.c.l.b16 %v10241
    %v10416 = vunpack.c.h.b16 %v10241
    %v10417 = vunpack.c.l.b16 %v10242
    %v10418 = vunpack.c.h.b16 %v10242
    %v10419 = vunpack.c.l.b16 %v10243
    %v10420 = vunpack.c.h.b16 %v10243
    %v10421 = vunpack.c.l.b16 %v10244
    %v10422 = vunpack.c.h.b16 %v10244
    %v10423 = vunpack.c.l.b16 %v10245
    %v10424 = vunpack.c.h.b16 %v10245
    %v10425 = vunpack.c.l.b16 %v10246
    %v10426 = vunpack.c.h.b16 %v10246
    %v10427 = vunpack.c.l.b16 %v10247
    %v10428 = vunpack.c.h.b16 %v10247
    %v10429 = vunpack.c.l.b16 %v10248
    %v10430 = vunpack.c.h.b16 %v10248
    %v10431 = vunpack.c.l.b16 %v10249
    %v10432 = vunpack.c.h.b16 %v10249
    %v10433 = vunpack.c.l.b16 %v10250
    %v10434 = vunpack.c.h.b16 %v10250
    %v10435 = vunpack.c.l.b16 %v10251
    %v10436 = vunpack.c.h.b16 %v10251
    %v10437 = vunpack.c.l.b16 %v10252
    %v10438 = vunpack.c.h.b16 %v10252
    %v10439 = vunpack.c.l.b16 %v10253
    %v10440 = vunpack.c.h.b16 %v10253
    %v10441 = vunpack.c.l.b16 %v10254
    %v10442 = vunpack.c.h.b16 %v10254
    %v10443 = vunpack.c.l.b16 %v10255
    %v10444 = vunpack.c.h.b16 %v10255
    %v10445 = vunpack.c.l.b16 %v10256
    %v10446 = vunpack.c.h.b16 %v10256
    %v10447 = vunpack.c.l.b16 %v10257
    %v10448 = vunpack.c.h.b16 %v10257
    %v10449 = vunpack.c.l.b16 %v10258
    %v10450 = vunpack.c.h.b16 %v10258
    %v10451 = vunpack.c.l.b16 %v10259
    %v10452 = vunpack.c.h.b16 %v10259
    %v10453 = vunpack.c.l.b16 %v10260
    %v10454 = vunpack.c.h.b16 %v10260
    %v10455 = vunpack.c.l.b16 %v10261
    %v10456 = vunpack.c.h.b16 %v10261
    %v10457 = vunpack.c.l.b16 %v10262
    %v10458 = vunpack.c.h.b16 %v10262
    %v10459 = vunpack.c.l.b16 %v10263
    %v10460 = vunpack.c.h.b16 %v10263
    %v10461 = vunpack.c.l.b16 %v10264
    %v10462 = vunpack.c.h.b16 %v10264
    %v10463 = vunpack.c.l.b16 %v10265
    %v10464 = vunpack.c.h.b16 %v10265
    %v10465 = vunpack.c.l.b16 %v10266
    %v10466 = vunpack.c.h.b16 %v10266
    %v10467 = vunpack.c.l.b16 %v10267
    %v10468 = vunpack.c.h.b16 %v10267
    %v10469 = vunpack.c.l.b16 %v10268
    %v10470 = vunpack.c.h.b16 %v10268
    %v10471 = vunpack.c.l.b16 %v10269
    %v10472 = vunpack.c.h.b16 %v10269
    %v10473 = vunpack.c.l.b16 %v10270
    %v10474 = vunpack.c.h.b16 %v10270
    %v10475 = vpack.c.b16 %v10349, %v10347
    %v10476 = vpack.c.b16 %v10350, %v10348
    %v10477 = vpack.c.b16 %v10353, %v10351
    %v10478 = vpack.c.b16 %v10354, %v10352
    %v10479 = vpack.c.b16 %v10357, %v10355
    %v10480 = vpack.c.b16 %v10358, %v10356
    %v10481 = vpack.c.b16 %v10361, %v10359
    %v10482 = vpack.c.b16 %v10362, %v10360
    %v10483 = vpack.c.b16 %v10365, %v10363
    %v10484 = vpack.c.b16 %v10366, %v10364
    %v10485 = vpack.c.b16 %v10369, %v10367
    %v10486 = vpack.c.b16 %v10370, %v10368
    %v10487 = vpack.c.b16 %v10373, %v10371
    %v10488 = vpack.c.b16 %v10374, %v10372
    %v10489 = vpack.c.b16 %v10377, %v10375
    %v10490 = vpack.c.b16 %v10378, %v10376
    %v10491 = vpack.c.b16 %v10381, %v10379
    %v10492 = vpack.c.b16 %v10382, %v10380
    %v10493 = vpack.c.b16 %v10385, %v10383
    %v10494 = vpack.c.b16 %v10386, %v10384
    %v10495 = vpack.c.b16 %v10389, %v10387
    %v10496 = vpack.c.b16 %v10390, %v10388
    %v10497 = vpack.c.b16 %v10393, %v10391
    %v10498 = vpack.c.b16 %v10394, %v10392
    %v10499 = vpack.c.b16 %v10397, %v10395
    %v10500 = vpack.c.b16 %v10398, %v10396
    %v10501 = vpack.c.b16 %v10401, %v10399
    %v10502 = vpack.c.b16 %v10402, %v10400
    %v10503 = vpack.c.b16 %v10405, %v10403
    %v10504 = vpack.c.b16 %v10406, %v10404
    %v10505 = vpack.c.b16 %v10409, %v10407
    %v10506 = vpack.c.b16 %v10410, %v10408
    %v10507 = vpack.c.b16 %v10413, %v10411
    %v10508 = vpack.c.b16 %v10414, %v10412
    %v10509 = vpack.c.b16 %v10417, %v10415
    %v10510 = vpack.c.b16 %v10418, %v10416
    %v10511 = vpack.c.b16 %v10421, %v10419
    %v10512 = vpack.c.b16 %v10422, %v10420
    %v10513 = vpack.c.b16 %v10425, %v10423
    %v10514 = vpack.c.b16 %v10426, %v10424
    %v10515 = vpack.c.b16 %v10429, %v10427
    %v10516 = vpack.c.b16 %v10430, %v10428
    %v10517 = vpack.c.b16 %v10433, %v10431
    %v10518 = vpack.c.b16 %v10434, %v10432
    %v10519 = vpack.c.b16 %v10437, %v10435
    %v10520 = vpack.c.b16 %v10438, %v10436
    %v10521 = vpack.c.b16 %v10441, %v10439
    %v10522 = vpack.c.b16 %v10442, %v10440
    %v10523 = vpack.c.b16 %v10445, %v10443
    %v10524 = vpack.c.b16 %v10446, %v10444
    %v10525 = vpack.c.b16 %v10449, %v10447
    %v10526 = vpack.c.b16 %v10450, %v10448
    %v10527 = vpack.c.b16 %v10453, %v10451
    %v10528 = vpack.c.b16 %v10454, %v10452
    %v10529 = vpack.c.b16 %v10457, %v10455
    %v10530 = vpack.c.b16 %v10458, %v10456
    %v10531 = vpack.c.b16 %v10461, %v10459
    %v10532 = vpack.c.b16 %v10462, %v10460
    %v10533 = vpack.c.b16 %v10465, %v10463
    %v10534 = vpack.c.b16 %v10466, %v10464
    %v10535 = vpack.c.b16 %v10469, %v10467
    %v10536 = vpack.c.b16 %v10470, %v10468
    %v10537 = vpack.c.b16 %v10473, %v10471
    %v10538 = vpack.c.b16 %v10474, %v10472
    %10603 = vmatprep.subr.bf16.mxu0 %v10476
    %10604 = vmatpush1.bf16.msra.mxu0 %v10475
    %10605 = vmatprep.subr.bf16.mxu0 %v10478
    %10606 = vmatpush1.bf16.msra.mxu0 %v10477
    %10607 = vmatprep.subr.bf16.mxu0 %v10480
    %10608 = vmatpush1.bf16.msra.mxu0 %v10479
    %10609 = vmatprep.subr.bf16.mxu0 %v10482
    %10610 = vmatpush1.bf16.msra.mxu0 %v10481
    %10611 = vmatprep.subr.bf16.mxu0 %v10484
    %10612 = vmatpush1.bf16.msra.mxu0 %v10483
    %10613 = vmatprep.subr.bf16.mxu0 %v10486
    %10614 = vmatpush1.bf16.msra.mxu0 %v10485
    %10615 = vmatprep.subr.bf16.mxu0 %v10488
    %10616 = vmatpush1.bf16.msra.mxu0 %v10487
    %10617 = vmatprep.subr.bf16.mxu0 %v10490
    %10618 = vmatpush1.bf16.msra.mxu0 %v10489
    %10619 = vmatprep.subr.bf16.mxu0 %v10492
    %10620 = vmatpush1.bf16.msra.mxu0 %v10491
    %10621 = vmatprep.subr.bf16.mxu0 %v10494
    %10622 = vmatpush1.bf16.msra.mxu0 %v10493
    %10623 = vmatprep.subr.bf16.mxu0 %v10496
    %10624 = vmatpush1.bf16.msra.mxu0 %v10495
    %10625 = vmatprep.subr.bf16.mxu0 %v10498
    %10626 = vmatpush1.bf16.msra.mxu0 %v10497
    %10627 = vmatprep.subr.bf16.mxu0 %v10500
    %10628 = vmatpush1.bf16.msra.mxu0 %v10499
    %10629 = vmatprep.subr.bf16.mxu0 %v10502
    %10630 = vmatpush1.bf16.msra.mxu0 %v10501
    %10631 = vmatprep.subr.bf16.mxu0 %v10504
    %10632 = vmatpush1.bf16.msra.mxu0 %v10503
    %10633 = vmatprep.subr.bf16.mxu0 %v10506
    %10634 = vmatpush1.bf16.msra.mxu0 %v10505
    %10635 = vmatprep.mubr.bf16.mxu0 %v10204
    %10636 = vmatmul.mubr.bf16.gmra.mrb[0].mxu0 %v10203
    %v10637 = vpop.f32.mrb[0].mxu0
    %v10638 = vadd.f32 %v10276, %v10637
    %v10639 = vpop.f32.mrb[0].mxu0
    %v10640 = vadd.f32 %v10280, %v10639
    %v10641 = vpop.f32.mrb[0].mxu0
    %v10642 = vpop.f32.mrb[0].mxu0
    %10643 = vdwg.mxu0
    %10644 = vmatprep.subr.bf16.mxu0 %v10508
    %10645 = vmatpush1.bf16.msra.mxu0 %v10507
    %10646 = vmatprep.subr.bf16.mxu0 %v10510
    %10647 = vmatpush1.bf16.msra.mxu0 %v10509
    %10648 = vmatprep.subr.bf16.mxu0 %v10512
    %10649 = vmatpush1.bf16.msra.mxu0 %v10511
    %10650 = vmatprep.subr.bf16.mxu0 %v10514
    %10651 = vmatpush1.bf16.msra.mxu0 %v10513
    %10652 = vmatprep.subr.bf16.mxu0 %v10516
    %10653 = vmatpush1.bf16.msra.mxu0 %v10515
    %10654 = vmatprep.subr.bf16.mxu0 %v10518
    %10655 = vmatpush1.bf16.msra.mxu0 %v10517
    %10656 = vmatprep.subr.bf16.mxu0 %v10520
    %10657 = vmatpush1.bf16.msra.mxu0 %v10519
    %10658 = vmatprep.subr.bf16.mxu0 %v10522
    %10659 = vmatpush1.bf16.msra.mxu0 %v10521
    %10660 = vmatprep.subr.bf16.mxu0 %v10524
    %10661 = vmatpush1.bf16.msra.mxu0 %v10523
    %10662 = vmatprep.subr.bf16.mxu0 %v10526
    %10663 = vmatpush1.bf16.msra.mxu0 %v10525
    %10664 = vmatprep.subr.bf16.mxu0 %v10528
    %10665 = vmatpush1.bf16.msra.mxu0 %v10527
    %10666 = vmatprep.subr.bf16.mxu0 %v10530
    %10667 = vmatpush1.bf16.msra.mxu0 %v10529
    %10668 = vmatprep.subr.bf16.mxu0 %v10532
    %10669 = vmatpush1.bf16.msra.mxu0 %v10531
    %10670 = vmatprep.subr.bf16.mxu0 %v10534
    %10671 = vmatpush1.bf16.msra.mxu0 %v10533
    %10672 = vmatprep.subr.bf16.mxu0 %v10536
    %10673 = vmatpush1.bf16.msra.mxu0 %v10535
    %10674 = vmatprep.subr.bf16.mxu0 %v10538
    %10675 = vmatpush1.bf16.msra.mxu0 %v10537
    %10676 = vmatprep.mubr.bf16.mxu0 %v10206
    %10677 = vmatmul.mubr.bf16.gmra.mrb[0].mxu0 %v10205
    %v10678 = vpop.f32.mrb[0].mxu0
    %v10679 = vadd.f32 %v10638, %v10678
    %v10680 = vpop.f32.mrb[0].mxu0
    %v10681 = vadd.f32 %v10640, %v10680
    %v10682 = vpop.f32.mrb[0].mxu0
    %v10683 = vpop.f32.mrb[0].mxu0
    %10684 = vdwg.mxu0
    %v10685 = vmax.f32 %v10679, 0.0
    %v10686 = vmax.f32 %v10681, 0.0
    %v10687 = vmin.f32 %v10685, 6.0
    %v10688 = vmin.f32 %v10686, 6.0
    %v10689 = vpack.c.bf16 %v10687, %v10687
    %v10690 = vpack.c.bf16 %v10688, %v10688
    %v10691 = vld [vmem:[#allocation25] sm:$0xf]
    %v10692 = vld [vmem:[#allocation25 + $0x4] sm:$0xf]
    %v10693 = vld [vmem:[#allocation25 + $0x8] sm:$0xf]
    %v10694 = vld [vmem:[#allocation25 + $0xc] sm:$0xf]
    %v10695 = vld [vmem:[#allocation25 + $0x10] sm:$0xf]
    %v10696 = vld [vmem:[#allocation25 + $0x14] sm:$0xf]
    %v10697 = vld [vmem:[#allocation25 + $0x18] sm:$0xf]
    %v10698 = vld [vmem:[#allocation25 + $0x1c] sm:$0xf]
    %v10699 = vld [vmem:[#allocation25 + $0x20] sm:$0xf]
    %v10700 = vld [vmem:[#allocation25 + $0x24] sm:$0xf]
    %v10701 = vld [vmem:[#allocation25 + $0x28] sm:$0xf]
    %v10702 = vld [vmem:[#allocation25 + $0x2c] sm:$0xf]
    %v10703 = vld [vmem:[#allocation25 + $0x30] sm:$0xf]
    %v10704 = vld [vmem:[#allocation25 + $0x34] sm:$0xf]
    %v10705 = vld [vmem:[#allocation25 + $0x38] sm:$0xf]
    %v10706 = vld [vmem:[#allocation25 + $0x3c] sm:$0xf]
    %v10707 = vld [vmem:[#allocation25 + $0x40] sm:$0xf]
    %v10708 = vld [vmem:[#allocation25 + $0x44] sm:$0xf]
    %v10709 = vld [vmem:[#allocation25 + $0x48] sm:$0xf]
    %v10710 = vld [vmem:[#allocation25 + $0x4c] sm:$0xf]
    %v10711 = vld [vmem:[#allocation25 + $0x50] sm:$0xf]
    %v10712 = vld [vmem:[#allocation25 + $0x54] sm:$0xf]
    %v10713 = vld [vmem:[#allocation25 + $0x58] sm:$0xf]
    %v10714 = vld [vmem:[#allocation25 + $0x5c] sm:$0xf]
    %v10715 = vld [vmem:[#allocation25 + $0x60] sm:$0xf]
    %v10716 = vld [vmem:[#allocation25 + $0x64] sm:$0xf]
    %v10717 = vld [vmem:[#allocation25 + $0x68] sm:$0xf]
    %v10718 = vld [vmem:[#allocation25 + $0x6c] sm:$0xf]
    %v10719 = vld [vmem:[#allocation25 + $0x70] sm:$0xf]
    %v10720 = vld [vmem:[#allocation25 + $0x74] sm:$0xf]
    %v10721 = vld [vmem:[#allocation25 + $0x78] sm:$0xf]
    %v10722 = vld [vmem:[#allocation25 + $0x7c] sm:$0xf]
    %v10723 = vld [vmem:[#allocation26] sm:$0x1]
    %v10725 = vlaneseq
    %v10726 = vshrl.u32 %v10725, 7
    %v10727 = vsub.s32 0, %v10726
    %v10728 = vrot.slane %v10723, %v10727
    %v10762 = vunpack.c.l.b16 %v10691
    %v10763 = vunpack.c.l.b16 %v10692
    %v10764 = vunpack.c.l.b16 %v10693
    %v10765 = vunpack.c.l.b16 %v10694
    %v10766 = vunpack.c.l.b16 %v10695
    %v10767 = vunpack.c.l.b16 %v10696
    %v10768 = vunpack.c.l.b16 %v10697
    %v10769 = vunpack.c.l.b16 %v10698
    %v10770 = vunpack.c.l.b16 %v10699
    %v10771 = vunpack.c.l.b16 %v10700
    %v10772 = vunpack.c.l.b16 %v10701
    %v10773 = vunpack.c.l.b16 %v10702
    %v10774 = vunpack.c.l.b16 %v10703
    %v10775 = vunpack.c.l.b16 %v10704
    %v10776 = vunpack.c.l.b16 %v10705
    %v10777 = vunpack.c.l.b16 %v10706
    %v10778 = vunpack.c.l.b16 %v10707
    %v10779 = vunpack.c.l.b16 %v10708
    %v10780 = vunpack.c.l.b16 %v10709
    %v10781 = vunpack.c.l.b16 %v10710
    %v10782 = vunpack.c.l.b16 %v10711
    %v10783 = vunpack.c.l.b16 %v10712
    %v10784 = vunpack.c.l.b16 %v10713
    %v10785 = vunpack.c.l.b16 %v10714
    %v10786 = vunpack.c.l.b16 %v10715
    %v10787 = vunpack.c.l.b16 %v10716
    %v10788 = vunpack.c.l.b16 %v10717
    %v10789 = vunpack.c.l.b16 %v10718
    %v10790 = vunpack.c.l.b16 %v10719
    %v10791 = vunpack.c.l.b16 %v10720
    %v10792 = vunpack.c.l.b16 %v10721
    %v10793 = vunpack.c.l.b16 %v10722
    %v10794 = vpack.c.b16 %v10763, %v10762
    %v10795 = vpack.c.b16 %v10765, %v10764
    %v10796 = vpack.c.b16 %v10767, %v10766
    %v10797 = vpack.c.b16 %v10769, %v10768
    %v10798 = vpack.c.b16 %v10771, %v10770
    %v10799 = vpack.c.b16 %v10773, %v10772
    %v10800 = vpack.c.b16 %v10775, %v10774
    %v10801 = vpack.c.b16 %v10777, %v10776
    %v10802 = vpack.c.b16 %v10779, %v10778
    %v10803 = vpack.c.b16 %v10781, %v10780
    %v10804 = vpack.c.b16 %v10783, %v10782
    %v10805 = vpack.c.b16 %v10785, %v10784
    %v10806 = vpack.c.b16 %v10787, %v10786
    %v10807 = vpack.c.b16 %v10789, %v10788
    %v10808 = vpack.c.b16 %v10791, %v10790
    %v10809 = vpack.c.b16 %v10793, %v10792
    %10826 = vmatprep.subr.bf16.mxu0 0
    %10827 = vmatpush1.bf16.msra.mxu0 %v10794
    %10828 = vmatprep.subr.bf16.mxu0 0
    %10829 = vmatpush1.bf16.msra.mxu0 %v10795
    %10830 = vmatprep.subr.bf16.mxu0 0
    %10831 = vmatpush1.bf16.msra.mxu0 %v10796
    %10832 = vmatprep.subr.bf16.mxu0 0
    %10833 = vmatpush1.bf16.msra.mxu0 %v10797
    %10834 = vmatprep.subr.bf16.mxu0 0
    %10835 = vmatpush1.bf16.msra.mxu0 %v10798
    %10836 = vmatprep.subr.bf16.mxu0 0
    %10837 = vmatpush1.bf16.msra.mxu0 %v10799
    %10838 = vmatprep.subr.bf16.mxu0 0
    %10839 = vmatpush1.bf16.msra.mxu0 %v10800
    %10840 = vmatprep.subr.bf16.mxu0 0
    %10841 = vmatpush1.bf16.msra.mxu0 %v10801
    %10842 = vmatprep.subr.bf16.mxu0 0
    %10843 = vmatpush1.bf16.msra.mxu0 %v10802
    %10844 = vmatprep.subr.bf16.mxu0 0
    %10845 = vmatpush1.bf16.msra.mxu0 %v10803
    %10846 = vmatprep.subr.bf16.mxu0 0
    %10847 = vmatpush1.bf16.msra.mxu0 %v10804
    %10848 = vmatprep.subr.bf16.mxu0 0
    %10849 = vmatpush1.bf16.msra.mxu0 %v10805
    %10850 = vmatprep.subr.bf16.mxu0 0
    %10851 = vmatpush1.bf16.msra.mxu0 %v10806
    %10852 = vmatprep.subr.bf16.mxu0 0
    %10853 = vmatpush1.bf16.msra.mxu0 %v10807
    %10854 = vmatprep.subr.bf16.mxu0 0
    %10855 = vmatpush1.bf16.msra.mxu0 %v10808
    %10856 = vmatprep.subr.bf16.mxu0 0
    %10857 = vmatpush1.bf16.msra.mxu0 %v10809
    %10858 = vmatprep.mubr.bf16.mxu0 %v10690
    %10859 = vmatmul.mubr.bf16.gmra.mrb[0].mxu0 %v10689
    %v10860 = vpop.f32.mrb[0].mxu0
    %v10861 = vadd.f32 %v10728, %v10860
    %v10862 = vpop.f32.mrb[0].mxu0
    %v10863 = vpop.f32.mrb[0].mxu0
    %v10864 = vpop.f32.mrb[0].mxu0
    %10865 = vdwg.mxu0
    %v10866 = vxor.u32 %v10861, 2147483648
    %v10867 = vmul.f32 %v10866, 1.442695
    %v10868 = vpow.pop %v10867
    %v10869 = vadd.f32 %v10868, 1.0
    %v10870 = vrcp.pop %v10869
    %v10871 = vmul.f32 1.0, %v10870
    %v10874 = vunpack.c.l.s4 1966171168
    %v10875 = vunpack.c.0.s8 %v10874
    %v10876 = vlaneseq
    %v10877 = vshrl.u32 %v10876, 7
    %v10878 = vsub.s32 %v10875, %v10877
    %v10879 = vrot.slane %v10871, %v10878
    %v10880 = vcombine.high %v10879, %v10879
    %v10882 = vunpack.c.l.s4 1966171168
    %v10883 = vunpack.c.0.s8 %v10882
    %v10884 = vlaneseq
    %v10885 = vshrl.u32 %v10884, 7
    %v10886 = vsub.s32 %v10883, %v10885
    %v10887 = vrot.slane %v10879, %v10886
    %v10889 = vunpack.c.l.s4 1966171168
    %v10890 = vunpack.c.0.s8 %v10889
    %v10891 = vlaneseq
    %v10892 = vshrl.u32 %v10891, 7
    %v10893 = vsub.s32 %v10890, %v10892
    %v10894 = vrot.slane %v10880, %v10893
    %10897 = vst [vmem:[#allocation28] sm:$0x1] %v10887
    %10898 = vst [vmem:[#allocation28 + $0x1] sm:$0x1] %v10894
    // Predicated region
    $region142: #{_forward_impl.1} parent=1 // pred_check
      _
    $region143: #{_forward_impl.1} parent=1 // pred_check_branch
      %10900 = sbr.rel (0) target = $region145
    $region144: #{_forward_impl.1} parent=1 // pred_region
      %s10902 = ssub.s32 32, 32
      %10903 = vsyncadd [#allocation4], %s10902
      %s10904 = sshll.u32 [#allocation28], 4
      %s10905 = int_to_ptr.vmem [resolvable:$true] %s10904
      %10910 = dma.vmem_to_hbm [thread:$0]  %s10905, 32, %s19, [#allocation4], 16, 16, 1
    $region145: #{_forward_impl.1} parent=1 // pred_fallthru
      _
    // Predicated region
    $region146: #{_forward_impl.1} parent=1 // pred_check
      _
    $region147: #{_forward_impl.1} parent=1 // pred_check_branch
      %10912 = sbr.rel (0) target = $region149
    $region148: #{_forward_impl.1} parent=1 // pred_region
      %10913 = dma.done [#allocation4], 32
    $region149: #{_forward_impl.1} parent=1 // pred_fallthru
      _
    %10914 = vsyncpa [#allocation3], 1
    %10915 = vsyncpa [#allocation6], 1
    %10916 = vsyncpa [#allocation9], 1
    %10917 = vsyncpa [#allocation12], 1
    %10918 = vsyncpa [#allocation15], 1
    %10919 = vsyncpa [#allocation18], 1
    %10920 = vsyncpa [#allocation21], 1
    %10921 = vsyncpa [#allocation24], 1
    %10922 = vsyncpa [#allocation27], 1
    %10923 = vsyncpa [#allocation4], 1

</llo_original>
